<compile_context>
chip_gen: v7x
topology: tpu7x:2x2x1
jax: 0.10.0
libtpu: 0.0.40
codegen_flags: <defaults>
</compile_context>

<pallas_src>
import jax
import jax.numpy as jnp
from jax import lax
from jax.experimental import pallas as pl
from jax.experimental.pallas import tpu as pltpu

H = 16            # spatial height
W = 16            # spatial width
C1 = 8            # hidden channels of the small ResNet
NCLS = 2          # module output size per sample
WC = W * C1       # 128: (width, channel)-interleaved lane width of features
HP = H + 2        # 18: row-padded rows per sample
NL = 128          # lane-padded logits width (lane-dense output store)
XL = 128          # lane-padded input width (contiguous full-lane DMA)

BT = 28           # samples per grid step
ROWS = BT * HP    # 504 stacked row-padded rows per grid block
M = ROWS - 2      # 502 matmul rows per dy tap


def _resnet_threshold_kernel(x_ref, s3_ref, valid_ref,
                             a1_ref, b1_ref, a2_ref, b2_ref, a3_ref, b3_ref,
                             pool_ref, wfc_ref, bfc_ref, default_ref,
                             out_ref, p_ref, f1_ref, acc_ref):
    """Processes BT samples per grid step.

    x_ref    : (ROWS, XL)   bf16 stacked row-padded, lane-padded inputs
    s3_ref   : (BT, 1)      f32  per-sample empty flag (1.0 => |x|.sum() < 1e-6)
    valid_ref: (M, 1)       f32  1.0 on real conv-output rows, 0.0 on junk rows
    a1_ref   : (3, XL, WC)  bf16 conv1 clipped banded weight (one per dy)
    a2/a3    : (3, WC, WC)  bf16 residual-block clipped banded weights
    b*_ref   : (1, WC)      f32  biases tiled over width
    pool_ref : (BT, ROWS)   bf16 per-sample pooling matrix (0/1), shift baked in
    wfc_ref  : (WC, NL)     bf16 fc weight tiled over width, /(H*W), zero-padded
    bfc_ref  : (1, NL)      f32
    default_ref: (1, NL)    f32  precomputed [100, -100, 0, ...] row
    out_ref  : (BT, NL)     f32  logits (lanes 0..1 meaningful)
    p_ref    : (ROWS, WC)   bf16 VMEM scratch: stacked feature maps (row-padded)
    f1_ref   : (M, WC)      bf16 VMEM scratch: skip operand
    acc_ref  : (M, WC)      f32  VMEM scratch: matmul accumulator
    """
    # Only the two stack-border rows are never written inside a step; the
    # within-sample pad rows get zeros from every layer's store (valid mask)
    # and column padding is folded into the banded weights, so no other
    # scratch zeroing is needed.
    zrow = jnp.zeros((1, WC), jnp.bfloat16)
    p_ref[0:1, :] = zrow
    p_ref[ROWS - 1:ROWS, :] = zrow

    # ---- conv1 (1 -> C1, 3x3, SAME): 3 banded MXU matmuls (one per dy) ----
    acc_ref[...] = jnp.dot(x_ref[0:M, :], a1_ref[0],
                           preferred_element_type=jnp.float32)
    acc_ref[...] += jnp.dot(x_ref[1:1 + M, :], a1_ref[1],
                            preferred_element_type=jnp.float32)
    acc_ref[...] += jnp.dot(x_ref[2:2 + M, :], a1_ref[2],
                            preferred_element_type=jnp.float32)
    f1 = (jnp.maximum(acc_ref[...] + b1_ref[...], 0.0)
          * valid_ref[...]).astype(jnp.bfloat16)
    p_ref[1:1 + M, :] = f1            # conv2 input (junk rows carry zeros)
    f1_ref[...] = f1                  # skip operand parked in VMEM

    # ---- residual block, conv2 + relu ----
    acc_ref[...] = jnp.dot(p_ref[0:M, :], a2_ref[0],
                           preferred_element_type=jnp.float32)
    acc_ref[...] += jnp.dot(p_ref[1:1 + M, :], a2_ref[1],
                            preferred_element_type=jnp.float32)
    acc_ref[...] += jnp.dot(p_ref[2:2 + M, :], a2_ref[2],
                            preferred_element_type=jnp.float32)
    f2 = (jnp.maximum(acc_ref[...] + b2_ref[...], 0.0)
          * valid_ref[...]).astype(jnp.bfloat16)
    p_ref[1:1 + M, :] = f2

    # ---- residual block, conv3 + identity skip + relu ----
    acc_ref[...] = jnp.dot(p_ref[0:M, :], a3_ref[0],
                           preferred_element_type=jnp.float32)
    acc_ref[...] += jnp.dot(p_ref[1:1 + M, :], a3_ref[1],
                            preferred_element_type=jnp.float32)
    acc_ref[...] += jnp.dot(p_ref[2:2 + M, :], a3_ref[2],
                            preferred_element_type=jnp.float32)
    f3 = jnp.maximum(acc_ref[...] + b3_ref[...]
                     + f1_ref[...].astype(jnp.float32), 0.0).astype(jnp.bfloat16)
    p_ref[1:1 + M, :] = f3            # junk rows are excluded by the pool matrix

    # ---- fused global mean pool + fc (two small matmuls) ----
    pooled = jnp.dot(pool_ref[...], p_ref[...],
                     preferred_element_type=jnp.float32)               # (BT, WC)
    logits = jnp.dot(pooled.astype(jnp.bfloat16), wfc_ref[...],
                     preferred_element_type=jnp.float32) + bfc_ref[...]  # (BT, NL)

    # ---- empty-sample threshold: sum|x| < 1e-6 -> [100, -100] ----
    empty = s3_ref[...] > 0.5                                          # (BT, 1)
    out_ref[...] = jnp.where(jnp.broadcast_to(empty, (BT, NL)),
                             jnp.broadcast_to(default_ref[...], (BT, NL)),
                             logits)


def _banded_taps(w, width):
    """(3,3,Ci,Co) conv weight -> (3, width*Ci, width*Co) clipped banded matrices.

    B[dy, j*Ci+ci, w*Co+co] = w[dy, j-w+1, ci, co] if -1 <= j-w <= 1 else 0,
    i.e. a SAME conv over unpadded columns: layer = sum_dy P[dy:dy+M,:] @ B[dy].
    Column (left/right) zero-padding is folded into the band clipping, so the
    feature scratch needs no pad lanes.
    """
    ci, co = w.shape[2], w.shape[3]
    j = jnp.arange(width)
    wi = jnp.arange(width)
    dx = jnp.arange(3)
    sel = (j[None, :, None] == wi[None, None, :] + dx[:, None, None] - 1
           ).astype(w.dtype)
    b = jnp.einsum('xjw,yxio->yjiwo', sel, w)     # (3, width, ci, width, co)
    return b.reshape(3, width * ci, width * co)


def init_params(key):
    ks = jax.random.split(key, 8)
    w1 = 0.2 * jax.random.normal(ks[0], (3, 3, 1, C1), jnp.float32)
    b1 = 0.1 * jax.random.normal(ks[1], (C1,), jnp.float32)
    w2 = 0.1 * jax.random.normal(ks[2], (3, 3, C1, C1), jnp.float32)
    b2 = 0.1 * jax.random.normal(ks[3], (C1,), jnp.float32)
    w3 = 0.1 * jax.random.normal(ks[4], (3, 3, C1, C1), jnp.float32)
    b3 = 0.1 * jax.random.normal(ks[5], (C1,), jnp.float32)
    wfc = 0.5 * jax.random.normal(ks[6], (C1, NCLS), jnp.float32)
    bfc = 0.1 * jax.random.normal(ks[7], (NCLS,), jnp.float32)
    return (w1, b1, w2, b2, w3, b3, wfc, bfc)


def prepare_params(params):
    """One-time weight expansion (hoisted out of the jitted forward)."""
    w1, b1, w2, b2, w3, b3, wfc, bfc = params
    a1 = _banded_taps(w1, W)                                   # (3, 16, 128)
    a1 = jnp.pad(a1, ((0, 0), (0, XL - W), (0, 0))).astype(jnp.bfloat16)  # (3,128,128)
    a2 = _banded_taps(w2, W).astype(jnp.bfloat16)              # (3, 128, 128)
    a3 = _banded_taps(w3, W).astype(jnp.bfloat16)              # (3, 128, 128)
    b1t = jnp.tile(b1, W)[None, :].astype(jnp.float32)         # (1, 128)
    b2t = jnp.tile(b2, W)[None, :].astype(jnp.float32)
    b3t = jnp.tile(b3, W)[None, :].astype(jnp.float32)
    # fc weight tiled over width, mean-pool 1/(H*W) folded in, lane-padded.
    wfc_pad = jnp.zeros((WC, NL), jnp.float32)
    wfc_pad = wfc_pad.at[:, :NCLS].set(jnp.tile(wfc, (W, 1)) / (H * W))
    wfc_pad = wfc_pad.astype(jnp.bfloat16)                     # (128, 128)
    bfc_pad = jnp.zeros((1, NL), jnp.float32).at[0, :NCLS].set(bfc)
    default_row = (jnp.zeros((1, NL), jnp.float32)
                   .at[0, 0].set(100.0).at[0, 1].set(-100.0))
    # Stack-row bookkeeping: conv-output row r belongs to sample r // HP,
    # feature row r % HP, and is real iff r % HP < H.
    r = jnp.arange(M)
    valid_f = ((r % HP) < H).astype(jnp.float32)[:, None]      # (M, 1)
    # Pooling matrix over the full scratch rows (features stored at row r+1).
    q = jnp.arange(ROWS)
    qm = q % HP
    pool = (((q[None, :] // HP) == jnp.arange(BT)[:, None])
            & (qm[None, :] >= 1) & (qm[None, :] <= H)).astype(jnp.bfloat16)  # (BT, ROWS)
    return (valid_f, a1, b1t, a2, b2t, a3, b3t, pool, wfc_pad, bfc_pad,
            default_row)


@jax.jit
def resnet_threshold_forward(x, prep):
    (valid_f, a1, b1t, a2, b2t, a3, b3t, pool, wfc_pad, bfc_pad,
     default_row) = prep
    B = x.shape[0]
    G = -(-B // BT)                      # grid steps
    Bp = G * BT

    # Zero-pad batch to a multiple of BT, rows by 1 top/bottom, lane-pad the
    # width to 128 (contiguous full-lane DMA + unmasked loads in the kernel).
    xp = jnp.pad(x, ((0, Bp - B), (1, 1), (0, XL - W)))        # (Bp, 18, 128) f32
    # Per-sample empty flag on exact f32 (padding adds zeros, sum unchanged;
    # batch-pad samples flag empty and are sliced off below).
    s3 = (jnp.sum(jnp.abs(xp), axis=(1, 2)) < 1e-6).astype(jnp.float32)
    s3 = s3.reshape(G, BT, 1)
    xstack = xp.reshape(G, ROWS, XL).astype(jnp.bfloat16)      # (G, 504, 128)

    grid_spec = pltpu.PrefetchScalarGridSpec(
        num_scalar_prefetch=0,
        grid=(G,),
        in_specs=[
            pl.BlockSpec((None, ROWS, XL), lambda g: (g, 0, 0)),   # xstack
            pl.BlockSpec((None, BT, 1), lambda g: (g, 0, 0)),      # empty flags
            pl.BlockSpec((M, 1), lambda g: (0, 0)),                # valid-row mask
            pl.BlockSpec((3, XL, WC), lambda g: (0, 0, 0)),        # conv1 banded taps
            pl.BlockSpec((1, WC), lambda g: (0, 0)),               # b1
            pl.BlockSpec((3, WC, WC), lambda g: (0, 0, 0)),        # conv2 banded taps
            pl.BlockSpec((1, WC), lambda g: (0, 0)),               # b2
            pl.BlockSpec((3, WC, WC), lambda g: (0, 0, 0)),        # conv3 banded taps
            pl.BlockSpec((1, WC), lambda g: (0, 0)),               # b3
            pl.BlockSpec((BT, ROWS), lambda g: (0, 0)),            # pooling matrix
            pl.BlockSpec((WC, NL), lambda g: (0, 0)),              # fused pool+fc weight
            pl.BlockSpec((1, NL), lambda g: (0, 0)),               # fc bias
            pl.BlockSpec((1, NL), lambda g: (0, 0)),               # default [100,-100,...]
        ],
        out_specs=pl.BlockSpec((None, BT, NL), lambda g: (g, 0, 0)),
        scratch_shapes=[pltpu.VMEM((ROWS, WC), jnp.bfloat16),      # feature stack
                        pltpu.VMEM((M, WC), jnp.bfloat16),         # f1 skip
                        pltpu.VMEM((M, WC), jnp.float32)],         # f32 accumulator
    )
    out = pl.pallas_call(
        _resnet_threshold_kernel,
        out_shape=jax.ShapeDtypeStruct((G, BT, NL), jnp.float32),
        grid_spec=grid_spec,
        compiler_params=pltpu.CompilerParams(
            dimension_semantics=("parallel",)),   # shards over both TCs on v7x
    )(xstack, s3, valid_f, a1, b1t, a2, b2t, a3, b3t, pool, wfc_pad, bfc_pad,
      default_row)

    return out.reshape(Bp, NL)[:B, :NCLS]


def reference_forward(x, params):
    """Pure-JAX reference reproducing the PyTorch module semantics."""
    w1, b1, w2, b2, w3, b3, wfc, bfc = params
    s3_mask = jnp.sum(jnp.abs(x), axis=(1, 2)) < 1e-6
    h = x[:, None, :, :]                               # NCHW, C=1
    hp = lax.Precision.HIGHEST

    def conv(inp, wgt, bias):
        out = lax.conv_general_dilated(
            inp, wgt, (1, 1), 'SAME',
            dimension_numbers=('NCHW', 'HWIO', 'NCHW'), precision=hp)
        return out + bias[None, :, None, None]

    f1 = jax.nn.relu(conv(h, w1, b1))
    f2 = jax.nn.relu(conv(f1, w2, b2))
    f3 = jax.nn.relu(conv(f2, w3, b3) + f1)
    pooled = jnp.mean(f3, axis=(2, 3))                 # (B, C1)
    logits = jnp.dot(pooled, wfc, precision=hp) + bfc  # (B, 2)
    default = jnp.array([100.0, -100.0], jnp.float32)
    return jnp.where(s3_mask[:, None], default[None, :], logits)


if __name__ == "__main__":
    key = jax.random.PRNGKey(0)
    kp, kx = jax.random.split(key)
    params = init_params(kp)
    prep = prepare_params(params)        # one-time weight expansion

    x = jax.random.normal(kx, (2, H, W), jnp.float32)
    x = x.at[1].set(0.0)                 # second sample triggers the threshold branch

    out = resnet_threshold_forward(x, prep)
    out = jax.block_until_ready(out)

    ref = reference_forward(x, params)
    assert out.shape == (2, NCLS)
    assert jnp.allclose(out[1], jnp.array([100.0, -100.0], jnp.float32))
    assert jnp.allclose(out, ref, rtol=2e-2, atol=2e-2), (out, ref)
    print("KERNEL_OK")
</pallas_src>

<mosaic_0001>
module attributes {stable_mosaic.version = 11 : i64} {
  func.func @_resnet_threshold_kernel(%arg0: i32, %arg1: memref<1x504x128xbf16, #tpu.memory_space<vmem>>, %arg2: memref<1x28x1xf32, #tpu.memory_space<vmem>>, %arg3: memref<502x1xf32, #tpu.memory_space<vmem>>, %arg4: memref<3x128x128xbf16, #tpu.memory_space<vmem>>, %arg5: memref<1x128xf32, #tpu.memory_space<vmem>>, %arg6: memref<3x128x128xbf16, #tpu.memory_space<vmem>>, %arg7: memref<1x128xf32, #tpu.memory_space<vmem>>, %arg8: memref<3x128x128xbf16, #tpu.memory_space<vmem>>, %arg9: memref<1x128xf32, #tpu.memory_space<vmem>>, %arg10: memref<28x504xbf16, #tpu.memory_space<vmem>>, %arg11: memref<128x128xbf16, #tpu.memory_space<vmem>>, %arg12: memref<1x128xf32, #tpu.memory_space<vmem>>, %arg13: memref<1x128xf32, #tpu.memory_space<vmem>>, %arg14: memref<1x28x128xf32, #tpu.memory_space<vmem>>, %arg15: memref<504x128xbf16, #tpu.memory_space<vmem>>, %arg16: memref<502x128xbf16, #tpu.memory_space<vmem>>, %arg17: memref<502x128xf32, #tpu.memory_space<vmem>>) attributes {dimension_semantics = [#tpu.dimension_semantics<parallel>], iteration_bounds = array<i64: 1>, scalar_prefetch = 0 : i64, scratch_operands = 3 : i64, tpu.core_type = #tpu.core_type<tc>, window_params = [{transform_indices = @transform_0, window_bounds = array<i64: 1, 504, 128>}, {transform_indices = @transform_1, window_bounds = array<i64: 1, 28, 1>}, {pipeline_mode = #tpu.pipeline_mode<synchronous>, transform_indices = @transform_2, window_bounds = array<i64: 502, 1>}, {pipeline_mode = #tpu.pipeline_mode<synchronous>, transform_indices = @transform_3, window_bounds = array<i64: 3, 128, 128>}, {pipeline_mode = #tpu.pipeline_mode<synchronous>, transform_indices = @transform_4, window_bounds = array<i64: 1, 128>}, {pipeline_mode = #tpu.pipeline_mode<synchronous>, transform_indices = @transform_5, window_bounds = array<i64: 3, 128, 128>}, {pipeline_mode = #tpu.pipeline_mode<synchronous>, transform_indices = @transform_6, window_bounds = array<i64: 1, 128>}, {pipeline_mode = #tpu.pipeline_mode<synchronous>, transform_indices = @transform_7, window_bounds = array<i64: 3, 128, 128>}, {pipeline_mode = #tpu.pipeline_mode<synchronous>, transform_indices = @transform_8, window_bounds = array<i64: 1, 128>}, {pipeline_mode = #tpu.pipeline_mode<synchronous>, transform_indices = @transform_9, window_bounds = array<i64: 28, 504>}, {pipeline_mode = #tpu.pipeline_mode<synchronous>, transform_indices = @transform_10, window_bounds = array<i64: 128, 128>}, {pipeline_mode = #tpu.pipeline_mode<synchronous>, transform_indices = @transform_11, window_bounds = array<i64: 1, 128>}, {pipeline_mode = #tpu.pipeline_mode<synchronous>, transform_indices = @transform_12, window_bounds = array<i64: 1, 128>}, {transform_indices = @transform_13, window_bounds = array<i64: 1, 28, 128>}]} {
    %cst = arith.constant 0.000000e+00 : bf16
    %0 = vector.broadcast %cst : bf16 to vector<1x128xbf16>
    %c0 = arith.constant 0 : index
    %c0_0 = arith.constant 0 : index
    %1 = vector.load %arg15[%c0, %c0_0] : memref<504x128xbf16, #tpu.memory_space<vmem>>, vector<1x128xbf16>
    tpu.vector_store %arg15[%c0, %c0_0], %0 {strides = array<i32>} : memref<504x128xbf16, #tpu.memory_space<vmem>>, vector<1x128xbf16>,
    %c503 = arith.constant 503 : index
    %c0_1 = arith.constant 0 : index
    %2 = vector.load %arg15[%c503, %c0_1] : memref<504x128xbf16, #tpu.memory_space<vmem>>, vector<1x128xbf16>
    tpu.vector_store %arg15[%c503, %c0_1], %0 {strides = array<i32>} : memref<504x128xbf16, #tpu.memory_space<vmem>>, vector<1x128xbf16>,
    %c0_2 = arith.constant 0 : index
    %c0_3 = arith.constant 0 : index
    %c0_4 = arith.constant 0 : index
    %3 = vector.load %arg1[%c0_2, %c0_3, %c0_4] : memref<1x504x128xbf16, #tpu.memory_space<vmem>>, vector<1x502x128xbf16>
    %4 = vector.shape_cast %3 : vector<1x502x128xbf16> to vector<502x128xbf16>
    %c0_5 = arith.constant 0 : index
    %c0_6 = arith.constant 0 : index
    %c0_7 = arith.constant 0 : index
    %5 = vector.load %arg4[%c0_5, %c0_6, %c0_7] : memref<3x128x128xbf16, #tpu.memory_space<vmem>>, vector<1x128x128xbf16>
    %6 = vector.shape_cast %5 : vector<1x128x128xbf16> to vector<128x128xbf16>
    %cst_8 = arith.constant dense<0.000000e+00> : vector<502x128xf32>
    %7 = tpu.matmul %4, %6, %cst_8 {dimension_numbers = #tpu.dot_dimension_numbers<[1], [0], [0], [1], [0, 0, 1, 1], [], []>} : vector<502x128xbf16>, vector<128x128xbf16>, vector<502x128xf32> -> vector<502x128xf32>
    %c0_9 = arith.constant 0 : index
    %c0_10 = arith.constant 0 : index
    %8 = vector.load %arg17[%c0_9, %c0_10] : memref<502x128xf32, #tpu.memory_space<vmem>>, vector<502x128xf32>
    tpu.vector_store %arg17[%c0_9, %c0_10], %7 {strides = array<i32>} : memref<502x128xf32, #tpu.memory_space<vmem>>, vector<502x128xf32>,
    %c0_11 = arith.constant 0 : index
    %c0_12 = arith.constant 0 : index
    %9 = vector.load %arg17[%c0_11, %c0_12] : memref<502x128xf32, #tpu.memory_space<vmem>>, vector<502x128xf32>
    %c0_13 = arith.constant 0 : index
    %c1 = arith.constant 1 : index
    %c0_14 = arith.constant 0 : index
    %10 = vector.load %arg1[%c0_13, %c1, %c0_14] : memref<1x504x128xbf16, #tpu.memory_space<vmem>>, vector<1x502x128xbf16>
    %11 = vector.shape_cast %10 : vector<1x502x128xbf16> to vector<502x128xbf16>
    %c1_15 = arith.constant 1 : index
    %c0_16 = arith.constant 0 : index
    %c0_17 = arith.constant 0 : index
    %12 = vector.load %arg4[%c1_15, %c0_16, %c0_17] : memref<3x128x128xbf16, #tpu.memory_space<vmem>>, vector<1x128x128xbf16>
    %13 = vector.shape_cast %12 : vector<1x128x128xbf16> to vector<128x128xbf16>
    %cst_18 = arith.constant dense<0.000000e+00> : vector<502x128xf32>
    %14 = tpu.matmul %11, %13, %cst_18 {dimension_numbers = #tpu.dot_dimension_numbers<[1], [0], [0], [1], [0, 0, 1, 1], [], []>} : vector<502x128xbf16>, vector<128x128xbf16>, vector<502x128xf32> -> vector<502x128xf32>
    %15 = arith.addf %9, %14 : vector<502x128xf32>
    %c0_19 = arith.constant 0 : index
    %c0_20 = arith.constant 0 : index
    %16 = vector.load %arg17[%c0_19, %c0_20] : memref<502x128xf32, #tpu.memory_space<vmem>>, vector<502x128xf32>
    tpu.vector_store %arg17[%c0_19, %c0_20], %15 {strides = array<i32>} : memref<502x128xf32, #tpu.memory_space<vmem>>, vector<502x128xf32>,
    %c0_21 = arith.constant 0 : index
    %c0_22 = arith.constant 0 : index
    %17 = vector.load %arg17[%c0_21, %c0_22] : memref<502x128xf32, #tpu.memory_space<vmem>>, vector<502x128xf32>
    %c0_23 = arith.constant 0 : index
    %c2 = arith.constant 2 : index
    %c0_24 = arith.constant 0 : index
    %18 = vector.load %arg1[%c0_23, %c2, %c0_24] : memref<1x504x128xbf16, #tpu.memory_space<vmem>>, vector<1x502x128xbf16>
    %19 = vector.shape_cast %18 : vector<1x502x128xbf16> to vector<502x128xbf16>
    %c2_25 = arith.constant 2 : index
    %c0_26 = arith.constant 0 : index
    %c0_27 = arith.constant 0 : index
    %20 = vector.load %arg4[%c2_25, %c0_26, %c0_27] : memref<3x128x128xbf16, #tpu.memory_space<vmem>>, vector<1x128x128xbf16>
    %21 = vector.shape_cast %20 : vector<1x128x128xbf16> to vector<128x128xbf16>
    %cst_28 = arith.constant dense<0.000000e+00> : vector<502x128xf32>
    %22 = tpu.matmul %19, %21, %cst_28 {dimension_numbers = #tpu.dot_dimension_numbers<[1], [0], [0], [1], [0, 0, 1, 1], [], []>} : vector<502x128xbf16>, vector<128x128xbf16>, vector<502x128xf32> -> vector<502x128xf32>
    %23 = arith.addf %17, %22 : vector<502x128xf32>
    %c0_29 = arith.constant 0 : index
    %c0_30 = arith.constant 0 : index
    %24 = vector.load %arg17[%c0_29, %c0_30] : memref<502x128xf32, #tpu.memory_space<vmem>>, vector<502x128xf32>
    tpu.vector_store %arg17[%c0_29, %c0_30], %23 {strides = array<i32>} : memref<502x128xf32, #tpu.memory_space<vmem>>, vector<502x128xf32>,
    %c0_31 = arith.constant 0 : index
    %c0_32 = arith.constant 0 : index
    %25 = vector.load %arg17[%c0_31, %c0_32] : memref<502x128xf32, #tpu.memory_space<vmem>>, vector<502x128xf32>
    %c0_33 = arith.constant 0 : index
    %c0_34 = arith.constant 0 : index
    %26 = vector.load %arg5[%c0_33, %c0_34] : memref<1x128xf32, #tpu.memory_space<vmem>>, vector<1x128xf32>
    %27 = vector.broadcast %26 : vector<1x128xf32> to vector<502x128xf32>
    %28 = arith.addf %25, %27 : vector<502x128xf32>
    %cst_35 = arith.constant 0.000000e+00 : f32
    %29 = vector.broadcast %cst_35 : f32 to vector<502x128xf32>
    %30 = arith.maximumf %28, %29 : vector<502x128xf32>
    %c0_36 = arith.constant 0 : index
    %c0_37 = arith.constant 0 : index
    %31 = vector.load %arg3[%c0_36, %c0_37] : memref<502x1xf32, #tpu.memory_space<vmem>>, vector<502x1xf32>
    %32 = vector.broadcast %31 : vector<502x1xf32> to vector<502x128xf32>
    %33 = arith.mulf %30, %32 : vector<502x128xf32>
    %34 = arith.truncf %33 : vector<502x128xf32> to vector<502x128xbf16>
    %c1_38 = arith.constant 1 : index
    %c0_39 = arith.constant 0 : index
    %35 = vector.load %arg15[%c1_38, %c0_39] : memref<504x128xbf16, #tpu.memory_space<vmem>>, vector<502x128xbf16>
    tpu.vector_store %arg15[%c1_38, %c0_39], %34 {strides = array<i32>} : memref<504x128xbf16, #tpu.memory_space<vmem>>, vector<502x128xbf16>,
    %c0_40 = arith.constant 0 : index
    %c0_41 = arith.constant 0 : index
    %36 = vector.load %arg16[%c0_40, %c0_41] : memref<502x128xbf16, #tpu.memory_space<vmem>>, vector<502x128xbf16>
    tpu.vector_store %arg16[%c0_40, %c0_41], %34 {strides = array<i32>} : memref<502x128xbf16, #tpu.memory_space<vmem>>, vector<502x128xbf16>,
    %c0_42 = arith.constant 0 : index
    %c0_43 = arith.constant 0 : index
    %37 = vector.load %arg15[%c0_42, %c0_43] : memref<504x128xbf16, #tpu.memory_space<vmem>>, vector<502x128xbf16>
    %c0_44 = arith.constant 0 : index
    %c0_45 = arith.constant 0 : index
    %c0_46 = arith.constant 0 : index
    %38 = vector.load %arg6[%c0_44, %c0_45, %c0_46] : memref<3x128x128xbf16, #tpu.memory_space<vmem>>, vector<1x128x128xbf16>
    %39 = vector.shape_cast %38 : vector<1x128x128xbf16> to vector<128x128xbf16>
    %cst_47 = arith.constant dense<0.000000e+00> : vector<502x128xf32>
    %40 = tpu.matmul %37, %39, %cst_47 {dimension_numbers = #tpu.dot_dimension_numbers<[1], [0], [0], [1], [0, 0, 1, 1], [], []>} : vector<502x128xbf16>, vector<128x128xbf16>, vector<502x128xf32> -> vector<502x128xf32>
    %c0_48 = arith.constant 0 : index
    %c0_49 = arith.constant 0 : index
    %41 = vector.load %arg17[%c0_48, %c0_49] : memref<502x128xf32, #tpu.memory_space<vmem>>, vector<502x128xf32>
    tpu.vector_store %arg17[%c0_48, %c0_49], %40 {strides = array<i32>} : memref<502x128xf32, #tpu.memory_space<vmem>>, vector<502x128xf32>,
    %c0_50 = arith.constant 0 : index
    %c0_51 = arith.constant 0 : index
    %42 = vector.load %arg17[%c0_50, %c0_51] : memref<502x128xf32, #tpu.memory_space<vmem>>, vector<502x128xf32>
    %c1_52 = arith.constant 1 : index
    %c0_53 = arith.constant 0 : index
    %43 = vector.load %arg15[%c1_52, %c0_53] : memref<504x128xbf16, #tpu.memory_space<vmem>>, vector<502x128xbf16>
    %c1_54 = arith.constant 1 : index
    %c0_55 = arith.constant 0 : index
    %c0_56 = arith.constant 0 : index
    %44 = vector.load %arg6[%c1_54, %c0_55, %c0_56] : memref<3x128x128xbf16, #tpu.memory_space<vmem>>, vector<1x128x128xbf16>
    %45 = vector.shape_cast %44 : vector<1x128x128xbf16> to vector<128x128xbf16>
    %cst_57 = arith.constant dense<0.000000e+00> : vector<502x128xf32>
    %46 = tpu.matmul %43, %45, %cst_57 {dimension_numbers = #tpu.dot_dimension_numbers<[1], [0], [0], [1], [0, 0, 1, 1], [], []>} : vector<502x128xbf16>, vector<128x128xbf16>, vector<502x128xf32> -> vector<502x128xf32>
    %47 = arith.addf %42, %46 : vector<502x128xf32>
    %c0_58 = arith.constant 0 : index
    %c0_59 = arith.constant 0 : index
    %48 = vector.load %arg17[%c0_58, %c0_59] : memref<502x128xf32, #tpu.memory_space<vmem>>, vector<502x128xf32>
    tpu.vector_store %arg17[%c0_58, %c0_59], %47 {strides = array<i32>} : memref<502x128xf32, #tpu.memory_space<vmem>>, vector<502x128xf32>,
    %c0_60 = arith.constant 0 : index
    %c0_61 = arith.constant 0 : index
    %49 = vector.load %arg17[%c0_60, %c0_61] : memref<502x128xf32, #tpu.memory_space<vmem>>, vector<502x128xf32>
    %c2_62 = arith.constant 2 : index
    %c0_63 = arith.constant 0 : index
    %50 = vector.load %arg15[%c2_62, %c0_63] : memref<504x128xbf16, #tpu.memory_space<vmem>>, vector<502x128xbf16>
    %c2_64 = arith.constant 2 : index
    %c0_65 = arith.constant 0 : index
    %c0_66 = arith.constant 0 : index
    %51 = vector.load %arg6[%c2_64, %c0_65, %c0_66] : memref<3x128x128xbf16, #tpu.memory_space<vmem>>, vector<1x128x128xbf16>
    %52 = vector.shape_cast %51 : vector<1x128x128xbf16> to vector<128x128xbf16>
    %cst_67 = arith.constant dense<0.000000e+00> : vector<502x128xf32>
    %53 = tpu.matmul %50, %52, %cst_67 {dimension_numbers = #tpu.dot_dimension_numbers<[1], [0], [0], [1], [0, 0, 1, 1], [], []>} : vector<502x128xbf16>, vector<128x128xbf16>, vector<502x128xf32> -> vector<502x128xf32>
    %54 = arith.addf %49, %53 : vector<502x128xf32>
    %c0_68 = arith.constant 0 : index
    %c0_69 = arith.constant 0 : index
    %55 = vector.load %arg17[%c0_68, %c0_69] : memref<502x128xf32, #tpu.memory_space<vmem>>, vector<502x128xf32>
    tpu.vector_store %arg17[%c0_68, %c0_69], %54 {strides = array<i32>} : memref<502x128xf32, #tpu.memory_space<vmem>>, vector<502x128xf32>,
    %c0_70 = arith.constant 0 : index
    %c0_71 = arith.constant 0 : index
    %56 = vector.load %arg17[%c0_70, %c0_71] : memref<502x128xf32, #tpu.memory_space<vmem>>, vector<502x128xf32>
    %c0_72 = arith.constant 0 : index
    %c0_73 = arith.constant 0 : index
    %57 = vector.load %arg7[%c0_72, %c0_73] : memref<1x128xf32, #tpu.memory_space<vmem>>, vector<1x128xf32>
    %58 = vector.broadcast %57 : vector<1x128xf32> to vector<502x128xf32>
    %59 = arith.addf %56, %58 : vector<502x128xf32>
    %cst_74 = arith.constant 0.000000e+00 : f32
    %60 = vector.broadcast %cst_74 : f32 to vector<502x128xf32>
    %61 = arith.maximumf %59, %60 : vector<502x128xf32>
    %c0_75 = arith.constant 0 : index
    %c0_76 = arith.constant 0 : index
    %62 = vector.load %arg3[%c0_75, %c0_76] : memref<502x1xf32, #tpu.memory_space<vmem>>, vector<502x1xf32>
    %63 = vector.broadcast %62 : vector<502x1xf32> to vector<502x128xf32>
    %64 = arith.mulf %61, %63 : vector<502x128xf32>
    %65 = arith.truncf %64 : vector<502x128xf32> to vector<502x128xbf16>
    %c1_77 = arith.constant 1 : index
    %c0_78 = arith.constant 0 : index
    %66 = vector.load %arg15[%c1_77, %c0_78] : memref<504x128xbf16, #tpu.memory_space<vmem>>, vector<502x128xbf16>
    tpu.vector_store %arg15[%c1_77, %c0_78], %65 {strides = array<i32>} : memref<504x128xbf16, #tpu.memory_space<vmem>>, vector<502x128xbf16>,
    %c0_79 = arith.constant 0 : index
    %c0_80 = arith.constant 0 : index
    %67 = vector.load %arg15[%c0_79, %c0_80] : memref<504x128xbf16, #tpu.memory_space<vmem>>, vector<502x128xbf16>
    %c0_81 = arith.constant 0 : index
    %c0_82 = arith.constant 0 : index
    %c0_83 = arith.constant 0 : index
    %68 = vector.load %arg8[%c0_81, %c0_82, %c0_83] : memref<3x128x128xbf16, #tpu.memory_space<vmem>>, vector<1x128x128xbf16>
    %69 = vector.shape_cast %68 : vector<1x128x128xbf16> to vector<128x128xbf16>
    %cst_84 = arith.constant dense<0.000000e+00> : vector<502x128xf32>
    %70 = tpu.matmul %67, %69, %cst_84 {dimension_numbers = #tpu.dot_dimension_numbers<[1], [0], [0], [1], [0, 0, 1, 1], [], []>} : vector<502x128xbf16>, vector<128x128xbf16>, vector<502x128xf32> -> vector<502x128xf32>
    %c0_85 = arith.constant 0 : index
    %c0_86 = arith.constant 0 : index
    %71 = vector.load %arg17[%c0_85, %c0_86] : memref<502x128xf32, #tpu.memory_space<vmem>>, vector<502x128xf32>
    tpu.vector_store %arg17[%c0_85, %c0_86], %70 {strides = array<i32>} : memref<502x128xf32, #tpu.memory_space<vmem>>, vector<502x128xf32>,
    %c0_87 = arith.constant 0 : index
    %c0_88 = arith.constant 0 : index
    %72 = vector.load %arg17[%c0_87, %c0_88] : memref<502x128xf32, #tpu.memory_space<vmem>>, vector<502x128xf32>
    %c1_89 = arith.constant 1 : index
    %c0_90 = arith.constant 0 : index
    %73 = vector.load %arg15[%c1_89, %c0_90] : memref<504x128xbf16, #tpu.memory_space<vmem>>, vector<502x128xbf16>
    %c1_91 = arith.constant 1 : index
    %c0_92 = arith.constant 0 : index
    %c0_93 = arith.constant 0 : index
    %74 = vector.load %arg8[%c1_91, %c0_92, %c0_93] : memref<3x128x128xbf16, #tpu.memory_space<vmem>>, vector<1x128x128xbf16>
    %75 = vector.shape_cast %74 : vector<1x128x128xbf16> to vector<128x128xbf16>
    %cst_94 = arith.constant dense<0.000000e+00> : vector<502x128xf32>
    %76 = tpu.matmul %73, %75, %cst_94 {dimension_numbers = #tpu.dot_dimension_numbers<[1], [0], [0], [1], [0, 0, 1, 1], [], []>} : vector<502x128xbf16>, vector<128x128xbf16>, vector<502x128xf32> -> vector<502x128xf32>
    %77 = arith.addf %72, %76 : vector<502x128xf32>
    %c0_95 = arith.constant 0 : index
    %c0_96 = arith.constant 0 : index
    %78 = vector.load %arg17[%c0_95, %c0_96] : memref<502x128xf32, #tpu.memory_space<vmem>>, vector<502x128xf32>
    tpu.vector_store %arg17[%c0_95, %c0_96], %77 {strides = array<i32>} : memref<502x128xf32, #tpu.memory_space<vmem>>, vector<502x128xf32>,
    %c0_97 = arith.constant 0 : index
    %c0_98 = arith.constant 0 : index
    %79 = vector.load %arg17[%c0_97, %c0_98] : memref<502x128xf32, #tpu.memory_space<vmem>>, vector<502x128xf32>
    %c2_99 = arith.constant 2 : index
    %c0_100 = arith.constant 0 : index
    %80 = vector.load %arg15[%c2_99, %c0_100] : memref<504x128xbf16, #tpu.memory_space<vmem>>, vector<502x128xbf16>
    %c2_101 = arith.constant 2 : index
    %c0_102 = arith.constant 0 : index
    %c0_103 = arith.constant 0 : index
    %81 = vector.load %arg8[%c2_101, %c0_102, %c0_103] : memref<3x128x128xbf16, #tpu.memory_space<vmem>>, vector<1x128x128xbf16>
    %82 = vector.shape_cast %81 : vector<1x128x128xbf16> to vector<128x128xbf16>
    %cst_104 = arith.constant dense<0.000000e+00> : vector<502x128xf32>
    %83 = tpu.matmul %80, %82, %cst_104 {dimension_numbers = #tpu.dot_dimension_numbers<[1], [0], [0], [1], [0, 0, 1, 1], [], []>} : vector<502x128xbf16>, vector<128x128xbf16>, vector<502x128xf32> -> vector<502x128xf32>
    %84 = arith.addf %79, %83 : vector<502x128xf32>
    %c0_105 = arith.constant 0 : index
    %c0_106 = arith.constant 0 : index
    %85 = vector.load %arg17[%c0_105, %c0_106] : memref<502x128xf32, #tpu.memory_space<vmem>>, vector<502x128xf32>
    tpu.vector_store %arg17[%c0_105, %c0_106], %84 {strides = array<i32>} : memref<502x128xf32, #tpu.memory_space<vmem>>, vector<502x128xf32>,
    %c0_107 = arith.constant 0 : index
    %c0_108 = arith.constant 0 : index
    %86 = vector.load %arg17[%c0_107, %c0_108] : memref<502x128xf32, #tpu.memory_space<vmem>>, vector<502x128xf32>
    %c0_109 = arith.constant 0 : index
    %c0_110 = arith.constant 0 : index
    %87 = vector.load %arg9[%c0_109, %c0_110] : memref<1x128xf32, #tpu.memory_space<vmem>>, vector<1x128xf32>
    %88 = vector.broadcast %87 : vector<1x128xf32> to vector<502x128xf32>
    %89 = arith.addf %86, %88 : vector<502x128xf32>
    %c0_111 = arith.constant 0 : index
    %c0_112 = arith.constant 0 : index
    %90 = vector.load %arg16[%c0_111, %c0_112] : memref<502x128xbf16, #tpu.memory_space<vmem>>, vector<502x128xbf16>
    %91 = arith.extf %90 : vector<502x128xbf16> to vector<502x128xf32>
    %92 = arith.addf %89, %91 : vector<502x128xf32>
    %cst_113 = arith.constant 0.000000e+00 : f32
    %93 = vector.broadcast %cst_113 : f32 to vector<502x128xf32>
    %94 = arith.maximumf %92, %93 : vector<502x128xf32>
    %95 = arith.truncf %94 : vector<502x128xf32> to vector<502x128xbf16>
    %c1_114 = arith.constant 1 : index
    %c0_115 = arith.constant 0 : index
    %96 = vector.load %arg15[%c1_114, %c0_115] : memref<504x128xbf16, #tpu.memory_space<vmem>>, vector<502x128xbf16>
    tpu.vector_store %arg15[%c1_114, %c0_115], %95 {strides = array<i32>} : memref<504x128xbf16, #tpu.memory_space<vmem>>, vector<502x128xbf16>,
    %c0_116 = arith.constant 0 : index
    %c0_117 = arith.constant 0 : index
    %97 = vector.load %arg10[%c0_116, %c0_117] : memref<28x504xbf16, #tpu.memory_space<vmem>>, vector<28x504xbf16>
    %c0_118 = arith.constant 0 : index
    %c0_119 = arith.constant 0 : index
    %98 = vector.load %arg15[%c0_118, %c0_119] : memref<504x128xbf16, #tpu.memory_space<vmem>>, vector<504x128xbf16>
    %cst_120 = arith.constant dense<0.000000e+00> : vector<28x128xf32>
    %99 = tpu.matmul %97, %98, %cst_120 {dimension_numbers = #tpu.dot_dimension_numbers<[1], [0], [0], [1], [0, 0, 1, 1], [], []>} : vector<28x504xbf16>, vector<504x128xbf16>, vector<28x128xf32> -> vector<28x128xf32>
    %100 = arith.truncf %99 : vector<28x128xf32> to vector<28x128xbf16>
    %c0_121 = arith.constant 0 : index
    %c0_122 = arith.constant 0 : index
    %101 = vector.load %arg11[%c0_121, %c0_122] : memref<128x128xbf16, #tpu.memory_space<vmem>>, vector<128x128xbf16>
    %cst_123 = arith.constant dense<0.000000e+00> : vector<28x128xf32>
    %102 = tpu.matmul %100, %101, %cst_123 {dimension_numbers = #tpu.dot_dimension_numbers<[1], [0], [0], [1], [0, 0, 1, 1], [], []>} : vector<28x128xbf16>, vector<128x128xbf16>, vector<28x128xf32> -> vector<28x128xf32>
    %c0_124 = arith.constant 0 : index
    %c0_125 = arith.constant 0 : index
    %103 = vector.load %arg12[%c0_124, %c0_125] : memref<1x128xf32, #tpu.memory_space<vmem>>, vector<1x128xf32>
    %104 = vector.broadcast %103 : vector<1x128xf32> to vector<28x128xf32>
    %105 = arith.addf %102, %104 : vector<28x128xf32>
    %c0_126 = arith.constant 0 : index
    %c0_127 = arith.constant 0 : index
    %c0_128 = arith.constant 0 : index
    %106 = vector.load %arg2[%c0_126, %c0_127, %c0_128] : memref<1x28x1xf32, #tpu.memory_space<vmem>>, vector<1x28x1xf32>
    %107 = vector.shape_cast %106 : vector<1x28x1xf32> to vector<28x1xf32>
    %cst_129 = arith.constant 5.000000e-01 : f32
    %108 = vector.broadcast %cst_129 : f32 to vector<28x1xf32>
    %109 = arith.cmpf ogt, %107, %108 : vector<28x1xf32>
    %110 = vector.shape_cast %109 : vector<28x1xi1> to vector<28x1xi1>
    %111 = vector.broadcast %110 : vector<28x1xi1> to vector<28x128xi1>
    %c0_130 = arith.constant 0 : index
    %c0_131 = arith.constant 0 : index
    %112 = vector.load %arg13[%c0_130, %c0_131] : memref<1x128xf32, #tpu.memory_space<vmem>>, vector<1x128xf32>
    %113 = vector.shape_cast %112 : vector<1x128xf32> to vector<1x128xf32>
    %114 = vector.broadcast %113 : vector<1x128xf32> to vector<28x128xf32>
    %115 = arith.select %111, %114, %105 : vector<28x128xi1>, vector<28x128xf32>
    %c0_132 = arith.constant 0 : index
    %c0_133 = arith.constant 0 : index
    %c0_134 = arith.constant 0 : index
    %116 = vector.load %arg14[%c0_132, %c0_133, %c0_134] : memref<1x28x128xf32, #tpu.memory_space<vmem>>, vector<1x28x128xf32>
    %117 = vector.shape_cast %116 : vector<1x28x128xf32> to vector<28x128xf32>
    %118 = vector.shape_cast %115 : vector<28x128xf32> to vector<1x28x128xf32>
    tpu.vector_store %arg14[%c0_132, %c0_133, %c0_134], %118 {strides = array<i32>} : memref<1x28x128xf32, #tpu.memory_space<vmem>>, vector<1x28x128xf32>,
    return
  }
  func.func @transform_0(%arg0: i32) -> (i32, i32, i32) {
    %c0_i32 = arith.constant 0 : i32
    %c0_i32_0 = arith.constant 0 : i32
    %c0_i32_1 = arith.constant 0 : i32
    return %arg0, %c0_i32, %c0_i32_0 : i32, i32, i32
  }
  func.func @transform_1(%arg0: i32) -> (i32, i32, i32) {
    %c0_i32 = arith.constant 0 : i32
    %c0_i32_0 = arith.constant 0 : i32
    %c0_i32_1 = arith.constant 0 : i32
    return %arg0, %c0_i32, %c0_i32_0 : i32, i32, i32
  }
  func.func @transform_2(%arg0: i32) -> (i32, i32) {
    %c0_i32 = arith.constant 0 : i32
    %c0_i32_0 = arith.constant 0 : i32
    %c0_i32_1 = arith.constant 0 : i32
    return %c0_i32, %c0_i32_0 : i32, i32
  }
  func.func @transform_3(%arg0: i32) -> (i32, i32, i32) {
    %c0_i32 = arith.constant 0 : i32
    %c0_i32_0 = arith.constant 0 : i32
    %c0_i32_1 = arith.constant 0 : i32
    %c0_i32_2 = arith.constant 0 : i32
    return %c0_i32, %c0_i32_0, %c0_i32_1 : i32, i32, i32
  }
  func.func @transform_4(%arg0: i32) -> (i32, i32) {
    %c0_i32 = arith.constant 0 : i32
    %c0_i32_0 = arith.constant 0 : i32
    %c0_i32_1 = arith.constant 0 : i32
    return %c0_i32, %c0_i32_0 : i32, i32
  }
  func.func @transform_5(%arg0: i32) -> (i32, i32, i32) {
    %c0_i32 = arith.constant 0 : i32
    %c0_i32_0 = arith.constant 0 : i32
    %c0_i32_1 = arith.constant 0 : i32
    %c0_i32_2 = arith.constant 0 : i32
    return %c0_i32, %c0_i32_0, %c0_i32_1 : i32, i32, i32
  }
  func.func @transform_6(%arg0: i32) -> (i32, i32) {
    %c0_i32 = arith.constant 0 : i32
    %c0_i32_0 = arith.constant 0 : i32
    %c0_i32_1 = arith.constant 0 : i32
    return %c0_i32, %c0_i32_0 : i32, i32
  }
  func.func @transform_7(%arg0: i32) -> (i32, i32, i32) {
    %c0_i32 = arith.constant 0 : i32
    %c0_i32_0 = arith.constant 0 : i32
    %c0_i32_1 = arith.constant 0 : i32
    %c0_i32_2 = arith.constant 0 : i32
    return %c0_i32, %c0_i32_0, %c0_i32_1 : i32, i32, i32
  }
  func.func @transform_8(%arg0: i32) -> (i32, i32) {
    %c0_i32 = arith.constant 0 : i32
    %c0_i32_0 = arith.constant 0 : i32
    %c0_i32_1 = arith.constant 0 : i32
    return %c0_i32, %c0_i32_0 : i32, i32
  }
  func.func @transform_9(%arg0: i32) -> (i32, i32) {
    %c0_i32 = arith.constant 0 : i32
    %c0_i32_0 = arith.constant 0 : i32
    %c0_i32_1 = arith.constant 0 : i32
    return %c0_i32, %c0_i32_0 : i32, i32
  }
  func.func @transform_10(%arg0: i32) -> (i32, i32) {
    %c0_i32 = arith.constant 0 : i32
    %c0_i32_0 = arith.constant 0 : i32
    %c0_i32_1 = arith.constant 0 : i32
    return %c0_i32, %c0_i32_0 : i32, i32
  }
  func.func @transform_11(%arg0: i32) -> (i32, i32) {
    %c0_i32 = arith.constant 0 : i32
    %c0_i32_0 = arith.constant 0 : i32
    %c0_i32_1 = arith.constant 0 : i32
    return %c0_i32, %c0_i32_0 : i32, i32
  }
  func.func @transform_12(%arg0: i32) -> (i32, i32) {
    %c0_i32 = arith.constant 0 : i32
    %c0_i32_0 = arith.constant 0 : i32
    %c0_i32_1 = arith.constant 0 : i32
    return %c0_i32, %c0_i32_0 : i32, i32
  }
  func.func @transform_13(%arg0: i32) -> (i32, i32, i32) {
    %c0_i32 = arith.constant 0 : i32
    %c0_i32_0 = arith.constant 0 : i32
    %c0_i32_1 = arith.constant 0 : i32
    return %arg0, %c0_i32, %c0_i32_0 : i32, i32, i32
  }
}

</mosaic_0001>

<llo_original>
// kernel: resnet_threshold_forward.1
$region0: #{resnet_threshold_forward.1}
  #allocation0 [shape = 'u32[]', space=smem, size = 0x4, offset = 0x4, fixed_abs, tag = 'smem constant byte address 0x4 - core index']
  #allocation1 [shape = 'u32[144,128]{1,0:T(1,128)}', space=vmem, size = 0x12000, scoped, tag = 'internal scratch']
  #allocation2 [shape = 'bf16[504,128]{1,0:T(8,128)(2,1)}', space=vmem, size = 0x1f800, scoped, tag = 'scratch operand']
  #allocation3 [shape = 'bf16[502,128]{1,0:T(8,128)(2,1)}', space=vmem, size = 0x1f800, scoped, tag = 'scratch operand']
  #allocation4 [shape = 'f32[502,128]{1,0:T(8,128)}', space=vmem, size = 0x3f000, scoped, tag = 'scratch operand']
  %s0 = inlined_call_operand.vmem [shape: bf16[1,504,128], index: 0, kind: input, shape index: {}]
  %s1 = inlined_call_operand.vmem [shape: f32[1,28,1], index: 1, kind: input, shape index: {}]
  %s2 = inlined_call_operand.vmem [shape: f32[502,1], index: 2, kind: input, shape index: {}]
  %s3 = inlined_call_operand.vmem [shape: bf16[3,128,128], index: 3, kind: input, shape index: {}]
  %s4 = inlined_call_operand.vmem [shape: f32[1,128], index: 4, kind: input, shape index: {}]
  %s5 = inlined_call_operand.vmem [shape: bf16[3,128,128], index: 5, kind: input, shape index: {}]
  %s6 = inlined_call_operand.vmem [shape: f32[1,128], index: 6, kind: input, shape index: {}]
  %s7 = inlined_call_operand.vmem [shape: bf16[3,128,128], index: 7, kind: input, shape index: {}]
  %s8 = inlined_call_operand.vmem [shape: f32[1,128], index: 8, kind: input, shape index: {}]
  %s9 = inlined_call_operand.vmem [shape: bf16[28,504], index: 9, kind: input, shape index: {}]
  %s10 = inlined_call_operand.vmem [shape: bf16[128,128], index: 10, kind: input, shape index: {}]
  %s11 = inlined_call_operand.vmem [shape: f32[1,128], index: 11, kind: input, shape index: {}]
  %s12 = inlined_call_operand.vmem [shape: f32[1,128], index: 12, kind: input, shape index: {}]
  %s13 = inlined_call_operand.vmem [shape: f32[1,28,128], index: 13, kind: output, shape index: {}]
  %s14 = sld [smem:[#allocation0]]
  $region62: #{resnet_threshold_forward.1} parent=0
    _
  %s16 = ssub.s32 1, %s14
  %s17 = scalar_select 0, %s16, %s14
  // Predicated region
  $region2: #{resnet_threshold_forward.1} parent=0 // pred_check
    _
  $region3: #{resnet_threshold_forward.1} parent=0 // pred_check_branch
    %19 = sbr.rel (0) target = $region5
  $region4: #{resnet_threshold_forward.1} parent=0 // pred_region
    _
  $region5: #{resnet_threshold_forward.1} parent=0 // pred_fallthru
    _
  // Predicated region
  $region6: #{resnet_threshold_forward.1} parent=0 // pred_check
    _
  $region7: #{resnet_threshold_forward.1} parent=0 // pred_check_branch
    %21 = sbr.rel (0) target = $region9
  $region8: #{resnet_threshold_forward.1} parent=0 // pred_region
    _
  $region9: #{resnet_threshold_forward.1} parent=0 // pred_fallthru
    _
  // Predicated region
  $region10: #{resnet_threshold_forward.1} parent=0 // pred_check
    _
  $region11: #{resnet_threshold_forward.1} parent=0 // pred_check_branch
    %23 = sbr.rel (0) target = $region13
  $region12: #{resnet_threshold_forward.1} parent=0 // pred_region
    _
  $region13: #{resnet_threshold_forward.1} parent=0 // pred_fallthru
    _
  // Predicated region
  $region14: #{resnet_threshold_forward.1} parent=0 // pred_check
    _
  $region15: #{resnet_threshold_forward.1} parent=0 // pred_check_branch
    %25 = sbr.rel (0) target = $region17
  $region16: #{resnet_threshold_forward.1} parent=0 // pred_region
    _
  $region17: #{resnet_threshold_forward.1} parent=0 // pred_fallthru
    _
  // Predicated region
  $region18: #{resnet_threshold_forward.1} parent=0 // pred_check
    _
  $region19: #{resnet_threshold_forward.1} parent=0 // pred_check_branch
    %27 = sbr.rel (0) target = $region21
  $region20: #{resnet_threshold_forward.1} parent=0 // pred_region
    _
  $region21: #{resnet_threshold_forward.1} parent=0 // pred_fallthru
    _
  // Predicated region
  $region22: #{resnet_threshold_forward.1} parent=0 // pred_check
    _
  $region23: #{resnet_threshold_forward.1} parent=0 // pred_check_branch
    %29 = sbr.rel (0) target = $region25
  $region24: #{resnet_threshold_forward.1} parent=0 // pred_region
    _
  $region25: #{resnet_threshold_forward.1} parent=0 // pred_fallthru
    _
  // Predicated region
  $region26: #{resnet_threshold_forward.1} parent=0 // pred_check
    _
  $region27: #{resnet_threshold_forward.1} parent=0 // pred_check_branch
    %31 = sbr.rel (0) target = $region29
  $region28: #{resnet_threshold_forward.1} parent=0 // pred_region
    _
  $region29: #{resnet_threshold_forward.1} parent=0 // pred_fallthru
    _
  // Predicated region
  $region30: #{resnet_threshold_forward.1} parent=0 // pred_check
    _
  $region31: #{resnet_threshold_forward.1} parent=0 // pred_check_branch
    %33 = sbr.rel (0) target = $region33
  $region32: #{resnet_threshold_forward.1} parent=0 // pred_region
    _
  $region33: #{resnet_threshold_forward.1} parent=0 // pred_fallthru
    _
  // Predicated region
  $region34: #{resnet_threshold_forward.1} parent=0 // pred_check
    _
  $region35: #{resnet_threshold_forward.1} parent=0 // pred_check_branch
    %35 = sbr.rel (0) target = $region37
  $region36: #{resnet_threshold_forward.1} parent=0 // pred_region
    _
  $region37: #{resnet_threshold_forward.1} parent=0 // pred_fallthru
    _
  // Predicated region
  $region38: #{resnet_threshold_forward.1} parent=0 // pred_check
    _
  $region39: #{resnet_threshold_forward.1} parent=0 // pred_check_branch
    %37 = sbr.rel (0) target = $region41
  $region40: #{resnet_threshold_forward.1} parent=0 // pred_region
    _
  $region41: #{resnet_threshold_forward.1} parent=0 // pred_fallthru
    _
  // Predicated region
  $region42: #{resnet_threshold_forward.1} parent=0 // pred_check
    _
  $region43: #{resnet_threshold_forward.1} parent=0 // pred_check_branch
    %39 = sbr.rel (0) target = $region45
  $region44: #{resnet_threshold_forward.1} parent=0 // pred_region
    _
  $region45: #{resnet_threshold_forward.1} parent=0 // pred_fallthru
    _
  // Predicated region
  $region46: #{resnet_threshold_forward.1} parent=0 // pred_check
    _
  $region47: #{resnet_threshold_forward.1} parent=0 // pred_check_branch
    %41 = sbr.rel (0) target = $region49
  $region48: #{resnet_threshold_forward.1} parent=0 // pred_region
    _
  $region49: #{resnet_threshold_forward.1} parent=0 // pred_fallthru
    _
  // Predicated region
  $region50: #{resnet_threshold_forward.1} parent=0 // pred_check
    _
  $region51: #{resnet_threshold_forward.1} parent=0 // pred_check_branch
    %43 = sbr.rel (0) target = $region53
  $region52: #{resnet_threshold_forward.1} parent=0 // pred_region
    _
  $region53: #{resnet_threshold_forward.1} parent=0 // pred_fallthru
    _
  %vm45 = vcmask 1040384
  %vm46 = vsmask.f32 256
  %vm47 = vmand %vm45, %vm46
  %v48 = vld [vmem:[#allocation2] sm:$0x1]
  %v49 = vsel %vm47, 0, %v48
  %50 = vst [vmem:[#allocation2] sm:$0x1] %v49
  %vm51 = vcmask 1043459
  %vm52 = vsmask.f32 7950
  %vm53 = vmand %vm51, %vm52
  %v54 = vld [vmem:[#allocation2 + $0xf8] sm:$0x8]
  %v55 = vsel %vm53, 0, %v54
  %56 = vst [vmem:[#allocation2 + $0xf8] sm:$0x8] %v55
  %v57 = vld [vmem:[%s0] sm:$0xf]
  %v58 = vld [vmem:[%s0 + $0x4] sm:$0xf]
  %v59 = vld [vmem:[%s0 + $0x8] sm:$0xf]
  %v60 = vld [vmem:[%s0 + $0xc] sm:$0xf]
  %v61 = vld [vmem:[%s0 + $0x10] sm:$0xf]
  %v62 = vld [vmem:[%s0 + $0x14] sm:$0xf]
  %v63 = vld [vmem:[%s0 + $0x18] sm:$0xf]
  %v64 = vld [vmem:[%s0 + $0x1c] sm:$0xf]
  %v65 = vld [vmem:[%s0 + $0x20] sm:$0xf]
  %v66 = vld [vmem:[%s0 + $0x24] sm:$0xf]
  %v67 = vld [vmem:[%s0 + $0x28] sm:$0xf]
  %v68 = vld [vmem:[%s0 + $0x2c] sm:$0xf]
  %v69 = vld [vmem:[%s0 + $0x30] sm:$0xf]
  %v70 = vld [vmem:[%s0 + $0x34] sm:$0xf]
  %v71 = vld [vmem:[%s0 + $0x38] sm:$0xf]
  %v72 = vld [vmem:[%s0 + $0x3c] sm:$0xf]
  %v73 = vld [vmem:[%s0 + $0x40] sm:$0xf]
  %v74 = vld [vmem:[%s0 + $0x44] sm:$0xf]
  %v75 = vld [vmem:[%s0 + $0x48] sm:$0xf]
  %v76 = vld [vmem:[%s0 + $0x4c] sm:$0xf]
  %v77 = vld [vmem:[%s0 + $0x50] sm:$0xf]
  %v78 = vld [vmem:[%s0 + $0x54] sm:$0xf]
  %v79 = vld [vmem:[%s0 + $0x58] sm:$0xf]
  %v80 = vld [vmem:[%s0 + $0x5c] sm:$0xf]
  %v81 = vld [vmem:[%s0 + $0x60] sm:$0xf]
  %v82 = vld [vmem:[%s0 + $0x64] sm:$0xf]
  %v83 = vld [vmem:[%s0 + $0x68] sm:$0xf]
  %v84 = vld [vmem:[%s0 + $0x6c] sm:$0xf]
  %v85 = vld [vmem:[%s0 + $0x70] sm:$0xf]
  %v86 = vld [vmem:[%s0 + $0x74] sm:$0xf]
  %v87 = vld [vmem:[%s0 + $0x78] sm:$0xf]
  %v88 = vld [vmem:[%s0 + $0x7c] sm:$0xf]
  %v89 = vld [vmem:[%s0 + $0x80] sm:$0xf]
  %v90 = vld [vmem:[%s0 + $0x84] sm:$0xf]
  %v91 = vld [vmem:[%s0 + $0x88] sm:$0xf]
  %v92 = vld [vmem:[%s0 + $0x8c] sm:$0xf]
  %v93 = vld [vmem:[%s0 + $0x90] sm:$0xf]
  %v94 = vld [vmem:[%s0 + $0x94] sm:$0xf]
  %v95 = vld [vmem:[%s0 + $0x98] sm:$0xf]
  %v96 = vld [vmem:[%s0 + $0x9c] sm:$0xf]
  %v97 = vld [vmem:[%s0 + $0xa0] sm:$0xf]
  %v98 = vld [vmem:[%s0 + $0xa4] sm:$0xf]
  %v99 = vld [vmem:[%s0 + $0xa8] sm:$0xf]
  %v100 = vld [vmem:[%s0 + $0xac] sm:$0xf]
  %v101 = vld [vmem:[%s0 + $0xb0] sm:$0xf]
  %v102 = vld [vmem:[%s0 + $0xb4] sm:$0xf]
  %v103 = vld [vmem:[%s0 + $0xb8] sm:$0xf]
  %v104 = vld [vmem:[%s0 + $0xbc] sm:$0xf]
  %v105 = vld [vmem:[%s0 + $0xc0] sm:$0xf]
  %v106 = vld [vmem:[%s0 + $0xc4] sm:$0xf]
  %v107 = vld [vmem:[%s0 + $0xc8] sm:$0xf]
  %v108 = vld [vmem:[%s0 + $0xcc] sm:$0xf]
  %v109 = vld [vmem:[%s0 + $0xd0] sm:$0xf]
  %v110 = vld [vmem:[%s0 + $0xd4] sm:$0xf]
  %v111 = vld [vmem:[%s0 + $0xd8] sm:$0xf]
  %v112 = vld [vmem:[%s0 + $0xdc] sm:$0xf]
  %v113 = vld [vmem:[%s0 + $0xe0] sm:$0xf]
  %v114 = vld [vmem:[%s0 + $0xe4] sm:$0xf]
  %v115 = vld [vmem:[%s0 + $0xe8] sm:$0xf]
  %v116 = vld [vmem:[%s0 + $0xec] sm:$0xf]
  %v117 = vld [vmem:[%s0 + $0xf0] sm:$0xf]
  %v118 = vld [vmem:[%s0 + $0xf4] sm:$0xf]
  %v119 = vld [vmem:[%s0 + $0xf8] sm:$0x7]
  %v120 = vld [vmem:[%s3] sm:$0xf]
  %v121 = vld [vmem:[%s3 + $0x4] sm:$0xf]
  %v122 = vld [vmem:[%s3 + $0x8] sm:$0xf]
  %v123 = vld [vmem:[%s3 + $0xc] sm:$0xf]
  %v124 = vld [vmem:[%s3 + $0x10] sm:$0xf]
  %v125 = vld [vmem:[%s3 + $0x14] sm:$0xf]
  %v126 = vld [vmem:[%s3 + $0x18] sm:$0xf]
  %v127 = vld [vmem:[%s3 + $0x1c] sm:$0xf]
  %v128 = vld [vmem:[%s3 + $0x20] sm:$0xf]
  %v129 = vld [vmem:[%s3 + $0x24] sm:$0xf]
  %v130 = vld [vmem:[%s3 + $0x28] sm:$0xf]
  %v131 = vld [vmem:[%s3 + $0x2c] sm:$0xf]
  %v132 = vld [vmem:[%s3 + $0x30] sm:$0xf]
  %v133 = vld [vmem:[%s3 + $0x34] sm:$0xf]
  %v134 = vld [vmem:[%s3 + $0x38] sm:$0xf]
  %v135 = vld [vmem:[%s3 + $0x3c] sm:$0xf]
  %v199 = vunpack.c.l.b16 %v57
  %v200 = vunpack.c.l.b16 %v58
  %v201 = vunpack.c.l.b16 %v59
  %v202 = vunpack.c.l.b16 %v60
  %v203 = vunpack.c.l.b16 %v61
  %v204 = vunpack.c.l.b16 %v62
  %v205 = vunpack.c.l.b16 %v63
  %v206 = vunpack.c.l.b16 %v64
  %v207 = vunpack.c.l.b16 %v65
  %v208 = vunpack.c.l.b16 %v66
  %v209 = vunpack.c.l.b16 %v67
  %v210 = vunpack.c.l.b16 %v68
  %v211 = vunpack.c.l.b16 %v69
  %v212 = vunpack.c.l.b16 %v70
  %v213 = vunpack.c.l.b16 %v71
  %v214 = vunpack.c.l.b16 %v72
  %v215 = vunpack.c.l.b16 %v73
  %v216 = vunpack.c.l.b16 %v74
  %v217 = vunpack.c.l.b16 %v75
  %v218 = vunpack.c.l.b16 %v76
  %v219 = vunpack.c.l.b16 %v77
  %v220 = vunpack.c.l.b16 %v78
  %v221 = vunpack.c.l.b16 %v79
  %v222 = vunpack.c.l.b16 %v80
  %v223 = vunpack.c.l.b16 %v81
  %v224 = vunpack.c.l.b16 %v82
  %v225 = vunpack.c.l.b16 %v83
  %v226 = vunpack.c.l.b16 %v84
  %v227 = vunpack.c.l.b16 %v85
  %v228 = vunpack.c.l.b16 %v86
  %v229 = vunpack.c.l.b16 %v87
  %v230 = vunpack.c.l.b16 %v88
  %v231 = vunpack.c.l.b16 %v89
  %v232 = vunpack.c.l.b16 %v90
  %v233 = vunpack.c.l.b16 %v91
  %v234 = vunpack.c.l.b16 %v92
  %v235 = vunpack.c.l.b16 %v93
  %v236 = vunpack.c.l.b16 %v94
  %v237 = vunpack.c.l.b16 %v95
  %v238 = vunpack.c.l.b16 %v96
  %v239 = vunpack.c.l.b16 %v97
  %v240 = vunpack.c.l.b16 %v98
  %v241 = vunpack.c.l.b16 %v99
  %v242 = vunpack.c.l.b16 %v100
  %v243 = vunpack.c.l.b16 %v101
  %v244 = vunpack.c.l.b16 %v102
  %v245 = vunpack.c.l.b16 %v103
  %v246 = vunpack.c.l.b16 %v104
  %v247 = vunpack.c.l.b16 %v105
  %v248 = vunpack.c.l.b16 %v106
  %v249 = vunpack.c.l.b16 %v107
  %v250 = vunpack.c.l.b16 %v108
  %v251 = vunpack.c.l.b16 %v109
  %v252 = vunpack.c.l.b16 %v110
  %v253 = vunpack.c.l.b16 %v111
  %v254 = vunpack.c.l.b16 %v112
  %v255 = vunpack.c.l.b16 %v113
  %v256 = vunpack.c.l.b16 %v114
  %v257 = vunpack.c.l.b16 %v115
  %v258 = vunpack.c.l.b16 %v116
  %v259 = vunpack.c.l.b16 %v117
  %v260 = vunpack.c.l.b16 %v118
  %v261 = vunpack.c.l.b16 %v119
  %v262 = vpack.c.b16 %v200, %v199
  %v263 = vpack.c.b16 %v202, %v201
  %v264 = vpack.c.b16 %v204, %v203
  %v265 = vpack.c.b16 %v206, %v205
  %v266 = vpack.c.b16 %v208, %v207
  %v267 = vpack.c.b16 %v210, %v209
  %v268 = vpack.c.b16 %v212, %v211
  %v269 = vpack.c.b16 %v214, %v213
  %v270 = vpack.c.b16 %v216, %v215
  %v271 = vpack.c.b16 %v218, %v217
  %v272 = vpack.c.b16 %v220, %v219
  %v273 = vpack.c.b16 %v222, %v221
  %v274 = vpack.c.b16 %v224, %v223
  %v275 = vpack.c.b16 %v226, %v225
  %v276 = vpack.c.b16 %v228, %v227
  %v277 = vpack.c.b16 %v230, %v229
  %v278 = vpack.c.b16 %v232, %v231
  %v279 = vpack.c.b16 %v234, %v233
  %v280 = vpack.c.b16 %v236, %v235
  %v281 = vpack.c.b16 %v238, %v237
  %v282 = vpack.c.b16 %v240, %v239
  %v283 = vpack.c.b16 %v242, %v241
  %v284 = vpack.c.b16 %v244, %v243
  %v285 = vpack.c.b16 %v246, %v245
  %v286 = vpack.c.b16 %v248, %v247
  %v287 = vpack.c.b16 %v250, %v249
  %v288 = vpack.c.b16 %v252, %v251
  %v289 = vpack.c.b16 %v254, %v253
  %v290 = vpack.c.b16 %v256, %v255
  %v291 = vpack.c.b16 %v258, %v257
  %v292 = vpack.c.b16 %v260, %v259
  %v293 = vpack.c.b16 %v261, %v261
  %v342 = vunpack.c.l.b16 %v120
  %v343 = vunpack.c.l.b16 %v121
  %v344 = vunpack.c.l.b16 %v122
  %v345 = vunpack.c.l.b16 %v123
  %v346 = vunpack.c.l.b16 %v124
  %v347 = vunpack.c.l.b16 %v125
  %v348 = vunpack.c.l.b16 %v126
  %v349 = vunpack.c.l.b16 %v127
  %v350 = vunpack.c.l.b16 %v128
  %v351 = vunpack.c.l.b16 %v129
  %v352 = vunpack.c.l.b16 %v130
  %v353 = vunpack.c.l.b16 %v131
  %v354 = vunpack.c.l.b16 %v132
  %v355 = vunpack.c.l.b16 %v133
  %v356 = vunpack.c.l.b16 %v134
  %v357 = vunpack.c.l.b16 %v135
  %v358 = vpack.c.b16 %v343, %v342
  %v359 = vpack.c.b16 %v345, %v344
  %v360 = vpack.c.b16 %v347, %v346
  %v361 = vpack.c.b16 %v349, %v348
  %v362 = vpack.c.b16 %v351, %v350
  %v363 = vpack.c.b16 %v353, %v352
  %v364 = vpack.c.b16 %v355, %v354
  %v365 = vpack.c.b16 %v357, %v356
  %374 = vmatprep.subr.bf16.mxu0 0
  %375 = vmatpush1.bf16.msra.mxu0 %v358
  %376 = vmatprep.subr.bf16.mxu0 0
  %377 = vmatpush1.bf16.msra.mxu0 %v359
  %378 = vmatprep.subr.bf16.mxu0 0
  %379 = vmatpush1.bf16.msra.mxu0 %v360
  %380 = vmatprep.subr.bf16.mxu0 0
  %381 = vmatpush1.bf16.msra.mxu0 %v361
  %382 = vmatprep.subr.bf16.mxu0 0
  %383 = vmatpush1.bf16.msra.mxu0 %v362
  %384 = vmatprep.subr.bf16.mxu0 0
  %385 = vmatpush1.bf16.msra.mxu0 %v363
  %386 = vmatprep.subr.bf16.mxu0 0
  %387 = vmatpush1.bf16.msra.mxu0 %v364
  %388 = vmatprep.subr.bf16.mxu0 0
  %389 = vmatpush1.bf16.msra.mxu0 %v365
  %390 = vmatprep.subr.bf16.mxu0 0
  %391 = vmatpush1.bf16.msra.mxu0 0
  %392 = vmatprep.subr.bf16.mxu0 0
  %393 = vmatpush1.bf16.msra.mxu0 0
  %394 = vmatprep.subr.bf16.mxu0 0
  %395 = vmatpush1.bf16.msra.mxu0 0
  %396 = vmatprep.subr.bf16.mxu0 0
  %397 = vmatpush1.bf16.msra.mxu0 0
  %398 = vmatprep.subr.bf16.mxu0 0
  %399 = vmatpush1.bf16.msra.mxu0 0
  %400 = vmatprep.subr.bf16.mxu0 0
  %401 = vmatpush1.bf16.msra.mxu0 0
  %402 = vmatprep.subr.bf16.mxu0 0
  %403 = vmatpush1.bf16.msra.mxu0 0
  %404 = vmatprep.subr.bf16.mxu0 0
  %405 = vmatpush1.bf16.msra.mxu0 0
  %406 = vmatprep.mubr.bf16.mxu0 0
  %407 = vmatmul.mubr.bf16.gmra.mrb[0].mxu0 %v262
  %v408 = vpop.f32.mrb[0].mxu0
  %v409 = vadd.f32 0.0, %v408
  %v410 = vpop.f32.mrb[0].mxu0
  %v411 = vpop.f32.mrb[0].mxu0
  %v412 = vadd.f32 0.0, %v411
  %v413 = vpop.f32.mrb[0].mxu0
  %414 = vmatprep.mubr.bf16.mxu0 0
  %415 = vmatmul.mubr.bf16.gmra.mrb[0].mxu0 %v263
  %v416 = vpop.f32.mrb[0].mxu0
  %v417 = vadd.f32 0.0, %v416
  %v418 = vpop.f32.mrb[0].mxu0
  %v419 = vpop.f32.mrb[0].mxu0
  %v420 = vadd.f32 0.0, %v419
  %v421 = vpop.f32.mrb[0].mxu0
  %422 = vmatprep.mubr.bf16.mxu0 0
  %423 = vmatmul.mubr.bf16.gmra.mrb[0].mxu0 %v264
  %v424 = vpop.f32.mrb[0].mxu0
  %v425 = vadd.f32 0.0, %v424
  %v426 = vpop.f32.mrb[0].mxu0
  %v427 = vpop.f32.mrb[0].mxu0
  %v428 = vadd.f32 0.0, %v427
  %v429 = vpop.f32.mrb[0].mxu0
  %430 = vmatprep.mubr.bf16.mxu0 0
  %431 = vmatmul.mubr.bf16.gmra.mrb[0].mxu0 %v265
  %v432 = vpop.f32.mrb[0].mxu0
  %v433 = vadd.f32 0.0, %v432
  %v434 = vpop.f32.mrb[0].mxu0
  %v435 = vpop.f32.mrb[0].mxu0
  %v436 = vadd.f32 0.0, %v435
  %v437 = vpop.f32.mrb[0].mxu0
  %438 = vmatprep.mubr.bf16.mxu0 0
  %439 = vmatmul.mubr.bf16.gmra.mrb[0].mxu0 %v266
  %v440 = vpop.f32.mrb[0].mxu0
  %v441 = vadd.f32 0.0, %v440
  %v442 = vpop.f32.mrb[0].mxu0
  %v443 = vpop.f32.mrb[0].mxu0
  %v444 = vadd.f32 0.0, %v443
  %v445 = vpop.f32.mrb[0].mxu0
  %446 = vmatprep.mubr.bf16.mxu0 0
  %447 = vmatmul.mubr.bf16.gmra.mrb[0].mxu0 %v267
  %v448 = vpop.f32.mrb[0].mxu0
  %v449 = vadd.f32 0.0, %v448
  %v450 = vpop.f32.mrb[0].mxu0
  %v451 = vpop.f32.mrb[0].mxu0
  %v452 = vadd.f32 0.0, %v451
  %v453 = vpop.f32.mrb[0].mxu0
  %454 = vmatprep.mubr.bf16.mxu0 0
  %455 = vmatmul.mubr.bf16.gmra.mrb[0].mxu0 %v268
  %v456 = vpop.f32.mrb[0].mxu0
  %v457 = vadd.f32 0.0, %v456
  %v458 = vpop.f32.mrb[0].mxu0
  %v459 = vpop.f32.mrb[0].mxu0
  %v460 = vadd.f32 0.0, %v459
  %v461 = vpop.f32.mrb[0].mxu0
  %462 = vmatprep.mubr.bf16.mxu0 0
  %463 = vmatmul.mubr.bf16.gmra.mrb[0].mxu0 %v269
  %v464 = vpop.f32.mrb[0].mxu0
  %v465 = vadd.f32 0.0, %v464
  %v466 = vpop.f32.mrb[0].mxu0
  %v467 = vpop.f32.mrb[0].mxu0
  %v468 = vadd.f32 0.0, %v467
  %v469 = vpop.f32.mrb[0].mxu0
  %470 = vmatprep.mubr.bf16.mxu0 0
  %471 = vmatmul.mubr.bf16.gmra.mrb[0].mxu0 %v270
  %v472 = vpop.f32.mrb[0].mxu0
  %v473 = vadd.f32 0.0, %v472
  %v474 = vpop.f32.mrb[0].mxu0
  %v475 = vpop.f32.mrb[0].mxu0
  %v476 = vadd.f32 0.0, %v475
  %v477 = vpop.f32.mrb[0].mxu0
  %478 = vmatprep.mubr.bf16.mxu0 0
  %479 = vmatmul.mubr.bf16.gmra.mrb[0].mxu0 %v271
  %v480 = vpop.f32.mrb[0].mxu0
  %v481 = vadd.f32 0.0, %v480
  %v482 = vpop.f32.mrb[0].mxu0
  %v483 = vpop.f32.mrb[0].mxu0
  %v484 = vadd.f32 0.0, %v483
  %v485 = vpop.f32.mrb[0].mxu0
  %486 = vmatprep.mubr.bf16.mxu0 0
  %487 = vmatmul.mubr.bf16.gmra.mrb[0].mxu0 %v272
  %v488 = vpop.f32.mrb[0].mxu0
  %v489 = vadd.f32 0.0, %v488
  %v490 = vpop.f32.mrb[0].mxu0
  %v491 = vpop.f32.mrb[0].mxu0
  %v492 = vadd.f32 0.0, %v491
  %v493 = vpop.f32.mrb[0].mxu0
  %494 = vmatprep.mubr.bf16.mxu0 0
  %495 = vmatmul.mubr.bf16.gmra.mrb[0].mxu0 %v273
  %v496 = vpop.f32.mrb[0].mxu0
  %v497 = vadd.f32 0.0, %v496
  %v498 = vpop.f32.mrb[0].mxu0
  %v499 = vpop.f32.mrb[0].mxu0
  %v500 = vadd.f32 0.0, %v499
  %v501 = vpop.f32.mrb[0].mxu0
  %502 = vmatprep.mubr.bf16.mxu0 0
  %503 = vmatmul.mubr.bf16.gmra.mrb[0].mxu0 %v274
  %v504 = vpop.f32.mrb[0].mxu0
  %v505 = vadd.f32 0.0, %v504
  %v506 = vpop.f32.mrb[0].mxu0
  %v507 = vpop.f32.mrb[0].mxu0
  %v508 = vadd.f32 0.0, %v507
  %v509 = vpop.f32.mrb[0].mxu0
  %510 = vmatprep.mubr.bf16.mxu0 0
  %511 = vmatmul.mubr.bf16.gmra.mrb[0].mxu0 %v275
  %v512 = vpop.f32.mrb[0].mxu0
  %v513 = vadd.f32 0.0, %v512
  %v514 = vpop.f32.mrb[0].mxu0
  %v515 = vpop.f32.mrb[0].mxu0
  %v516 = vadd.f32 0.0, %v515
  %v517 = vpop.f32.mrb[0].mxu0
  %518 = vmatprep.mubr.bf16.mxu0 0
  %519 = vmatmul.mubr.bf16.gmra.mrb[0].mxu0 %v276
  %v520 = vpop.f32.mrb[0].mxu0
  %v521 = vadd.f32 0.0, %v520
  %v522 = vpop.f32.mrb[0].mxu0
  %v523 = vpop.f32.mrb[0].mxu0
  %v524 = vadd.f32 0.0, %v523
  %v525 = vpop.f32.mrb[0].mxu0
  %526 = vmatprep.mubr.bf16.mxu0 0
  %527 = vmatmul.mubr.bf16.gmra.mrb[0].mxu0 %v277
  %v528 = vpop.f32.mrb[0].mxu0
  %v529 = vadd.f32 0.0, %v528
  %v530 = vpop.f32.mrb[0].mxu0
  %v531 = vpop.f32.mrb[0].mxu0
  %v532 = vadd.f32 0.0, %v531
  %v533 = vpop.f32.mrb[0].mxu0
  %534 = vmatprep.mubr.bf16.mxu0 0
  %535 = vmatmul.mubr.bf16.gmra.mrb[0].mxu0 %v278
  %v536 = vpop.f32.mrb[0].mxu0
  %v537 = vadd.f32 0.0, %v536
  %v538 = vpop.f32.mrb[0].mxu0
  %v539 = vpop.f32.mrb[0].mxu0
  %v540 = vadd.f32 0.0, %v539
  %v541 = vpop.f32.mrb[0].mxu0
  %542 = vmatprep.mubr.bf16.mxu0 0
  %543 = vmatmul.mubr.bf16.gmra.mrb[0].mxu0 %v279
  %v544 = vpop.f32.mrb[0].mxu0
  %v545 = vadd.f32 0.0, %v544
  %v546 = vpop.f32.mrb[0].mxu0
  %v547 = vpop.f32.mrb[0].mxu0
  %v548 = vadd.f32 0.0, %v547
  %v549 = vpop.f32.mrb[0].mxu0
  %550 = vmatprep.mubr.bf16.mxu0 0
  %551 = vmatmul.mubr.bf16.gmra.mrb[0].mxu0 %v280
  %v552 = vpop.f32.mrb[0].mxu0
  %v553 = vadd.f32 0.0, %v552
  %v554 = vpop.f32.mrb[0].mxu0
  %v555 = vpop.f32.mrb[0].mxu0
  %v556 = vadd.f32 0.0, %v555
  %v557 = vpop.f32.mrb[0].mxu0
  %558 = vmatprep.mubr.bf16.mxu0 0
  %559 = vmatmul.mubr.bf16.gmra.mrb[0].mxu0 %v281
  %v560 = vpop.f32.mrb[0].mxu0
  %v561 = vadd.f32 0.0, %v560
  %v562 = vpop.f32.mrb[0].mxu0
  %v563 = vpop.f32.mrb[0].mxu0
  %v564 = vadd.f32 0.0, %v563
  %v565 = vpop.f32.mrb[0].mxu0
  %566 = vmatprep.mubr.bf16.mxu0 0
  %567 = vmatmul.mubr.bf16.gmra.mrb[0].mxu0 %v282
  %v568 = vpop.f32.mrb[0].mxu0
  %v569 = vadd.f32 0.0, %v568
  %v570 = vpop.f32.mrb[0].mxu0
  %v571 = vpop.f32.mrb[0].mxu0
  %v572 = vadd.f32 0.0, %v571
  %v573 = vpop.f32.mrb[0].mxu0
  %574 = vmatprep.mubr.bf16.mxu0 0
  %575 = vmatmul.mubr.bf16.gmra.mrb[0].mxu0 %v283
  %v576 = vpop.f32.mrb[0].mxu0
  %v577 = vadd.f32 0.0, %v576
  %v578 = vpop.f32.mrb[0].mxu0
  %v579 = vpop.f32.mrb[0].mxu0
  %v580 = vadd.f32 0.0, %v579
  %v581 = vpop.f32.mrb[0].mxu0
  %582 = vmatprep.mubr.bf16.mxu0 0
  %583 = vmatmul.mubr.bf16.gmra.mrb[0].mxu0 %v284
  %v584 = vpop.f32.mrb[0].mxu0
  %v585 = vadd.f32 0.0, %v584
  %v586 = vpop.f32.mrb[0].mxu0
  %v587 = vpop.f32.mrb[0].mxu0
  %v588 = vadd.f32 0.0, %v587
  %v589 = vpop.f32.mrb[0].mxu0
  %590 = vmatprep.mubr.bf16.mxu0 0
  %591 = vmatmul.mubr.bf16.gmra.mrb[0].mxu0 %v285
  %v592 = vpop.f32.mrb[0].mxu0
  %v593 = vadd.f32 0.0, %v592
  %v594 = vpop.f32.mrb[0].mxu0
  %v595 = vpop.f32.mrb[0].mxu0
  %v596 = vadd.f32 0.0, %v595
  %v597 = vpop.f32.mrb[0].mxu0
  %598 = vmatprep.mubr.bf16.mxu0 0
  %599 = vmatmul.mubr.bf16.gmra.mrb[0].mxu0 %v286
  %v600 = vpop.f32.mrb[0].mxu0
  %v601 = vadd.f32 0.0, %v600
  %v602 = vpop.f32.mrb[0].mxu0
  %v603 = vpop.f32.mrb[0].mxu0
  %v604 = vadd.f32 0.0, %v603
  %v605 = vpop.f32.mrb[0].mxu0
  %606 = vmatprep.mubr.bf16.mxu0 0
  %607 = vmatmul.mubr.bf16.gmra.mrb[0].mxu0 %v287
  %v608 = vpop.f32.mrb[0].mxu0
  %v609 = vadd.f32 0.0, %v608
  %v610 = vpop.f32.mrb[0].mxu0
  %v611 = vpop.f32.mrb[0].mxu0
  %v612 = vadd.f32 0.0, %v611
  %v613 = vpop.f32.mrb[0].mxu0
  %614 = vmatprep.mubr.bf16.mxu0 0
  %615 = vmatmul.mubr.bf16.gmra.mrb[0].mxu0 %v288
  %v616 = vpop.f32.mrb[0].mxu0
  %v617 = vadd.f32 0.0, %v616
  %v618 = vpop.f32.mrb[0].mxu0
  %v619 = vpop.f32.mrb[0].mxu0
  %v620 = vadd.f32 0.0, %v619
  %v621 = vpop.f32.mrb[0].mxu0
  %622 = vmatprep.mubr.bf16.mxu0 0
  %623 = vmatmul.mubr.bf16.gmra.mrb[0].mxu0 %v289
  %v624 = vpop.f32.mrb[0].mxu0
  %v625 = vadd.f32 0.0, %v624
  %v626 = vpop.f32.mrb[0].mxu0
  %v627 = vpop.f32.mrb[0].mxu0
  %v628 = vadd.f32 0.0, %v627
  %v629 = vpop.f32.mrb[0].mxu0
  %630 = vmatprep.mubr.bf16.mxu0 0
  %631 = vmatmul.mubr.bf16.gmra.mrb[0].mxu0 %v290
  %v632 = vpop.f32.mrb[0].mxu0
  %v633 = vadd.f32 0.0, %v632
  %v634 = vpop.f32.mrb[0].mxu0
  %v635 = vpop.f32.mrb[0].mxu0
  %v636 = vadd.f32 0.0, %v635
  %v637 = vpop.f32.mrb[0].mxu0
  %638 = vmatprep.mubr.bf16.mxu0 0
  %639 = vmatmul.mubr.bf16.gmra.mrb[0].mxu0 %v291
  %v640 = vpop.f32.mrb[0].mxu0
  %v641 = vadd.f32 0.0, %v640
  %v642 = vpop.f32.mrb[0].mxu0
  %v643 = vpop.f32.mrb[0].mxu0
  %v644 = vadd.f32 0.0, %v643
  %v645 = vpop.f32.mrb[0].mxu0
  %646 = vmatprep.mubr.bf16.mxu0 0
  %647 = vmatmul.mubr.bf16.gmra.mrb[0].mxu0 %v292
  %v648 = vpop.f32.mrb[0].mxu0
  %v649 = vadd.f32 0.0, %v648
  %v650 = vpop.f32.mrb[0].mxu0
  %v651 = vpop.f32.mrb[0].mxu0
  %v652 = vadd.f32 0.0, %v651
  %v653 = vpop.f32.mrb[0].mxu0
  %654 = vmatprep.mubr.bf16.mxu0 0
  %655 = vmatmul.mubr.bf16.gmra.mrb[0].mxu0 %v293
  %v656 = vpop.f32.mrb[0].mxu0
  %v657 = vadd.f32 0.0, %v656
  %v658 = vpop.f32.mrb[0].mxu0
  %v659 = vpop.f32.mrb[0].mxu0
  %v660 = vpop.f32.mrb[0].mxu0
  %661 = vdwg.mxu0
  %662 = vst [vmem:[#allocation4] sm:$0xff] %v409
  %663 = vst [vmem:[#allocation4 + $0x8] sm:$0xff] %v412
  %664 = vst [vmem:[#allocation4 + $0x10] sm:$0xff] %v417
  %665 = vst [vmem:[#allocation4 + $0x18] sm:$0xff] %v420
  %666 = vst [vmem:[#allocation4 + $0x20] sm:$0xff] %v425
  %667 = vst [vmem:[#allocation4 + $0x28] sm:$0xff] %v428
  %668 = vst [vmem:[#allocation4 + $0x30] sm:$0xff] %v433
  %669 = vst [vmem:[#allocation4 + $0x38] sm:$0xff] %v436
  %670 = vst [vmem:[#allocation4 + $0x40] sm:$0xff] %v441
  %671 = vst [vmem:[#allocation4 + $0x48] sm:$0xff] %v444
  %672 = vst [vmem:[#allocation4 + $0x50] sm:$0xff] %v449
  %673 = vst [vmem:[#allocation4 + $0x58] sm:$0xff] %v452
  %674 = vst [vmem:[#allocation4 + $0x60] sm:$0xff] %v457
  %675 = vst [vmem:[#allocation4 + $0x68] sm:$0xff] %v460
  %676 = vst [vmem:[#allocation4 + $0x70] sm:$0xff] %v465
  %677 = vst [vmem:[#allocation4 + $0x78] sm:$0xff] %v468
  %678 = vst [vmem:[#allocation4 + $0x80] sm:$0xff] %v473
  %679 = vst [vmem:[#allocation4 + $0x88] sm:$0xff] %v476
  %680 = vst [vmem:[#allocation4 + $0x90] sm:$0xff] %v481
  %681 = vst [vmem:[#allocation4 + $0x98] sm:$0xff] %v484
  %682 = vst [vmem:[#allocation4 + $0xa0] sm:$0xff] %v489
  %683 = vst [vmem:[#allocation4 + $0xa8] sm:$0xff] %v492
  %684 = vst [vmem:[#allocation4 + $0xb0] sm:$0xff] %v497
  %685 = vst [vmem:[#allocation4 + $0xb8] sm:$0xff] %v500
  %686 = vst [vmem:[#allocation4 + $0xc0] sm:$0xff] %v505
  %687 = vst [vmem:[#allocation4 + $0xc8] sm:$0xff] %v508
  %688 = vst [vmem:[#allocation4 + $0xd0] sm:$0xff] %v513
  %689 = vst [vmem:[#allocation4 + $0xd8] sm:$0xff] %v516
  %690 = vst [vmem:[#allocation4 + $0xe0] sm:$0xff] %v521
  %691 = vst [vmem:[#allocation4 + $0xe8] sm:$0xff] %v524
  %692 = vst [vmem:[#allocation4 + $0xf0] sm:$0xff] %v529
  %693 = vst [vmem:[#allocation4 + $0xf8] sm:$0xff] %v532
  %694 = vst [vmem:[#allocation4 + $0x100] sm:$0xff] %v537
  %695 = vst [vmem:[#allocation4 + $0x108] sm:$0xff] %v540
  %696 = vst [vmem:[#allocation4 + $0x110] sm:$0xff] %v545
  %697 = vst [vmem:[#allocation4 + $0x118] sm:$0xff] %v548
  %698 = vst [vmem:[#allocation4 + $0x120] sm:$0xff] %v553
  %699 = vst [vmem:[#allocation4 + $0x128] sm:$0xff] %v556
  %700 = vst [vmem:[#allocation4 + $0x130] sm:$0xff] %v561
  %701 = vst [vmem:[#allocation4 + $0x138] sm:$0xff] %v564
  %702 = vst [vmem:[#allocation4 + $0x140] sm:$0xff] %v569
  %703 = vst [vmem:[#allocation4 + $0x148] sm:$0xff] %v572
  %704 = vst [vmem:[#allocation4 + $0x150] sm:$0xff] %v577
  %705 = vst [vmem:[#allocation4 + $0x158] sm:$0xff] %v580
  %706 = vst [vmem:[#allocation4 + $0x160] sm:$0xff] %v585
  %707 = vst [vmem:[#allocation4 + $0x168] sm:$0xff] %v588
  %708 = vst [vmem:[#allocation4 + $0x170] sm:$0xff] %v593
  %709 = vst [vmem:[#allocation4 + $0x178] sm:$0xff] %v596
  %710 = vst [vmem:[#allocation4 + $0x180] sm:$0xff] %v601
  %711 = vst [vmem:[#allocation4 + $0x188] sm:$0xff] %v604
  %712 = vst [vmem:[#allocation4 + $0x190] sm:$0xff] %v609
  %713 = vst [vmem:[#allocation4 + $0x198] sm:$0xff] %v612
  %714 = vst [vmem:[#allocation4 + $0x1a0] sm:$0xff] %v617
  %715 = vst [vmem:[#allocation4 + $0x1a8] sm:$0xff] %v620
  %716 = vst [vmem:[#allocation4 + $0x1b0] sm:$0xff] %v625
  %717 = vst [vmem:[#allocation4 + $0x1b8] sm:$0xff] %v628
  %718 = vst [vmem:[#allocation4 + $0x1c0] sm:$0xff] %v633
  %719 = vst [vmem:[#allocation4 + $0x1c8] sm:$0xff] %v636
  %720 = vst [vmem:[#allocation4 + $0x1d0] sm:$0xff] %v641
  %721 = vst [vmem:[#allocation4 + $0x1d8] sm:$0xff] %v644
  %722 = vst [vmem:[#allocation4 + $0x1e0] sm:$0xff] %v649
  %723 = vst [vmem:[#allocation4 + $0x1e8] sm:$0xff] %v652
  %724 = vst [vmem:[#allocation4 + $0x1f0] sm:$0x3f] %v657
  %v725 = vld [vmem:[#allocation4] sm:$0xff]
  %v726 = vld [vmem:[#allocation4 + $0x8] sm:$0xff]
  %v727 = vld [vmem:[#allocation4 + $0x10] sm:$0xff]
  %v728 = vld [vmem:[#allocation4 + $0x18] sm:$0xff]
  %v729 = vld [vmem:[#allocation4 + $0x20] sm:$0xff]
  %v730 = vld [vmem:[#allocation4 + $0x28] sm:$0xff]
  %v731 = vld [vmem:[#allocation4 + $0x30] sm:$0xff]
  %v732 = vld [vmem:[#allocation4 + $0x38] sm:$0xff]
  %v733 = vld [vmem:[#allocation4 + $0x40] sm:$0xff]
  %v734 = vld [vmem:[#allocation4 + $0x48] sm:$0xff]
  %v735 = vld [vmem:[#allocation4 + $0x50] sm:$0xff]
  %v736 = vld [vmem:[#allocation4 + $0x58] sm:$0xff]
  %v737 = vld [vmem:[#allocation4 + $0x60] sm:$0xff]
  %v738 = vld [vmem:[#allocation4 + $0x68] sm:$0xff]
  %v739 = vld [vmem:[#allocation4 + $0x70] sm:$0xff]
  %v740 = vld [vmem:[#allocation4 + $0x78] sm:$0xff]
  %v741 = vld [vmem:[#allocation4 + $0x80] sm:$0xff]
  %v742 = vld [vmem:[#allocation4 + $0x88] sm:$0xff]
  %v743 = vld [vmem:[#allocation4 + $0x90] sm:$0xff]
  %v744 = vld [vmem:[#allocation4 + $0x98] sm:$0xff]
  %v745 = vld [vmem:[#allocation4 + $0xa0] sm:$0xff]
  %v746 = vld [vmem:[#allocation4 + $0xa8] sm:$0xff]
  %v747 = vld [vmem:[#allocation4 + $0xb0] sm:$0xff]
  %v748 = vld [vmem:[#allocation4 + $0xb8] sm:$0xff]
  %v749 = vld [vmem:[#allocation4 + $0xc0] sm:$0xff]
  %v750 = vld [vmem:[#allocation4 + $0xc8] sm:$0xff]
  %v751 = vld [vmem:[#allocation4 + $0xd0] sm:$0xff]
  %v752 = vld [vmem:[#allocation4 + $0xd8] sm:$0xff]
  %v753 = vld [vmem:[#allocation4 + $0xe0] sm:$0xff]
  %v754 = vld [vmem:[#allocation4 + $0xe8] sm:$0xff]
  %v755 = vld [vmem:[#allocation4 + $0xf0] sm:$0xff]
  %v756 = vld [vmem:[#allocation4 + $0xf8] sm:$0xff]
  %v757 = vld [vmem:[#allocation4 + $0x100] sm:$0xff]
  %v758 = vld [vmem:[#allocation4 + $0x108] sm:$0xff]
  %v759 = vld [vmem:[#allocation4 + $0x110] sm:$0xff]
  %v760 = vld [vmem:[#allocation4 + $0x118] sm:$0xff]
  %v761 = vld [vmem:[#allocation4 + $0x120] sm:$0xff]
  %v762 = vld [vmem:[#allocation4 + $0x128] sm:$0xff]
  %v763 = vld [vmem:[#allocation4 + $0x130] sm:$0xff]
  %v764 = vld [vmem:[#allocation4 + $0x138] sm:$0xff]
  %v765 = vld [vmem:[#allocation4 + $0x140] sm:$0xff]
  %v766 = vld [vmem:[#allocation4 + $0x148] sm:$0xff]
  %v767 = vld [vmem:[#allocation4 + $0x150] sm:$0xff]
  %v768 = vld [vmem:[#allocation4 + $0x158] sm:$0xff]
  %v769 = vld [vmem:[#allocation4 + $0x160] sm:$0xff]
  %v770 = vld [vmem:[#allocation4 + $0x168] sm:$0xff]
  %v771 = vld [vmem:[#allocation4 + $0x170] sm:$0xff]
  %v772 = vld [vmem:[#allocation4 + $0x178] sm:$0xff]
  %v773 = vld [vmem:[#allocation4 + $0x180] sm:$0xff]
  %v774 = vld [vmem:[#allocation4 + $0x188] sm:$0xff]
  %v775 = vld [vmem:[#allocation4 + $0x190] sm:$0xff]
  %v776 = vld [vmem:[#allocation4 + $0x198] sm:$0xff]
  %v777 = vld [vmem:[#allocation4 + $0x1a0] sm:$0xff]
  %v778 = vld [vmem:[#allocation4 + $0x1a8] sm:$0xff]
  %v779 = vld [vmem:[#allocation4 + $0x1b0] sm:$0xff]
  %v780 = vld [vmem:[#allocation4 + $0x1b8] sm:$0xff]
  %v781 = vld [vmem:[#allocation4 + $0x1c0] sm:$0xff]
  %v782 = vld [vmem:[#allocation4 + $0x1c8] sm:$0xff]
  %v783 = vld [vmem:[#allocation4 + $0x1d0] sm:$0xff]
  %v784 = vld [vmem:[#allocation4 + $0x1d8] sm:$0xff]
  %v785 = vld [vmem:[#allocation4 + $0x1e0] sm:$0xff]
  %v786 = vld [vmem:[#allocation4 + $0x1e8] sm:$0xff]
  %v787 = vld [vmem:[#allocation4 + $0x1f0] sm:$0x3f]
  %v788 = vld [vmem:[%s0] sm:$0xf]
  %v789 = vld [vmem:[%s0 + $0x4] sm:$0xf]
  %v790 = vld [vmem:[%s0 + $0x8] sm:$0xf]
  %v791 = vld [vmem:[%s0 + $0xc] sm:$0xf]
  %v792 = vld [vmem:[%s0 + $0x10] sm:$0xf]
  %v793 = vld [vmem:[%s0 + $0x14] sm:$0xf]
  %v794 = vld [vmem:[%s0 + $0x18] sm:$0xf]
  %v795 = vld [vmem:[%s0 + $0x1c] sm:$0xf]
  %v796 = vld [vmem:[%s0 + $0x20] sm:$0xf]
  %v797 = vld [vmem:[%s0 + $0x24] sm:$0xf]
  %v798 = vld [vmem:[%s0 + $0x28] sm:$0xf]
  %v799 = vld [vmem:[%s0 + $0x2c] sm:$0xf]
  %v800 = vld [vmem:[%s0 + $0x30] sm:$0xf]
  %v801 = vld [vmem:[%s0 + $0x34] sm:$0xf]
  %v802 = vld [vmem:[%s0 + $0x38] sm:$0xf]
  %v803 = vld [vmem:[%s0 + $0x3c] sm:$0xf]
  %v804 = vld [vmem:[%s0 + $0x40] sm:$0xf]
  %v805 = vld [vmem:[%s0 + $0x44] sm:$0xf]
  %v806 = vld [vmem:[%s0 + $0x48] sm:$0xf]
  %v807 = vld [vmem:[%s0 + $0x4c] sm:$0xf]
  %v808 = vld [vmem:[%s0 + $0x50] sm:$0xf]
  %v809 = vld [vmem:[%s0 + $0x54] sm:$0xf]
  %v810 = vld [vmem:[%s0 + $0x58] sm:$0xf]
  %v811 = vld [vmem:[%s0 + $0x5c] sm:$0xf]
  %v812 = vld [vmem:[%s0 + $0x60] sm:$0xf]
  %v813 = vld [vmem:[%s0 + $0x64] sm:$0xf]
  %v814 = vld [vmem:[%s0 + $0x68] sm:$0xf]
  %v815 = vld [vmem:[%s0 + $0x6c] sm:$0xf]
  %v816 = vld [vmem:[%s0 + $0x70] sm:$0xf]
  %v817 = vld [vmem:[%s0 + $0x74] sm:$0xf]
  %v818 = vld [vmem:[%s0 + $0x78] sm:$0xf]
  %v819 = vld [vmem:[%s0 + $0x7c] sm:$0xf]
  %v820 = vld [vmem:[%s0 + $0x80] sm:$0xf]
  %v821 = vld [vmem:[%s0 + $0x84] sm:$0xf]
  %v822 = vld [vmem:[%s0 + $0x88] sm:$0xf]
  %v823 = vld [vmem:[%s0 + $0x8c] sm:$0xf]
  %v824 = vld [vmem:[%s0 + $0x90] sm:$0xf]
  %v825 = vld [vmem:[%s0 + $0x94] sm:$0xf]
  %v826 = vld [vmem:[%s0 + $0x98] sm:$0xf]
  %v827 = vld [vmem:[%s0 + $0x9c] sm:$0xf]
  %v828 = vld [vmem:[%s0 + $0xa0] sm:$0xf]
  %v829 = vld [vmem:[%s0 + $0xa4] sm:$0xf]
  %v830 = vld [vmem:[%s0 + $0xa8] sm:$0xf]
  %v831 = vld [vmem:[%s0 + $0xac] sm:$0xf]
  %v832 = vld [vmem:[%s0 + $0xb0] sm:$0xf]
  %v833 = vld [vmem:[%s0 + $0xb4] sm:$0xf]
  %v834 = vld [vmem:[%s0 + $0xb8] sm:$0xf]
  %v835 = vld [vmem:[%s0 + $0xbc] sm:$0xf]
  %v836 = vld [vmem:[%s0 + $0xc0] sm:$0xf]
  %v837 = vld [vmem:[%s0 + $0xc4] sm:$0xf]
  %v838 = vld [vmem:[%s0 + $0xc8] sm:$0xf]
  %v839 = vld [vmem:[%s0 + $0xcc] sm:$0xf]
  %v840 = vld [vmem:[%s0 + $0xd0] sm:$0xf]
  %v841 = vld [vmem:[%s0 + $0xd4] sm:$0xf]
  %v842 = vld [vmem:[%s0 + $0xd8] sm:$0xf]
  %v843 = vld [vmem:[%s0 + $0xdc] sm:$0xf]
  %v844 = vld [vmem:[%s0 + $0xe0] sm:$0xf]
  %v845 = vld [vmem:[%s0 + $0xe4] sm:$0xf]
  %v846 = vld [vmem:[%s0 + $0xe8] sm:$0xf]
  %v847 = vld [vmem:[%s0 + $0xec] sm:$0xf]
  %v848 = vld [vmem:[%s0 + $0xf0] sm:$0xf]
  %v849 = vld [vmem:[%s0 + $0xf4] sm:$0xf]
  %v850 = vld [vmem:[%s0 + $0xf8] sm:$0xf]
  %s851 = scalar_lea.vmem %s3, 64
  %v852 = vld [vmem:[%s851] sm:$0xf]
  %v853 = vld [vmem:[%s851 + $0x4] sm:$0xf]
  %v854 = vld [vmem:[%s851 + $0x8] sm:$0xf]
  %v855 = vld [vmem:[%s851 + $0xc] sm:$0xf]
  %v856 = vld [vmem:[%s851 + $0x10] sm:$0xf]
  %v857 = vld [vmem:[%s851 + $0x14] sm:$0xf]
  %v858 = vld [vmem:[%s851 + $0x18] sm:$0xf]
  %v859 = vld [vmem:[%s851 + $0x1c] sm:$0xf]
  %v860 = vld [vmem:[%s851 + $0x20] sm:$0xf]
  %v861 = vld [vmem:[%s851 + $0x24] sm:$0xf]
  %v862 = vld [vmem:[%s851 + $0x28] sm:$0xf]
  %v863 = vld [vmem:[%s851 + $0x2c] sm:$0xf]
  %v864 = vld [vmem:[%s851 + $0x30] sm:$0xf]
  %v865 = vld [vmem:[%s851 + $0x34] sm:$0xf]
  %v866 = vld [vmem:[%s851 + $0x38] sm:$0xf]
  %v867 = vld [vmem:[%s851 + $0x3c] sm:$0xf]
  %v931 = vunpack.c.l.b16 %v788
  %v932 = vunpack.c.l.b16 %v789
  %v933 = vunpack.c.l.b16 %v790
  %v934 = vunpack.c.l.b16 %v791
  %v935 = vunpack.c.l.b16 %v792
  %v936 = vunpack.c.l.b16 %v793
  %v937 = vunpack.c.l.b16 %v794
  %v938 = vunpack.c.l.b16 %v795
  %v939 = vunpack.c.l.b16 %v796
  %v940 = vunpack.c.l.b16 %v797
  %v941 = vunpack.c.l.b16 %v798
  %v942 = vunpack.c.l.b16 %v799
  %v943 = vunpack.c.l.b16 %v800
  %v944 = vunpack.c.l.b16 %v801
  %v945 = vunpack.c.l.b16 %v802
  %v946 = vunpack.c.l.b16 %v803
  %v947 = vunpack.c.l.b16 %v804
  %v948 = vunpack.c.l.b16 %v805
  %v949 = vunpack.c.l.b16 %v806
  %v950 = vunpack.c.l.b16 %v807
  %v951 = vunpack.c.l.b16 %v808
  %v952 = vunpack.c.l.b16 %v809
  %v953 = vunpack.c.l.b16 %v810
  %v954 = vunpack.c.l.b16 %v811
  %v955 = vunpack.c.l.b16 %v812
  %v956 = vunpack.c.l.b16 %v813
  %v957 = vunpack.c.l.b16 %v814
  %v958 = vunpack.c.l.b16 %v815
  %v959 = vunpack.c.l.b16 %v816
  %v960 = vunpack.c.l.b16 %v817
  %v961 = vunpack.c.l.b16 %v818
  %v962 = vunpack.c.l.b16 %v819
  %v963 = vunpack.c.l.b16 %v820
  %v964 = vunpack.c.l.b16 %v821
  %v965 = vunpack.c.l.b16 %v822
  %v966 = vunpack.c.l.b16 %v823
  %v967 = vunpack.c.l.b16 %v824
  %v968 = vunpack.c.l.b16 %v825
  %v969 = vunpack.c.l.b16 %v826
  %v970 = vunpack.c.l.b16 %v827
  %v971 = vunpack.c.l.b16 %v828
  %v972 = vunpack.c.l.b16 %v829
  %v973 = vunpack.c.l.b16 %v830
  %v974 = vunpack.c.l.b16 %v831
  %v975 = vunpack.c.l.b16 %v832
  %v976 = vunpack.c.l.b16 %v833
  %v977 = vunpack.c.l.b16 %v834
  %v978 = vunpack.c.l.b16 %v835
  %v979 = vunpack.c.l.b16 %v836
  %v980 = vunpack.c.l.b16 %v837
  %v981 = vunpack.c.l.b16 %v838
  %v982 = vunpack.c.l.b16 %v839
  %v983 = vunpack.c.l.b16 %v840
  %v984 = vunpack.c.l.b16 %v841
  %v985 = vunpack.c.l.b16 %v842
  %v986 = vunpack.c.l.b16 %v843
  %v987 = vunpack.c.l.b16 %v844
  %v988 = vunpack.c.l.b16 %v845
  %v989 = vunpack.c.l.b16 %v846
  %v990 = vunpack.c.l.b16 %v847
  %v991 = vunpack.c.l.b16 %v848
  %v992 = vunpack.c.l.b16 %v849
  %v993 = vunpack.c.l.b16 %v850
  %v994 = vpack.c.b16 %v932, %v931
  %v995 = vpack.c.b16 %v934, %v933
  %v996 = vpack.c.b16 %v936, %v935
  %v997 = vpack.c.b16 %v938, %v937
  %v998 = vpack.c.b16 %v940, %v939
  %v999 = vpack.c.b16 %v942, %v941
  %v1000 = vpack.c.b16 %v944, %v943
  %v1001 = vpack.c.b16 %v946, %v945
  %v1002 = vpack.c.b16 %v948, %v947
  %v1003 = vpack.c.b16 %v950, %v949
  %v1004 = vpack.c.b16 %v952, %v951
  %v1005 = vpack.c.b16 %v954, %v953
  %v1006 = vpack.c.b16 %v956, %v955
  %v1007 = vpack.c.b16 %v958, %v957
  %v1008 = vpack.c.b16 %v960, %v959
  %v1009 = vpack.c.b16 %v962, %v961
  %v1010 = vpack.c.b16 %v964, %v963
  %v1011 = vpack.c.b16 %v966, %v965
  %v1012 = vpack.c.b16 %v968, %v967
  %v1013 = vpack.c.b16 %v970, %v969
  %v1014 = vpack.c.b16 %v972, %v971
  %v1015 = vpack.c.b16 %v974, %v973
  %v1016 = vpack.c.b16 %v976, %v975
  %v1017 = vpack.c.b16 %v978, %v977
  %v1018 = vpack.c.b16 %v980, %v979
  %v1019 = vpack.c.b16 %v982, %v981
  %v1020 = vpack.c.b16 %v984, %v983
  %v1021 = vpack.c.b16 %v986, %v985
  %v1022 = vpack.c.b16 %v988, %v987
  %v1023 = vpack.c.b16 %v990, %v989
  %v1024 = vpack.c.b16 %v992, %v991
  %v1025 = vpack.c.b16 %v993, %v993
  %vm1026 = vsmask.f32 7424
  %v1028 = vshrl.u32 %v994, 16
  %v1030 = vshll.u32 %v994, 16
  %v1032 = vrot.slane %v1030, 1
  %v1033 = vor.u32 %v1028, %v1032
  %v1035 = vshll.u32 %v995, 16
  %v1037 = vrot.slane %v1035, 1
  %v1038 = vsel %vm1026, %v1033, %v1037
  %v1039 = vshrl.u32 %v995, 16
  %v1041 = vor.u32 %v1039, %v1037
  %v1043 = vshll.u32 %v996, 16
  %v1045 = vrot.slane %v1043, 1
  %v1046 = vsel %vm1026, %v1041, %v1045
  %v1047 = vshrl.u32 %v996, 16
  %v1049 = vor.u32 %v1047, %v1045
  %v1051 = vshll.u32 %v997, 16
  %v1053 = vrot.slane %v1051, 1
  %v1054 = vsel %vm1026, %v1049, %v1053
  %v1055 = vshrl.u32 %v997, 16
  %v1057 = vor.u32 %v1055, %v1053
  %v1059 = vshll.u32 %v998, 16
  %v1061 = vrot.slane %v1059, 1
  %v1062 = vsel %vm1026, %v1057, %v1061
  %v1063 = vshrl.u32 %v998, 16
  %v1065 = vor.u32 %v1063, %v1061
  %v1067 = vshll.u32 %v999, 16
  %v1069 = vrot.slane %v1067, 1
  %v1070 = vsel %vm1026, %v1065, %v1069
  %v1071 = vshrl.u32 %v999, 16
  %v1073 = vor.u32 %v1071, %v1069
  %v1075 = vshll.u32 %v1000, 16
  %v1077 = vrot.slane %v1075, 1
  %v1078 = vsel %vm1026, %v1073, %v1077
  %v1079 = vshrl.u32 %v1000, 16
  %v1081 = vor.u32 %v1079, %v1077
  %v1083 = vshll.u32 %v1001, 16
  %v1085 = vrot.slane %v1083, 1
  %v1086 = vsel %vm1026, %v1081, %v1085
  %v1087 = vshrl.u32 %v1001, 16
  %v1089 = vor.u32 %v1087, %v1085
  %v1091 = vshll.u32 %v1002, 16
  %v1093 = vrot.slane %v1091, 1
  %v1094 = vsel %vm1026, %v1089, %v1093
  %v1095 = vshrl.u32 %v1002, 16
  %v1097 = vor.u32 %v1095, %v1093
  %v1099 = vshll.u32 %v1003, 16
  %v1101 = vrot.slane %v1099, 1
  %v1102 = vsel %vm1026, %v1097, %v1101
  %v1103 = vshrl.u32 %v1003, 16
  %v1105 = vor.u32 %v1103, %v1101
  %v1107 = vshll.u32 %v1004, 16
  %v1109 = vrot.slane %v1107, 1
  %v1110 = vsel %vm1026, %v1105, %v1109
  %v1111 = vshrl.u32 %v1004, 16
  %v1113 = vor.u32 %v1111, %v1109
  %v1115 = vshll.u32 %v1005, 16
  %v1117 = vrot.slane %v1115, 1
  %v1118 = vsel %vm1026, %v1113, %v1117
  %v1119 = vshrl.u32 %v1005, 16
  %v1121 = vor.u32 %v1119, %v1117
  %v1123 = vshll.u32 %v1006, 16
  %v1125 = vrot.slane %v1123, 1
  %v1126 = vsel %vm1026, %v1121, %v1125
  %v1127 = vshrl.u32 %v1006, 16
  %v1129 = vor.u32 %v1127, %v1125
  %v1131 = vshll.u32 %v1007, 16
  %v1133 = vrot.slane %v1131, 1
  %v1134 = vsel %vm1026, %v1129, %v1133
  %v1135 = vshrl.u32 %v1007, 16
  %v1137 = vor.u32 %v1135, %v1133
  %v1139 = vshll.u32 %v1008, 16
  %v1141 = vrot.slane %v1139, 1
  %v1142 = vsel %vm1026, %v1137, %v1141
  %v1143 = vshrl.u32 %v1008, 16
  %v1145 = vor.u32 %v1143, %v1141
  %v1147 = vshll.u32 %v1009, 16
  %v1149 = vrot.slane %v1147, 1
  %v1150 = vsel %vm1026, %v1145, %v1149
  %v1151 = vshrl.u32 %v1009, 16
  %v1153 = vor.u32 %v1151, %v1149
  %v1155 = vshll.u32 %v1010, 16
  %v1157 = vrot.slane %v1155, 1
  %v1158 = vsel %vm1026, %v1153, %v1157
  %v1159 = vshrl.u32 %v1010, 16
  %v1161 = vor.u32 %v1159, %v1157
  %v1163 = vshll.u32 %v1011, 16
  %v1165 = vrot.slane %v1163, 1
  %v1166 = vsel %vm1026, %v1161, %v1165
  %v1167 = vshrl.u32 %v1011, 16
  %v1169 = vor.u32 %v1167, %v1165
  %v1171 = vshll.u32 %v1012, 16
  %v1173 = vrot.slane %v1171, 1
  %v1174 = vsel %vm1026, %v1169, %v1173
  %v1175 = vshrl.u32 %v1012, 16
  %v1177 = vor.u32 %v1175, %v1173
  %v1179 = vshll.u32 %v1013, 16
  %v1181 = vrot.slane %v1179, 1
  %v1182 = vsel %vm1026, %v1177, %v1181
  %v1183 = vshrl.u32 %v1013, 16
  %v1185 = vor.u32 %v1183, %v1181
  %v1187 = vshll.u32 %v1014, 16
  %v1189 = vrot.slane %v1187, 1
  %v1190 = vsel %vm1026, %v1185, %v1189
  %v1191 = vshrl.u32 %v1014, 16
  %v1193 = vor.u32 %v1191, %v1189
  %v1195 = vshll.u32 %v1015, 16
  %v1197 = vrot.slane %v1195, 1
  %v1198 = vsel %vm1026, %v1193, %v1197
  %v1199 = vshrl.u32 %v1015, 16
  %v1201 = vor.u32 %v1199, %v1197
  %v1203 = vshll.u32 %v1016, 16
  %v1205 = vrot.slane %v1203, 1
  %v1206 = vsel %vm1026, %v1201, %v1205
  %v1207 = vshrl.u32 %v1016, 16
  %v1209 = vor.u32 %v1207, %v1205
  %v1211 = vshll.u32 %v1017, 16
  %v1213 = vrot.slane %v1211, 1
  %v1214 = vsel %vm1026, %v1209, %v1213
  %v1215 = vshrl.u32 %v1017, 16
  %v1217 = vor.u32 %v1215, %v1213
  %v1219 = vshll.u32 %v1018, 16
  %v1221 = vrot.slane %v1219, 1
  %v1222 = vsel %vm1026, %v1217, %v1221
  %v1223 = vshrl.u32 %v1018, 16
  %v1225 = vor.u32 %v1223, %v1221
  %v1227 = vshll.u32 %v1019, 16
  %v1229 = vrot.slane %v1227, 1
  %v1230 = vsel %vm1026, %v1225, %v1229
  %v1231 = vshrl.u32 %v1019, 16
  %v1233 = vor.u32 %v1231, %v1229
  %v1235 = vshll.u32 %v1020, 16
  %v1237 = vrot.slane %v1235, 1
  %v1238 = vsel %vm1026, %v1233, %v1237
  %v1239 = vshrl.u32 %v1020, 16
  %v1241 = vor.u32 %v1239, %v1237
  %v1243 = vshll.u32 %v1021, 16
  %v1245 = vrot.slane %v1243, 1
  %v1246 = vsel %vm1026, %v1241, %v1245
  %v1247 = vshrl.u32 %v1021, 16
  %v1249 = vor.u32 %v1247, %v1245
  %v1251 = vshll.u32 %v1022, 16
  %v1253 = vrot.slane %v1251, 1
  %v1254 = vsel %vm1026, %v1249, %v1253
  %v1255 = vshrl.u32 %v1022, 16
  %v1257 = vor.u32 %v1255, %v1253
  %v1259 = vshll.u32 %v1023, 16
  %v1261 = vrot.slane %v1259, 1
  %v1262 = vsel %vm1026, %v1257, %v1261
  %v1263 = vshrl.u32 %v1023, 16
  %v1265 = vor.u32 %v1263, %v1261
  %v1267 = vshll.u32 %v1024, 16
  %v1269 = vrot.slane %v1267, 1
  %v1270 = vsel %vm1026, %v1265, %v1269
  %v1271 = vshrl.u32 %v1024, 16
  %v1273 = vor.u32 %v1271, %v1269
  %v1275 = vshll.u32 %v1025, 16
  %v1277 = vrot.slane %v1275, 1
  %v1278 = vsel %vm1026, %v1273, %v1277
  %v1279 = vshrl.u32 %v1025, 16
  %v1281 = vor.u32 %v1279, %v1277
  %v1330 = vunpack.c.l.b16 %v852
  %v1331 = vunpack.c.l.b16 %v853
  %v1332 = vunpack.c.l.b16 %v854
  %v1333 = vunpack.c.l.b16 %v855
  %v1334 = vunpack.c.l.b16 %v856
  %v1335 = vunpack.c.l.b16 %v857
  %v1336 = vunpack.c.l.b16 %v858
  %v1337 = vunpack.c.l.b16 %v859
  %v1338 = vunpack.c.l.b16 %v860
  %v1339 = vunpack.c.l.b16 %v861
  %v1340 = vunpack.c.l.b16 %v862
  %v1341 = vunpack.c.l.b16 %v863
  %v1342 = vunpack.c.l.b16 %v864
  %v1343 = vunpack.c.l.b16 %v865
  %v1344 = vunpack.c.l.b16 %v866
  %v1345 = vunpack.c.l.b16 %v867
  %v1346 = vpack.c.b16 %v1331, %v1330
  %v1347 = vpack.c.b16 %v1333, %v1332
  %v1348 = vpack.c.b16 %v1335, %v1334
  %v1349 = vpack.c.b16 %v1337, %v1336
  %v1350 = vpack.c.b16 %v1339, %v1338
  %v1351 = vpack.c.b16 %v1341, %v1340
  %v1352 = vpack.c.b16 %v1343, %v1342
  %v1353 = vpack.c.b16 %v1345, %v1344
  %1362 = vmatprep.subr.bf16.mxu0 0
  %1363 = vmatpush1.bf16.msra.mxu0 %v1346
  %1364 = vmatprep.subr.bf16.mxu0 0
  %1365 = vmatpush1.bf16.msra.mxu0 %v1347
  %1366 = vmatprep.subr.bf16.mxu0 0
  %1367 = vmatpush1.bf16.msra.mxu0 %v1348
  %1368 = vmatprep.subr.bf16.mxu0 0
  %1369 = vmatpush1.bf16.msra.mxu0 %v1349
  %1370 = vmatprep.subr.bf16.mxu0 0
  %1371 = vmatpush1.bf16.msra.mxu0 %v1350
  %1372 = vmatprep.subr.bf16.mxu0 0
  %1373 = vmatpush1.bf16.msra.mxu0 %v1351
  %1374 = vmatprep.subr.bf16.mxu0 0
  %1375 = vmatpush1.bf16.msra.mxu0 %v1352
  %1376 = vmatprep.subr.bf16.mxu0 0
  %1377 = vmatpush1.bf16.msra.mxu0 %v1353
  %1378 = vmatprep.subr.bf16.mxu0 0
  %1379 = vmatpush1.bf16.msra.mxu0 0
  %1380 = vmatprep.subr.bf16.mxu0 0
  %1381 = vmatpush1.bf16.msra.mxu0 0
  %1382 = vmatprep.subr.bf16.mxu0 0
  %1383 = vmatpush1.bf16.msra.mxu0 0
  %1384 = vmatprep.subr.bf16.mxu0 0
  %1385 = vmatpush1.bf16.msra.mxu0 0
  %1386 = vmatprep.subr.bf16.mxu0 0
  %1387 = vmatpush1.bf16.msra.mxu0 0
  %1388 = vmatprep.subr.bf16.mxu0 0
  %1389 = vmatpush1.bf16.msra.mxu0 0
  %1390 = vmatprep.subr.bf16.mxu0 0
  %1391 = vmatpush1.bf16.msra.mxu0 0
  %1392 = vmatprep.subr.bf16.mxu0 0
  %1393 = vmatpush1.bf16.msra.mxu0 0
  %1394 = vmatprep.mubr.bf16.mxu0 0
  %1395 = vmatmul.mubr.bf16.gmra.mrb[0].mxu0 %v1038
  %v1396 = vpop.f32.mrb[0].mxu0
  %v1397 = vadd.f32 0.0, %v1396
  %v1398 = vpop.f32.mrb[0].mxu0
  %v1399 = vpop.f32.mrb[0].mxu0
  %v1400 = vadd.f32 0.0, %v1399
  %v1401 = vpop.f32.mrb[0].mxu0
  %1402 = vmatprep.mubr.bf16.mxu0 0
  %1403 = vmatmul.mubr.bf16.gmra.mrb[0].mxu0 %v1046
  %v1404 = vpop.f32.mrb[0].mxu0
  %v1405 = vadd.f32 0.0, %v1404
  %v1406 = vpop.f32.mrb[0].mxu0
  %v1407 = vpop.f32.mrb[0].mxu0
  %v1408 = vadd.f32 0.0, %v1407
  %v1409 = vpop.f32.mrb[0].mxu0
  %1410 = vmatprep.mubr.bf16.mxu0 0
  %1411 = vmatmul.mubr.bf16.gmra.mrb[0].mxu0 %v1054
  %v1412 = vpop.f32.mrb[0].mxu0
  %v1413 = vadd.f32 0.0, %v1412
  %v1414 = vpop.f32.mrb[0].mxu0
  %v1415 = vpop.f32.mrb[0].mxu0
  %v1416 = vadd.f32 0.0, %v1415
  %v1417 = vpop.f32.mrb[0].mxu0
  %1418 = vmatprep.mubr.bf16.mxu0 0
  %1419 = vmatmul.mubr.bf16.gmra.mrb[0].mxu0 %v1062
  %v1420 = vpop.f32.mrb[0].mxu0
  %v1421 = vadd.f32 0.0, %v1420
  %v1422 = vpop.f32.mrb[0].mxu0
  %v1423 = vpop.f32.mrb[0].mxu0
  %v1424 = vadd.f32 0.0, %v1423
  %v1425 = vpop.f32.mrb[0].mxu0
  %1426 = vmatprep.mubr.bf16.mxu0 0
  %1427 = vmatmul.mubr.bf16.gmra.mrb[0].mxu0 %v1070
  %v1428 = vpop.f32.mrb[0].mxu0
  %v1429 = vadd.f32 0.0, %v1428
  %v1430 = vpop.f32.mrb[0].mxu0
  %v1431 = vpop.f32.mrb[0].mxu0
  %v1432 = vadd.f32 0.0, %v1431
  %v1433 = vpop.f32.mrb[0].mxu0
  %1434 = vmatprep.mubr.bf16.mxu0 0
  %1435 = vmatmul.mubr.bf16.gmra.mrb[0].mxu0 %v1078
  %v1436 = vpop.f32.mrb[0].mxu0
  %v1437 = vadd.f32 0.0, %v1436
  %v1438 = vpop.f32.mrb[0].mxu0
  %v1439 = vpop.f32.mrb[0].mxu0
  %v1440 = vadd.f32 0.0, %v1439
  %v1441 = vpop.f32.mrb[0].mxu0
  %1442 = vmatprep.mubr.bf16.mxu0 0
  %1443 = vmatmul.mubr.bf16.gmra.mrb[0].mxu0 %v1086
  %v1444 = vpop.f32.mrb[0].mxu0
  %v1445 = vadd.f32 0.0, %v1444
  %v1446 = vpop.f32.mrb[0].mxu0
  %v1447 = vpop.f32.mrb[0].mxu0
  %v1448 = vadd.f32 0.0, %v1447
  %v1449 = vpop.f32.mrb[0].mxu0
  %1450 = vmatprep.mubr.bf16.mxu0 0
  %1451 = vmatmul.mubr.bf16.gmra.mrb[0].mxu0 %v1094
  %v1452 = vpop.f32.mrb[0].mxu0
  %v1453 = vadd.f32 0.0, %v1452
  %v1454 = vpop.f32.mrb[0].mxu0
  %v1455 = vpop.f32.mrb[0].mxu0
  %v1456 = vadd.f32 0.0, %v1455
  %v1457 = vpop.f32.mrb[0].mxu0
  %1458 = vmatprep.mubr.bf16.mxu0 0
  %1459 = vmatmul.mubr.bf16.gmra.mrb[0].mxu0 %v1102
  %v1460 = vpop.f32.mrb[0].mxu0
  %v1461 = vadd.f32 0.0, %v1460
  %v1462 = vpop.f32.mrb[0].mxu0
  %v1463 = vpop.f32.mrb[0].mxu0
  %v1464 = vadd.f32 0.0, %v1463
  %v1465 = vpop.f32.mrb[0].mxu0
  %1466 = vmatprep.mubr.bf16.mxu0 0
  %1467 = vmatmul.mubr.bf16.gmra.mrb[0].mxu0 %v1110
  %v1468 = vpop.f32.mrb[0].mxu0
  %v1469 = vadd.f32 0.0, %v1468
  %v1470 = vpop.f32.mrb[0].mxu0
  %v1471 = vpop.f32.mrb[0].mxu0
  %v1472 = vadd.f32 0.0, %v1471
  %v1473 = vpop.f32.mrb[0].mxu0
  %1474 = vmatprep.mubr.bf16.mxu0 0
  %1475 = vmatmul.mubr.bf16.gmra.mrb[0].mxu0 %v1118
  %v1476 = vpop.f32.mrb[0].mxu0
  %v1477 = vadd.f32 0.0, %v1476
  %v1478 = vpop.f32.mrb[0].mxu0
  %v1479 = vpop.f32.mrb[0].mxu0
  %v1480 = vadd.f32 0.0, %v1479
  %v1481 = vpop.f32.mrb[0].mxu0
  %1482 = vmatprep.mubr.bf16.mxu0 0
  %1483 = vmatmul.mubr.bf16.gmra.mrb[0].mxu0 %v1126
  %v1484 = vpop.f32.mrb[0].mxu0
  %v1485 = vadd.f32 0.0, %v1484
  %v1486 = vpop.f32.mrb[0].mxu0
  %v1487 = vpop.f32.mrb[0].mxu0
  %v1488 = vadd.f32 0.0, %v1487
  %v1489 = vpop.f32.mrb[0].mxu0
  %1490 = vmatprep.mubr.bf16.mxu0 0
  %1491 = vmatmul.mubr.bf16.gmra.mrb[0].mxu0 %v1134
  %v1492 = vpop.f32.mrb[0].mxu0
  %v1493 = vadd.f32 0.0, %v1492
  %v1494 = vpop.f32.mrb[0].mxu0
  %v1495 = vpop.f32.mrb[0].mxu0
  %v1496 = vadd.f32 0.0, %v1495
  %v1497 = vpop.f32.mrb[0].mxu0
  %1498 = vmatprep.mubr.bf16.mxu0 0
  %1499 = vmatmul.mubr.bf16.gmra.mrb[0].mxu0 %v1142
  %v1500 = vpop.f32.mrb[0].mxu0
  %v1501 = vadd.f32 0.0, %v1500
  %v1502 = vpop.f32.mrb[0].mxu0
  %v1503 = vpop.f32.mrb[0].mxu0
  %v1504 = vadd.f32 0.0, %v1503
  %v1505 = vpop.f32.mrb[0].mxu0
  %1506 = vmatprep.mubr.bf16.mxu0 0
  %1507 = vmatmul.mubr.bf16.gmra.mrb[0].mxu0 %v1150
  %v1508 = vpop.f32.mrb[0].mxu0
  %v1509 = vadd.f32 0.0, %v1508
  %v1510 = vpop.f32.mrb[0].mxu0
  %v1511 = vpop.f32.mrb[0].mxu0
  %v1512 = vadd.f32 0.0, %v1511
  %v1513 = vpop.f32.mrb[0].mxu0
  %1514 = vmatprep.mubr.bf16.mxu0 0
  %1515 = vmatmul.mubr.bf16.gmra.mrb[0].mxu0 %v1158
  %v1516 = vpop.f32.mrb[0].mxu0
  %v1517 = vadd.f32 0.0, %v1516
  %v1518 = vpop.f32.mrb[0].mxu0
  %v1519 = vpop.f32.mrb[0].mxu0
  %v1520 = vadd.f32 0.0, %v1519
  %v1521 = vpop.f32.mrb[0].mxu0
  %1522 = vmatprep.mubr.bf16.mxu0 0
  %1523 = vmatmul.mubr.bf16.gmra.mrb[0].mxu0 %v1166
  %v1524 = vpop.f32.mrb[0].mxu0
  %v1525 = vadd.f32 0.0, %v1524
  %v1526 = vpop.f32.mrb[0].mxu0
  %v1527 = vpop.f32.mrb[0].mxu0
  %v1528 = vadd.f32 0.0, %v1527
  %v1529 = vpop.f32.mrb[0].mxu0
  %1530 = vmatprep.mubr.bf16.mxu0 0
  %1531 = vmatmul.mubr.bf16.gmra.mrb[0].mxu0 %v1174
  %v1532 = vpop.f32.mrb[0].mxu0
  %v1533 = vadd.f32 0.0, %v1532
  %v1534 = vpop.f32.mrb[0].mxu0
  %v1535 = vpop.f32.mrb[0].mxu0
  %v1536 = vadd.f32 0.0, %v1535
  %v1537 = vpop.f32.mrb[0].mxu0
  %1538 = vmatprep.mubr.bf16.mxu0 0
  %1539 = vmatmul.mubr.bf16.gmra.mrb[0].mxu0 %v1182
  %v1540 = vpop.f32.mrb[0].mxu0
  %v1541 = vadd.f32 0.0, %v1540
  %v1542 = vpop.f32.mrb[0].mxu0
  %v1543 = vpop.f32.mrb[0].mxu0
  %v1544 = vadd.f32 0.0, %v1543
  %v1545 = vpop.f32.mrb[0].mxu0
  %1546 = vmatprep.mubr.bf16.mxu0 0
  %1547 = vmatmul.mubr.bf16.gmra.mrb[0].mxu0 %v1190
  %v1548 = vpop.f32.mrb[0].mxu0
  %v1549 = vadd.f32 0.0, %v1548
  %v1550 = vpop.f32.mrb[0].mxu0
  %v1551 = vpop.f32.mrb[0].mxu0
  %v1552 = vadd.f32 0.0, %v1551
  %v1553 = vpop.f32.mrb[0].mxu0
  %1554 = vmatprep.mubr.bf16.mxu0 0
  %1555 = vmatmul.mubr.bf16.gmra.mrb[0].mxu0 %v1198
  %v1556 = vpop.f32.mrb[0].mxu0
  %v1557 = vadd.f32 0.0, %v1556
  %v1558 = vpop.f32.mrb[0].mxu0
  %v1559 = vpop.f32.mrb[0].mxu0
  %v1560 = vadd.f32 0.0, %v1559
  %v1561 = vpop.f32.mrb[0].mxu0
  %1562 = vmatprep.mubr.bf16.mxu0 0
  %1563 = vmatmul.mubr.bf16.gmra.mrb[0].mxu0 %v1206
  %v1564 = vpop.f32.mrb[0].mxu0
  %v1565 = vadd.f32 0.0, %v1564
  %v1566 = vpop.f32.mrb[0].mxu0
  %v1567 = vpop.f32.mrb[0].mxu0
  %v1568 = vadd.f32 0.0, %v1567
  %v1569 = vpop.f32.mrb[0].mxu0
  %1570 = vmatprep.mubr.bf16.mxu0 0
  %1571 = vmatmul.mubr.bf16.gmra.mrb[0].mxu0 %v1214
  %v1572 = vpop.f32.mrb[0].mxu0
  %v1573 = vadd.f32 0.0, %v1572
  %v1574 = vpop.f32.mrb[0].mxu0
  %v1575 = vpop.f32.mrb[0].mxu0
  %v1576 = vadd.f32 0.0, %v1575
  %v1577 = vpop.f32.mrb[0].mxu0
  %1578 = vmatprep.mubr.bf16.mxu0 0
  %1579 = vmatmul.mubr.bf16.gmra.mrb[0].mxu0 %v1222
  %v1580 = vpop.f32.mrb[0].mxu0
  %v1581 = vadd.f32 0.0, %v1580
  %v1582 = vpop.f32.mrb[0].mxu0
  %v1583 = vpop.f32.mrb[0].mxu0
  %v1584 = vadd.f32 0.0, %v1583
  %v1585 = vpop.f32.mrb[0].mxu0
  %1586 = vmatprep.mubr.bf16.mxu0 0
  %1587 = vmatmul.mubr.bf16.gmra.mrb[0].mxu0 %v1230
  %v1588 = vpop.f32.mrb[0].mxu0
  %v1589 = vadd.f32 0.0, %v1588
  %v1590 = vpop.f32.mrb[0].mxu0
  %v1591 = vpop.f32.mrb[0].mxu0
  %v1592 = vadd.f32 0.0, %v1591
  %v1593 = vpop.f32.mrb[0].mxu0
  %1594 = vmatprep.mubr.bf16.mxu0 0
  %1595 = vmatmul.mubr.bf16.gmra.mrb[0].mxu0 %v1238
  %v1596 = vpop.f32.mrb[0].mxu0
  %v1597 = vadd.f32 0.0, %v1596
  %v1598 = vpop.f32.mrb[0].mxu0
  %v1599 = vpop.f32.mrb[0].mxu0
  %v1600 = vadd.f32 0.0, %v1599
  %v1601 = vpop.f32.mrb[0].mxu0
  %1602 = vmatprep.mubr.bf16.mxu0 0
  %1603 = vmatmul.mubr.bf16.gmra.mrb[0].mxu0 %v1246
  %v1604 = vpop.f32.mrb[0].mxu0
  %v1605 = vadd.f32 0.0, %v1604
  %v1606 = vpop.f32.mrb[0].mxu0
  %v1607 = vpop.f32.mrb[0].mxu0
  %v1608 = vadd.f32 0.0, %v1607
  %v1609 = vpop.f32.mrb[0].mxu0
  %1610 = vmatprep.mubr.bf16.mxu0 0
  %1611 = vmatmul.mubr.bf16.gmra.mrb[0].mxu0 %v1254
  %v1612 = vpop.f32.mrb[0].mxu0
  %v1613 = vadd.f32 0.0, %v1612
  %v1614 = vpop.f32.mrb[0].mxu0
  %v1615 = vpop.f32.mrb[0].mxu0
  %v1616 = vadd.f32 0.0, %v1615
  %v1617 = vpop.f32.mrb[0].mxu0
  %1618 = vmatprep.mubr.bf16.mxu0 0
  %1619 = vmatmul.mubr.bf16.gmra.mrb[0].mxu0 %v1262
  %v1620 = vpop.f32.mrb[0].mxu0
  %v1621 = vadd.f32 0.0, %v1620
  %v1622 = vpop.f32.mrb[0].mxu0
  %v1623 = vpop.f32.mrb[0].mxu0
  %v1624 = vadd.f32 0.0, %v1623
  %v1625 = vpop.f32.mrb[0].mxu0
  %1626 = vmatprep.mubr.bf16.mxu0 0
  %1627 = vmatmul.mubr.bf16.gmra.mrb[0].mxu0 %v1270
  %v1628 = vpop.f32.mrb[0].mxu0
  %v1629 = vadd.f32 0.0, %v1628
  %v1630 = vpop.f32.mrb[0].mxu0
  %v1631 = vpop.f32.mrb[0].mxu0
  %v1632 = vadd.f32 0.0, %v1631
  %v1633 = vpop.f32.mrb[0].mxu0
  %1634 = vmatprep.mubr.bf16.mxu0 0
  %1635 = vmatmul.mubr.bf16.gmra.mrb[0].mxu0 %v1278
  %v1636 = vpop.f32.mrb[0].mxu0
  %v1637 = vadd.f32 0.0, %v1636
  %v1638 = vpop.f32.mrb[0].mxu0
  %v1639 = vpop.f32.mrb[0].mxu0
  %v1640 = vadd.f32 0.0, %v1639
  %v1641 = vpop.f32.mrb[0].mxu0
  %1642 = vmatprep.mubr.bf16.mxu0 0
  %1643 = vmatmul.mubr.bf16.gmra.mrb[0].mxu0 %v1281
  %v1644 = vpop.f32.mrb[0].mxu0
  %v1645 = vadd.f32 0.0, %v1644
  %v1646 = vpop.f32.mrb[0].mxu0
  %v1647 = vpop.f32.mrb[0].mxu0
  %v1648 = vpop.f32.mrb[0].mxu0
  %1649 = vdwg.mxu0
  %v1650 = vadd.f32 %v725, %v1397
  %v1651 = vadd.f32 %v726, %v1400
  %v1652 = vadd.f32 %v727, %v1405
  %v1653 = vadd.f32 %v728, %v1408
  %v1654 = vadd.f32 %v729, %v1413
  %v1655 = vadd.f32 %v730, %v1416
  %v1656 = vadd.f32 %v731, %v1421
  %v1657 = vadd.f32 %v732, %v1424
  %v1658 = vadd.f32 %v733, %v1429
  %v1659 = vadd.f32 %v734, %v1432
  %v1660 = vadd.f32 %v735, %v1437
  %v1661 = vadd.f32 %v736, %v1440
  %v1662 = vadd.f32 %v737, %v1445
  %v1663 = vadd.f32 %v738, %v1448
  %v1664 = vadd.f32 %v739, %v1453
  %v1665 = vadd.f32 %v740, %v1456
  %v1666 = vadd.f32 %v741, %v1461
  %v1667 = vadd.f32 %v742, %v1464
  %v1668 = vadd.f32 %v743, %v1469
  %v1669 = vadd.f32 %v744, %v1472
  %v1670 = vadd.f32 %v745, %v1477
  %v1671 = vadd.f32 %v746, %v1480
  %v1672 = vadd.f32 %v747, %v1485
  %v1673 = vadd.f32 %v748, %v1488
  %v1674 = vadd.f32 %v749, %v1493
  %v1675 = vadd.f32 %v750, %v1496
  %v1676 = vadd.f32 %v751, %v1501
  %v1677 = vadd.f32 %v752, %v1504
  %v1678 = vadd.f32 %v753, %v1509
  %v1679 = vadd.f32 %v754, %v1512
  %v1680 = vadd.f32 %v755, %v1517
  %v1681 = vadd.f32 %v756, %v1520
  %v1682 = vadd.f32 %v757, %v1525
  %v1683 = vadd.f32 %v758, %v1528
  %v1684 = vadd.f32 %v759, %v1533
  %v1685 = vadd.f32 %v760, %v1536
  %v1686 = vadd.f32 %v761, %v1541
  %v1687 = vadd.f32 %v762, %v1544
  %v1688 = vadd.f32 %v763, %v1549
  %v1689 = vadd.f32 %v764, %v1552
  %v1690 = vadd.f32 %v765, %v1557
  %v1691 = vadd.f32 %v766, %v1560
  %v1692 = vadd.f32 %v767, %v1565
  %v1693 = vadd.f32 %v768, %v1568
  %v1694 = vadd.f32 %v769, %v1573
  %v1695 = vadd.f32 %v770, %v1576
  %v1696 = vadd.f32 %v771, %v1581
  %v1697 = vadd.f32 %v772, %v1584
  %v1698 = vadd.f32 %v773, %v1589
  %v1699 = vadd.f32 %v774, %v1592
  %v1700 = vadd.f32 %v775, %v1597
  %v1701 = vadd.f32 %v776, %v1600
  %v1702 = vadd.f32 %v777, %v1605
  %v1703 = vadd.f32 %v778, %v1608
  %v1704 = vadd.f32 %v779, %v1613
  %v1705 = vadd.f32 %v780, %v1616
  %v1706 = vadd.f32 %v781, %v1621
  %v1707 = vadd.f32 %v782, %v1624
  %v1708 = vadd.f32 %v783, %v1629
  %v1709 = vadd.f32 %v784, %v1632
  %v1710 = vadd.f32 %v785, %v1637
  %v1711 = vadd.f32 %v786, %v1640
  %v1712 = vadd.f32 %v787, %v1645
  %1713 = vst [vmem:[#allocation4] sm:$0xff] %v1650
  %1714 = vst [vmem:[#allocation4 + $0x8] sm:$0xff] %v1651
  %1715 = vst [vmem:[#allocation4 + $0x10] sm:$0xff] %v1652
  %1716 = vst [vmem:[#allocation4 + $0x18] sm:$0xff] %v1653
  %1717 = vst [vmem:[#allocation4 + $0x20] sm:$0xff] %v1654
  %1718 = vst [vmem:[#allocation4 + $0x28] sm:$0xff] %v1655
  %1719 = vst [vmem:[#allocation4 + $0x30] sm:$0xff] %v1656
  %1720 = vst [vmem:[#allocation4 + $0x38] sm:$0xff] %v1657
  %1721 = vst [vmem:[#allocation4 + $0x40] sm:$0xff] %v1658
  %1722 = vst [vmem:[#allocation4 + $0x48] sm:$0xff] %v1659
  %1723 = vst [vmem:[#allocation4 + $0x50] sm:$0xff] %v1660
  %1724 = vst [vmem:[#allocation4 + $0x58] sm:$0xff] %v1661
  %1725 = vst [vmem:[#allocation4 + $0x60] sm:$0xff] %v1662
  %1726 = vst [vmem:[#allocation4 + $0x68] sm:$0xff] %v1663
  %1727 = vst [vmem:[#allocation4 + $0x70] sm:$0xff] %v1664
  %1728 = vst [vmem:[#allocation4 + $0x78] sm:$0xff] %v1665
  %1729 = vst [vmem:[#allocation4 + $0x80] sm:$0xff] %v1666
  %1730 = vst [vmem:[#allocation4 + $0x88] sm:$0xff] %v1667
  %1731 = vst [vmem:[#allocation4 + $0x90] sm:$0xff] %v1668
  %1732 = vst [vmem:[#allocation4 + $0x98] sm:$0xff] %v1669
  %1733 = vst [vmem:[#allocation4 + $0xa0] sm:$0xff] %v1670
  %1734 = vst [vmem:[#allocation4 + $0xa8] sm:$0xff] %v1671
  %1735 = vst [vmem:[#allocation4 + $0xb0] sm:$0xff] %v1672
  %1736 = vst [vmem:[#allocation4 + $0xb8] sm:$0xff] %v1673
  %1737 = vst [vmem:[#allocation4 + $0xc0] sm:$0xff] %v1674
  %1738 = vst [vmem:[#allocation4 + $0xc8] sm:$0xff] %v1675
  %1739 = vst [vmem:[#allocation4 + $0xd0] sm:$0xff] %v1676
  %1740 = vst [vmem:[#allocation4 + $0xd8] sm:$0xff] %v1677
  %1741 = vst [vmem:[#allocation4 + $0xe0] sm:$0xff] %v1678
  %1742 = vst [vmem:[#allocation4 + $0xe8] sm:$0xff] %v1679
  %1743 = vst [vmem:[#allocation4 + $0xf0] sm:$0xff] %v1680
  %1744 = vst [vmem:[#allocation4 + $0xf8] sm:$0xff] %v1681
  %1745 = vst [vmem:[#allocation4 + $0x100] sm:$0xff] %v1682
  %1746 = vst [vmem:[#allocation4 + $0x108] sm:$0xff] %v1683
  %1747 = vst [vmem:[#allocation4 + $0x110] sm:$0xff] %v1684
  %1748 = vst [vmem:[#allocation4 + $0x118] sm:$0xff] %v1685
  %1749 = vst [vmem:[#allocation4 + $0x120] sm:$0xff] %v1686
  %1750 = vst [vmem:[#allocation4 + $0x128] sm:$0xff] %v1687
  %1751 = vst [vmem:[#allocation4 + $0x130] sm:$0xff] %v1688
  %1752 = vst [vmem:[#allocation4 + $0x138] sm:$0xff] %v1689
  %1753 = vst [vmem:[#allocation4 + $0x140] sm:$0xff] %v1690
  %1754 = vst [vmem:[#allocation4 + $0x148] sm:$0xff] %v1691
  %1755 = vst [vmem:[#allocation4 + $0x150] sm:$0xff] %v1692
  %1756 = vst [vmem:[#allocation4 + $0x158] sm:$0xff] %v1693
  %1757 = vst [vmem:[#allocation4 + $0x160] sm:$0xff] %v1694
  %1758 = vst [vmem:[#allocation4 + $0x168] sm:$0xff] %v1695
  %1759 = vst [vmem:[#allocation4 + $0x170] sm:$0xff] %v1696
  %1760 = vst [vmem:[#allocation4 + $0x178] sm:$0xff] %v1697
  %1761 = vst [vmem:[#allocation4 + $0x180] sm:$0xff] %v1698
  %1762 = vst [vmem:[#allocation4 + $0x188] sm:$0xff] %v1699
  %1763 = vst [vmem:[#allocation4 + $0x190] sm:$0xff] %v1700
  %1764 = vst [vmem:[#allocation4 + $0x198] sm:$0xff] %v1701
  %1765 = vst [vmem:[#allocation4 + $0x1a0] sm:$0xff] %v1702
  %1766 = vst [vmem:[#allocation4 + $0x1a8] sm:$0xff] %v1703
  %1767 = vst [vmem:[#allocation4 + $0x1b0] sm:$0xff] %v1704
  %1768 = vst [vmem:[#allocation4 + $0x1b8] sm:$0xff] %v1705
  %1769 = vst [vmem:[#allocation4 + $0x1c0] sm:$0xff] %v1706
  %1770 = vst [vmem:[#allocation4 + $0x1c8] sm:$0xff] %v1707
  %1771 = vst [vmem:[#allocation4 + $0x1d0] sm:$0xff] %v1708
  %1772 = vst [vmem:[#allocation4 + $0x1d8] sm:$0xff] %v1709
  %1773 = vst [vmem:[#allocation4 + $0x1e0] sm:$0xff] %v1710
  %1774 = vst [vmem:[#allocation4 + $0x1e8] sm:$0xff] %v1711
  %1775 = vst [vmem:[#allocation4 + $0x1f0] sm:$0x3f] %v1712
  %v1776 = vld [vmem:[#allocation4] sm:$0xff]
  %v1777 = vld [vmem:[#allocation4 + $0x8] sm:$0xff]
  %v1778 = vld [vmem:[#allocation4 + $0x10] sm:$0xff]
  %v1779 = vld [vmem:[#allocation4 + $0x18] sm:$0xff]
  %v1780 = vld [vmem:[#allocation4 + $0x20] sm:$0xff]
  %v1781 = vld [vmem:[#allocation4 + $0x28] sm:$0xff]
  %v1782 = vld [vmem:[#allocation4 + $0x30] sm:$0xff]
  %v1783 = vld [vmem:[#allocation4 + $0x38] sm:$0xff]
  %v1784 = vld [vmem:[#allocation4 + $0x40] sm:$0xff]
  %v1785 = vld [vmem:[#allocation4 + $0x48] sm:$0xff]
  %v1786 = vld [vmem:[#allocation4 + $0x50] sm:$0xff]
  %v1787 = vld [vmem:[#allocation4 + $0x58] sm:$0xff]
  %v1788 = vld [vmem:[#allocation4 + $0x60] sm:$0xff]
  %v1789 = vld [vmem:[#allocation4 + $0x68] sm:$0xff]
  %v1790 = vld [vmem:[#allocation4 + $0x70] sm:$0xff]
  %v1791 = vld [vmem:[#allocation4 + $0x78] sm:$0xff]
  %v1792 = vld [vmem:[#allocation4 + $0x80] sm:$0xff]
  %v1793 = vld [vmem:[#allocation4 + $0x88] sm:$0xff]
  %v1794 = vld [vmem:[#allocation4 + $0x90] sm:$0xff]
  %v1795 = vld [vmem:[#allocation4 + $0x98] sm:$0xff]
  %v1796 = vld [vmem:[#allocation4 + $0xa0] sm:$0xff]
  %v1797 = vld [vmem:[#allocation4 + $0xa8] sm:$0xff]
  %v1798 = vld [vmem:[#allocation4 + $0xb0] sm:$0xff]
  %v1799 = vld [vmem:[#allocation4 + $0xb8] sm:$0xff]
  %v1800 = vld [vmem:[#allocation4 + $0xc0] sm:$0xff]
  %v1801 = vld [vmem:[#allocation4 + $0xc8] sm:$0xff]
  %v1802 = vld [vmem:[#allocation4 + $0xd0] sm:$0xff]
  %v1803 = vld [vmem:[#allocation4 + $0xd8] sm:$0xff]
  %v1804 = vld [vmem:[#allocation4 + $0xe0] sm:$0xff]
  %v1805 = vld [vmem:[#allocation4 + $0xe8] sm:$0xff]
  %v1806 = vld [vmem:[#allocation4 + $0xf0] sm:$0xff]
  %v1807 = vld [vmem:[#allocation4 + $0xf8] sm:$0xff]
  %v1808 = vld [vmem:[#allocation4 + $0x100] sm:$0xff]
  %v1809 = vld [vmem:[#allocation4 + $0x108] sm:$0xff]
  %v1810 = vld [vmem:[#allocation4 + $0x110] sm:$0xff]
  %v1811 = vld [vmem:[#allocation4 + $0x118] sm:$0xff]
  %v1812 = vld [vmem:[#allocation4 + $0x120] sm:$0xff]
  %v1813 = vld [vmem:[#allocation4 + $0x128] sm:$0xff]
  %v1814 = vld [vmem:[#allocation4 + $0x130] sm:$0xff]
  %v1815 = vld [vmem:[#allocation4 + $0x138] sm:$0xff]
  %v1816 = vld [vmem:[#allocation4 + $0x140] sm:$0xff]
  %v1817 = vld [vmem:[#allocation4 + $0x148] sm:$0xff]
  %v1818 = vld [vmem:[#allocation4 + $0x150] sm:$0xff]
  %v1819 = vld [vmem:[#allocation4 + $0x158] sm:$0xff]
  %v1820 = vld [vmem:[#allocation4 + $0x160] sm:$0xff]
  %v1821 = vld [vmem:[#allocation4 + $0x168] sm:$0xff]
  %v1822 = vld [vmem:[#allocation4 + $0x170] sm:$0xff]
  %v1823 = vld [vmem:[#allocation4 + $0x178] sm:$0xff]
  %v1824 = vld [vmem:[#allocation4 + $0x180] sm:$0xff]
  %v1825 = vld [vmem:[#allocation4 + $0x188] sm:$0xff]
  %v1826 = vld [vmem:[#allocation4 + $0x190] sm:$0xff]
  %v1827 = vld [vmem:[#allocation4 + $0x198] sm:$0xff]
  %v1828 = vld [vmem:[#allocation4 + $0x1a0] sm:$0xff]
  %v1829 = vld [vmem:[#allocation4 + $0x1a8] sm:$0xff]
  %v1830 = vld [vmem:[#allocation4 + $0x1b0] sm:$0xff]
  %v1831 = vld [vmem:[#allocation4 + $0x1b8] sm:$0xff]
  %v1832 = vld [vmem:[#allocation4 + $0x1c0] sm:$0xff]
  %v1833 = vld [vmem:[#allocation4 + $0x1c8] sm:$0xff]
  %v1834 = vld [vmem:[#allocation4 + $0x1d0] sm:$0xff]
  %v1835 = vld [vmem:[#allocation4 + $0x1d8] sm:$0xff]
  %v1836 = vld [vmem:[#allocation4 + $0x1e0] sm:$0xff]
  %v1837 = vld [vmem:[#allocation4 + $0x1e8] sm:$0xff]
  %v1838 = vld [vmem:[#allocation4 + $0x1f0] sm:$0x3f]
  %v1839 = vld [vmem:[%s0] sm:$0xe]
  %v1840 = vld [vmem:[%s0 + $0x4] sm:$0xf]
  %v1841 = vld [vmem:[%s0 + $0x8] sm:$0xf]
  %v1842 = vld [vmem:[%s0 + $0xc] sm:$0xf]
  %v1843 = vld [vmem:[%s0 + $0x10] sm:$0xf]
  %v1844 = vld [vmem:[%s0 + $0x14] sm:$0xf]
  %v1845 = vld [vmem:[%s0 + $0x18] sm:$0xf]
  %v1846 = vld [vmem:[%s0 + $0x1c] sm:$0xf]
  %v1847 = vld [vmem:[%s0 + $0x20] sm:$0xf]
  %v1848 = vld [vmem:[%s0 + $0x24] sm:$0xf]
  %v1849 = vld [vmem:[%s0 + $0x28] sm:$0xf]
  %v1850 = vld [vmem:[%s0 + $0x2c] sm:$0xf]
  %v1851 = vld [vmem:[%s0 + $0x30] sm:$0xf]
  %v1852 = vld [vmem:[%s0 + $0x34] sm:$0xf]
  %v1853 = vld [vmem:[%s0 + $0x38] sm:$0xf]
  %v1854 = vld [vmem:[%s0 + $0x3c] sm:$0xf]
  %v1855 = vld [vmem:[%s0 + $0x40] sm:$0xf]
  %v1856 = vld [vmem:[%s0 + $0x44] sm:$0xf]
  %v1857 = vld [vmem:[%s0 + $0x48] sm:$0xf]
  %v1858 = vld [vmem:[%s0 + $0x4c] sm:$0xf]
  %v1859 = vld [vmem:[%s0 + $0x50] sm:$0xf]
  %v1860 = vld [vmem:[%s0 + $0x54] sm:$0xf]
  %v1861 = vld [vmem:[%s0 + $0x58] sm:$0xf]
  %v1862 = vld [vmem:[%s0 + $0x5c] sm:$0xf]
  %v1863 = vld [vmem:[%s0 + $0x60] sm:$0xf]
  %v1864 = vld [vmem:[%s0 + $0x64] sm:$0xf]
  %v1865 = vld [vmem:[%s0 + $0x68] sm:$0xf]
  %v1866 = vld [vmem:[%s0 + $0x6c] sm:$0xf]
  %v1867 = vld [vmem:[%s0 + $0x70] sm:$0xf]
  %v1868 = vld [vmem:[%s0 + $0x74] sm:$0xf]
  %v1869 = vld [vmem:[%s0 + $0x78] sm:$0xf]
  %v1870 = vld [vmem:[%s0 + $0x7c] sm:$0xf]
  %v1871 = vld [vmem:[%s0 + $0x80] sm:$0xf]
  %v1872 = vld [vmem:[%s0 + $0x84] sm:$0xf]
  %v1873 = vld [vmem:[%s0 + $0x88] sm:$0xf]
  %v1874 = vld [vmem:[%s0 + $0x8c] sm:$0xf]
  %v1875 = vld [vmem:[%s0 + $0x90] sm:$0xf]
  %v1876 = vld [vmem:[%s0 + $0x94] sm:$0xf]
  %v1877 = vld [vmem:[%s0 + $0x98] sm:$0xf]
  %v1878 = vld [vmem:[%s0 + $0x9c] sm:$0xf]
  %v1879 = vld [vmem:[%s0 + $0xa0] sm:$0xf]
  %v1880 = vld [vmem:[%s0 + $0xa4] sm:$0xf]
  %v1881 = vld [vmem:[%s0 + $0xa8] sm:$0xf]
  %v1882 = vld [vmem:[%s0 + $0xac] sm:$0xf]
  %v1883 = vld [vmem:[%s0 + $0xb0] sm:$0xf]
  %v1884 = vld [vmem:[%s0 + $0xb4] sm:$0xf]
  %v1885 = vld [vmem:[%s0 + $0xb8] sm:$0xf]
  %v1886 = vld [vmem:[%s0 + $0xbc] sm:$0xf]
  %v1887 = vld [vmem:[%s0 + $0xc0] sm:$0xf]
  %v1888 = vld [vmem:[%s0 + $0xc4] sm:$0xf]
  %v1889 = vld [vmem:[%s0 + $0xc8] sm:$0xf]
  %v1890 = vld [vmem:[%s0 + $0xcc] sm:$0xf]
  %v1891 = vld [vmem:[%s0 + $0xd0] sm:$0xf]
  %v1892 = vld [vmem:[%s0 + $0xd4] sm:$0xf]
  %v1893 = vld [vmem:[%s0 + $0xd8] sm:$0xf]
  %v1894 = vld [vmem:[%s0 + $0xdc] sm:$0xf]
  %v1895 = vld [vmem:[%s0 + $0xe0] sm:$0xf]
  %v1896 = vld [vmem:[%s0 + $0xe4] sm:$0xf]
  %v1897 = vld [vmem:[%s0 + $0xe8] sm:$0xf]
  %v1898 = vld [vmem:[%s0 + $0xec] sm:$0xf]
  %v1899 = vld [vmem:[%s0 + $0xf0] sm:$0xf]
  %v1900 = vld [vmem:[%s0 + $0xf4] sm:$0xf]
  %v1901 = vld [vmem:[%s0 + $0xf8] sm:$0xf]
  %s1902 = scalar_lea.vmem %s3, 128
  %v1903 = vld [vmem:[%s1902] sm:$0xf]
  %v1904 = vld [vmem:[%s1902 + $0x4] sm:$0xf]
  %v1905 = vld [vmem:[%s1902 + $0x8] sm:$0xf]
  %v1906 = vld [vmem:[%s1902 + $0xc] sm:$0xf]
  %v1907 = vld [vmem:[%s1902 + $0x10] sm:$0xf]
  %v1908 = vld [vmem:[%s1902 + $0x14] sm:$0xf]
  %v1909 = vld [vmem:[%s1902 + $0x18] sm:$0xf]
  %v1910 = vld [vmem:[%s1902 + $0x1c] sm:$0xf]
  %v1911 = vld [vmem:[%s1902 + $0x20] sm:$0xf]
  %v1912 = vld [vmem:[%s1902 + $0x24] sm:$0xf]
  %v1913 = vld [vmem:[%s1902 + $0x28] sm:$0xf]
  %v1914 = vld [vmem:[%s1902 + $0x2c] sm:$0xf]
  %v1915 = vld [vmem:[%s1902 + $0x30] sm:$0xf]
  %v1916 = vld [vmem:[%s1902 + $0x34] sm:$0xf]
  %v1917 = vld [vmem:[%s1902 + $0x38] sm:$0xf]
  %v1918 = vld [vmem:[%s1902 + $0x3c] sm:$0xf]
  %v1982 = vunpack.c.l.b16 %v1839
  %v1983 = vunpack.c.l.b16 %v1840
  %v1984 = vunpack.c.l.b16 %v1841
  %v1985 = vunpack.c.l.b16 %v1842
  %v1986 = vunpack.c.l.b16 %v1843
  %v1987 = vunpack.c.l.b16 %v1844
  %v1988 = vunpack.c.l.b16 %v1845
  %v1989 = vunpack.c.l.b16 %v1846
  %v1990 = vunpack.c.l.b16 %v1847
  %v1991 = vunpack.c.l.b16 %v1848
  %v1992 = vunpack.c.l.b16 %v1849
  %v1993 = vunpack.c.l.b16 %v1850
  %v1994 = vunpack.c.l.b16 %v1851
  %v1995 = vunpack.c.l.b16 %v1852
  %v1996 = vunpack.c.l.b16 %v1853
  %v1997 = vunpack.c.l.b16 %v1854
  %v1998 = vunpack.c.l.b16 %v1855
  %v1999 = vunpack.c.l.b16 %v1856
  %v2000 = vunpack.c.l.b16 %v1857
  %v2001 = vunpack.c.l.b16 %v1858
  %v2002 = vunpack.c.l.b16 %v1859
  %v2003 = vunpack.c.l.b16 %v1860
  %v2004 = vunpack.c.l.b16 %v1861
  %v2005 = vunpack.c.l.b16 %v1862
  %v2006 = vunpack.c.l.b16 %v1863
  %v2007 = vunpack.c.l.b16 %v1864
  %v2008 = vunpack.c.l.b16 %v1865
  %v2009 = vunpack.c.l.b16 %v1866
  %v2010 = vunpack.c.l.b16 %v1867
  %v2011 = vunpack.c.l.b16 %v1868
  %v2012 = vunpack.c.l.b16 %v1869
  %v2013 = vunpack.c.l.b16 %v1870
  %v2014 = vunpack.c.l.b16 %v1871
  %v2015 = vunpack.c.l.b16 %v1872
  %v2016 = vunpack.c.l.b16 %v1873
  %v2017 = vunpack.c.l.b16 %v1874
  %v2018 = vunpack.c.l.b16 %v1875
  %v2019 = vunpack.c.l.b16 %v1876
  %v2020 = vunpack.c.l.b16 %v1877
  %v2021 = vunpack.c.l.b16 %v1878
  %v2022 = vunpack.c.l.b16 %v1879
  %v2023 = vunpack.c.l.b16 %v1880
  %v2024 = vunpack.c.l.b16 %v1881
  %v2025 = vunpack.c.l.b16 %v1882
  %v2026 = vunpack.c.l.b16 %v1883
  %v2027 = vunpack.c.l.b16 %v1884
  %v2028 = vunpack.c.l.b16 %v1885
  %v2029 = vunpack.c.l.b16 %v1886
  %v2030 = vunpack.c.l.b16 %v1887
  %v2031 = vunpack.c.l.b16 %v1888
  %v2032 = vunpack.c.l.b16 %v1889
  %v2033 = vunpack.c.l.b16 %v1890
  %v2034 = vunpack.c.l.b16 %v1891
  %v2035 = vunpack.c.l.b16 %v1892
  %v2036 = vunpack.c.l.b16 %v1893
  %v2037 = vunpack.c.l.b16 %v1894
  %v2038 = vunpack.c.l.b16 %v1895
  %v2039 = vunpack.c.l.b16 %v1896
  %v2040 = vunpack.c.l.b16 %v1897
  %v2041 = vunpack.c.l.b16 %v1898
  %v2042 = vunpack.c.l.b16 %v1899
  %v2043 = vunpack.c.l.b16 %v1900
  %v2044 = vunpack.c.l.b16 %v1901
  %v2045 = vpack.c.b16 %v1983, %v1982
  %v2046 = vpack.c.b16 %v1985, %v1984
  %v2047 = vpack.c.b16 %v1987, %v1986
  %v2048 = vpack.c.b16 %v1989, %v1988
  %v2049 = vpack.c.b16 %v1991, %v1990
  %v2050 = vpack.c.b16 %v1993, %v1992
  %v2051 = vpack.c.b16 %v1995, %v1994
  %v2052 = vpack.c.b16 %v1997, %v1996
  %v2053 = vpack.c.b16 %v1999, %v1998
  %v2054 = vpack.c.b16 %v2001, %v2000
  %v2055 = vpack.c.b16 %v2003, %v2002
  %v2056 = vpack.c.b16 %v2005, %v2004
  %v2057 = vpack.c.b16 %v2007, %v2006
  %v2058 = vpack.c.b16 %v2009, %v2008
  %v2059 = vpack.c.b16 %v2011, %v2010
  %v2060 = vpack.c.b16 %v2013, %v2012
  %v2061 = vpack.c.b16 %v2015, %v2014
  %v2062 = vpack.c.b16 %v2017, %v2016
  %v2063 = vpack.c.b16 %v2019, %v2018
  %v2064 = vpack.c.b16 %v2021, %v2020
  %v2065 = vpack.c.b16 %v2023, %v2022
  %v2066 = vpack.c.b16 %v2025, %v2024
  %v2067 = vpack.c.b16 %v2027, %v2026
  %v2068 = vpack.c.b16 %v2029, %v2028
  %v2069 = vpack.c.b16 %v2031, %v2030
  %v2070 = vpack.c.b16 %v2033, %v2032
  %v2071 = vpack.c.b16 %v2035, %v2034
  %v2072 = vpack.c.b16 %v2037, %v2036
  %v2073 = vpack.c.b16 %v2039, %v2038
  %v2074 = vpack.c.b16 %v2041, %v2040
  %v2075 = vpack.c.b16 %v2043, %v2042
  %v2076 = vpack.c.b16 %v2044, %v2044
  %vm2077 = vcmask 1046528
  %v2078 = vrot.slane %v2045, 1
  %v2079 = vrot.slane %v2046, 1
  %v2080 = vsel %vm2077, %v2078, %v2079
  %v2081 = vrot.slane %v2047, 1
  %v2082 = vsel %vm2077, %v2079, %v2081
  %v2083 = vrot.slane %v2048, 1
  %v2084 = vsel %vm2077, %v2081, %v2083
  %v2085 = vrot.slane %v2049, 1
  %v2086 = vsel %vm2077, %v2083, %v2085
  %v2087 = vrot.slane %v2050, 1
  %v2088 = vsel %vm2077, %v2085, %v2087
  %v2089 = vrot.slane %v2051, 1
  %v2090 = vsel %vm2077, %v2087, %v2089
  %v2091 = vrot.slane %v2052, 1
  %v2092 = vsel %vm2077, %v2089, %v2091
  %v2093 = vrot.slane %v2053, 1
  %v2094 = vsel %vm2077, %v2091, %v2093
  %v2095 = vrot.slane %v2054, 1
  %v2096 = vsel %vm2077, %v2093, %v2095
  %v2097 = vrot.slane %v2055, 1
  %v2098 = vsel %vm2077, %v2095, %v2097
  %v2099 = vrot.slane %v2056, 1
  %v2100 = vsel %vm2077, %v2097, %v2099
  %v2101 = vrot.slane %v2057, 1
  %v2102 = vsel %vm2077, %v2099, %v2101
  %v2103 = vrot.slane %v2058, 1
  %v2104 = vsel %vm2077, %v2101, %v2103
  %v2105 = vrot.slane %v2059, 1
  %v2106 = vsel %vm2077, %v2103, %v2105
  %v2107 = vrot.slane %v2060, 1
  %v2108 = vsel %vm2077, %v2105, %v2107
  %v2109 = vrot.slane %v2061, 1
  %v2110 = vsel %vm2077, %v2107, %v2109
  %v2111 = vrot.slane %v2062, 1
  %v2112 = vsel %vm2077, %v2109, %v2111
  %v2113 = vrot.slane %v2063, 1
  %v2114 = vsel %vm2077, %v2111, %v2113
  %v2115 = vrot.slane %v2064, 1
  %v2116 = vsel %vm2077, %v2113, %v2115
  %v2117 = vrot.slane %v2065, 1
  %v2118 = vsel %vm2077, %v2115, %v2117
  %v2119 = vrot.slane %v2066, 1
  %v2120 = vsel %vm2077, %v2117, %v2119
  %v2121 = vrot.slane %v2067, 1
  %v2122 = vsel %vm2077, %v2119, %v2121
  %v2123 = vrot.slane %v2068, 1
  %v2124 = vsel %vm2077, %v2121, %v2123
  %v2125 = vrot.slane %v2069, 1
  %v2126 = vsel %vm2077, %v2123, %v2125
  %v2127 = vrot.slane %v2070, 1
  %v2128 = vsel %vm2077, %v2125, %v2127
  %v2129 = vrot.slane %v2071, 1
  %v2130 = vsel %vm2077, %v2127, %v2129
  %v2131 = vrot.slane %v2072, 1
  %v2132 = vsel %vm2077, %v2129, %v2131
  %v2133 = vrot.slane %v2073, 1
  %v2134 = vsel %vm2077, %v2131, %v2133
  %v2135 = vrot.slane %v2074, 1
  %v2136 = vsel %vm2077, %v2133, %v2135
  %v2137 = vrot.slane %v2075, 1
  %v2138 = vsel %vm2077, %v2135, %v2137
  %v2139 = vrot.slane %v2076, 1
  %v2140 = vsel %vm2077, %v2137, %v2139
  %v2189 = vunpack.c.l.b16 %v1903
  %v2190 = vunpack.c.l.b16 %v1904
  %v2191 = vunpack.c.l.b16 %v1905
  %v2192 = vunpack.c.l.b16 %v1906
  %v2193 = vunpack.c.l.b16 %v1907
  %v2194 = vunpack.c.l.b16 %v1908
  %v2195 = vunpack.c.l.b16 %v1909
  %v2196 = vunpack.c.l.b16 %v1910
  %v2197 = vunpack.c.l.b16 %v1911
  %v2198 = vunpack.c.l.b16 %v1912
  %v2199 = vunpack.c.l.b16 %v1913
  %v2200 = vunpack.c.l.b16 %v1914
  %v2201 = vunpack.c.l.b16 %v1915
  %v2202 = vunpack.c.l.b16 %v1916
  %v2203 = vunpack.c.l.b16 %v1917
  %v2204 = vunpack.c.l.b16 %v1918
  %v2205 = vpack.c.b16 %v2190, %v2189
  %v2206 = vpack.c.b16 %v2192, %v2191
  %v2207 = vpack.c.b16 %v2194, %v2193
  %v2208 = vpack.c.b16 %v2196, %v2195
  %v2209 = vpack.c.b16 %v2198, %v2197
  %v2210 = vpack.c.b16 %v2200, %v2199
  %v2211 = vpack.c.b16 %v2202, %v2201
  %v2212 = vpack.c.b16 %v2204, %v2203
  %2221 = vmatprep.subr.bf16.mxu0 0
  %2222 = vmatpush1.bf16.msra.mxu0 %v2205
  %2223 = vmatprep.subr.bf16.mxu0 0
  %2224 = vmatpush1.bf16.msra.mxu0 %v2206
  %2225 = vmatprep.subr.bf16.mxu0 0
  %2226 = vmatpush1.bf16.msra.mxu0 %v2207
  %2227 = vmatprep.subr.bf16.mxu0 0
  %2228 = vmatpush1.bf16.msra.mxu0 %v2208
  %2229 = vmatprep.subr.bf16.mxu0 0
  %2230 = vmatpush1.bf16.msra.mxu0 %v2209
  %2231 = vmatprep.subr.bf16.mxu0 0
  %2232 = vmatpush1.bf16.msra.mxu0 %v2210
  %2233 = vmatprep.subr.bf16.mxu0 0
  %2234 = vmatpush1.bf16.msra.mxu0 %v2211
  %2235 = vmatprep.subr.bf16.mxu0 0
  %2236 = vmatpush1.bf16.msra.mxu0 %v2212
  %2237 = vmatprep.subr.bf16.mxu0 0
  %2238 = vmatpush1.bf16.msra.mxu0 0
  %2239 = vmatprep.subr.bf16.mxu0 0
  %2240 = vmatpush1.bf16.msra.mxu0 0
  %2241 = vmatprep.subr.bf16.mxu0 0
  %2242 = vmatpush1.bf16.msra.mxu0 0
  %2243 = vmatprep.subr.bf16.mxu0 0
  %2244 = vmatpush1.bf16.msra.mxu0 0
  %2245 = vmatprep.subr.bf16.mxu0 0
  %2246 = vmatpush1.bf16.msra.mxu0 0
  %2247 = vmatprep.subr.bf16.mxu0 0
  %2248 = vmatpush1.bf16.msra.mxu0 0
  %2249 = vmatprep.subr.bf16.mxu0 0
  %2250 = vmatpush1.bf16.msra.mxu0 0
  %2251 = vmatprep.subr.bf16.mxu0 0
  %2252 = vmatpush1.bf16.msra.mxu0 0
  %2253 = vmatprep.mubr.bf16.mxu0 0
  %2254 = vmatmul.mubr.bf16.gmra.mrb[0].mxu0 %v2080
  %v2255 = vpop.f32.mrb[0].mxu0
  %v2256 = vadd.f32 0.0, %v2255
  %v2257 = vpop.f32.mrb[0].mxu0
  %v2258 = vpop.f32.mrb[0].mxu0
  %v2259 = vadd.f32 0.0, %v2258
  %v2260 = vpop.f32.mrb[0].mxu0
  %2261 = vmatprep.mubr.bf16.mxu0 0
  %2262 = vmatmul.mubr.bf16.gmra.mrb[0].mxu0 %v2082
  %v2263 = vpop.f32.mrb[0].mxu0
  %v2264 = vadd.f32 0.0, %v2263
  %v2265 = vpop.f32.mrb[0].mxu0
  %v2266 = vpop.f32.mrb[0].mxu0
  %v2267 = vadd.f32 0.0, %v2266
  %v2268 = vpop.f32.mrb[0].mxu0
  %2269 = vmatprep.mubr.bf16.mxu0 0
  %2270 = vmatmul.mubr.bf16.gmra.mrb[0].mxu0 %v2084
  %v2271 = vpop.f32.mrb[0].mxu0
  %v2272 = vadd.f32 0.0, %v2271
  %v2273 = vpop.f32.mrb[0].mxu0
  %v2274 = vpop.f32.mrb[0].mxu0
  %v2275 = vadd.f32 0.0, %v2274
  %v2276 = vpop.f32.mrb[0].mxu0
  %2277 = vmatprep.mubr.bf16.mxu0 0
  %2278 = vmatmul.mubr.bf16.gmra.mrb[0].mxu0 %v2086
  %v2279 = vpop.f32.mrb[0].mxu0
  %v2280 = vadd.f32 0.0, %v2279
  %v2281 = vpop.f32.mrb[0].mxu0
  %v2282 = vpop.f32.mrb[0].mxu0
  %v2283 = vadd.f32 0.0, %v2282
  %v2284 = vpop.f32.mrb[0].mxu0
  %2285 = vmatprep.mubr.bf16.mxu0 0
  %2286 = vmatmul.mubr.bf16.gmra.mrb[0].mxu0 %v2088
  %v2287 = vpop.f32.mrb[0].mxu0
  %v2288 = vadd.f32 0.0, %v2287
  %v2289 = vpop.f32.mrb[0].mxu0
  %v2290 = vpop.f32.mrb[0].mxu0
  %v2291 = vadd.f32 0.0, %v2290
  %v2292 = vpop.f32.mrb[0].mxu0
  %2293 = vmatprep.mubr.bf16.mxu0 0
  %2294 = vmatmul.mubr.bf16.gmra.mrb[0].mxu0 %v2090
  %v2295 = vpop.f32.mrb[0].mxu0
  %v2296 = vadd.f32 0.0, %v2295
  %v2297 = vpop.f32.mrb[0].mxu0
  %v2298 = vpop.f32.mrb[0].mxu0
  %v2299 = vadd.f32 0.0, %v2298
  %v2300 = vpop.f32.mrb[0].mxu0
  %2301 = vmatprep.mubr.bf16.mxu0 0
  %2302 = vmatmul.mubr.bf16.gmra.mrb[0].mxu0 %v2092
  %v2303 = vpop.f32.mrb[0].mxu0
  %v2304 = vadd.f32 0.0, %v2303
  %v2305 = vpop.f32.mrb[0].mxu0
  %v2306 = vpop.f32.mrb[0].mxu0
  %v2307 = vadd.f32 0.0, %v2306
  %v2308 = vpop.f32.mrb[0].mxu0
  %2309 = vmatprep.mubr.bf16.mxu0 0
  %2310 = vmatmul.mubr.bf16.gmra.mrb[0].mxu0 %v2094
  %v2311 = vpop.f32.mrb[0].mxu0
  %v2312 = vadd.f32 0.0, %v2311
  %v2313 = vpop.f32.mrb[0].mxu0
  %v2314 = vpop.f32.mrb[0].mxu0
  %v2315 = vadd.f32 0.0, %v2314
  %v2316 = vpop.f32.mrb[0].mxu0
  %2317 = vmatprep.mubr.bf16.mxu0 0
  %2318 = vmatmul.mubr.bf16.gmra.mrb[0].mxu0 %v2096
  %v2319 = vpop.f32.mrb[0].mxu0
  %v2320 = vadd.f32 0.0, %v2319
  %v2321 = vpop.f32.mrb[0].mxu0
  %v2322 = vpop.f32.mrb[0].mxu0
  %v2323 = vadd.f32 0.0, %v2322
  %v2324 = vpop.f32.mrb[0].mxu0
  %2325 = vmatprep.mubr.bf16.mxu0 0
  %2326 = vmatmul.mubr.bf16.gmra.mrb[0].mxu0 %v2098
  %v2327 = vpop.f32.mrb[0].mxu0
  %v2328 = vadd.f32 0.0, %v2327
  %v2329 = vpop.f32.mrb[0].mxu0
  %v2330 = vpop.f32.mrb[0].mxu0
  %v2331 = vadd.f32 0.0, %v2330
  %v2332 = vpop.f32.mrb[0].mxu0
  %2333 = vmatprep.mubr.bf16.mxu0 0
  %2334 = vmatmul.mubr.bf16.gmra.mrb[0].mxu0 %v2100
  %v2335 = vpop.f32.mrb[0].mxu0
  %v2336 = vadd.f32 0.0, %v2335
  %v2337 = vpop.f32.mrb[0].mxu0
  %v2338 = vpop.f32.mrb[0].mxu0
  %v2339 = vadd.f32 0.0, %v2338
  %v2340 = vpop.f32.mrb[0].mxu0
  %2341 = vmatprep.mubr.bf16.mxu0 0
  %2342 = vmatmul.mubr.bf16.gmra.mrb[0].mxu0 %v2102
  %v2343 = vpop.f32.mrb[0].mxu0
  %v2344 = vadd.f32 0.0, %v2343
  %v2345 = vpop.f32.mrb[0].mxu0
  %v2346 = vpop.f32.mrb[0].mxu0
  %v2347 = vadd.f32 0.0, %v2346
  %v2348 = vpop.f32.mrb[0].mxu0
  %2349 = vmatprep.mubr.bf16.mxu0 0
  %2350 = vmatmul.mubr.bf16.gmra.mrb[0].mxu0 %v2104
  %v2351 = vpop.f32.mrb[0].mxu0
  %v2352 = vadd.f32 0.0, %v2351
  %v2353 = vpop.f32.mrb[0].mxu0
  %v2354 = vpop.f32.mrb[0].mxu0
  %v2355 = vadd.f32 0.0, %v2354
  %v2356 = vpop.f32.mrb[0].mxu0
  %2357 = vmatprep.mubr.bf16.mxu0 0
  %2358 = vmatmul.mubr.bf16.gmra.mrb[0].mxu0 %v2106
  %v2359 = vpop.f32.mrb[0].mxu0
  %v2360 = vadd.f32 0.0, %v2359
  %v2361 = vpop.f32.mrb[0].mxu0
  %v2362 = vpop.f32.mrb[0].mxu0
  %v2363 = vadd.f32 0.0, %v2362
  %v2364 = vpop.f32.mrb[0].mxu0
  %2365 = vmatprep.mubr.bf16.mxu0 0
  %2366 = vmatmul.mubr.bf16.gmra.mrb[0].mxu0 %v2108
  %v2367 = vpop.f32.mrb[0].mxu0
  %v2368 = vadd.f32 0.0, %v2367
  %v2369 = vpop.f32.mrb[0].mxu0
  %v2370 = vpop.f32.mrb[0].mxu0
  %v2371 = vadd.f32 0.0, %v2370
  %v2372 = vpop.f32.mrb[0].mxu0
  %2373 = vmatprep.mubr.bf16.mxu0 0
  %2374 = vmatmul.mubr.bf16.gmra.mrb[0].mxu0 %v2110
  %v2375 = vpop.f32.mrb[0].mxu0
  %v2376 = vadd.f32 0.0, %v2375
  %v2377 = vpop.f32.mrb[0].mxu0
  %v2378 = vpop.f32.mrb[0].mxu0
  %v2379 = vadd.f32 0.0, %v2378
  %v2380 = vpop.f32.mrb[0].mxu0
  %2381 = vmatprep.mubr.bf16.mxu0 0
  %2382 = vmatmul.mubr.bf16.gmra.mrb[0].mxu0 %v2112
  %v2383 = vpop.f32.mrb[0].mxu0
  %v2384 = vadd.f32 0.0, %v2383
  %v2385 = vpop.f32.mrb[0].mxu0
  %v2386 = vpop.f32.mrb[0].mxu0
  %v2387 = vadd.f32 0.0, %v2386
  %v2388 = vpop.f32.mrb[0].mxu0
  %2389 = vmatprep.mubr.bf16.mxu0 0
  %2390 = vmatmul.mubr.bf16.gmra.mrb[0].mxu0 %v2114
  %v2391 = vpop.f32.mrb[0].mxu0
  %v2392 = vadd.f32 0.0, %v2391
  %v2393 = vpop.f32.mrb[0].mxu0
  %v2394 = vpop.f32.mrb[0].mxu0
  %v2395 = vadd.f32 0.0, %v2394
  %v2396 = vpop.f32.mrb[0].mxu0
  %2397 = vmatprep.mubr.bf16.mxu0 0
  %2398 = vmatmul.mubr.bf16.gmra.mrb[0].mxu0 %v2116
  %v2399 = vpop.f32.mrb[0].mxu0
  %v2400 = vadd.f32 0.0, %v2399
  %v2401 = vpop.f32.mrb[0].mxu0
  %v2402 = vpop.f32.mrb[0].mxu0
  %v2403 = vadd.f32 0.0, %v2402
  %v2404 = vpop.f32.mrb[0].mxu0
  %2405 = vmatprep.mubr.bf16.mxu0 0
  %2406 = vmatmul.mubr.bf16.gmra.mrb[0].mxu0 %v2118
  %v2407 = vpop.f32.mrb[0].mxu0
  %v2408 = vadd.f32 0.0, %v2407
  %v2409 = vpop.f32.mrb[0].mxu0
  %v2410 = vpop.f32.mrb[0].mxu0
  %v2411 = vadd.f32 0.0, %v2410
  %v2412 = vpop.f32.mrb[0].mxu0
  %2413 = vmatprep.mubr.bf16.mxu0 0
  %2414 = vmatmul.mubr.bf16.gmra.mrb[0].mxu0 %v2120
  %v2415 = vpop.f32.mrb[0].mxu0
  %v2416 = vadd.f32 0.0, %v2415
  %v2417 = vpop.f32.mrb[0].mxu0
  %v2418 = vpop.f32.mrb[0].mxu0
  %v2419 = vadd.f32 0.0, %v2418
  %v2420 = vpop.f32.mrb[0].mxu0
  %2421 = vmatprep.mubr.bf16.mxu0 0
  %2422 = vmatmul.mubr.bf16.gmra.mrb[0].mxu0 %v2122
  %v2423 = vpop.f32.mrb[0].mxu0
  %v2424 = vadd.f32 0.0, %v2423
  %v2425 = vpop.f32.mrb[0].mxu0
  %v2426 = vpop.f32.mrb[0].mxu0
  %v2427 = vadd.f32 0.0, %v2426
  %v2428 = vpop.f32.mrb[0].mxu0
  %2429 = vmatprep.mubr.bf16.mxu0 0
  %2430 = vmatmul.mubr.bf16.gmra.mrb[0].mxu0 %v2124
  %v2431 = vpop.f32.mrb[0].mxu0
  %v2432 = vadd.f32 0.0, %v2431
  %v2433 = vpop.f32.mrb[0].mxu0
  %v2434 = vpop.f32.mrb[0].mxu0
  %v2435 = vadd.f32 0.0, %v2434
  %v2436 = vpop.f32.mrb[0].mxu0
  %2437 = vmatprep.mubr.bf16.mxu0 0
  %2438 = vmatmul.mubr.bf16.gmra.mrb[0].mxu0 %v2126
  %v2439 = vpop.f32.mrb[0].mxu0
  %v2440 = vadd.f32 0.0, %v2439
  %v2441 = vpop.f32.mrb[0].mxu0
  %v2442 = vpop.f32.mrb[0].mxu0
  %v2443 = vadd.f32 0.0, %v2442
  %v2444 = vpop.f32.mrb[0].mxu0
  %2445 = vmatprep.mubr.bf16.mxu0 0
  %2446 = vmatmul.mubr.bf16.gmra.mrb[0].mxu0 %v2128
  %v2447 = vpop.f32.mrb[0].mxu0
  %v2448 = vadd.f32 0.0, %v2447
  %v2449 = vpop.f32.mrb[0].mxu0
  %v2450 = vpop.f32.mrb[0].mxu0
  %v2451 = vadd.f32 0.0, %v2450
  %v2452 = vpop.f32.mrb[0].mxu0
  %2453 = vmatprep.mubr.bf16.mxu0 0
  %2454 = vmatmul.mubr.bf16.gmra.mrb[0].mxu0 %v2130
  %v2455 = vpop.f32.mrb[0].mxu0
  %v2456 = vadd.f32 0.0, %v2455
  %v2457 = vpop.f32.mrb[0].mxu0
  %v2458 = vpop.f32.mrb[0].mxu0
  %v2459 = vadd.f32 0.0, %v2458
  %v2460 = vpop.f32.mrb[0].mxu0
  %2461 = vmatprep.mubr.bf16.mxu0 0
  %2462 = vmatmul.mubr.bf16.gmra.mrb[0].mxu0 %v2132
  %v2463 = vpop.f32.mrb[0].mxu0
  %v2464 = vadd.f32 0.0, %v2463
  %v2465 = vpop.f32.mrb[0].mxu0
  %v2466 = vpop.f32.mrb[0].mxu0
  %v2467 = vadd.f32 0.0, %v2466
  %v2468 = vpop.f32.mrb[0].mxu0
  %2469 = vmatprep.mubr.bf16.mxu0 0
  %2470 = vmatmul.mubr.bf16.gmra.mrb[0].mxu0 %v2134
  %v2471 = vpop.f32.mrb[0].mxu0
  %v2472 = vadd.f32 0.0, %v2471
  %v2473 = vpop.f32.mrb[0].mxu0
  %v2474 = vpop.f32.mrb[0].mxu0
  %v2475 = vadd.f32 0.0, %v2474
  %v2476 = vpop.f32.mrb[0].mxu0
  %2477 = vmatprep.mubr.bf16.mxu0 0
  %2478 = vmatmul.mubr.bf16.gmra.mrb[0].mxu0 %v2136
  %v2479 = vpop.f32.mrb[0].mxu0
  %v2480 = vadd.f32 0.0, %v2479
  %v2481 = vpop.f32.mrb[0].mxu0
  %v2482 = vpop.f32.mrb[0].mxu0
  %v2483 = vadd.f32 0.0, %v2482
  %v2484 = vpop.f32.mrb[0].mxu0
  %2485 = vmatprep.mubr.bf16.mxu0 0
  %2486 = vmatmul.mubr.bf16.gmra.mrb[0].mxu0 %v2138
  %v2487 = vpop.f32.mrb[0].mxu0
  %v2488 = vadd.f32 0.0, %v2487
  %v2489 = vpop.f32.mrb[0].mxu0
  %v2490 = vpop.f32.mrb[0].mxu0
  %v2491 = vadd.f32 0.0, %v2490
  %v2492 = vpop.f32.mrb[0].mxu0
  %2493 = vmatprep.mubr.bf16.mxu0 0
  %2494 = vmatmul.mubr.bf16.gmra.mrb[0].mxu0 %v2140
  %v2495 = vpop.f32.mrb[0].mxu0
  %v2496 = vadd.f32 0.0, %v2495
  %v2497 = vpop.f32.mrb[0].mxu0
  %v2498 = vpop.f32.mrb[0].mxu0
  %v2499 = vadd.f32 0.0, %v2498
  %v2500 = vpop.f32.mrb[0].mxu0
  %2501 = vmatprep.mubr.bf16.mxu0 0
  %2502 = vmatmul.mubr.bf16.gmra.mrb[0].mxu0 %v2139
  %v2503 = vpop.f32.mrb[0].mxu0
  %v2504 = vadd.f32 0.0, %v2503
  %v2505 = vpop.f32.mrb[0].mxu0
  %v2506 = vpop.f32.mrb[0].mxu0
  %v2507 = vpop.f32.mrb[0].mxu0
  %2508 = vdwg.mxu0
  %v2509 = vadd.f32 %v1776, %v2256
  %v2510 = vadd.f32 %v1777, %v2259
  %v2511 = vadd.f32 %v1778, %v2264
  %v2512 = vadd.f32 %v1779, %v2267
  %v2513 = vadd.f32 %v1780, %v2272
  %v2514 = vadd.f32 %v1781, %v2275
  %v2515 = vadd.f32 %v1782, %v2280
  %v2516 = vadd.f32 %v1783, %v2283
  %v2517 = vadd.f32 %v1784, %v2288
  %v2518 = vadd.f32 %v1785, %v2291
  %v2519 = vadd.f32 %v1786, %v2296
  %v2520 = vadd.f32 %v1787, %v2299
  %v2521 = vadd.f32 %v1788, %v2304
  %v2522 = vadd.f32 %v1789, %v2307
  %v2523 = vadd.f32 %v1790, %v2312
  %v2524 = vadd.f32 %v1791, %v2315
  %v2525 = vadd.f32 %v1792, %v2320
  %v2526 = vadd.f32 %v1793, %v2323
  %v2527 = vadd.f32 %v1794, %v2328
  %v2528 = vadd.f32 %v1795, %v2331
  %v2529 = vadd.f32 %v1796, %v2336
  %v2530 = vadd.f32 %v1797, %v2339
  %v2531 = vadd.f32 %v1798, %v2344
  %v2532 = vadd.f32 %v1799, %v2347
  %v2533 = vadd.f32 %v1800, %v2352
  %v2534 = vadd.f32 %v1801, %v2355
  %v2535 = vadd.f32 %v1802, %v2360
  %v2536 = vadd.f32 %v1803, %v2363
  %v2537 = vadd.f32 %v1804, %v2368
  %v2538 = vadd.f32 %v1805, %v2371
  %v2539 = vadd.f32 %v1806, %v2376
  %v2540 = vadd.f32 %v1807, %v2379
  %v2541 = vadd.f32 %v1808, %v2384
  %v2542 = vadd.f32 %v1809, %v2387
  %v2543 = vadd.f32 %v1810, %v2392
  %v2544 = vadd.f32 %v1811, %v2395
  %v2545 = vadd.f32 %v1812, %v2400
  %v2546 = vadd.f32 %v1813, %v2403
  %v2547 = vadd.f32 %v1814, %v2408
  %v2548 = vadd.f32 %v1815, %v2411
  %v2549 = vadd.f32 %v1816, %v2416
  %v2550 = vadd.f32 %v1817, %v2419
  %v2551 = vadd.f32 %v1818, %v2424
  %v2552 = vadd.f32 %v1819, %v2427
  %v2553 = vadd.f32 %v1820, %v2432
  %v2554 = vadd.f32 %v1821, %v2435
  %v2555 = vadd.f32 %v1822, %v2440
  %v2556 = vadd.f32 %v1823, %v2443
  %v2557 = vadd.f32 %v1824, %v2448
  %v2558 = vadd.f32 %v1825, %v2451
  %v2559 = vadd.f32 %v1826, %v2456
  %v2560 = vadd.f32 %v1827, %v2459
  %v2561 = vadd.f32 %v1828, %v2464
  %v2562 = vadd.f32 %v1829, %v2467
  %v2563 = vadd.f32 %v1830, %v2472
  %v2564 = vadd.f32 %v1831, %v2475
  %v2565 = vadd.f32 %v1832, %v2480
  %v2566 = vadd.f32 %v1833, %v2483
  %v2567 = vadd.f32 %v1834, %v2488
  %v2568 = vadd.f32 %v1835, %v2491
  %v2569 = vadd.f32 %v1836, %v2496
  %v2570 = vadd.f32 %v1837, %v2499
  %v2571 = vadd.f32 %v1838, %v2504
  %2572 = vst [vmem:[#allocation4] sm:$0xff] %v2509
  %2573 = vst [vmem:[#allocation4 + $0x8] sm:$0xff] %v2510
  %2574 = vst [vmem:[#allocation4 + $0x10] sm:$0xff] %v2511
  %2575 = vst [vmem:[#allocation4 + $0x18] sm:$0xff] %v2512
  %2576 = vst [vmem:[#allocation4 + $0x20] sm:$0xff] %v2513
  %2577 = vst [vmem:[#allocation4 + $0x28] sm:$0xff] %v2514
  %2578 = vst [vmem:[#allocation4 + $0x30] sm:$0xff] %v2515
  %2579 = vst [vmem:[#allocation4 + $0x38] sm:$0xff] %v2516
  %2580 = vst [vmem:[#allocation4 + $0x40] sm:$0xff] %v2517
  %2581 = vst [vmem:[#allocation4 + $0x48] sm:$0xff] %v2518
  %2582 = vst [vmem:[#allocation4 + $0x50] sm:$0xff] %v2519
  %2583 = vst [vmem:[#allocation4 + $0x58] sm:$0xff] %v2520
  %2584 = vst [vmem:[#allocation4 + $0x60] sm:$0xff] %v2521
  %2585 = vst [vmem:[#allocation4 + $0x68] sm:$0xff] %v2522
  %2586 = vst [vmem:[#allocation4 + $0x70] sm:$0xff] %v2523
  %2587 = vst [vmem:[#allocation4 + $0x78] sm:$0xff] %v2524
  %2588 = vst [vmem:[#allocation4 + $0x80] sm:$0xff] %v2525
  %2589 = vst [vmem:[#allocation4 + $0x88] sm:$0xff] %v2526
  %2590 = vst [vmem:[#allocation4 + $0x90] sm:$0xff] %v2527
  %2591 = vst [vmem:[#allocation4 + $0x98] sm:$0xff] %v2528
  %2592 = vst [vmem:[#allocation4 + $0xa0] sm:$0xff] %v2529
  %2593 = vst [vmem:[#allocation4 + $0xa8] sm:$0xff] %v2530
  %2594 = vst [vmem:[#allocation4 + $0xb0] sm:$0xff] %v2531
  %2595 = vst [vmem:[#allocation4 + $0xb8] sm:$0xff] %v2532
  %2596 = vst [vmem:[#allocation4 + $0xc0] sm:$0xff] %v2533
  %2597 = vst [vmem:[#allocation4 + $0xc8] sm:$0xff] %v2534
  %2598 = vst [vmem:[#allocation4 + $0xd0] sm:$0xff] %v2535
  %2599 = vst [vmem:[#allocation4 + $0xd8] sm:$0xff] %v2536
  %2600 = vst [vmem:[#allocation4 + $0xe0] sm:$0xff] %v2537
  %2601 = vst [vmem:[#allocation4 + $0xe8] sm:$0xff] %v2538
  %2602 = vst [vmem:[#allocation4 + $0xf0] sm:$0xff] %v2539
  %2603 = vst [vmem:[#allocation4 + $0xf8] sm:$0xff] %v2540
  %2604 = vst [vmem:[#allocation4 + $0x100] sm:$0xff] %v2541
  %2605 = vst [vmem:[#allocation4 + $0x108] sm:$0xff] %v2542
  %2606 = vst [vmem:[#allocation4 + $0x110] sm:$0xff] %v2543
  %2607 = vst [vmem:[#allocation4 + $0x118] sm:$0xff] %v2544
  %2608 = vst [vmem:[#allocation4 + $0x120] sm:$0xff] %v2545
  %2609 = vst [vmem:[#allocation4 + $0x128] sm:$0xff] %v2546
  %2610 = vst [vmem:[#allocation4 + $0x130] sm:$0xff] %v2547
  %2611 = vst [vmem:[#allocation4 + $0x138] sm:$0xff] %v2548
  %2612 = vst [vmem:[#allocation4 + $0x140] sm:$0xff] %v2549
  %2613 = vst [vmem:[#allocation4 + $0x148] sm:$0xff] %v2550
  %2614 = vst [vmem:[#allocation4 + $0x150] sm:$0xff] %v2551
  %2615 = vst [vmem:[#allocation4 + $0x158] sm:$0xff] %v2552
  %2616 = vst [vmem:[#allocation4 + $0x160] sm:$0xff] %v2553
  %2617 = vst [vmem:[#allocation4 + $0x168] sm:$0xff] %v2554
  %2618 = vst [vmem:[#allocation4 + $0x170] sm:$0xff] %v2555
  %2619 = vst [vmem:[#allocation4 + $0x178] sm:$0xff] %v2556
  %2620 = vst [vmem:[#allocation4 + $0x180] sm:$0xff] %v2557
  %2621 = vst [vmem:[#allocation4 + $0x188] sm:$0xff] %v2558
  %2622 = vst [vmem:[#allocation4 + $0x190] sm:$0xff] %v2559
  %2623 = vst [vmem:[#allocation4 + $0x198] sm:$0xff] %v2560
  %2624 = vst [vmem:[#allocation4 + $0x1a0] sm:$0xff] %v2561
  %2625 = vst [vmem:[#allocation4 + $0x1a8] sm:$0xff] %v2562
  %2626 = vst [vmem:[#allocation4 + $0x1b0] sm:$0xff] %v2563
  %2627 = vst [vmem:[#allocation4 + $0x1b8] sm:$0xff] %v2564
  %2628 = vst [vmem:[#allocation4 + $0x1c0] sm:$0xff] %v2565
  %2629 = vst [vmem:[#allocation4 + $0x1c8] sm:$0xff] %v2566
  %2630 = vst [vmem:[#allocation4 + $0x1d0] sm:$0xff] %v2567
  %2631 = vst [vmem:[#allocation4 + $0x1d8] sm:$0xff] %v2568
  %2632 = vst [vmem:[#allocation4 + $0x1e0] sm:$0xff] %v2569
  %2633 = vst [vmem:[#allocation4 + $0x1e8] sm:$0xff] %v2570
  %2634 = vst [vmem:[#allocation4 + $0x1f0] sm:$0x3f] %v2571
  %v2635 = vld [vmem:[#allocation4] sm:$0xff]
  %v2636 = vld [vmem:[#allocation4 + $0x8] sm:$0xff]
  %v2637 = vld [vmem:[#allocation4 + $0x10] sm:$0xff]
  %v2638 = vld [vmem:[#allocation4 + $0x18] sm:$0xff]
  %v2639 = vld [vmem:[#allocation4 + $0x20] sm:$0xff]
  %v2640 = vld [vmem:[#allocation4 + $0x28] sm:$0xff]
  %v2641 = vld [vmem:[#allocation4 + $0x30] sm:$0xff]
  %v2642 = vld [vmem:[#allocation4 + $0x38] sm:$0xff]
  %v2643 = vld [vmem:[#allocation4 + $0x40] sm:$0xff]
  %v2644 = vld [vmem:[#allocation4 + $0x48] sm:$0xff]
  %v2645 = vld [vmem:[#allocation4 + $0x50] sm:$0xff]
  %v2646 = vld [vmem:[#allocation4 + $0x58] sm:$0xff]
  %v2647 = vld [vmem:[#allocation4 + $0x60] sm:$0xff]
  %v2648 = vld [vmem:[#allocation4 + $0x68] sm:$0xff]
  %v2649 = vld [vmem:[#allocation4 + $0x70] sm:$0xff]
  %v2650 = vld [vmem:[#allocation4 + $0x78] sm:$0xff]
  %v2651 = vld [vmem:[#allocation4 + $0x80] sm:$0xff]
  %v2652 = vld [vmem:[#allocation4 + $0x88] sm:$0xff]
  %v2653 = vld [vmem:[#allocation4 + $0x90] sm:$0xff]
  %v2654 = vld [vmem:[#allocation4 + $0x98] sm:$0xff]
  %v2655 = vld [vmem:[#allocation4 + $0xa0] sm:$0xff]
  %v2656 = vld [vmem:[#allocation4 + $0xa8] sm:$0xff]
  %v2657 = vld [vmem:[#allocation4 + $0xb0] sm:$0xff]
  %v2658 = vld [vmem:[#allocation4 + $0xb8] sm:$0xff]
  %v2659 = vld [vmem:[#allocation4 + $0xc0] sm:$0xff]
  %v2660 = vld [vmem:[#allocation4 + $0xc8] sm:$0xff]
  %v2661 = vld [vmem:[#allocation4 + $0xd0] sm:$0xff]
  %v2662 = vld [vmem:[#allocation4 + $0xd8] sm:$0xff]
  %v2663 = vld [vmem:[#allocation4 + $0xe0] sm:$0xff]
  %v2664 = vld [vmem:[#allocation4 + $0xe8] sm:$0xff]
  %v2665 = vld [vmem:[#allocation4 + $0xf0] sm:$0xff]
  %v2666 = vld [vmem:[#allocation4 + $0xf8] sm:$0xff]
  %v2667 = vld [vmem:[#allocation4 + $0x100] sm:$0xff]
  %v2668 = vld [vmem:[#allocation4 + $0x108] sm:$0xff]
  %v2669 = vld [vmem:[#allocation4 + $0x110] sm:$0xff]
  %v2670 = vld [vmem:[#allocation4 + $0x118] sm:$0xff]
  %v2671 = vld [vmem:[#allocation4 + $0x120] sm:$0xff]
  %v2672 = vld [vmem:[#allocation4 + $0x128] sm:$0xff]
  %v2673 = vld [vmem:[#allocation4 + $0x130] sm:$0xff]
  %v2674 = vld [vmem:[#allocation4 + $0x138] sm:$0xff]
  %v2675 = vld [vmem:[#allocation4 + $0x140] sm:$0xff]
  %v2676 = vld [vmem:[#allocation4 + $0x148] sm:$0xff]
  %v2677 = vld [vmem:[#allocation4 + $0x150] sm:$0xff]
  %v2678 = vld [vmem:[#allocation4 + $0x158] sm:$0xff]
  %v2679 = vld [vmem:[#allocation4 + $0x160] sm:$0xff]
  %v2680 = vld [vmem:[#allocation4 + $0x168] sm:$0xff]
  %v2681 = vld [vmem:[#allocation4 + $0x170] sm:$0xff]
  %v2682 = vld [vmem:[#allocation4 + $0x178] sm:$0xff]
  %v2683 = vld [vmem:[#allocation4 + $0x180] sm:$0xff]
  %v2684 = vld [vmem:[#allocation4 + $0x188] sm:$0xff]
  %v2685 = vld [vmem:[#allocation4 + $0x190] sm:$0xff]
  %v2686 = vld [vmem:[#allocation4 + $0x198] sm:$0xff]
  %v2687 = vld [vmem:[#allocation4 + $0x1a0] sm:$0xff]
  %v2688 = vld [vmem:[#allocation4 + $0x1a8] sm:$0xff]
  %v2689 = vld [vmem:[#allocation4 + $0x1b0] sm:$0xff]
  %v2690 = vld [vmem:[#allocation4 + $0x1b8] sm:$0xff]
  %v2691 = vld [vmem:[#allocation4 + $0x1c0] sm:$0xff]
  %v2692 = vld [vmem:[#allocation4 + $0x1c8] sm:$0xff]
  %v2693 = vld [vmem:[#allocation4 + $0x1d0] sm:$0xff]
  %v2694 = vld [vmem:[#allocation4 + $0x1d8] sm:$0xff]
  %v2695 = vld [vmem:[#allocation4 + $0x1e0] sm:$0xff]
  %v2696 = vld [vmem:[#allocation4 + $0x1e8] sm:$0xff]
  %v2697 = vld [vmem:[#allocation4 + $0x1f0] sm:$0x3f]
  %v2698 = vld [vmem:[%s4] sm:$0x1]
  %v2700 = vlaneseq
  %v2701 = vshrl.u32 %v2700, 7
  %v2702 = vsub.s32 0, %v2701
  %v2703 = vrot.slane %v2698, %v2702
  %v2705 = vadd.f32 %v2635, %v2703
  %v2706 = vadd.f32 %v2636, %v2703
  %v2707 = vadd.f32 %v2637, %v2703
  %v2708 = vadd.f32 %v2638, %v2703
  %v2709 = vadd.f32 %v2639, %v2703
  %v2710 = vadd.f32 %v2640, %v2703
  %v2711 = vadd.f32 %v2641, %v2703
  %v2712 = vadd.f32 %v2642, %v2703
  %v2713 = vadd.f32 %v2643, %v2703
  %v2714 = vadd.f32 %v2644, %v2703
  %v2715 = vadd.f32 %v2645, %v2703
  %v2716 = vadd.f32 %v2646, %v2703
  %v2717 = vadd.f32 %v2647, %v2703
  %v2718 = vadd.f32 %v2648, %v2703
  %v2719 = vadd.f32 %v2649, %v2703
  %v2720 = vadd.f32 %v2650, %v2703
  %v2721 = vadd.f32 %v2651, %v2703
  %v2722 = vadd.f32 %v2652, %v2703
  %v2723 = vadd.f32 %v2653, %v2703
  %v2724 = vadd.f32 %v2654, %v2703
  %v2725 = vadd.f32 %v2655, %v2703
  %v2726 = vadd.f32 %v2656, %v2703
  %v2727 = vadd.f32 %v2657, %v2703
  %v2728 = vadd.f32 %v2658, %v2703
  %v2729 = vadd.f32 %v2659, %v2703
  %v2730 = vadd.f32 %v2660, %v2703
  %v2731 = vadd.f32 %v2661, %v2703
  %v2732 = vadd.f32 %v2662, %v2703
  %v2733 = vadd.f32 %v2663, %v2703
  %v2734 = vadd.f32 %v2664, %v2703
  %v2735 = vadd.f32 %v2665, %v2703
  %v2736 = vadd.f32 %v2666, %v2703
  %v2737 = vadd.f32 %v2667, %v2703
  %v2738 = vadd.f32 %v2668, %v2703
  %v2739 = vadd.f32 %v2669, %v2703
  %v2740 = vadd.f32 %v2670, %v2703
  %v2741 = vadd.f32 %v2671, %v2703
  %v2742 = vadd.f32 %v2672, %v2703
  %v2743 = vadd.f32 %v2673, %v2703
  %v2744 = vadd.f32 %v2674, %v2703
  %v2745 = vadd.f32 %v2675, %v2703
  %v2746 = vadd.f32 %v2676, %v2703
  %v2747 = vadd.f32 %v2677, %v2703
  %v2748 = vadd.f32 %v2678, %v2703
  %v2749 = vadd.f32 %v2679, %v2703
  %v2750 = vadd.f32 %v2680, %v2703
  %v2751 = vadd.f32 %v2681, %v2703
  %v2752 = vadd.f32 %v2682, %v2703
  %v2753 = vadd.f32 %v2683, %v2703
  %v2754 = vadd.f32 %v2684, %v2703
  %v2755 = vadd.f32 %v2685, %v2703
  %v2756 = vadd.f32 %v2686, %v2703
  %v2757 = vadd.f32 %v2687, %v2703
  %v2758 = vadd.f32 %v2688, %v2703
  %v2759 = vadd.f32 %v2689, %v2703
  %v2760 = vadd.f32 %v2690, %v2703
  %v2761 = vadd.f32 %v2691, %v2703
  %v2762 = vadd.f32 %v2692, %v2703
  %v2763 = vadd.f32 %v2693, %v2703
  %v2764 = vadd.f32 %v2694, %v2703
  %v2765 = vadd.f32 %v2695, %v2703
  %v2766 = vadd.f32 %v2696, %v2703
  %v2767 = vadd.f32 %v2697, %v2703
  %v2768 = vmax.f32 %v2705, 0.0
  %v2769 = vmax.f32 %v2706, 0.0
  %v2770 = vmax.f32 %v2707, 0.0
  %v2771 = vmax.f32 %v2708, 0.0
  %v2772 = vmax.f32 %v2709, 0.0
  %v2773 = vmax.f32 %v2710, 0.0
  %v2774 = vmax.f32 %v2711, 0.0
  %v2775 = vmax.f32 %v2712, 0.0
  %v2776 = vmax.f32 %v2713, 0.0
  %v2777 = vmax.f32 %v2714, 0.0
  %v2778 = vmax.f32 %v2715, 0.0
  %v2779 = vmax.f32 %v2716, 0.0
  %v2780 = vmax.f32 %v2717, 0.0
  %v2781 = vmax.f32 %v2718, 0.0
  %v2782 = vmax.f32 %v2719, 0.0
  %v2783 = vmax.f32 %v2720, 0.0
  %v2784 = vmax.f32 %v2721, 0.0
  %v2785 = vmax.f32 %v2722, 0.0
  %v2786 = vmax.f32 %v2723, 0.0
  %v2787 = vmax.f32 %v2724, 0.0
  %v2788 = vmax.f32 %v2725, 0.0
  %v2789 = vmax.f32 %v2726, 0.0
  %v2790 = vmax.f32 %v2727, 0.0
  %v2791 = vmax.f32 %v2728, 0.0
  %v2792 = vmax.f32 %v2729, 0.0
  %v2793 = vmax.f32 %v2730, 0.0
  %v2794 = vmax.f32 %v2731, 0.0
  %v2795 = vmax.f32 %v2732, 0.0
  %v2796 = vmax.f32 %v2733, 0.0
  %v2797 = vmax.f32 %v2734, 0.0
  %v2798 = vmax.f32 %v2735, 0.0
  %v2799 = vmax.f32 %v2736, 0.0
  %v2800 = vmax.f32 %v2737, 0.0
  %v2801 = vmax.f32 %v2738, 0.0
  %v2802 = vmax.f32 %v2739, 0.0
  %v2803 = vmax.f32 %v2740, 0.0
  %v2804 = vmax.f32 %v2741, 0.0
  %v2805 = vmax.f32 %v2742, 0.0
  %v2806 = vmax.f32 %v2743, 0.0
  %v2807 = vmax.f32 %v2744, 0.0
  %v2808 = vmax.f32 %v2745, 0.0
  %v2809 = vmax.f32 %v2746, 0.0
  %v2810 = vmax.f32 %v2747, 0.0
  %v2811 = vmax.f32 %v2748, 0.0
  %v2812 = vmax.f32 %v2749, 0.0
  %v2813 = vmax.f32 %v2750, 0.0
  %v2814 = vmax.f32 %v2751, 0.0
  %v2815 = vmax.f32 %v2752, 0.0
  %v2816 = vmax.f32 %v2753, 0.0
  %v2817 = vmax.f32 %v2754, 0.0
  %v2818 = vmax.f32 %v2755, 0.0
  %v2819 = vmax.f32 %v2756, 0.0
  %v2820 = vmax.f32 %v2757, 0.0
  %v2821 = vmax.f32 %v2758, 0.0
  %v2822 = vmax.f32 %v2759, 0.0
  %v2823 = vmax.f32 %v2760, 0.0
  %v2824 = vmax.f32 %v2761, 0.0
  %v2825 = vmax.f32 %v2762, 0.0
  %v2826 = vmax.f32 %v2763, 0.0
  %v2827 = vmax.f32 %v2764, 0.0
  %v2828 = vmax.f32 %v2765, 0.0
  %v2829 = vmax.f32 %v2766, 0.0
  %v2830 = vmax.f32 %v2767, 0.0
  %v2831 = vld [vmem:[%s2] sm:$0xff]
  %v2832 = vld [vmem:[%s2 + $0x8] sm:$0xff]
  %v2833 = vld [vmem:[%s2 + $0x10] sm:$0xff]
  %v2834 = vld [vmem:[%s2 + $0x18] sm:$0xff]
  %v2835 = vld [vmem:[%s2 + $0x20] sm:$0xff]
  %v2836 = vld [vmem:[%s2 + $0x28] sm:$0xff]
  %v2837 = vld [vmem:[%s2 + $0x30] sm:$0xff]
  %v2838 = vld [vmem:[%s2 + $0x38] sm:$0xff]
  %v2839 = vld [vmem:[%s2 + $0x40] sm:$0xff]
  %v2840 = vld [vmem:[%s2 + $0x48] sm:$0xff]
  %v2841 = vld [vmem:[%s2 + $0x50] sm:$0xff]
  %v2842 = vld [vmem:[%s2 + $0x58] sm:$0xff]
  %v2843 = vld [vmem:[%s2 + $0x60] sm:$0xff]
  %v2844 = vld [vmem:[%s2 + $0x68] sm:$0xff]
  %v2845 = vld [vmem:[%s2 + $0x70] sm:$0xff]
  %v2846 = vld [vmem:[%s2 + $0x78] sm:$0xff]
  %v2847 = vld [vmem:[%s2 + $0x80] sm:$0xff]
  %v2848 = vld [vmem:[%s2 + $0x88] sm:$0xff]
  %v2849 = vld [vmem:[%s2 + $0x90] sm:$0xff]
  %v2850 = vld [vmem:[%s2 + $0x98] sm:$0xff]
  %v2851 = vld [vmem:[%s2 + $0xa0] sm:$0xff]
  %v2852 = vld [vmem:[%s2 + $0xa8] sm:$0xff]
  %v2853 = vld [vmem:[%s2 + $0xb0] sm:$0xff]
  %v2854 = vld [vmem:[%s2 + $0xb8] sm:$0xff]
  %v2855 = vld [vmem:[%s2 + $0xc0] sm:$0xff]
  %v2856 = vld [vmem:[%s2 + $0xc8] sm:$0xff]
  %v2857 = vld [vmem:[%s2 + $0xd0] sm:$0xff]
  %v2858 = vld [vmem:[%s2 + $0xd8] sm:$0xff]
  %v2859 = vld [vmem:[%s2 + $0xe0] sm:$0xff]
  %v2860 = vld [vmem:[%s2 + $0xe8] sm:$0xff]
  %v2861 = vld [vmem:[%s2 + $0xf0] sm:$0xff]
  %v2862 = vld [vmem:[%s2 + $0xf8] sm:$0xff]
  %v2863 = vld [vmem:[%s2 + $0x100] sm:$0xff]
  %v2864 = vld [vmem:[%s2 + $0x108] sm:$0xff]
  %v2865 = vld [vmem:[%s2 + $0x110] sm:$0xff]
  %v2866 = vld [vmem:[%s2 + $0x118] sm:$0xff]
  %v2867 = vld [vmem:[%s2 + $0x120] sm:$0xff]
  %v2868 = vld [vmem:[%s2 + $0x128] sm:$0xff]
  %v2869 = vld [vmem:[%s2 + $0x130] sm:$0xff]
  %v2870 = vld [vmem:[%s2 + $0x138] sm:$0xff]
  %v2871 = vld [vmem:[%s2 + $0x140] sm:$0xff]
  %v2872 = vld [vmem:[%s2 + $0x148] sm:$0xff]
  %v2873 = vld [vmem:[%s2 + $0x150] sm:$0xff]
  %v2874 = vld [vmem:[%s2 + $0x158] sm:$0xff]
  %v2875 = vld [vmem:[%s2 + $0x160] sm:$0xff]
  %v2876 = vld [vmem:[%s2 + $0x168] sm:$0xff]
  %v2877 = vld [vmem:[%s2 + $0x170] sm:$0xff]
  %v2878 = vld [vmem:[%s2 + $0x178] sm:$0xff]
  %v2879 = vld [vmem:[%s2 + $0x180] sm:$0xff]
  %v2880 = vld [vmem:[%s2 + $0x188] sm:$0xff]
  %v2881 = vld [vmem:[%s2 + $0x190] sm:$0xff]
  %v2882 = vld [vmem:[%s2 + $0x198] sm:$0xff]
  %v2883 = vld [vmem:[%s2 + $0x1a0] sm:$0xff]
  %v2884 = vld [vmem:[%s2 + $0x1a8] sm:$0xff]
  %v2885 = vld [vmem:[%s2 + $0x1b0] sm:$0xff]
  %v2886 = vld [vmem:[%s2 + $0x1b8] sm:$0xff]
  %v2887 = vld [vmem:[%s2 + $0x1c0] sm:$0xff]
  %v2888 = vld [vmem:[%s2 + $0x1c8] sm:$0xff]
  %v2889 = vld [vmem:[%s2 + $0x1d0] sm:$0xff]
  %v2890 = vld [vmem:[%s2 + $0x1d8] sm:$0xff]
  %v2891 = vld [vmem:[%s2 + $0x1e0] sm:$0xff]
  %v2892 = vld [vmem:[%s2 + $0x1e8] sm:$0xff]
  %v2893 = vld [vmem:[%s2 + $0x1f0] sm:$0x3f]
  %2895 = vset.pattern.permute.xlu0 0
  %2896 = vperm.xlu0 %2895, %v2831
  %v2897 = vpop.permute.xlu0 %2896
  %2900 = vset.pattern.permute.xlu0 0
  %2901 = vperm.xlu0 %2900, %v2832
  %v2902 = vpop.permute.xlu0 %2901
  %2905 = vset.pattern.permute.xlu0 0
  %2906 = vperm.xlu0 %2905, %v2833
  %v2907 = vpop.permute.xlu0 %2906
  %2910 = vset.pattern.permute.xlu0 0
  %2911 = vperm.xlu0 %2910, %v2834
  %v2912 = vpop.permute.xlu0 %2911
  %2915 = vset.pattern.permute.xlu0 0
  %2916 = vperm.xlu0 %2915, %v2835
  %v2917 = vpop.permute.xlu0 %2916
  %2920 = vset.pattern.permute.xlu0 0
  %2921 = vperm.xlu0 %2920, %v2836
  %v2922 = vpop.permute.xlu0 %2921
  %2925 = vset.pattern.permute.xlu0 0
  %2926 = vperm.xlu0 %2925, %v2837
  %v2927 = vpop.permute.xlu0 %2926
  %2930 = vset.pattern.permute.xlu0 0
  %2931 = vperm.xlu0 %2930, %v2838
  %v2932 = vpop.permute.xlu0 %2931
  %2935 = vset.pattern.permute.xlu0 0
  %2936 = vperm.xlu0 %2935, %v2839
  %v2937 = vpop.permute.xlu0 %2936
  %2940 = vset.pattern.permute.xlu0 0
  %2941 = vperm.xlu0 %2940, %v2840
  %v2942 = vpop.permute.xlu0 %2941
  %2945 = vset.pattern.permute.xlu0 0
  %2946 = vperm.xlu0 %2945, %v2841
  %v2947 = vpop.permute.xlu0 %2946
  %2950 = vset.pattern.permute.xlu0 0
  %2951 = vperm.xlu0 %2950, %v2842
  %v2952 = vpop.permute.xlu0 %2951
  %2955 = vset.pattern.permute.xlu0 0
  %2956 = vperm.xlu0 %2955, %v2843
  %v2957 = vpop.permute.xlu0 %2956
  %2960 = vset.pattern.permute.xlu0 0
  %2961 = vperm.xlu0 %2960, %v2844
  %v2962 = vpop.permute.xlu0 %2961
  %2965 = vset.pattern.permute.xlu0 0
  %2966 = vperm.xlu0 %2965, %v2845
  %v2967 = vpop.permute.xlu0 %2966
  %2970 = vset.pattern.permute.xlu0 0
  %2971 = vperm.xlu0 %2970, %v2846
  %v2972 = vpop.permute.xlu0 %2971
  %2975 = vset.pattern.permute.xlu0 0
  %2976 = vperm.xlu0 %2975, %v2847
  %v2977 = vpop.permute.xlu0 %2976
  %2980 = vset.pattern.permute.xlu0 0
  %2981 = vperm.xlu0 %2980, %v2848
  %v2982 = vpop.permute.xlu0 %2981
  %2985 = vset.pattern.permute.xlu0 0
  %2986 = vperm.xlu0 %2985, %v2849
  %v2987 = vpop.permute.xlu0 %2986
  %2990 = vset.pattern.permute.xlu0 0
  %2991 = vperm.xlu0 %2990, %v2850
  %v2992 = vpop.permute.xlu0 %2991
  %2995 = vset.pattern.permute.xlu0 0
  %2996 = vperm.xlu0 %2995, %v2851
  %v2997 = vpop.permute.xlu0 %2996
  %3000 = vset.pattern.permute.xlu0 0
  %3001 = vperm.xlu0 %3000, %v2852
  %v3002 = vpop.permute.xlu0 %3001
  %3005 = vset.pattern.permute.xlu0 0
  %3006 = vperm.xlu0 %3005, %v2853
  %v3007 = vpop.permute.xlu0 %3006
  %3010 = vset.pattern.permute.xlu0 0
  %3011 = vperm.xlu0 %3010, %v2854
  %v3012 = vpop.permute.xlu0 %3011
  %3015 = vset.pattern.permute.xlu0 0
  %3016 = vperm.xlu0 %3015, %v2855
  %v3017 = vpop.permute.xlu0 %3016
  %3020 = vset.pattern.permute.xlu0 0
  %3021 = vperm.xlu0 %3020, %v2856
  %v3022 = vpop.permute.xlu0 %3021
  %3025 = vset.pattern.permute.xlu0 0
  %3026 = vperm.xlu0 %3025, %v2857
  %v3027 = vpop.permute.xlu0 %3026
  %3030 = vset.pattern.permute.xlu0 0
  %3031 = vperm.xlu0 %3030, %v2858
  %v3032 = vpop.permute.xlu0 %3031
  %3035 = vset.pattern.permute.xlu0 0
  %3036 = vperm.xlu0 %3035, %v2859
  %v3037 = vpop.permute.xlu0 %3036
  %3040 = vset.pattern.permute.xlu0 0
  %3041 = vperm.xlu0 %3040, %v2860
  %v3042 = vpop.permute.xlu0 %3041
  %3045 = vset.pattern.permute.xlu0 0
  %3046 = vperm.xlu0 %3045, %v2861
  %v3047 = vpop.permute.xlu0 %3046
  %3050 = vset.pattern.permute.xlu0 0
  %3051 = vperm.xlu0 %3050, %v2862
  %v3052 = vpop.permute.xlu0 %3051
  %3055 = vset.pattern.permute.xlu0 0
  %3056 = vperm.xlu0 %3055, %v2863
  %v3057 = vpop.permute.xlu0 %3056
  %3060 = vset.pattern.permute.xlu0 0
  %3061 = vperm.xlu0 %3060, %v2864
  %v3062 = vpop.permute.xlu0 %3061
  %3065 = vset.pattern.permute.xlu0 0
  %3066 = vperm.xlu0 %3065, %v2865
  %v3067 = vpop.permute.xlu0 %3066
  %3070 = vset.pattern.permute.xlu0 0
  %3071 = vperm.xlu0 %3070, %v2866
  %v3072 = vpop.permute.xlu0 %3071
  %3075 = vset.pattern.permute.xlu0 0
  %3076 = vperm.xlu0 %3075, %v2867
  %v3077 = vpop.permute.xlu0 %3076
  %3080 = vset.pattern.permute.xlu0 0
  %3081 = vperm.xlu0 %3080, %v2868
  %v3082 = vpop.permute.xlu0 %3081
  %3085 = vset.pattern.permute.xlu0 0
  %3086 = vperm.xlu0 %3085, %v2869
  %v3087 = vpop.permute.xlu0 %3086
  %3090 = vset.pattern.permute.xlu0 0
  %3091 = vperm.xlu0 %3090, %v2870
  %v3092 = vpop.permute.xlu0 %3091
  %3095 = vset.pattern.permute.xlu0 0
  %3096 = vperm.xlu0 %3095, %v2871
  %v3097 = vpop.permute.xlu0 %3096
  %3100 = vset.pattern.permute.xlu0 0
  %3101 = vperm.xlu0 %3100, %v2872
  %v3102 = vpop.permute.xlu0 %3101
  %3105 = vset.pattern.permute.xlu0 0
  %3106 = vperm.xlu0 %3105, %v2873
  %v3107 = vpop.permute.xlu0 %3106
  %3110 = vset.pattern.permute.xlu0 0
  %3111 = vperm.xlu0 %3110, %v2874
  %v3112 = vpop.permute.xlu0 %3111
  %3115 = vset.pattern.permute.xlu0 0
  %3116 = vperm.xlu0 %3115, %v2875
  %v3117 = vpop.permute.xlu0 %3116
  %3120 = vset.pattern.permute.xlu0 0
  %3121 = vperm.xlu0 %3120, %v2876
  %v3122 = vpop.permute.xlu0 %3121
  %3125 = vset.pattern.permute.xlu0 0
  %3126 = vperm.xlu0 %3125, %v2877
  %v3127 = vpop.permute.xlu0 %3126
  %3130 = vset.pattern.permute.xlu0 0
  %3131 = vperm.xlu0 %3130, %v2878
  %v3132 = vpop.permute.xlu0 %3131
  %3135 = vset.pattern.permute.xlu0 0
  %3136 = vperm.xlu0 %3135, %v2879
  %v3137 = vpop.permute.xlu0 %3136
  %3140 = vset.pattern.permute.xlu0 0
  %3141 = vperm.xlu0 %3140, %v2880
  %v3142 = vpop.permute.xlu0 %3141
  %3145 = vset.pattern.permute.xlu0 0
  %3146 = vperm.xlu0 %3145, %v2881
  %v3147 = vpop.permute.xlu0 %3146
  %3150 = vset.pattern.permute.xlu0 0
  %3151 = vperm.xlu0 %3150, %v2882
  %v3152 = vpop.permute.xlu0 %3151
  %3155 = vset.pattern.permute.xlu0 0
  %3156 = vperm.xlu0 %3155, %v2883
  %v3157 = vpop.permute.xlu0 %3156
  %3160 = vset.pattern.permute.xlu0 0
  %3161 = vperm.xlu0 %3160, %v2884
  %v3162 = vpop.permute.xlu0 %3161
  %3165 = vset.pattern.permute.xlu0 0
  %3166 = vperm.xlu0 %3165, %v2885
  %v3167 = vpop.permute.xlu0 %3166
  %3170 = vset.pattern.permute.xlu0 0
  %3171 = vperm.xlu0 %3170, %v2886
  %v3172 = vpop.permute.xlu0 %3171
  %3175 = vset.pattern.permute.xlu0 0
  %3176 = vperm.xlu0 %3175, %v2887
  %v3177 = vpop.permute.xlu0 %3176
  %3180 = vset.pattern.permute.xlu0 0
  %3181 = vperm.xlu0 %3180, %v2888
  %v3182 = vpop.permute.xlu0 %3181
  %3185 = vset.pattern.permute.xlu0 0
  %3186 = vperm.xlu0 %3185, %v2889
  %v3187 = vpop.permute.xlu0 %3186
  %3190 = vset.pattern.permute.xlu0 0
  %3191 = vperm.xlu0 %3190, %v2890
  %v3192 = vpop.permute.xlu0 %3191
  %3195 = vset.pattern.permute.xlu0 0
  %3196 = vperm.xlu0 %3195, %v2891
  %v3197 = vpop.permute.xlu0 %3196
  %3200 = vset.pattern.permute.xlu0 0
  %3201 = vperm.xlu0 %3200, %v2892
  %v3202 = vpop.permute.xlu0 %3201
  %3205 = vset.pattern.permute.xlu0 0
  %3206 = vperm.xlu0 %3205, %v2893
  %v3207 = vpop.permute.xlu0 %3206
  %v3209 = vmul.f32 %v2768, %v2897
  %v3210 = vmul.f32 %v2769, %v2902
  %v3211 = vmul.f32 %v2770, %v2907
  %v3212 = vmul.f32 %v2771, %v2912
  %v3213 = vmul.f32 %v2772, %v2917
  %v3214 = vmul.f32 %v2773, %v2922
  %v3215 = vmul.f32 %v2774, %v2927
  %v3216 = vmul.f32 %v2775, %v2932
  %v3217 = vmul.f32 %v2776, %v2937
  %v3218 = vmul.f32 %v2777, %v2942
  %v3219 = vmul.f32 %v2778, %v2947
  %v3220 = vmul.f32 %v2779, %v2952
  %v3221 = vmul.f32 %v2780, %v2957
  %v3222 = vmul.f32 %v2781, %v2962
  %v3223 = vmul.f32 %v2782, %v2967
  %v3224 = vmul.f32 %v2783, %v2972
  %v3225 = vmul.f32 %v2784, %v2977
  %v3226 = vmul.f32 %v2785, %v2982
  %v3227 = vmul.f32 %v2786, %v2987
  %v3228 = vmul.f32 %v2787, %v2992
  %v3229 = vmul.f32 %v2788, %v2997
  %v3230 = vmul.f32 %v2789, %v3002
  %v3231 = vmul.f32 %v2790, %v3007
  %v3232 = vmul.f32 %v2791, %v3012
  %v3233 = vmul.f32 %v2792, %v3017
  %v3234 = vmul.f32 %v2793, %v3022
  %v3235 = vmul.f32 %v2794, %v3027
  %v3236 = vmul.f32 %v2795, %v3032
  %v3237 = vmul.f32 %v2796, %v3037
  %v3238 = vmul.f32 %v2797, %v3042
  %v3239 = vmul.f32 %v2798, %v3047
  %v3240 = vmul.f32 %v2799, %v3052
  %v3241 = vmul.f32 %v2800, %v3057
  %v3242 = vmul.f32 %v2801, %v3062
  %v3243 = vmul.f32 %v2802, %v3067
  %v3244 = vmul.f32 %v2803, %v3072
  %v3245 = vmul.f32 %v2804, %v3077
  %v3246 = vmul.f32 %v2805, %v3082
  %v3247 = vmul.f32 %v2806, %v3087
  %v3248 = vmul.f32 %v2807, %v3092
  %v3249 = vmul.f32 %v2808, %v3097
  %v3250 = vmul.f32 %v2809, %v3102
  %v3251 = vmul.f32 %v2810, %v3107
  %v3252 = vmul.f32 %v2811, %v3112
  %v3253 = vmul.f32 %v2812, %v3117
  %v3254 = vmul.f32 %v2813, %v3122
  %v3255 = vmul.f32 %v2814, %v3127
  %v3256 = vmul.f32 %v2815, %v3132
  %v3257 = vmul.f32 %v2816, %v3137
  %v3258 = vmul.f32 %v2817, %v3142
  %v3259 = vmul.f32 %v2818, %v3147
  %v3260 = vmul.f32 %v2819, %v3152
  %v3261 = vmul.f32 %v2820, %v3157
  %v3262 = vmul.f32 %v2821, %v3162
  %v3263 = vmul.f32 %v2822, %v3167
  %v3264 = vmul.f32 %v2823, %v3172
  %v3265 = vmul.f32 %v2824, %v3177
  %v3266 = vmul.f32 %v2825, %v3182
  %v3267 = vmul.f32 %v2826, %v3187
  %v3268 = vmul.f32 %v2827, %v3192
  %v3269 = vmul.f32 %v2828, %v3197
  %v3270 = vmul.f32 %v2829, %v3202
  %v3271 = vmul.f32 %v2830, %v3207
  %v3272 = vpack.c.bf16 %v3210, %v3209
  %v3273 = vpack.c.bf16 %v3212, %v3211
  %v3274 = vpack.c.bf16 %v3214, %v3213
  %v3275 = vpack.c.bf16 %v3216, %v3215
  %v3276 = vpack.c.bf16 %v3218, %v3217
  %v3277 = vpack.c.bf16 %v3220, %v3219
  %v3278 = vpack.c.bf16 %v3222, %v3221
  %v3279 = vpack.c.bf16 %v3224, %v3223
  %v3280 = vpack.c.bf16 %v3226, %v3225
  %v3281 = vpack.c.bf16 %v3228, %v3227
  %v3282 = vpack.c.bf16 %v3230, %v3229
  %v3283 = vpack.c.bf16 %v3232, %v3231
  %v3284 = vpack.c.bf16 %v3234, %v3233
  %v3285 = vpack.c.bf16 %v3236, %v3235
  %v3286 = vpack.c.bf16 %v3238, %v3237
  %v3287 = vpack.c.bf16 %v3240, %v3239
  %v3288 = vpack.c.bf16 %v3242, %v3241
  %v3289 = vpack.c.bf16 %v3244, %v3243
  %v3290 = vpack.c.bf16 %v3246, %v3245
  %v3291 = vpack.c.bf16 %v3248, %v3247
  %v3292 = vpack.c.bf16 %v3250, %v3249
  %v3293 = vpack.c.bf16 %v3252, %v3251
  %v3294 = vpack.c.bf16 %v3254, %v3253
  %v3295 = vpack.c.bf16 %v3256, %v3255
  %v3296 = vpack.c.bf16 %v3258, %v3257
  %v3297 = vpack.c.bf16 %v3260, %v3259
  %v3298 = vpack.c.bf16 %v3262, %v3261
  %v3299 = vpack.c.bf16 %v3264, %v3263
  %v3300 = vpack.c.bf16 %v3266, %v3265
  %v3301 = vpack.c.bf16 %v3268, %v3267
  %v3302 = vpack.c.bf16 %v3270, %v3269
  %v3303 = vpack.c.bf16 %v3271, %v3271
  %v3336 = vunpack.c.l.b16 %v3272
  %v3337 = vunpack.c.h.b16 %v3272
  %v3338 = vunpack.c.l.b16 %v3273
  %v3339 = vunpack.c.h.b16 %v3273
  %v3340 = vunpack.c.l.b16 %v3274
  %v3341 = vunpack.c.h.b16 %v3274
  %v3342 = vunpack.c.l.b16 %v3275
  %v3343 = vunpack.c.h.b16 %v3275
  %v3344 = vunpack.c.l.b16 %v3276
  %v3345 = vunpack.c.h.b16 %v3276
  %v3346 = vunpack.c.l.b16 %v3277
  %v3347 = vunpack.c.h.b16 %v3277
  %v3348 = vunpack.c.l.b16 %v3278
  %v3349 = vunpack.c.h.b16 %v3278
  %v3350 = vunpack.c.l.b16 %v3279
  %v3351 = vunpack.c.h.b16 %v3279
  %v3352 = vunpack.c.l.b16 %v3280
  %v3353 = vunpack.c.h.b16 %v3280
  %v3354 = vunpack.c.l.b16 %v3281
  %v3355 = vunpack.c.h.b16 %v3281
  %v3356 = vunpack.c.l.b16 %v3282
  %v3357 = vunpack.c.h.b16 %v3282
  %v3358 = vunpack.c.l.b16 %v3283
  %v3359 = vunpack.c.h.b16 %v3283
  %v3360 = vunpack.c.l.b16 %v3284
  %v3361 = vunpack.c.h.b16 %v3284
  %v3362 = vunpack.c.l.b16 %v3285
  %v3363 = vunpack.c.h.b16 %v3285
  %v3364 = vunpack.c.l.b16 %v3286
  %v3365 = vunpack.c.h.b16 %v3286
  %v3366 = vunpack.c.l.b16 %v3287
  %v3367 = vunpack.c.h.b16 %v3287
  %v3368 = vunpack.c.l.b16 %v3288
  %v3369 = vunpack.c.h.b16 %v3288
  %v3370 = vunpack.c.l.b16 %v3289
  %v3371 = vunpack.c.h.b16 %v3289
  %v3372 = vunpack.c.l.b16 %v3290
  %v3373 = vunpack.c.h.b16 %v3290
  %v3374 = vunpack.c.l.b16 %v3291
  %v3375 = vunpack.c.h.b16 %v3291
  %v3376 = vunpack.c.l.b16 %v3292
  %v3377 = vunpack.c.h.b16 %v3292
  %v3378 = vunpack.c.l.b16 %v3293
  %v3379 = vunpack.c.h.b16 %v3293
  %v3380 = vunpack.c.l.b16 %v3294
  %v3381 = vunpack.c.h.b16 %v3294
  %v3382 = vunpack.c.l.b16 %v3295
  %v3383 = vunpack.c.h.b16 %v3295
  %v3384 = vunpack.c.l.b16 %v3296
  %v3385 = vunpack.c.h.b16 %v3296
  %v3386 = vunpack.c.l.b16 %v3297
  %v3387 = vunpack.c.h.b16 %v3297
  %v3388 = vunpack.c.l.b16 %v3298
  %v3389 = vunpack.c.h.b16 %v3298
  %v3390 = vunpack.c.l.b16 %v3299
  %v3391 = vunpack.c.h.b16 %v3299
  %v3392 = vunpack.c.l.b16 %v3300
  %v3393 = vunpack.c.h.b16 %v3300
  %v3394 = vunpack.c.l.b16 %v3301
  %v3395 = vunpack.c.h.b16 %v3301
  %v3396 = vunpack.c.l.b16 %v3302
  %v3397 = vunpack.c.h.b16 %v3302
  %v3398 = vunpack.c.l.b16 %v3303
  %v3399 = vpack.c.b16 %v3336, %v3336
  %v3400 = vpack.c.b16 %v3337, %v3337
  %v3401 = vpack.c.b16 %v3338, %v3338
  %v3402 = vpack.c.b16 %v3339, %v3339
  %v3403 = vpack.c.b16 %v3340, %v3340
  %v3404 = vpack.c.b16 %v3341, %v3341
  %v3405 = vpack.c.b16 %v3342, %v3342
  %v3406 = vpack.c.b16 %v3343, %v3343
  %v3407 = vpack.c.b16 %v3344, %v3344
  %v3408 = vpack.c.b16 %v3345, %v3345
  %v3409 = vpack.c.b16 %v3346, %v3346
  %v3410 = vpack.c.b16 %v3347, %v3347
  %v3411 = vpack.c.b16 %v3348, %v3348
  %v3412 = vpack.c.b16 %v3349, %v3349
  %v3413 = vpack.c.b16 %v3350, %v3350
  %v3414 = vpack.c.b16 %v3351, %v3351
  %v3415 = vpack.c.b16 %v3352, %v3352
  %v3416 = vpack.c.b16 %v3353, %v3353
  %v3417 = vpack.c.b16 %v3354, %v3354
  %v3418 = vpack.c.b16 %v3355, %v3355
  %v3419 = vpack.c.b16 %v3356, %v3356
  %v3420 = vpack.c.b16 %v3357, %v3357
  %v3421 = vpack.c.b16 %v3358, %v3358
  %v3422 = vpack.c.b16 %v3359, %v3359
  %v3423 = vpack.c.b16 %v3360, %v3360
  %v3424 = vpack.c.b16 %v3361, %v3361
  %v3425 = vpack.c.b16 %v3362, %v3362
  %v3426 = vpack.c.b16 %v3363, %v3363
  %v3427 = vpack.c.b16 %v3364, %v3364
  %v3428 = vpack.c.b16 %v3365, %v3365
  %v3429 = vpack.c.b16 %v3366, %v3366
  %v3430 = vpack.c.b16 %v3367, %v3367
  %v3431 = vpack.c.b16 %v3368, %v3368
  %v3432 = vpack.c.b16 %v3369, %v3369
  %v3433 = vpack.c.b16 %v3370, %v3370
  %v3434 = vpack.c.b16 %v3371, %v3371
  %v3435 = vpack.c.b16 %v3372, %v3372
  %v3436 = vpack.c.b16 %v3373, %v3373
  %v3437 = vpack.c.b16 %v3374, %v3374
  %v3438 = vpack.c.b16 %v3375, %v3375
  %v3439 = vpack.c.b16 %v3376, %v3376
  %v3440 = vpack.c.b16 %v3377, %v3377
  %v3441 = vpack.c.b16 %v3378, %v3378
  %v3442 = vpack.c.b16 %v3379, %v3379
  %v3443 = vpack.c.b16 %v3380, %v3380
  %v3444 = vpack.c.b16 %v3381, %v3381
  %v3445 = vpack.c.b16 %v3382, %v3382
  %v3446 = vpack.c.b16 %v3383, %v3383
  %v3447 = vpack.c.b16 %v3384, %v3384
  %v3448 = vpack.c.b16 %v3385, %v3385
  %v3449 = vpack.c.b16 %v3386, %v3386
  %v3450 = vpack.c.b16 %v3387, %v3387
  %v3451 = vpack.c.b16 %v3388, %v3388
  %v3452 = vpack.c.b16 %v3389, %v3389
  %v3453 = vpack.c.b16 %v3390, %v3390
  %v3454 = vpack.c.b16 %v3391, %v3391
  %v3455 = vpack.c.b16 %v3392, %v3392
  %v3456 = vpack.c.b16 %v3393, %v3393
  %v3457 = vpack.c.b16 %v3394, %v3394
  %v3458 = vpack.c.b16 %v3395, %v3395
  %v3459 = vpack.c.b16 %v3396, %v3396
  %v3460 = vpack.c.b16 %v3397, %v3397
  %v3461 = vpack.c.b16 %v3398, %v3398
  %vm3462 = vsmask.f32 4368
  %vm3463 = vmor %vm46, %vm3462
  %v3465 = vshrl.u32 %v3399, 16
  %v3467 = vrot.slane %v3465, 7
  %v3468 = vshll.u32 %v3399, 16
  %v3470 = vor.u32 %v3467, %v3468
  %v3471 = vrot.slane %v3467, 4
  %v3473 = vshrl.u32 %v3400, 16
  %v3475 = vrot.slane %v3473, 7
  %v3476 = vshll.u32 %v3400, 16
  %v3478 = vor.u32 %v3475, %v3476
  %v3479 = vsel %vm3463, %v3471, %v3478
  %v3480 = vrot.slane %v3475, 4
  %v3482 = vshrl.u32 %v3401, 16
  %v3484 = vrot.slane %v3482, 7
  %v3485 = vshll.u32 %v3401, 16
  %v3487 = vor.u32 %v3484, %v3485
  %v3488 = vsel %vm3463, %v3480, %v3487
  %v3489 = vrot.slane %v3484, 4
  %v3491 = vshrl.u32 %v3402, 16
  %v3493 = vrot.slane %v3491, 7
  %v3494 = vshll.u32 %v3402, 16
  %v3496 = vor.u32 %v3493, %v3494
  %v3497 = vsel %vm3463, %v3489, %v3496
  %v3498 = vrot.slane %v3493, 4
  %v3500 = vshrl.u32 %v3403, 16
  %v3502 = vrot.slane %v3500, 7
  %v3503 = vshll.u32 %v3403, 16
  %v3505 = vor.u32 %v3502, %v3503
  %v3506 = vsel %vm3463, %v3498, %v3505
  %v3507 = vrot.slane %v3502, 4
  %v3509 = vshrl.u32 %v3404, 16
  %v3511 = vrot.slane %v3509, 7
  %v3512 = vshll.u32 %v3404, 16
  %v3514 = vor.u32 %v3511, %v3512
  %v3515 = vsel %vm3463, %v3507, %v3514
  %v3516 = vrot.slane %v3511, 4
  %v3518 = vshrl.u32 %v3405, 16
  %v3520 = vrot.slane %v3518, 7
  %v3521 = vshll.u32 %v3405, 16
  %v3523 = vor.u32 %v3520, %v3521
  %v3524 = vsel %vm3463, %v3516, %v3523
  %v3525 = vrot.slane %v3520, 4
  %v3527 = vshrl.u32 %v3406, 16
  %v3529 = vrot.slane %v3527, 7
  %v3530 = vshll.u32 %v3406, 16
  %v3532 = vor.u32 %v3529, %v3530
  %v3533 = vsel %vm3463, %v3525, %v3532
  %v3534 = vrot.slane %v3529, 4
  %v3536 = vshrl.u32 %v3407, 16
  %v3538 = vrot.slane %v3536, 7
  %v3539 = vshll.u32 %v3407, 16
  %v3541 = vor.u32 %v3538, %v3539
  %v3542 = vsel %vm3463, %v3534, %v3541
  %v3543 = vrot.slane %v3538, 4
  %v3545 = vshrl.u32 %v3408, 16
  %v3547 = vrot.slane %v3545, 7
  %v3548 = vshll.u32 %v3408, 16
  %v3550 = vor.u32 %v3547, %v3548
  %v3551 = vsel %vm3463, %v3543, %v3550
  %v3552 = vrot.slane %v3547, 4
  %v3554 = vshrl.u32 %v3409, 16
  %v3556 = vrot.slane %v3554, 7
  %v3557 = vshll.u32 %v3409, 16
  %v3559 = vor.u32 %v3556, %v3557
  %v3560 = vsel %vm3463, %v3552, %v3559
  %v3561 = vrot.slane %v3556, 4
  %v3563 = vshrl.u32 %v3410, 16
  %v3565 = vrot.slane %v3563, 7
  %v3566 = vshll.u32 %v3410, 16
  %v3568 = vor.u32 %v3565, %v3566
  %v3569 = vsel %vm3463, %v3561, %v3568
  %v3570 = vrot.slane %v3565, 4
  %v3572 = vshrl.u32 %v3411, 16
  %v3574 = vrot.slane %v3572, 7
  %v3575 = vshll.u32 %v3411, 16
  %v3577 = vor.u32 %v3574, %v3575
  %v3578 = vsel %vm3463, %v3570, %v3577
  %v3579 = vrot.slane %v3574, 4
  %v3581 = vshrl.u32 %v3412, 16
  %v3583 = vrot.slane %v3581, 7
  %v3584 = vshll.u32 %v3412, 16
  %v3586 = vor.u32 %v3583, %v3584
  %v3587 = vsel %vm3463, %v3579, %v3586
  %v3588 = vrot.slane %v3583, 4
  %v3590 = vshrl.u32 %v3413, 16
  %v3592 = vrot.slane %v3590, 7
  %v3593 = vshll.u32 %v3413, 16
  %v3595 = vor.u32 %v3592, %v3593
  %v3596 = vsel %vm3463, %v3588, %v3595
  %v3597 = vrot.slane %v3592, 4
  %v3599 = vshrl.u32 %v3414, 16
  %v3601 = vrot.slane %v3599, 7
  %v3602 = vshll.u32 %v3414, 16
  %v3604 = vor.u32 %v3601, %v3602
  %v3605 = vsel %vm3463, %v3597, %v3604
  %v3606 = vrot.slane %v3601, 4
  %v3608 = vshrl.u32 %v3415, 16
  %v3610 = vrot.slane %v3608, 7
  %v3611 = vshll.u32 %v3415, 16
  %v3613 = vor.u32 %v3610, %v3611
  %v3614 = vsel %vm3463, %v3606, %v3613
  %v3615 = vrot.slane %v3610, 4
  %v3617 = vshrl.u32 %v3416, 16
  %v3619 = vrot.slane %v3617, 7
  %v3620 = vshll.u32 %v3416, 16
  %v3622 = vor.u32 %v3619, %v3620
  %v3623 = vsel %vm3463, %v3615, %v3622
  %v3624 = vrot.slane %v3619, 4
  %v3626 = vshrl.u32 %v3417, 16
  %v3628 = vrot.slane %v3626, 7
  %v3629 = vshll.u32 %v3417, 16
  %v3631 = vor.u32 %v3628, %v3629
  %v3632 = vsel %vm3463, %v3624, %v3631
  %v3633 = vrot.slane %v3628, 4
  %v3635 = vshrl.u32 %v3418, 16
  %v3637 = vrot.slane %v3635, 7
  %v3638 = vshll.u32 %v3418, 16
  %v3640 = vor.u32 %v3637, %v3638
  %v3641 = vsel %vm3463, %v3633, %v3640
  %v3642 = vrot.slane %v3637, 4
  %v3644 = vshrl.u32 %v3419, 16
  %v3646 = vrot.slane %v3644, 7
  %v3647 = vshll.u32 %v3419, 16
  %v3649 = vor.u32 %v3646, %v3647
  %v3650 = vsel %vm3463, %v3642, %v3649
  %v3651 = vrot.slane %v3646, 4
  %v3653 = vshrl.u32 %v3420, 16
  %v3655 = vrot.slane %v3653, 7
  %v3656 = vshll.u32 %v3420, 16
  %v3658 = vor.u32 %v3655, %v3656
  %v3659 = vsel %vm3463, %v3651, %v3658
  %v3660 = vrot.slane %v3655, 4
  %v3662 = vshrl.u32 %v3421, 16
  %v3664 = vrot.slane %v3662, 7
  %v3665 = vshll.u32 %v3421, 16
  %v3667 = vor.u32 %v3664, %v3665
  %v3668 = vsel %vm3463, %v3660, %v3667
  %v3669 = vrot.slane %v3664, 4
  %v3671 = vshrl.u32 %v3422, 16
  %v3673 = vrot.slane %v3671, 7
  %v3674 = vshll.u32 %v3422, 16
  %v3676 = vor.u32 %v3673, %v3674
  %v3677 = vsel %vm3463, %v3669, %v3676
  %v3678 = vrot.slane %v3673, 4
  %v3680 = vshrl.u32 %v3423, 16
  %v3682 = vrot.slane %v3680, 7
  %v3683 = vshll.u32 %v3423, 16
  %v3685 = vor.u32 %v3682, %v3683
  %v3686 = vsel %vm3463, %v3678, %v3685
  %v3687 = vrot.slane %v3682, 4
  %v3689 = vshrl.u32 %v3424, 16
  %v3691 = vrot.slane %v3689, 7
  %v3692 = vshll.u32 %v3424, 16
  %v3694 = vor.u32 %v3691, %v3692
  %v3695 = vsel %vm3463, %v3687, %v3694
  %v3696 = vrot.slane %v3691, 4
  %v3698 = vshrl.u32 %v3425, 16
  %v3700 = vrot.slane %v3698, 7
  %v3701 = vshll.u32 %v3425, 16
  %v3703 = vor.u32 %v3700, %v3701
  %v3704 = vsel %vm3463, %v3696, %v3703
  %v3705 = vrot.slane %v3700, 4
  %v3707 = vshrl.u32 %v3426, 16
  %v3709 = vrot.slane %v3707, 7
  %v3710 = vshll.u32 %v3426, 16
  %v3712 = vor.u32 %v3709, %v3710
  %v3713 = vsel %vm3463, %v3705, %v3712
  %v3714 = vrot.slane %v3709, 4
  %v3716 = vshrl.u32 %v3427, 16
  %v3718 = vrot.slane %v3716, 7
  %v3719 = vshll.u32 %v3427, 16
  %v3721 = vor.u32 %v3718, %v3719
  %v3722 = vsel %vm3463, %v3714, %v3721
  %v3723 = vrot.slane %v3718, 4
  %v3725 = vshrl.u32 %v3428, 16
  %v3727 = vrot.slane %v3725, 7
  %v3728 = vshll.u32 %v3428, 16
  %v3730 = vor.u32 %v3727, %v3728
  %v3731 = vsel %vm3463, %v3723, %v3730
  %v3732 = vrot.slane %v3727, 4
  %v3734 = vshrl.u32 %v3429, 16
  %v3736 = vrot.slane %v3734, 7
  %v3737 = vshll.u32 %v3429, 16
  %v3739 = vor.u32 %v3736, %v3737
  %v3740 = vsel %vm3463, %v3732, %v3739
  %v3741 = vrot.slane %v3736, 4
  %v3743 = vshrl.u32 %v3430, 16
  %v3745 = vrot.slane %v3743, 7
  %v3746 = vshll.u32 %v3430, 16
  %v3748 = vor.u32 %v3745, %v3746
  %v3749 = vsel %vm3463, %v3741, %v3748
  %v3750 = vrot.slane %v3745, 4
  %v3752 = vshrl.u32 %v3431, 16
  %v3754 = vrot.slane %v3752, 7
  %v3755 = vshll.u32 %v3431, 16
  %v3757 = vor.u32 %v3754, %v3755
  %v3758 = vsel %vm3463, %v3750, %v3757
  %v3759 = vrot.slane %v3754, 4
  %v3761 = vshrl.u32 %v3432, 16
  %v3763 = vrot.slane %v3761, 7
  %v3764 = vshll.u32 %v3432, 16
  %v3766 = vor.u32 %v3763, %v3764
  %v3767 = vsel %vm3463, %v3759, %v3766
  %v3768 = vrot.slane %v3763, 4
  %v3770 = vshrl.u32 %v3433, 16
  %v3772 = vrot.slane %v3770, 7
  %v3773 = vshll.u32 %v3433, 16
  %v3775 = vor.u32 %v3772, %v3773
  %v3776 = vsel %vm3463, %v3768, %v3775
  %v3777 = vrot.slane %v3772, 4
  %v3779 = vshrl.u32 %v3434, 16
  %v3781 = vrot.slane %v3779, 7
  %v3782 = vshll.u32 %v3434, 16
  %v3784 = vor.u32 %v3781, %v3782
  %v3785 = vsel %vm3463, %v3777, %v3784
  %v3786 = vrot.slane %v3781, 4
  %v3788 = vshrl.u32 %v3435, 16
  %v3790 = vrot.slane %v3788, 7
  %v3791 = vshll.u32 %v3435, 16
  %v3793 = vor.u32 %v3790, %v3791
  %v3794 = vsel %vm3463, %v3786, %v3793
  %v3795 = vrot.slane %v3790, 4
  %v3797 = vshrl.u32 %v3436, 16
  %v3799 = vrot.slane %v3797, 7
  %v3800 = vshll.u32 %v3436, 16
  %v3802 = vor.u32 %v3799, %v3800
  %v3803 = vsel %vm3463, %v3795, %v3802
  %v3804 = vrot.slane %v3799, 4
  %v3806 = vshrl.u32 %v3437, 16
  %v3808 = vrot.slane %v3806, 7
  %v3809 = vshll.u32 %v3437, 16
  %v3811 = vor.u32 %v3808, %v3809
  %v3812 = vsel %vm3463, %v3804, %v3811
  %v3813 = vrot.slane %v3808, 4
  %v3815 = vshrl.u32 %v3438, 16
  %v3817 = vrot.slane %v3815, 7
  %v3818 = vshll.u32 %v3438, 16
  %v3820 = vor.u32 %v3817, %v3818
  %v3821 = vsel %vm3463, %v3813, %v3820
  %v3822 = vrot.slane %v3817, 4
  %v3824 = vshrl.u32 %v3439, 16
  %v3826 = vrot.slane %v3824, 7
  %v3827 = vshll.u32 %v3439, 16
  %v3829 = vor.u32 %v3826, %v3827
  %v3830 = vsel %vm3463, %v3822, %v3829
  %v3831 = vrot.slane %v3826, 4
  %v3833 = vshrl.u32 %v3440, 16
  %v3835 = vrot.slane %v3833, 7
  %v3836 = vshll.u32 %v3440, 16
  %v3838 = vor.u32 %v3835, %v3836
  %v3839 = vsel %vm3463, %v3831, %v3838
  %v3840 = vrot.slane %v3835, 4
  %v3842 = vshrl.u32 %v3441, 16
  %v3844 = vrot.slane %v3842, 7
  %v3845 = vshll.u32 %v3441, 16
  %v3847 = vor.u32 %v3844, %v3845
  %v3848 = vsel %vm3463, %v3840, %v3847
  %v3849 = vrot.slane %v3844, 4
  %v3851 = vshrl.u32 %v3442, 16
  %v3853 = vrot.slane %v3851, 7
  %v3854 = vshll.u32 %v3442, 16
  %v3856 = vor.u32 %v3853, %v3854
  %v3857 = vsel %vm3463, %v3849, %v3856
  %v3858 = vrot.slane %v3853, 4
  %v3860 = vshrl.u32 %v3443, 16
  %v3862 = vrot.slane %v3860, 7
  %v3863 = vshll.u32 %v3443, 16
  %v3865 = vor.u32 %v3862, %v3863
  %v3866 = vsel %vm3463, %v3858, %v3865
  %v3867 = vrot.slane %v3862, 4
  %v3869 = vshrl.u32 %v3444, 16
  %v3871 = vrot.slane %v3869, 7
  %v3872 = vshll.u32 %v3444, 16
  %v3874 = vor.u32 %v3871, %v3872
  %v3875 = vsel %vm3463, %v3867, %v3874
  %v3876 = vrot.slane %v3871, 4
  %v3878 = vshrl.u32 %v3445, 16
  %v3880 = vrot.slane %v3878, 7
  %v3881 = vshll.u32 %v3445, 16
  %v3883 = vor.u32 %v3880, %v3881
  %v3884 = vsel %vm3463, %v3876, %v3883
  %v3885 = vrot.slane %v3880, 4
  %v3887 = vshrl.u32 %v3446, 16
  %v3889 = vrot.slane %v3887, 7
  %v3890 = vshll.u32 %v3446, 16
  %v3892 = vor.u32 %v3889, %v3890
  %v3893 = vsel %vm3463, %v3885, %v3892
  %v3894 = vrot.slane %v3889, 4
  %v3896 = vshrl.u32 %v3447, 16
  %v3898 = vrot.slane %v3896, 7
  %v3899 = vshll.u32 %v3447, 16
  %v3901 = vor.u32 %v3898, %v3899
  %v3902 = vsel %vm3463, %v3894, %v3901
  %v3903 = vrot.slane %v3898, 4
  %v3905 = vshrl.u32 %v3448, 16
  %v3907 = vrot.slane %v3905, 7
  %v3908 = vshll.u32 %v3448, 16
  %v3910 = vor.u32 %v3907, %v3908
  %v3911 = vsel %vm3463, %v3903, %v3910
  %v3912 = vrot.slane %v3907, 4
  %v3914 = vshrl.u32 %v3449, 16
  %v3916 = vrot.slane %v3914, 7
  %v3917 = vshll.u32 %v3449, 16
  %v3919 = vor.u32 %v3916, %v3917
  %v3920 = vsel %vm3463, %v3912, %v3919
  %v3921 = vrot.slane %v3916, 4
  %v3923 = vshrl.u32 %v3450, 16
  %v3925 = vrot.slane %v3923, 7
  %v3926 = vshll.u32 %v3450, 16
  %v3928 = vor.u32 %v3925, %v3926
  %v3929 = vsel %vm3463, %v3921, %v3928
  %v3930 = vrot.slane %v3925, 4
  %v3932 = vshrl.u32 %v3451, 16
  %v3934 = vrot.slane %v3932, 7
  %v3935 = vshll.u32 %v3451, 16
  %v3937 = vor.u32 %v3934, %v3935
  %v3938 = vsel %vm3463, %v3930, %v3937
  %v3939 = vrot.slane %v3934, 4
  %v3941 = vshrl.u32 %v3452, 16
  %v3943 = vrot.slane %v3941, 7
  %v3944 = vshll.u32 %v3452, 16
  %v3946 = vor.u32 %v3943, %v3944
  %v3947 = vsel %vm3463, %v3939, %v3946
  %v3948 = vrot.slane %v3943, 4
  %v3950 = vshrl.u32 %v3453, 16
  %v3952 = vrot.slane %v3950, 7
  %v3953 = vshll.u32 %v3453, 16
  %v3955 = vor.u32 %v3952, %v3953
  %v3956 = vsel %vm3463, %v3948, %v3955
  %v3957 = vrot.slane %v3952, 4
  %v3959 = vshrl.u32 %v3454, 16
  %v3961 = vrot.slane %v3959, 7
  %v3962 = vshll.u32 %v3454, 16
  %v3964 = vor.u32 %v3961, %v3962
  %v3965 = vsel %vm3463, %v3957, %v3964
  %v3966 = vrot.slane %v3961, 4
  %v3968 = vshrl.u32 %v3455, 16
  %v3970 = vrot.slane %v3968, 7
  %v3971 = vshll.u32 %v3455, 16
  %v3973 = vor.u32 %v3970, %v3971
  %v3974 = vsel %vm3463, %v3966, %v3973
  %v3975 = vrot.slane %v3970, 4
  %v3977 = vshrl.u32 %v3456, 16
  %v3979 = vrot.slane %v3977, 7
  %v3980 = vshll.u32 %v3456, 16
  %v3982 = vor.u32 %v3979, %v3980
  %v3983 = vsel %vm3463, %v3975, %v3982
  %v3984 = vrot.slane %v3979, 4
  %v3986 = vshrl.u32 %v3457, 16
  %v3988 = vrot.slane %v3986, 7
  %v3989 = vshll.u32 %v3457, 16
  %v3991 = vor.u32 %v3988, %v3989
  %v3992 = vsel %vm3463, %v3984, %v3991
  %v3993 = vrot.slane %v3988, 4
  %v3995 = vshrl.u32 %v3458, 16
  %v3997 = vrot.slane %v3995, 7
  %v3998 = vshll.u32 %v3458, 16
  %v4000 = vor.u32 %v3997, %v3998
  %v4001 = vsel %vm3463, %v3993, %v4000
  %v4002 = vrot.slane %v3997, 4
  %v4004 = vshrl.u32 %v3459, 16
  %v4006 = vrot.slane %v4004, 7
  %v4007 = vshll.u32 %v3459, 16
  %v4009 = vor.u32 %v4006, %v4007
  %v4010 = vsel %vm3463, %v4002, %v4009
  %v4011 = vrot.slane %v4006, 4
  %v4013 = vshrl.u32 %v3460, 16
  %v4015 = vrot.slane %v4013, 7
  %v4016 = vshll.u32 %v3460, 16
  %v4018 = vor.u32 %v4015, %v4016
  %v4019 = vsel %vm3463, %v4011, %v4018
  %v4020 = vrot.slane %v4015, 4
  %v4022 = vshrl.u32 %v3461, 16
  %v4024 = vrot.slane %v4022, 7
  %v4025 = vshll.u32 %v3461, 16
  %v4027 = vor.u32 %v4024, %v4025
  %v4028 = vsel %vm3463, %v4020, %v4027
  %vm4092 = vcmask 1043456
  %vm4093 = vsmask.f32 7938
  %vm4094 = vmand %vm4092, %vm4093
  %v4095 = vld [vmem:[#allocation2] sm:$0xf]
  %v4096 = vsel %vm4094, %v3470, %v4095
  %4097 = vst [vmem:[#allocation2] sm:$0xf] %v4096
  %4098 = vst [vmem:[#allocation2 + $0x4] sm:$0xf] %v3479
  %4099 = vst [vmem:[#allocation2 + $0x8] sm:$0xf] %v3488
  %4100 = vst [vmem:[#allocation2 + $0xc] sm:$0xf] %v3497
  %4101 = vst [vmem:[#allocation2 + $0x10] sm:$0xf] %v3506
  %4102 = vst [vmem:[#allocation2 + $0x14] sm:$0xf] %v3515
  %4103 = vst [vmem:[#allocation2 + $0x18] sm:$0xf] %v3524
  %4104 = vst [vmem:[#allocation2 + $0x1c] sm:$0xf] %v3533
  %4105 = vst [vmem:[#allocation2 + $0x20] sm:$0xf] %v3542
  %4106 = vst [vmem:[#allocation2 + $0x24] sm:$0xf] %v3551
  %4107 = vst [vmem:[#allocation2 + $0x28] sm:$0xf] %v3560
  %4108 = vst [vmem:[#allocation2 + $0x2c] sm:$0xf] %v3569
  %4109 = vst [vmem:[#allocation2 + $0x30] sm:$0xf] %v3578
  %4110 = vst [vmem:[#allocation2 + $0x34] sm:$0xf] %v3587
  %4111 = vst [vmem:[#allocation2 + $0x38] sm:$0xf] %v3596
  %4112 = vst [vmem:[#allocation2 + $0x3c] sm:$0xf] %v3605
  %4113 = vst [vmem:[#allocation2 + $0x40] sm:$0xf] %v3614
  %4114 = vst [vmem:[#allocation2 + $0x44] sm:$0xf] %v3623
  %4115 = vst [vmem:[#allocation2 + $0x48] sm:$0xf] %v3632
  %4116 = vst [vmem:[#allocation2 + $0x4c] sm:$0xf] %v3641
  %4117 = vst [vmem:[#allocation2 + $0x50] sm:$0xf] %v3650
  %4118 = vst [vmem:[#allocation2 + $0x54] sm:$0xf] %v3659
  %4119 = vst [vmem:[#allocation2 + $0x58] sm:$0xf] %v3668
  %4120 = vst [vmem:[#allocation2 + $0x5c] sm:$0xf] %v3677
  %4121 = vst [vmem:[#allocation2 + $0x60] sm:$0xf] %v3686
  %4122 = vst [vmem:[#allocation2 + $0x64] sm:$0xf] %v3695
  %4123 = vst [vmem:[#allocation2 + $0x68] sm:$0xf] %v3704
  %4124 = vst [vmem:[#allocation2 + $0x6c] sm:$0xf] %v3713
  %4125 = vst [vmem:[#allocation2 + $0x70] sm:$0xf] %v3722
  %4126 = vst [vmem:[#allocation2 + $0x74] sm:$0xf] %v3731
  %4127 = vst [vmem:[#allocation2 + $0x78] sm:$0xf] %v3740
  %4128 = vst [vmem:[#allocation2 + $0x7c] sm:$0xf] %v3749
  %4129 = vst [vmem:[#allocation2 + $0x80] sm:$0xf] %v3758
  %4130 = vst [vmem:[#allocation2 + $0x84] sm:$0xf] %v3767
  %4131 = vst [vmem:[#allocation2 + $0x88] sm:$0xf] %v3776
  %4132 = vst [vmem:[#allocation2 + $0x8c] sm:$0xf] %v3785
  %4133 = vst [vmem:[#allocation2 + $0x90] sm:$0xf] %v3794
  %4134 = vst [vmem:[#allocation2 + $0x94] sm:$0xf] %v3803
  %4135 = vst [vmem:[#allocation2 + $0x98] sm:$0xf] %v3812
  %4136 = vst [vmem:[#allocation2 + $0x9c] sm:$0xf] %v3821
  %4137 = vst [vmem:[#allocation2 + $0xa0] sm:$0xf] %v3830
  %4138 = vst [vmem:[#allocation2 + $0xa4] sm:$0xf] %v3839
  %4139 = vst [vmem:[#allocation2 + $0xa8] sm:$0xf] %v3848
  %4140 = vst [vmem:[#allocation2 + $0xac] sm:$0xf] %v3857
  %4141 = vst [vmem:[#allocation2 + $0xb0] sm:$0xf] %v3866
  %4142 = vst [vmem:[#allocation2 + $0xb4] sm:$0xf] %v3875
  %4143 = vst [vmem:[#allocation2 + $0xb8] sm:$0xf] %v3884
  %4144 = vst [vmem:[#allocation2 + $0xbc] sm:$0xf] %v3893
  %4145 = vst [vmem:[#allocation2 + $0xc0] sm:$0xf] %v3902
  %4146 = vst [vmem:[#allocation2 + $0xc4] sm:$0xf] %v3911
  %4147 = vst [vmem:[#allocation2 + $0xc8] sm:$0xf] %v3920
  %4148 = vst [vmem:[#allocation2 + $0xcc] sm:$0xf] %v3929
  %4149 = vst [vmem:[#allocation2 + $0xd0] sm:$0xf] %v3938
  %4150 = vst [vmem:[#allocation2 + $0xd4] sm:$0xf] %v3947
  %4151 = vst [vmem:[#allocation2 + $0xd8] sm:$0xf] %v3956
  %4152 = vst [vmem:[#allocation2 + $0xdc] sm:$0xf] %v3965
  %4153 = vst [vmem:[#allocation2 + $0xe0] sm:$0xf] %v3974
  %4154 = vst [vmem:[#allocation2 + $0xe4] sm:$0xf] %v3983
  %4155 = vst [vmem:[#allocation2 + $0xe8] sm:$0xf] %v3992
  %4156 = vst [vmem:[#allocation2 + $0xec] sm:$0xf] %v4001
  %4157 = vst [vmem:[#allocation2 + $0xf0] sm:$0xf] %v4010
  %4158 = vst [vmem:[#allocation2 + $0xf4] sm:$0xf] %v4019
  %vm4159 = vsmask.f32 3328
  %vm4160 = vmand %vm4092, %vm4159
  %v4161 = vld [vmem:[#allocation2 + $0xf8] sm:$0xf]
  %v4162 = vsel %vm4160, %v4028, %v4161
  %4163 = vst [vmem:[#allocation2 + $0xf8] sm:$0xf] %v4162
  %4227 = vst [vmem:[#allocation3] sm:$0xf] %v3399
  %4228 = vst [vmem:[#allocation3 + $0x4] sm:$0xf] %v3400
  %4229 = vst [vmem:[#allocation3 + $0x8] sm:$0xf] %v3401
  %4230 = vst [vmem:[#allocation3 + $0xc] sm:$0xf] %v3402
  %4231 = vst [vmem:[#allocation3 + $0x10] sm:$0xf] %v3403
  %4232 = vst [vmem:[#allocation3 + $0x14] sm:$0xf] %v3404
  %4233 = vst [vmem:[#allocation3 + $0x18] sm:$0xf] %v3405
  %4234 = vst [vmem:[#allocation3 + $0x1c] sm:$0xf] %v3406
  %4235 = vst [vmem:[#allocation3 + $0x20] sm:$0xf] %v3407
  %4236 = vst [vmem:[#allocation3 + $0x24] sm:$0xf] %v3408
  %4237 = vst [vmem:[#allocation3 + $0x28] sm:$0xf] %v3409
  %4238 = vst [vmem:[#allocation3 + $0x2c] sm:$0xf] %v3410
  %4239 = vst [vmem:[#allocation3 + $0x30] sm:$0xf] %v3411
  %4240 = vst [vmem:[#allocation3 + $0x34] sm:$0xf] %v3412
  %4241 = vst [vmem:[#allocation3 + $0x38] sm:$0xf] %v3413
  %4242 = vst [vmem:[#allocation3 + $0x3c] sm:$0xf] %v3414
  %4243 = vst [vmem:[#allocation3 + $0x40] sm:$0xf] %v3415
  %4244 = vst [vmem:[#allocation3 + $0x44] sm:$0xf] %v3416
  %4245 = vst [vmem:[#allocation3 + $0x48] sm:$0xf] %v3417
  %4246 = vst [vmem:[#allocation3 + $0x4c] sm:$0xf] %v3418
  %4247 = vst [vmem:[#allocation3 + $0x50] sm:$0xf] %v3419
  %4248 = vst [vmem:[#allocation3 + $0x54] sm:$0xf] %v3420
  %4249 = vst [vmem:[#allocation3 + $0x58] sm:$0xf] %v3421
  %4250 = vst [vmem:[#allocation3 + $0x5c] sm:$0xf] %v3422
  %4251 = vst [vmem:[#allocation3 + $0x60] sm:$0xf] %v3423
  %4252 = vst [vmem:[#allocation3 + $0x64] sm:$0xf] %v3424
  %4253 = vst [vmem:[#allocation3 + $0x68] sm:$0xf] %v3425
  %4254 = vst [vmem:[#allocation3 + $0x6c] sm:$0xf] %v3426
  %4255 = vst [vmem:[#allocation3 + $0x70] sm:$0xf] %v3427
  %4256 = vst [vmem:[#allocation3 + $0x74] sm:$0xf] %v3428
  %4257 = vst [vmem:[#allocation3 + $0x78] sm:$0xf] %v3429
  %4258 = vst [vmem:[#allocation3 + $0x7c] sm:$0xf] %v3430
  %4259 = vst [vmem:[#allocation3 + $0x80] sm:$0xf] %v3431
  %4260 = vst [vmem:[#allocation3 + $0x84] sm:$0xf] %v3432
  %4261 = vst [vmem:[#allocation3 + $0x88] sm:$0xf] %v3433
  %4262 = vst [vmem:[#allocation3 + $0x8c] sm:$0xf] %v3434
  %4263 = vst [vmem:[#allocation3 + $0x90] sm:$0xf] %v3435
  %4264 = vst [vmem:[#allocation3 + $0x94] sm:$0xf] %v3436
  %4265 = vst [vmem:[#allocation3 + $0x98] sm:$0xf] %v3437
  %4266 = vst [vmem:[#allocation3 + $0x9c] sm:$0xf] %v3438
  %4267 = vst [vmem:[#allocation3 + $0xa0] sm:$0xf] %v3439
  %4268 = vst [vmem:[#allocation3 + $0xa4] sm:$0xf] %v3440
  %4269 = vst [vmem:[#allocation3 + $0xa8] sm:$0xf] %v3441
  %4270 = vst [vmem:[#allocation3 + $0xac] sm:$0xf] %v3442
  %4271 = vst [vmem:[#allocation3 + $0xb0] sm:$0xf] %v3443
  %4272 = vst [vmem:[#allocation3 + $0xb4] sm:$0xf] %v3444
  %4273 = vst [vmem:[#allocation3 + $0xb8] sm:$0xf] %v3445
  %4274 = vst [vmem:[#allocation3 + $0xbc] sm:$0xf] %v3446
  %4275 = vst [vmem:[#allocation3 + $0xc0] sm:$0xf] %v3447
  %4276 = vst [vmem:[#allocation3 + $0xc4] sm:$0xf] %v3448
  %4277 = vst [vmem:[#allocation3 + $0xc8] sm:$0xf] %v3449
  %4278 = vst [vmem:[#allocation3 + $0xcc] sm:$0xf] %v3450
  %4279 = vst [vmem:[#allocation3 + $0xd0] sm:$0xf] %v3451
  %4280 = vst [vmem:[#allocation3 + $0xd4] sm:$0xf] %v3452
  %4281 = vst [vmem:[#allocation3 + $0xd8] sm:$0xf] %v3453
  %4282 = vst [vmem:[#allocation3 + $0xdc] sm:$0xf] %v3454
  %4283 = vst [vmem:[#allocation3 + $0xe0] sm:$0xf] %v3455
  %4284 = vst [vmem:[#allocation3 + $0xe4] sm:$0xf] %v3456
  %4285 = vst [vmem:[#allocation3 + $0xe8] sm:$0xf] %v3457
  %4286 = vst [vmem:[#allocation3 + $0xec] sm:$0xf] %v3458
  %4287 = vst [vmem:[#allocation3 + $0xf0] sm:$0xf] %v3459
  %4288 = vst [vmem:[#allocation3 + $0xf4] sm:$0xf] %v3460
  %4289 = vst [vmem:[#allocation3 + $0xf8] sm:$0x7] %v3461
  %v4290 = vld [vmem:[#allocation2] sm:$0xf]
  %v4291 = vld [vmem:[#allocation2 + $0x4] sm:$0xf]
  %v4292 = vld [vmem:[#allocation2 + $0x8] sm:$0xf]
  %v4293 = vld [vmem:[#allocation2 + $0xc] sm:$0xf]
  %v4294 = vld [vmem:[#allocation2 + $0x10] sm:$0xf]
  %v4295 = vld [vmem:[#allocation2 + $0x14] sm:$0xf]
  %v4296 = vld [vmem:[#allocation2 + $0x18] sm:$0xf]
  %v4297 = vld [vmem:[#allocation2 + $0x1c] sm:$0xf]
  %v4298 = vld [vmem:[#allocation2 + $0x20] sm:$0xf]
  %v4299 = vld [vmem:[#allocation2 + $0x24] sm:$0xf]
  %v4300 = vld [vmem:[#allocation2 + $0x28] sm:$0xf]
  %v4301 = vld [vmem:[#allocation2 + $0x2c] sm:$0xf]
  %v4302 = vld [vmem:[#allocation2 + $0x30] sm:$0xf]
  %v4303 = vld [vmem:[#allocation2 + $0x34] sm:$0xf]
  %v4304 = vld [vmem:[#allocation2 + $0x38] sm:$0xf]
  %v4305 = vld [vmem:[#allocation2 + $0x3c] sm:$0xf]
  %v4306 = vld [vmem:[#allocation2 + $0x40] sm:$0xf]
  %v4307 = vld [vmem:[#allocation2 + $0x44] sm:$0xf]
  %v4308 = vld [vmem:[#allocation2 + $0x48] sm:$0xf]
  %v4309 = vld [vmem:[#allocation2 + $0x4c] sm:$0xf]
  %v4310 = vld [vmem:[#allocation2 + $0x50] sm:$0xf]
  %v4311 = vld [vmem:[#allocation2 + $0x54] sm:$0xf]
  %v4312 = vld [vmem:[#allocation2 + $0x58] sm:$0xf]
  %v4313 = vld [vmem:[#allocation2 + $0x5c] sm:$0xf]
  %v4314 = vld [vmem:[#allocation2 + $0x60] sm:$0xf]
  %v4315 = vld [vmem:[#allocation2 + $0x64] sm:$0xf]
  %v4316 = vld [vmem:[#allocation2 + $0x68] sm:$0xf]
  %v4317 = vld [vmem:[#allocation2 + $0x6c] sm:$0xf]
  %v4318 = vld [vmem:[#allocation2 + $0x70] sm:$0xf]
  %v4319 = vld [vmem:[#allocation2 + $0x74] sm:$0xf]
  %v4320 = vld [vmem:[#allocation2 + $0x78] sm:$0xf]
  %v4321 = vld [vmem:[#allocation2 + $0x7c] sm:$0xf]
  %v4322 = vld [vmem:[#allocation2 + $0x80] sm:$0xf]
  %v4323 = vld [vmem:[#allocation2 + $0x84] sm:$0xf]
  %v4324 = vld [vmem:[#allocation2 + $0x88] sm:$0xf]
  %v4325 = vld [vmem:[#allocation2 + $0x8c] sm:$0xf]
  %v4326 = vld [vmem:[#allocation2 + $0x90] sm:$0xf]
  %v4327 = vld [vmem:[#allocation2 + $0x94] sm:$0xf]
  %v4328 = vld [vmem:[#allocation2 + $0x98] sm:$0xf]
  %v4329 = vld [vmem:[#allocation2 + $0x9c] sm:$0xf]
  %v4330 = vld [vmem:[#allocation2 + $0xa0] sm:$0xf]
  %v4331 = vld [vmem:[#allocation2 + $0xa4] sm:$0xf]
  %v4332 = vld [vmem:[#allocation2 + $0xa8] sm:$0xf]
  %v4333 = vld [vmem:[#allocation2 + $0xac] sm:$0xf]
  %v4334 = vld [vmem:[#allocation2 + $0xb0] sm:$0xf]
  %v4335 = vld [vmem:[#allocation2 + $0xb4] sm:$0xf]
  %v4336 = vld [vmem:[#allocation2 + $0xb8] sm:$0xf]
  %v4337 = vld [vmem:[#allocation2 + $0xbc] sm:$0xf]
  %v4338 = vld [vmem:[#allocation2 + $0xc0] sm:$0xf]
  %v4339 = vld [vmem:[#allocation2 + $0xc4] sm:$0xf]
  %v4340 = vld [vmem:[#allocation2 + $0xc8] sm:$0xf]
  %v4341 = vld [vmem:[#allocation2 + $0xcc] sm:$0xf]
  %v4342 = vld [vmem:[#allocation2 + $0xd0] sm:$0xf]
  %v4343 = vld [vmem:[#allocation2 + $0xd4] sm:$0xf]
  %v4344 = vld [vmem:[#allocation2 + $0xd8] sm:$0xf]
  %v4345 = vld [vmem:[#allocation2 + $0xdc] sm:$0xf]
  %v4346 = vld [vmem:[#allocation2 + $0xe0] sm:$0xf]
  %v4347 = vld [vmem:[#allocation2 + $0xe4] sm:$0xf]
  %v4348 = vld [vmem:[#allocation2 + $0xe8] sm:$0xf]
  %v4349 = vld [vmem:[#allocation2 + $0xec] sm:$0xf]
  %v4350 = vld [vmem:[#allocation2 + $0xf0] sm:$0xf]
  %v4351 = vld [vmem:[#allocation2 + $0xf4] sm:$0xf]
  %v4352 = vld [vmem:[#allocation2 + $0xf8] sm:$0x7]
  %v4353 = vld [vmem:[%s5] sm:$0xf]
  %v4354 = vld [vmem:[%s5 + $0x4] sm:$0xf]
  %v4355 = vld [vmem:[%s5 + $0x8] sm:$0xf]
  %v4356 = vld [vmem:[%s5 + $0xc] sm:$0xf]
  %v4357 = vld [vmem:[%s5 + $0x10] sm:$0xf]
  %v4358 = vld [vmem:[%s5 + $0x14] sm:$0xf]
  %v4359 = vld [vmem:[%s5 + $0x18] sm:$0xf]
  %v4360 = vld [vmem:[%s5 + $0x1c] sm:$0xf]
  %v4361 = vld [vmem:[%s5 + $0x20] sm:$0xf]
  %v4362 = vld [vmem:[%s5 + $0x24] sm:$0xf]
  %v4363 = vld [vmem:[%s5 + $0x28] sm:$0xf]
  %v4364 = vld [vmem:[%s5 + $0x2c] sm:$0xf]
  %v4365 = vld [vmem:[%s5 + $0x30] sm:$0xf]
  %v4366 = vld [vmem:[%s5 + $0x34] sm:$0xf]
  %v4367 = vld [vmem:[%s5 + $0x38] sm:$0xf]
  %v4368 = vld [vmem:[%s5 + $0x3c] sm:$0xf]
  %v4432 = vunpack.c.l.b16 %v4290
  %v4433 = vunpack.c.l.b16 %v4291
  %v4434 = vunpack.c.l.b16 %v4292
  %v4435 = vunpack.c.l.b16 %v4293
  %v4436 = vunpack.c.l.b16 %v4294
  %v4437 = vunpack.c.l.b16 %v4295
  %v4438 = vunpack.c.l.b16 %v4296
  %v4439 = vunpack.c.l.b16 %v4297
  %v4440 = vunpack.c.l.b16 %v4298
  %v4441 = vunpack.c.l.b16 %v4299
  %v4442 = vunpack.c.l.b16 %v4300
  %v4443 = vunpack.c.l.b16 %v4301
  %v4444 = vunpack.c.l.b16 %v4302
  %v4445 = vunpack.c.l.b16 %v4303
  %v4446 = vunpack.c.l.b16 %v4304
  %v4447 = vunpack.c.l.b16 %v4305
  %v4448 = vunpack.c.l.b16 %v4306
  %v4449 = vunpack.c.l.b16 %v4307
  %v4450 = vunpack.c.l.b16 %v4308
  %v4451 = vunpack.c.l.b16 %v4309
  %v4452 = vunpack.c.l.b16 %v4310
  %v4453 = vunpack.c.l.b16 %v4311
  %v4454 = vunpack.c.l.b16 %v4312
  %v4455 = vunpack.c.l.b16 %v4313
  %v4456 = vunpack.c.l.b16 %v4314
  %v4457 = vunpack.c.l.b16 %v4315
  %v4458 = vunpack.c.l.b16 %v4316
  %v4459 = vunpack.c.l.b16 %v4317
  %v4460 = vunpack.c.l.b16 %v4318
  %v4461 = vunpack.c.l.b16 %v4319
  %v4462 = vunpack.c.l.b16 %v4320
  %v4463 = vunpack.c.l.b16 %v4321
  %v4464 = vunpack.c.l.b16 %v4322
  %v4465 = vunpack.c.l.b16 %v4323
  %v4466 = vunpack.c.l.b16 %v4324
  %v4467 = vunpack.c.l.b16 %v4325
  %v4468 = vunpack.c.l.b16 %v4326
  %v4469 = vunpack.c.l.b16 %v4327
  %v4470 = vunpack.c.l.b16 %v4328
  %v4471 = vunpack.c.l.b16 %v4329
  %v4472 = vunpack.c.l.b16 %v4330
  %v4473 = vunpack.c.l.b16 %v4331
  %v4474 = vunpack.c.l.b16 %v4332
  %v4475 = vunpack.c.l.b16 %v4333
  %v4476 = vunpack.c.l.b16 %v4334
  %v4477 = vunpack.c.l.b16 %v4335
  %v4478 = vunpack.c.l.b16 %v4336
  %v4479 = vunpack.c.l.b16 %v4337
  %v4480 = vunpack.c.l.b16 %v4338
  %v4481 = vunpack.c.l.b16 %v4339
  %v4482 = vunpack.c.l.b16 %v4340
  %v4483 = vunpack.c.l.b16 %v4341
  %v4484 = vunpack.c.l.b16 %v4342
  %v4485 = vunpack.c.l.b16 %v4343
  %v4486 = vunpack.c.l.b16 %v4344
  %v4487 = vunpack.c.l.b16 %v4345
  %v4488 = vunpack.c.l.b16 %v4346
  %v4489 = vunpack.c.l.b16 %v4347
  %v4490 = vunpack.c.l.b16 %v4348
  %v4491 = vunpack.c.l.b16 %v4349
  %v4492 = vunpack.c.l.b16 %v4350
  %v4493 = vunpack.c.l.b16 %v4351
  %v4494 = vunpack.c.l.b16 %v4352
  %v4495 = vpack.c.b16 %v4433, %v4432
  %v4496 = vpack.c.b16 %v4435, %v4434
  %v4497 = vpack.c.b16 %v4437, %v4436
  %v4498 = vpack.c.b16 %v4439, %v4438
  %v4499 = vpack.c.b16 %v4441, %v4440
  %v4500 = vpack.c.b16 %v4443, %v4442
  %v4501 = vpack.c.b16 %v4445, %v4444
  %v4502 = vpack.c.b16 %v4447, %v4446
  %v4503 = vpack.c.b16 %v4449, %v4448
  %v4504 = vpack.c.b16 %v4451, %v4450
  %v4505 = vpack.c.b16 %v4453, %v4452
  %v4506 = vpack.c.b16 %v4455, %v4454
  %v4507 = vpack.c.b16 %v4457, %v4456
  %v4508 = vpack.c.b16 %v4459, %v4458
  %v4509 = vpack.c.b16 %v4461, %v4460
  %v4510 = vpack.c.b16 %v4463, %v4462
  %v4511 = vpack.c.b16 %v4465, %v4464
  %v4512 = vpack.c.b16 %v4467, %v4466
  %v4513 = vpack.c.b16 %v4469, %v4468
  %v4514 = vpack.c.b16 %v4471, %v4470
  %v4515 = vpack.c.b16 %v4473, %v4472
  %v4516 = vpack.c.b16 %v4475, %v4474
  %v4517 = vpack.c.b16 %v4477, %v4476
  %v4518 = vpack.c.b16 %v4479, %v4478
  %v4519 = vpack.c.b16 %v4481, %v4480
  %v4520 = vpack.c.b16 %v4483, %v4482
  %v4521 = vpack.c.b16 %v4485, %v4484
  %v4522 = vpack.c.b16 %v4487, %v4486
  %v4523 = vpack.c.b16 %v4489, %v4488
  %v4524 = vpack.c.b16 %v4491, %v4490
  %v4525 = vpack.c.b16 %v4493, %v4492
  %v4526 = vpack.c.b16 %v4494, %v4494
  %v4575 = vunpack.c.l.b16 %v4353
  %v4576 = vunpack.c.l.b16 %v4354
  %v4577 = vunpack.c.l.b16 %v4355
  %v4578 = vunpack.c.l.b16 %v4356
  %v4579 = vunpack.c.l.b16 %v4357
  %v4580 = vunpack.c.l.b16 %v4358
  %v4581 = vunpack.c.l.b16 %v4359
  %v4582 = vunpack.c.l.b16 %v4360
  %v4583 = vunpack.c.l.b16 %v4361
  %v4584 = vunpack.c.l.b16 %v4362
  %v4585 = vunpack.c.l.b16 %v4363
  %v4586 = vunpack.c.l.b16 %v4364
  %v4587 = vunpack.c.l.b16 %v4365
  %v4588 = vunpack.c.l.b16 %v4366
  %v4589 = vunpack.c.l.b16 %v4367
  %v4590 = vunpack.c.l.b16 %v4368
  %v4591 = vpack.c.b16 %v4576, %v4575
  %v4592 = vpack.c.b16 %v4578, %v4577
  %v4593 = vpack.c.b16 %v4580, %v4579
  %v4594 = vpack.c.b16 %v4582, %v4581
  %v4595 = vpack.c.b16 %v4584, %v4583
  %v4596 = vpack.c.b16 %v4586, %v4585
  %v4597 = vpack.c.b16 %v4588, %v4587
  %v4598 = vpack.c.b16 %v4590, %v4589
  %4607 = vmatprep.subr.bf16.mxu0 0
  %4608 = vmatpush1.bf16.msra.mxu0 %v4591
  %4609 = vmatprep.subr.bf16.mxu0 0
  %4610 = vmatpush1.bf16.msra.mxu0 %v4592
  %4611 = vmatprep.subr.bf16.mxu0 0
  %4612 = vmatpush1.bf16.msra.mxu0 %v4593
  %4613 = vmatprep.subr.bf16.mxu0 0
  %4614 = vmatpush1.bf16.msra.mxu0 %v4594
  %4615 = vmatprep.subr.bf16.mxu0 0
  %4616 = vmatpush1.bf16.msra.mxu0 %v4595
  %4617 = vmatprep.subr.bf16.mxu0 0
  %4618 = vmatpush1.bf16.msra.mxu0 %v4596
  %4619 = vmatprep.subr.bf16.mxu0 0
  %4620 = vmatpush1.bf16.msra.mxu0 %v4597
  %4621 = vmatprep.subr.bf16.mxu0 0
  %4622 = vmatpush1.bf16.msra.mxu0 %v4598
  %4623 = vmatprep.subr.bf16.mxu0 0
  %4624 = vmatpush1.bf16.msra.mxu0 0
  %4625 = vmatprep.subr.bf16.mxu0 0
  %4626 = vmatpush1.bf16.msra.mxu0 0
  %4627 = vmatprep.subr.bf16.mxu0 0
  %4628 = vmatpush1.bf16.msra.mxu0 0
  %4629 = vmatprep.subr.bf16.mxu0 0
  %4630 = vmatpush1.bf16.msra.mxu0 0
  %4631 = vmatprep.subr.bf16.mxu0 0
  %4632 = vmatpush1.bf16.msra.mxu0 0
  %4633 = vmatprep.subr.bf16.mxu0 0
  %4634 = vmatpush1.bf16.msra.mxu0 0
  %4635 = vmatprep.subr.bf16.mxu0 0
  %4636 = vmatpush1.bf16.msra.mxu0 0
  %4637 = vmatprep.subr.bf16.mxu0 0
  %4638 = vmatpush1.bf16.msra.mxu0 0
  %4639 = vmatprep.mubr.bf16.mxu0 0
  %4640 = vmatmul.mubr.bf16.gmra.mrb[0].mxu0 %v4495
  %v4641 = vpop.f32.mrb[0].mxu0
  %v4642 = vadd.f32 0.0, %v4641
  %v4643 = vpop.f32.mrb[0].mxu0
  %v4644 = vpop.f32.mrb[0].mxu0
  %v4645 = vadd.f32 0.0, %v4644
  %v4646 = vpop.f32.mrb[0].mxu0
  %4647 = vmatprep.mubr.bf16.mxu0 0
  %4648 = vmatmul.mubr.bf16.gmra.mrb[0].mxu0 %v4496
  %v4649 = vpop.f32.mrb[0].mxu0
  %v4650 = vadd.f32 0.0, %v4649
  %v4651 = vpop.f32.mrb[0].mxu0
  %v4652 = vpop.f32.mrb[0].mxu0
  %v4653 = vadd.f32 0.0, %v4652
  %v4654 = vpop.f32.mrb[0].mxu0
  %4655 = vmatprep.mubr.bf16.mxu0 0
  %4656 = vmatmul.mubr.bf16.gmra.mrb[0].mxu0 %v4497
  %v4657 = vpop.f32.mrb[0].mxu0
  %v4658 = vadd.f32 0.0, %v4657
  %v4659 = vpop.f32.mrb[0].mxu0
  %v4660 = vpop.f32.mrb[0].mxu0
  %v4661 = vadd.f32 0.0, %v4660
  %v4662 = vpop.f32.mrb[0].mxu0
  %4663 = vmatprep.mubr.bf16.mxu0 0
  %4664 = vmatmul.mubr.bf16.gmra.mrb[0].mxu0 %v4498
  %v4665 = vpop.f32.mrb[0].mxu0
  %v4666 = vadd.f32 0.0, %v4665
  %v4667 = vpop.f32.mrb[0].mxu0
  %v4668 = vpop.f32.mrb[0].mxu0
  %v4669 = vadd.f32 0.0, %v4668
  %v4670 = vpop.f32.mrb[0].mxu0
  %4671 = vmatprep.mubr.bf16.mxu0 0
  %4672 = vmatmul.mubr.bf16.gmra.mrb[0].mxu0 %v4499
  %v4673 = vpop.f32.mrb[0].mxu0
  %v4674 = vadd.f32 0.0, %v4673
  %v4675 = vpop.f32.mrb[0].mxu0
  %v4676 = vpop.f32.mrb[0].mxu0
  %v4677 = vadd.f32 0.0, %v4676
  %v4678 = vpop.f32.mrb[0].mxu0
  %4679 = vmatprep.mubr.bf16.mxu0 0
  %4680 = vmatmul.mubr.bf16.gmra.mrb[0].mxu0 %v4500
  %v4681 = vpop.f32.mrb[0].mxu0
  %v4682 = vadd.f32 0.0, %v4681
  %v4683 = vpop.f32.mrb[0].mxu0
  %v4684 = vpop.f32.mrb[0].mxu0
  %v4685 = vadd.f32 0.0, %v4684
  %v4686 = vpop.f32.mrb[0].mxu0
  %4687 = vmatprep.mubr.bf16.mxu0 0
  %4688 = vmatmul.mubr.bf16.gmra.mrb[0].mxu0 %v4501
  %v4689 = vpop.f32.mrb[0].mxu0
  %v4690 = vadd.f32 0.0, %v4689
  %v4691 = vpop.f32.mrb[0].mxu0
  %v4692 = vpop.f32.mrb[0].mxu0
  %v4693 = vadd.f32 0.0, %v4692
  %v4694 = vpop.f32.mrb[0].mxu0
  %4695 = vmatprep.mubr.bf16.mxu0 0
  %4696 = vmatmul.mubr.bf16.gmra.mrb[0].mxu0 %v4502
  %v4697 = vpop.f32.mrb[0].mxu0
  %v4698 = vadd.f32 0.0, %v4697
  %v4699 = vpop.f32.mrb[0].mxu0
  %v4700 = vpop.f32.mrb[0].mxu0
  %v4701 = vadd.f32 0.0, %v4700
  %v4702 = vpop.f32.mrb[0].mxu0
  %4703 = vmatprep.mubr.bf16.mxu0 0
  %4704 = vmatmul.mubr.bf16.gmra.mrb[0].mxu0 %v4503
  %v4705 = vpop.f32.mrb[0].mxu0
  %v4706 = vadd.f32 0.0, %v4705
  %v4707 = vpop.f32.mrb[0].mxu0
  %v4708 = vpop.f32.mrb[0].mxu0
  %v4709 = vadd.f32 0.0, %v4708
  %v4710 = vpop.f32.mrb[0].mxu0
  %4711 = vmatprep.mubr.bf16.mxu0 0
  %4712 = vmatmul.mubr.bf16.gmra.mrb[0].mxu0 %v4504
  %v4713 = vpop.f32.mrb[0].mxu0
  %v4714 = vadd.f32 0.0, %v4713
  %v4715 = vpop.f32.mrb[0].mxu0
  %v4716 = vpop.f32.mrb[0].mxu0
  %v4717 = vadd.f32 0.0, %v4716
  %v4718 = vpop.f32.mrb[0].mxu0
  %4719 = vmatprep.mubr.bf16.mxu0 0
  %4720 = vmatmul.mubr.bf16.gmra.mrb[0].mxu0 %v4505
  %v4721 = vpop.f32.mrb[0].mxu0
  %v4722 = vadd.f32 0.0, %v4721
  %v4723 = vpop.f32.mrb[0].mxu0
  %v4724 = vpop.f32.mrb[0].mxu0
  %v4725 = vadd.f32 0.0, %v4724
  %v4726 = vpop.f32.mrb[0].mxu0
  %4727 = vmatprep.mubr.bf16.mxu0 0
  %4728 = vmatmul.mubr.bf16.gmra.mrb[0].mxu0 %v4506
  %v4729 = vpop.f32.mrb[0].mxu0
  %v4730 = vadd.f32 0.0, %v4729
  %v4731 = vpop.f32.mrb[0].mxu0
  %v4732 = vpop.f32.mrb[0].mxu0
  %v4733 = vadd.f32 0.0, %v4732
  %v4734 = vpop.f32.mrb[0].mxu0
  %4735 = vmatprep.mubr.bf16.mxu0 0
  %4736 = vmatmul.mubr.bf16.gmra.mrb[0].mxu0 %v4507
  %v4737 = vpop.f32.mrb[0].mxu0
  %v4738 = vadd.f32 0.0, %v4737
  %v4739 = vpop.f32.mrb[0].mxu0
  %v4740 = vpop.f32.mrb[0].mxu0
  %v4741 = vadd.f32 0.0, %v4740
  %v4742 = vpop.f32.mrb[0].mxu0
  %4743 = vmatprep.mubr.bf16.mxu0 0
  %4744 = vmatmul.mubr.bf16.gmra.mrb[0].mxu0 %v4508
  %v4745 = vpop.f32.mrb[0].mxu0
  %v4746 = vadd.f32 0.0, %v4745
  %v4747 = vpop.f32.mrb[0].mxu0
  %v4748 = vpop.f32.mrb[0].mxu0
  %v4749 = vadd.f32 0.0, %v4748
  %v4750 = vpop.f32.mrb[0].mxu0
  %4751 = vmatprep.mubr.bf16.mxu0 0
  %4752 = vmatmul.mubr.bf16.gmra.mrb[0].mxu0 %v4509
  %v4753 = vpop.f32.mrb[0].mxu0
  %v4754 = vadd.f32 0.0, %v4753
  %v4755 = vpop.f32.mrb[0].mxu0
  %v4756 = vpop.f32.mrb[0].mxu0
  %v4757 = vadd.f32 0.0, %v4756
  %v4758 = vpop.f32.mrb[0].mxu0
  %4759 = vmatprep.mubr.bf16.mxu0 0
  %4760 = vmatmul.mubr.bf16.gmra.mrb[0].mxu0 %v4510
  %v4761 = vpop.f32.mrb[0].mxu0
  %v4762 = vadd.f32 0.0, %v4761
  %v4763 = vpop.f32.mrb[0].mxu0
  %v4764 = vpop.f32.mrb[0].mxu0
  %v4765 = vadd.f32 0.0, %v4764
  %v4766 = vpop.f32.mrb[0].mxu0
  %4767 = vmatprep.mubr.bf16.mxu0 0
  %4768 = vmatmul.mubr.bf16.gmra.mrb[0].mxu0 %v4511
  %v4769 = vpop.f32.mrb[0].mxu0
  %v4770 = vadd.f32 0.0, %v4769
  %v4771 = vpop.f32.mrb[0].mxu0
  %v4772 = vpop.f32.mrb[0].mxu0
  %v4773 = vadd.f32 0.0, %v4772
  %v4774 = vpop.f32.mrb[0].mxu0
  %4775 = vmatprep.mubr.bf16.mxu0 0
  %4776 = vmatmul.mubr.bf16.gmra.mrb[0].mxu0 %v4512
  %v4777 = vpop.f32.mrb[0].mxu0
  %v4778 = vadd.f32 0.0, %v4777
  %v4779 = vpop.f32.mrb[0].mxu0
  %v4780 = vpop.f32.mrb[0].mxu0
  %v4781 = vadd.f32 0.0, %v4780
  %v4782 = vpop.f32.mrb[0].mxu0
  %4783 = vmatprep.mubr.bf16.mxu0 0
  %4784 = vmatmul.mubr.bf16.gmra.mrb[0].mxu0 %v4513
  %v4785 = vpop.f32.mrb[0].mxu0
  %v4786 = vadd.f32 0.0, %v4785
  %v4787 = vpop.f32.mrb[0].mxu0
  %v4788 = vpop.f32.mrb[0].mxu0
  %v4789 = vadd.f32 0.0, %v4788
  %v4790 = vpop.f32.mrb[0].mxu0
  %4791 = vmatprep.mubr.bf16.mxu0 0
  %4792 = vmatmul.mubr.bf16.gmra.mrb[0].mxu0 %v4514
  %v4793 = vpop.f32.mrb[0].mxu0
  %v4794 = vadd.f32 0.0, %v4793
  %v4795 = vpop.f32.mrb[0].mxu0
  %v4796 = vpop.f32.mrb[0].mxu0
  %v4797 = vadd.f32 0.0, %v4796
  %v4798 = vpop.f32.mrb[0].mxu0
  %4799 = vmatprep.mubr.bf16.mxu0 0
  %4800 = vmatmul.mubr.bf16.gmra.mrb[0].mxu0 %v4515
  %v4801 = vpop.f32.mrb[0].mxu0
  %v4802 = vadd.f32 0.0, %v4801
  %v4803 = vpop.f32.mrb[0].mxu0
  %v4804 = vpop.f32.mrb[0].mxu0
  %v4805 = vadd.f32 0.0, %v4804
  %v4806 = vpop.f32.mrb[0].mxu0
  %4807 = vmatprep.mubr.bf16.mxu0 0
  %4808 = vmatmul.mubr.bf16.gmra.mrb[0].mxu0 %v4516
  %v4809 = vpop.f32.mrb[0].mxu0
  %v4810 = vadd.f32 0.0, %v4809
  %v4811 = vpop.f32.mrb[0].mxu0
  %v4812 = vpop.f32.mrb[0].mxu0
  %v4813 = vadd.f32 0.0, %v4812
  %v4814 = vpop.f32.mrb[0].mxu0
  %4815 = vmatprep.mubr.bf16.mxu0 0
  %4816 = vmatmul.mubr.bf16.gmra.mrb[0].mxu0 %v4517
  %v4817 = vpop.f32.mrb[0].mxu0
  %v4818 = vadd.f32 0.0, %v4817
  %v4819 = vpop.f32.mrb[0].mxu0
  %v4820 = vpop.f32.mrb[0].mxu0
  %v4821 = vadd.f32 0.0, %v4820
  %v4822 = vpop.f32.mrb[0].mxu0
  %4823 = vmatprep.mubr.bf16.mxu0 0
  %4824 = vmatmul.mubr.bf16.gmra.mrb[0].mxu0 %v4518
  %v4825 = vpop.f32.mrb[0].mxu0
  %v4826 = vadd.f32 0.0, %v4825
  %v4827 = vpop.f32.mrb[0].mxu0
  %v4828 = vpop.f32.mrb[0].mxu0
  %v4829 = vadd.f32 0.0, %v4828
  %v4830 = vpop.f32.mrb[0].mxu0
  %4831 = vmatprep.mubr.bf16.mxu0 0
  %4832 = vmatmul.mubr.bf16.gmra.mrb[0].mxu0 %v4519
  %v4833 = vpop.f32.mrb[0].mxu0
  %v4834 = vadd.f32 0.0, %v4833
  %v4835 = vpop.f32.mrb[0].mxu0
  %v4836 = vpop.f32.mrb[0].mxu0
  %v4837 = vadd.f32 0.0, %v4836
  %v4838 = vpop.f32.mrb[0].mxu0
  %4839 = vmatprep.mubr.bf16.mxu0 0
  %4840 = vmatmul.mubr.bf16.gmra.mrb[0].mxu0 %v4520
  %v4841 = vpop.f32.mrb[0].mxu0
  %v4842 = vadd.f32 0.0, %v4841
  %v4843 = vpop.f32.mrb[0].mxu0
  %v4844 = vpop.f32.mrb[0].mxu0
  %v4845 = vadd.f32 0.0, %v4844
  %v4846 = vpop.f32.mrb[0].mxu0
  %4847 = vmatprep.mubr.bf16.mxu0 0
  %4848 = vmatmul.mubr.bf16.gmra.mrb[0].mxu0 %v4521
  %v4849 = vpop.f32.mrb[0].mxu0
  %v4850 = vadd.f32 0.0, %v4849
  %v4851 = vpop.f32.mrb[0].mxu0
  %v4852 = vpop.f32.mrb[0].mxu0
  %v4853 = vadd.f32 0.0, %v4852
  %v4854 = vpop.f32.mrb[0].mxu0
  %4855 = vmatprep.mubr.bf16.mxu0 0
  %4856 = vmatmul.mubr.bf16.gmra.mrb[0].mxu0 %v4522
  %v4857 = vpop.f32.mrb[0].mxu0
  %v4858 = vadd.f32 0.0, %v4857
  %v4859 = vpop.f32.mrb[0].mxu0
  %v4860 = vpop.f32.mrb[0].mxu0
  %v4861 = vadd.f32 0.0, %v4860
  %v4862 = vpop.f32.mrb[0].mxu0
  %4863 = vmatprep.mubr.bf16.mxu0 0
  %4864 = vmatmul.mubr.bf16.gmra.mrb[0].mxu0 %v4523
  %v4865 = vpop.f32.mrb[0].mxu0
  %v4866 = vadd.f32 0.0, %v4865
  %v4867 = vpop.f32.mrb[0].mxu0
  %v4868 = vpop.f32.mrb[0].mxu0
  %v4869 = vadd.f32 0.0, %v4868
  %v4870 = vpop.f32.mrb[0].mxu0
  %4871 = vmatprep.mubr.bf16.mxu0 0
  %4872 = vmatmul.mubr.bf16.gmra.mrb[0].mxu0 %v4524
  %v4873 = vpop.f32.mrb[0].mxu0
  %v4874 = vadd.f32 0.0, %v4873
  %v4875 = vpop.f32.mrb[0].mxu0
  %v4876 = vpop.f32.mrb[0].mxu0
  %v4877 = vadd.f32 0.0, %v4876
  %v4878 = vpop.f32.mrb[0].mxu0
  %4879 = vmatprep.mubr.bf16.mxu0 0
  %4880 = vmatmul.mubr.bf16.gmra.mrb[0].mxu0 %v4525
  %v4881 = vpop.f32.mrb[0].mxu0
  %v4882 = vadd.f32 0.0, %v4881
  %v4883 = vpop.f32.mrb[0].mxu0
  %v4884 = vpop.f32.mrb[0].mxu0
  %v4885 = vadd.f32 0.0, %v4884
  %v4886 = vpop.f32.mrb[0].mxu0
  %4887 = vmatprep.mubr.bf16.mxu0 0
  %4888 = vmatmul.mubr.bf16.gmra.mrb[0].mxu0 %v4526
  %v4889 = vpop.f32.mrb[0].mxu0
  %v4890 = vadd.f32 0.0, %v4889
  %v4891 = vpop.f32.mrb[0].mxu0
  %v4892 = vpop.f32.mrb[0].mxu0
  %v4893 = vpop.f32.mrb[0].mxu0
  %4894 = vdwg.mxu0
  %4895 = vst [vmem:[#allocation4] sm:$0xff] %v4642
  %4896 = vst [vmem:[#allocation4 + $0x8] sm:$0xff] %v4645
  %4897 = vst [vmem:[#allocation4 + $0x10] sm:$0xff] %v4650
  %4898 = vst [vmem:[#allocation4 + $0x18] sm:$0xff] %v4653
  %4899 = vst [vmem:[#allocation4 + $0x20] sm:$0xff] %v4658
  %4900 = vst [vmem:[#allocation4 + $0x28] sm:$0xff] %v4661
  %4901 = vst [vmem:[#allocation4 + $0x30] sm:$0xff] %v4666
  %4902 = vst [vmem:[#allocation4 + $0x38] sm:$0xff] %v4669
  %4903 = vst [vmem:[#allocation4 + $0x40] sm:$0xff] %v4674
  %4904 = vst [vmem:[#allocation4 + $0x48] sm:$0xff] %v4677
  %4905 = vst [vmem:[#allocation4 + $0x50] sm:$0xff] %v4682
  %4906 = vst [vmem:[#allocation4 + $0x58] sm:$0xff] %v4685
  %4907 = vst [vmem:[#allocation4 + $0x60] sm:$0xff] %v4690
  %4908 = vst [vmem:[#allocation4 + $0x68] sm:$0xff] %v4693
  %4909 = vst [vmem:[#allocation4 + $0x70] sm:$0xff] %v4698
  %4910 = vst [vmem:[#allocation4 + $0x78] sm:$0xff] %v4701
  %4911 = vst [vmem:[#allocation4 + $0x80] sm:$0xff] %v4706
  %4912 = vst [vmem:[#allocation4 + $0x88] sm:$0xff] %v4709
  %4913 = vst [vmem:[#allocation4 + $0x90] sm:$0xff] %v4714
  %4914 = vst [vmem:[#allocation4 + $0x98] sm:$0xff] %v4717
  %4915 = vst [vmem:[#allocation4 + $0xa0] sm:$0xff] %v4722
  %4916 = vst [vmem:[#allocation4 + $0xa8] sm:$0xff] %v4725
  %4917 = vst [vmem:[#allocation4 + $0xb0] sm:$0xff] %v4730
  %4918 = vst [vmem:[#allocation4 + $0xb8] sm:$0xff] %v4733
  %4919 = vst [vmem:[#allocation4 + $0xc0] sm:$0xff] %v4738
  %4920 = vst [vmem:[#allocation4 + $0xc8] sm:$0xff] %v4741
  %4921 = vst [vmem:[#allocation4 + $0xd0] sm:$0xff] %v4746
  %4922 = vst [vmem:[#allocation4 + $0xd8] sm:$0xff] %v4749
  %4923 = vst [vmem:[#allocation4 + $0xe0] sm:$0xff] %v4754
  %4924 = vst [vmem:[#allocation4 + $0xe8] sm:$0xff] %v4757
  %4925 = vst [vmem:[#allocation4 + $0xf0] sm:$0xff] %v4762
  %4926 = vst [vmem:[#allocation4 + $0xf8] sm:$0xff] %v4765
  %4927 = vst [vmem:[#allocation4 + $0x100] sm:$0xff] %v4770
  %4928 = vst [vmem:[#allocation4 + $0x108] sm:$0xff] %v4773
  %4929 = vst [vmem:[#allocation4 + $0x110] sm:$0xff] %v4778
  %4930 = vst [vmem:[#allocation4 + $0x118] sm:$0xff] %v4781
  %4931 = vst [vmem:[#allocation4 + $0x120] sm:$0xff] %v4786
  %4932 = vst [vmem:[#allocation4 + $0x128] sm:$0xff] %v4789
  %4933 = vst [vmem:[#allocation4 + $0x130] sm:$0xff] %v4794
  %4934 = vst [vmem:[#allocation4 + $0x138] sm:$0xff] %v4797
  %4935 = vst [vmem:[#allocation4 + $0x140] sm:$0xff] %v4802
  %4936 = vst [vmem:[#allocation4 + $0x148] sm:$0xff] %v4805
  %4937 = vst [vmem:[#allocation4 + $0x150] sm:$0xff] %v4810
  %4938 = vst [vmem:[#allocation4 + $0x158] sm:$0xff] %v4813
  %4939 = vst [vmem:[#allocation4 + $0x160] sm:$0xff] %v4818
  %4940 = vst [vmem:[#allocation4 + $0x168] sm:$0xff] %v4821
  %4941 = vst [vmem:[#allocation4 + $0x170] sm:$0xff] %v4826
  %4942 = vst [vmem:[#allocation4 + $0x178] sm:$0xff] %v4829
  %4943 = vst [vmem:[#allocation4 + $0x180] sm:$0xff] %v4834
  %4944 = vst [vmem:[#allocation4 + $0x188] sm:$0xff] %v4837
  %4945 = vst [vmem:[#allocation4 + $0x190] sm:$0xff] %v4842
  %4946 = vst [vmem:[#allocation4 + $0x198] sm:$0xff] %v4845
  %4947 = vst [vmem:[#allocation4 + $0x1a0] sm:$0xff] %v4850
  %4948 = vst [vmem:[#allocation4 + $0x1a8] sm:$0xff] %v4853
  %4949 = vst [vmem:[#allocation4 + $0x1b0] sm:$0xff] %v4858
  %4950 = vst [vmem:[#allocation4 + $0x1b8] sm:$0xff] %v4861
  %4951 = vst [vmem:[#allocation4 + $0x1c0] sm:$0xff] %v4866
  %4952 = vst [vmem:[#allocation4 + $0x1c8] sm:$0xff] %v4869
  %4953 = vst [vmem:[#allocation4 + $0x1d0] sm:$0xff] %v4874
  %4954 = vst [vmem:[#allocation4 + $0x1d8] sm:$0xff] %v4877
  %4955 = vst [vmem:[#allocation4 + $0x1e0] sm:$0xff] %v4882
  %4956 = vst [vmem:[#allocation4 + $0x1e8] sm:$0xff] %v4885
  %4957 = vst [vmem:[#allocation4 + $0x1f0] sm:$0x3f] %v4890
  %v4958 = vld [vmem:[#allocation4] sm:$0xff]
  %v4959 = vld [vmem:[#allocation4 + $0x8] sm:$0xff]
  %v4960 = vld [vmem:[#allocation4 + $0x10] sm:$0xff]
  %v4961 = vld [vmem:[#allocation4 + $0x18] sm:$0xff]
  %v4962 = vld [vmem:[#allocation4 + $0x20] sm:$0xff]
  %v4963 = vld [vmem:[#allocation4 + $0x28] sm:$0xff]
  %v4964 = vld [vmem:[#allocation4 + $0x30] sm:$0xff]
  %v4965 = vld [vmem:[#allocation4 + $0x38] sm:$0xff]
  %v4966 = vld [vmem:[#allocation4 + $0x40] sm:$0xff]
  %v4967 = vld [vmem:[#allocation4 + $0x48] sm:$0xff]
  %v4968 = vld [vmem:[#allocation4 + $0x50] sm:$0xff]
  %v4969 = vld [vmem:[#allocation4 + $0x58] sm:$0xff]
  %v4970 = vld [vmem:[#allocation4 + $0x60] sm:$0xff]
  %v4971 = vld [vmem:[#allocation4 + $0x68] sm:$0xff]
  %v4972 = vld [vmem:[#allocation4 + $0x70] sm:$0xff]
  %v4973 = vld [vmem:[#allocation4 + $0x78] sm:$0xff]
  %v4974 = vld [vmem:[#allocation4 + $0x80] sm:$0xff]
  %v4975 = vld [vmem:[#allocation4 + $0x88] sm:$0xff]
  %v4976 = vld [vmem:[#allocation4 + $0x90] sm:$0xff]
  %v4977 = vld [vmem:[#allocation4 + $0x98] sm:$0xff]
  %v4978 = vld [vmem:[#allocation4 + $0xa0] sm:$0xff]
  %v4979 = vld [vmem:[#allocation4 + $0xa8] sm:$0xff]
  %v4980 = vld [vmem:[#allocation4 + $0xb0] sm:$0xff]
  %v4981 = vld [vmem:[#allocation4 + $0xb8] sm:$0xff]
  %v4982 = vld [vmem:[#allocation4 + $0xc0] sm:$0xff]
  %v4983 = vld [vmem:[#allocation4 + $0xc8] sm:$0xff]
  %v4984 = vld [vmem:[#allocation4 + $0xd0] sm:$0xff]
  %v4985 = vld [vmem:[#allocation4 + $0xd8] sm:$0xff]
  %v4986 = vld [vmem:[#allocation4 + $0xe0] sm:$0xff]
  %v4987 = vld [vmem:[#allocation4 + $0xe8] sm:$0xff]
  %v4988 = vld [vmem:[#allocation4 + $0xf0] sm:$0xff]
  %v4989 = vld [vmem:[#allocation4 + $0xf8] sm:$0xff]
  %v4990 = vld [vmem:[#allocation4 + $0x100] sm:$0xff]
  %v4991 = vld [vmem:[#allocation4 + $0x108] sm:$0xff]
  %v4992 = vld [vmem:[#allocation4 + $0x110] sm:$0xff]
  %v4993 = vld [vmem:[#allocation4 + $0x118] sm:$0xff]
  %v4994 = vld [vmem:[#allocation4 + $0x120] sm:$0xff]
  %v4995 = vld [vmem:[#allocation4 + $0x128] sm:$0xff]
  %v4996 = vld [vmem:[#allocation4 + $0x130] sm:$0xff]
  %v4997 = vld [vmem:[#allocation4 + $0x138] sm:$0xff]
  %v4998 = vld [vmem:[#allocation4 + $0x140] sm:$0xff]
  %v4999 = vld [vmem:[#allocation4 + $0x148] sm:$0xff]
  %v5000 = vld [vmem:[#allocation4 + $0x150] sm:$0xff]
  %v5001 = vld [vmem:[#allocation4 + $0x158] sm:$0xff]
  %v5002 = vld [vmem:[#allocation4 + $0x160] sm:$0xff]
  %v5003 = vld [vmem:[#allocation4 + $0x168] sm:$0xff]
  %v5004 = vld [vmem:[#allocation4 + $0x170] sm:$0xff]
  %v5005 = vld [vmem:[#allocation4 + $0x178] sm:$0xff]
  %v5006 = vld [vmem:[#allocation4 + $0x180] sm:$0xff]
  %v5007 = vld [vmem:[#allocation4 + $0x188] sm:$0xff]
  %v5008 = vld [vmem:[#allocation4 + $0x190] sm:$0xff]
  %v5009 = vld [vmem:[#allocation4 + $0x198] sm:$0xff]
  %v5010 = vld [vmem:[#allocation4 + $0x1a0] sm:$0xff]
  %v5011 = vld [vmem:[#allocation4 + $0x1a8] sm:$0xff]
  %v5012 = vld [vmem:[#allocation4 + $0x1b0] sm:$0xff]
  %v5013 = vld [vmem:[#allocation4 + $0x1b8] sm:$0xff]
  %v5014 = vld [vmem:[#allocation4 + $0x1c0] sm:$0xff]
  %v5015 = vld [vmem:[#allocation4 + $0x1c8] sm:$0xff]
  %v5016 = vld [vmem:[#allocation4 + $0x1d0] sm:$0xff]
  %v5017 = vld [vmem:[#allocation4 + $0x1d8] sm:$0xff]
  %v5018 = vld [vmem:[#allocation4 + $0x1e0] sm:$0xff]
  %v5019 = vld [vmem:[#allocation4 + $0x1e8] sm:$0xff]
  %v5020 = vld [vmem:[#allocation4 + $0x1f0] sm:$0x3f]
  %v5021 = vld [vmem:[#allocation2] sm:$0xf]
  %v5022 = vld [vmem:[#allocation2 + $0x4] sm:$0xf]
  %v5023 = vld [vmem:[#allocation2 + $0x8] sm:$0xf]
  %v5024 = vld [vmem:[#allocation2 + $0xc] sm:$0xf]
  %v5025 = vld [vmem:[#allocation2 + $0x10] sm:$0xf]
  %v5026 = vld [vmem:[#allocation2 + $0x14] sm:$0xf]
  %v5027 = vld [vmem:[#allocation2 + $0x18] sm:$0xf]
  %v5028 = vld [vmem:[#allocation2 + $0x1c] sm:$0xf]
  %v5029 = vld [vmem:[#allocation2 + $0x20] sm:$0xf]
  %v5030 = vld [vmem:[#allocation2 + $0x24] sm:$0xf]
  %v5031 = vld [vmem:[#allocation2 + $0x28] sm:$0xf]
  %v5032 = vld [vmem:[#allocation2 + $0x2c] sm:$0xf]
  %v5033 = vld [vmem:[#allocation2 + $0x30] sm:$0xf]
  %v5034 = vld [vmem:[#allocation2 + $0x34] sm:$0xf]
  %v5035 = vld [vmem:[#allocation2 + $0x38] sm:$0xf]
  %v5036 = vld [vmem:[#allocation2 + $0x3c] sm:$0xf]
  %v5037 = vld [vmem:[#allocation2 + $0x40] sm:$0xf]
  %v5038 = vld [vmem:[#allocation2 + $0x44] sm:$0xf]
  %v5039 = vld [vmem:[#allocation2 + $0x48] sm:$0xf]
  %v5040 = vld [vmem:[#allocation2 + $0x4c] sm:$0xf]
  %v5041 = vld [vmem:[#allocation2 + $0x50] sm:$0xf]
  %v5042 = vld [vmem:[#allocation2 + $0x54] sm:$0xf]
  %v5043 = vld [vmem:[#allocation2 + $0x58] sm:$0xf]
  %v5044 = vld [vmem:[#allocation2 + $0x5c] sm:$0xf]
  %v5045 = vld [vmem:[#allocation2 + $0x60] sm:$0xf]
  %v5046 = vld [vmem:[#allocation2 + $0x64] sm:$0xf]
  %v5047 = vld [vmem:[#allocation2 + $0x68] sm:$0xf]
  %v5048 = vld [vmem:[#allocation2 + $0x6c] sm:$0xf]
  %v5049 = vld [vmem:[#allocation2 + $0x70] sm:$0xf]
  %v5050 = vld [vmem:[#allocation2 + $0x74] sm:$0xf]
  %v5051 = vld [vmem:[#allocation2 + $0x78] sm:$0xf]
  %v5052 = vld [vmem:[#allocation2 + $0x7c] sm:$0xf]
  %v5053 = vld [vmem:[#allocation2 + $0x80] sm:$0xf]
  %v5054 = vld [vmem:[#allocation2 + $0x84] sm:$0xf]
  %v5055 = vld [vmem:[#allocation2 + $0x88] sm:$0xf]
  %v5056 = vld [vmem:[#allocation2 + $0x8c] sm:$0xf]
  %v5057 = vld [vmem:[#allocation2 + $0x90] sm:$0xf]
  %v5058 = vld [vmem:[#allocation2 + $0x94] sm:$0xf]
  %v5059 = vld [vmem:[#allocation2 + $0x98] sm:$0xf]
  %v5060 = vld [vmem:[#allocation2 + $0x9c] sm:$0xf]
  %v5061 = vld [vmem:[#allocation2 + $0xa0] sm:$0xf]
  %v5062 = vld [vmem:[#allocation2 + $0xa4] sm:$0xf]
  %v5063 = vld [vmem:[#allocation2 + $0xa8] sm:$0xf]
  %v5064 = vld [vmem:[#allocation2 + $0xac] sm:$0xf]
  %v5065 = vld [vmem:[#allocation2 + $0xb0] sm:$0xf]
  %v5066 = vld [vmem:[#allocation2 + $0xb4] sm:$0xf]
  %v5067 = vld [vmem:[#allocation2 + $0xb8] sm:$0xf]
  %v5068 = vld [vmem:[#allocation2 + $0xbc] sm:$0xf]
  %v5069 = vld [vmem:[#allocation2 + $0xc0] sm:$0xf]
  %v5070 = vld [vmem:[#allocation2 + $0xc4] sm:$0xf]
  %v5071 = vld [vmem:[#allocation2 + $0xc8] sm:$0xf]
  %v5072 = vld [vmem:[#allocation2 + $0xcc] sm:$0xf]
  %v5073 = vld [vmem:[#allocation2 + $0xd0] sm:$0xf]
  %v5074 = vld [vmem:[#allocation2 + $0xd4] sm:$0xf]
  %v5075 = vld [vmem:[#allocation2 + $0xd8] sm:$0xf]
  %v5076 = vld [vmem:[#allocation2 + $0xdc] sm:$0xf]
  %v5077 = vld [vmem:[#allocation2 + $0xe0] sm:$0xf]
  %v5078 = vld [vmem:[#allocation2 + $0xe4] sm:$0xf]
  %v5079 = vld [vmem:[#allocation2 + $0xe8] sm:$0xf]
  %v5080 = vld [vmem:[#allocation2 + $0xec] sm:$0xf]
  %v5081 = vld [vmem:[#allocation2 + $0xf0] sm:$0xf]
  %v5082 = vld [vmem:[#allocation2 + $0xf4] sm:$0xf]
  %v5083 = vld [vmem:[#allocation2 + $0xf8] sm:$0xf]
  %s5084 = scalar_lea.vmem %s5, 64
  %v5085 = vld [vmem:[%s5084] sm:$0xf]
  %v5086 = vld [vmem:[%s5084 + $0x4] sm:$0xf]
  %v5087 = vld [vmem:[%s5084 + $0x8] sm:$0xf]
  %v5088 = vld [vmem:[%s5084 + $0xc] sm:$0xf]
  %v5089 = vld [vmem:[%s5084 + $0x10] sm:$0xf]
  %v5090 = vld [vmem:[%s5084 + $0x14] sm:$0xf]
  %v5091 = vld [vmem:[%s5084 + $0x18] sm:$0xf]
  %v5092 = vld [vmem:[%s5084 + $0x1c] sm:$0xf]
  %v5093 = vld [vmem:[%s5084 + $0x20] sm:$0xf]
  %v5094 = vld [vmem:[%s5084 + $0x24] sm:$0xf]
  %v5095 = vld [vmem:[%s5084 + $0x28] sm:$0xf]
  %v5096 = vld [vmem:[%s5084 + $0x2c] sm:$0xf]
  %v5097 = vld [vmem:[%s5084 + $0x30] sm:$0xf]
  %v5098 = vld [vmem:[%s5084 + $0x34] sm:$0xf]
  %v5099 = vld [vmem:[%s5084 + $0x38] sm:$0xf]
  %v5100 = vld [vmem:[%s5084 + $0x3c] sm:$0xf]
  %v5164 = vunpack.c.l.b16 %v5021
  %v5165 = vunpack.c.l.b16 %v5022
  %v5166 = vunpack.c.l.b16 %v5023
  %v5167 = vunpack.c.l.b16 %v5024
  %v5168 = vunpack.c.l.b16 %v5025
  %v5169 = vunpack.c.l.b16 %v5026
  %v5170 = vunpack.c.l.b16 %v5027
  %v5171 = vunpack.c.l.b16 %v5028
  %v5172 = vunpack.c.l.b16 %v5029
  %v5173 = vunpack.c.l.b16 %v5030
  %v5174 = vunpack.c.l.b16 %v5031
  %v5175 = vunpack.c.l.b16 %v5032
  %v5176 = vunpack.c.l.b16 %v5033
  %v5177 = vunpack.c.l.b16 %v5034
  %v5178 = vunpack.c.l.b16 %v5035
  %v5179 = vunpack.c.l.b16 %v5036
  %v5180 = vunpack.c.l.b16 %v5037
  %v5181 = vunpack.c.l.b16 %v5038
  %v5182 = vunpack.c.l.b16 %v5039
  %v5183 = vunpack.c.l.b16 %v5040
  %v5184 = vunpack.c.l.b16 %v5041
  %v5185 = vunpack.c.l.b16 %v5042
  %v5186 = vunpack.c.l.b16 %v5043
  %v5187 = vunpack.c.l.b16 %v5044
  %v5188 = vunpack.c.l.b16 %v5045
  %v5189 = vunpack.c.l.b16 %v5046
  %v5190 = vunpack.c.l.b16 %v5047
  %v5191 = vunpack.c.l.b16 %v5048
  %v5192 = vunpack.c.l.b16 %v5049
  %v5193 = vunpack.c.l.b16 %v5050
  %v5194 = vunpack.c.l.b16 %v5051
  %v5195 = vunpack.c.l.b16 %v5052
  %v5196 = vunpack.c.l.b16 %v5053
  %v5197 = vunpack.c.l.b16 %v5054
  %v5198 = vunpack.c.l.b16 %v5055
  %v5199 = vunpack.c.l.b16 %v5056
  %v5200 = vunpack.c.l.b16 %v5057
  %v5201 = vunpack.c.l.b16 %v5058
  %v5202 = vunpack.c.l.b16 %v5059
  %v5203 = vunpack.c.l.b16 %v5060
  %v5204 = vunpack.c.l.b16 %v5061
  %v5205 = vunpack.c.l.b16 %v5062
  %v5206 = vunpack.c.l.b16 %v5063
  %v5207 = vunpack.c.l.b16 %v5064
  %v5208 = vunpack.c.l.b16 %v5065
  %v5209 = vunpack.c.l.b16 %v5066
  %v5210 = vunpack.c.l.b16 %v5067
  %v5211 = vunpack.c.l.b16 %v5068
  %v5212 = vunpack.c.l.b16 %v5069
  %v5213 = vunpack.c.l.b16 %v5070
  %v5214 = vunpack.c.l.b16 %v5071
  %v5215 = vunpack.c.l.b16 %v5072
  %v5216 = vunpack.c.l.b16 %v5073
  %v5217 = vunpack.c.l.b16 %v5074
  %v5218 = vunpack.c.l.b16 %v5075
  %v5219 = vunpack.c.l.b16 %v5076
  %v5220 = vunpack.c.l.b16 %v5077
  %v5221 = vunpack.c.l.b16 %v5078
  %v5222 = vunpack.c.l.b16 %v5079
  %v5223 = vunpack.c.l.b16 %v5080
  %v5224 = vunpack.c.l.b16 %v5081
  %v5225 = vunpack.c.l.b16 %v5082
  %v5226 = vunpack.c.l.b16 %v5083
  %v5227 = vpack.c.b16 %v5165, %v5164
  %v5228 = vpack.c.b16 %v5167, %v5166
  %v5229 = vpack.c.b16 %v5169, %v5168
  %v5230 = vpack.c.b16 %v5171, %v5170
  %v5231 = vpack.c.b16 %v5173, %v5172
  %v5232 = vpack.c.b16 %v5175, %v5174
  %v5233 = vpack.c.b16 %v5177, %v5176
  %v5234 = vpack.c.b16 %v5179, %v5178
  %v5235 = vpack.c.b16 %v5181, %v5180
  %v5236 = vpack.c.b16 %v5183, %v5182
  %v5237 = vpack.c.b16 %v5185, %v5184
  %v5238 = vpack.c.b16 %v5187, %v5186
  %v5239 = vpack.c.b16 %v5189, %v5188
  %v5240 = vpack.c.b16 %v5191, %v5190
  %v5241 = vpack.c.b16 %v5193, %v5192
  %v5242 = vpack.c.b16 %v5195, %v5194
  %v5243 = vpack.c.b16 %v5197, %v5196
  %v5244 = vpack.c.b16 %v5199, %v5198
  %v5245 = vpack.c.b16 %v5201, %v5200
  %v5246 = vpack.c.b16 %v5203, %v5202
  %v5247 = vpack.c.b16 %v5205, %v5204
  %v5248 = vpack.c.b16 %v5207, %v5206
  %v5249 = vpack.c.b16 %v5209, %v5208
  %v5250 = vpack.c.b16 %v5211, %v5210
  %v5251 = vpack.c.b16 %v5213, %v5212
  %v5252 = vpack.c.b16 %v5215, %v5214
  %v5253 = vpack.c.b16 %v5217, %v5216
  %v5254 = vpack.c.b16 %v5219, %v5218
  %v5255 = vpack.c.b16 %v5221, %v5220
  %v5256 = vpack.c.b16 %v5223, %v5222
  %v5257 = vpack.c.b16 %v5225, %v5224
  %v5258 = vpack.c.b16 %v5226, %v5226
  %v5260 = vshrl.u32 %v5227, 16
  %v5262 = vshll.u32 %v5227, 16
  %v5264 = vrot.slane %v5262, 1
  %v5265 = vor.u32 %v5260, %v5264
  %v5267 = vshll.u32 %v5228, 16
  %v5269 = vrot.slane %v5267, 1
  %v5270 = vsel %vm1026, %v5265, %v5269
  %v5271 = vshrl.u32 %v5228, 16
  %v5273 = vor.u32 %v5271, %v5269
  %v5275 = vshll.u32 %v5229, 16
  %v5277 = vrot.slane %v5275, 1
  %v5278 = vsel %vm1026, %v5273, %v5277
  %v5279 = vshrl.u32 %v5229, 16
  %v5281 = vor.u32 %v5279, %v5277
  %v5283 = vshll.u32 %v5230, 16
  %v5285 = vrot.slane %v5283, 1
  %v5286 = vsel %vm1026, %v5281, %v5285
  %v5287 = vshrl.u32 %v5230, 16
  %v5289 = vor.u32 %v5287, %v5285
  %v5291 = vshll.u32 %v5231, 16
  %v5293 = vrot.slane %v5291, 1
  %v5294 = vsel %vm1026, %v5289, %v5293
  %v5295 = vshrl.u32 %v5231, 16
  %v5297 = vor.u32 %v5295, %v5293
  %v5299 = vshll.u32 %v5232, 16
  %v5301 = vrot.slane %v5299, 1
  %v5302 = vsel %vm1026, %v5297, %v5301
  %v5303 = vshrl.u32 %v5232, 16
  %v5305 = vor.u32 %v5303, %v5301
  %v5307 = vshll.u32 %v5233, 16
  %v5309 = vrot.slane %v5307, 1
  %v5310 = vsel %vm1026, %v5305, %v5309
  %v5311 = vshrl.u32 %v5233, 16
  %v5313 = vor.u32 %v5311, %v5309
  %v5315 = vshll.u32 %v5234, 16
  %v5317 = vrot.slane %v5315, 1
  %v5318 = vsel %vm1026, %v5313, %v5317
  %v5319 = vshrl.u32 %v5234, 16
  %v5321 = vor.u32 %v5319, %v5317
  %v5323 = vshll.u32 %v5235, 16
  %v5325 = vrot.slane %v5323, 1
  %v5326 = vsel %vm1026, %v5321, %v5325
  %v5327 = vshrl.u32 %v5235, 16
  %v5329 = vor.u32 %v5327, %v5325
  %v5331 = vshll.u32 %v5236, 16
  %v5333 = vrot.slane %v5331, 1
  %v5334 = vsel %vm1026, %v5329, %v5333
  %v5335 = vshrl.u32 %v5236, 16
  %v5337 = vor.u32 %v5335, %v5333
  %v5339 = vshll.u32 %v5237, 16
  %v5341 = vrot.slane %v5339, 1
  %v5342 = vsel %vm1026, %v5337, %v5341
  %v5343 = vshrl.u32 %v5237, 16
  %v5345 = vor.u32 %v5343, %v5341
  %v5347 = vshll.u32 %v5238, 16
  %v5349 = vrot.slane %v5347, 1
  %v5350 = vsel %vm1026, %v5345, %v5349
  %v5351 = vshrl.u32 %v5238, 16
  %v5353 = vor.u32 %v5351, %v5349
  %v5355 = vshll.u32 %v5239, 16
  %v5357 = vrot.slane %v5355, 1
  %v5358 = vsel %vm1026, %v5353, %v5357
  %v5359 = vshrl.u32 %v5239, 16
  %v5361 = vor.u32 %v5359, %v5357
  %v5363 = vshll.u32 %v5240, 16
  %v5365 = vrot.slane %v5363, 1
  %v5366 = vsel %vm1026, %v5361, %v5365
  %v5367 = vshrl.u32 %v5240, 16
  %v5369 = vor.u32 %v5367, %v5365
  %v5371 = vshll.u32 %v5241, 16
  %v5373 = vrot.slane %v5371, 1
  %v5374 = vsel %vm1026, %v5369, %v5373
  %v5375 = vshrl.u32 %v5241, 16
  %v5377 = vor.u32 %v5375, %v5373
  %v5379 = vshll.u32 %v5242, 16
  %v5381 = vrot.slane %v5379, 1
  %v5382 = vsel %vm1026, %v5377, %v5381
  %v5383 = vshrl.u32 %v5242, 16
  %v5385 = vor.u32 %v5383, %v5381
  %v5387 = vshll.u32 %v5243, 16
  %v5389 = vrot.slane %v5387, 1
  %v5390 = vsel %vm1026, %v5385, %v5389
  %v5391 = vshrl.u32 %v5243, 16
  %v5393 = vor.u32 %v5391, %v5389
  %v5395 = vshll.u32 %v5244, 16
  %v5397 = vrot.slane %v5395, 1
  %v5398 = vsel %vm1026, %v5393, %v5397
  %v5399 = vshrl.u32 %v5244, 16
  %v5401 = vor.u32 %v5399, %v5397
  %v5403 = vshll.u32 %v5245, 16
  %v5405 = vrot.slane %v5403, 1
  %v5406 = vsel %vm1026, %v5401, %v5405
  %v5407 = vshrl.u32 %v5245, 16
  %v5409 = vor.u32 %v5407, %v5405
  %v5411 = vshll.u32 %v5246, 16
  %v5413 = vrot.slane %v5411, 1
  %v5414 = vsel %vm1026, %v5409, %v5413
  %v5415 = vshrl.u32 %v5246, 16
  %v5417 = vor.u32 %v5415, %v5413
  %v5419 = vshll.u32 %v5247, 16
  %v5421 = vrot.slane %v5419, 1
  %v5422 = vsel %vm1026, %v5417, %v5421
  %v5423 = vshrl.u32 %v5247, 16
  %v5425 = vor.u32 %v5423, %v5421
  %v5427 = vshll.u32 %v5248, 16
  %v5429 = vrot.slane %v5427, 1
  %v5430 = vsel %vm1026, %v5425, %v5429
  %v5431 = vshrl.u32 %v5248, 16
  %v5433 = vor.u32 %v5431, %v5429
  %v5435 = vshll.u32 %v5249, 16
  %v5437 = vrot.slane %v5435, 1
  %v5438 = vsel %vm1026, %v5433, %v5437
  %v5439 = vshrl.u32 %v5249, 16
  %v5441 = vor.u32 %v5439, %v5437
  %v5443 = vshll.u32 %v5250, 16
  %v5445 = vrot.slane %v5443, 1
  %v5446 = vsel %vm1026, %v5441, %v5445
  %v5447 = vshrl.u32 %v5250, 16
  %v5449 = vor.u32 %v5447, %v5445
  %v5451 = vshll.u32 %v5251, 16
  %v5453 = vrot.slane %v5451, 1
  %v5454 = vsel %vm1026, %v5449, %v5453
  %v5455 = vshrl.u32 %v5251, 16
  %v5457 = vor.u32 %v5455, %v5453
  %v5459 = vshll.u32 %v5252, 16
  %v5461 = vrot.slane %v5459, 1
  %v5462 = vsel %vm1026, %v5457, %v5461
  %v5463 = vshrl.u32 %v5252, 16
  %v5465 = vor.u32 %v5463, %v5461
  %v5467 = vshll.u32 %v5253, 16
  %v5469 = vrot.slane %v5467, 1
  %v5470 = vsel %vm1026, %v5465, %v5469
  %v5471 = vshrl.u32 %v5253, 16
  %v5473 = vor.u32 %v5471, %v5469
  %v5475 = vshll.u32 %v5254, 16
  %v5477 = vrot.slane %v5475, 1
  %v5478 = vsel %vm1026, %v5473, %v5477
  %v5479 = vshrl.u32 %v5254, 16
  %v5481 = vor.u32 %v5479, %v5477
  %v5483 = vshll.u32 %v5255, 16
  %v5485 = vrot.slane %v5483, 1
  %v5486 = vsel %vm1026, %v5481, %v5485
  %v5487 = vshrl.u32 %v5255, 16
  %v5489 = vor.u32 %v5487, %v5485
  %v5491 = vshll.u32 %v5256, 16
  %v5493 = vrot.slane %v5491, 1
  %v5494 = vsel %vm1026, %v5489, %v5493
  %v5495 = vshrl.u32 %v5256, 16
  %v5497 = vor.u32 %v5495, %v5493
  %v5499 = vshll.u32 %v5257, 16
  %v5501 = vrot.slane %v5499, 1
  %v5502 = vsel %vm1026, %v5497, %v5501
  %v5503 = vshrl.u32 %v5257, 16
  %v5505 = vor.u32 %v5503, %v5501
  %v5507 = vshll.u32 %v5258, 16
  %v5509 = vrot.slane %v5507, 1
  %v5510 = vsel %vm1026, %v5505, %v5509
  %v5511 = vshrl.u32 %v5258, 16
  %v5513 = vor.u32 %v5511, %v5509
  %v5562 = vunpack.c.l.b16 %v5085
  %v5563 = vunpack.c.l.b16 %v5086
  %v5564 = vunpack.c.l.b16 %v5087
  %v5565 = vunpack.c.l.b16 %v5088
  %v5566 = vunpack.c.l.b16 %v5089
  %v5567 = vunpack.c.l.b16 %v5090
  %v5568 = vunpack.c.l.b16 %v5091
  %v5569 = vunpack.c.l.b16 %v5092
  %v5570 = vunpack.c.l.b16 %v5093
  %v5571 = vunpack.c.l.b16 %v5094
  %v5572 = vunpack.c.l.b16 %v5095
  %v5573 = vunpack.c.l.b16 %v5096
  %v5574 = vunpack.c.l.b16 %v5097
  %v5575 = vunpack.c.l.b16 %v5098
  %v5576 = vunpack.c.l.b16 %v5099
  %v5577 = vunpack.c.l.b16 %v5100
  %v5578 = vpack.c.b16 %v5563, %v5562
  %v5579 = vpack.c.b16 %v5565, %v5564
  %v5580 = vpack.c.b16 %v5567, %v5566
  %v5581 = vpack.c.b16 %v5569, %v5568
  %v5582 = vpack.c.b16 %v5571, %v5570
  %v5583 = vpack.c.b16 %v5573, %v5572
  %v5584 = vpack.c.b16 %v5575, %v5574
  %v5585 = vpack.c.b16 %v5577, %v5576
  %5594 = vmatprep.subr.bf16.mxu0 0
  %5595 = vmatpush1.bf16.msra.mxu0 %v5578
  %5596 = vmatprep.subr.bf16.mxu0 0
  %5597 = vmatpush1.bf16.msra.mxu0 %v5579
  %5598 = vmatprep.subr.bf16.mxu0 0
  %5599 = vmatpush1.bf16.msra.mxu0 %v5580
  %5600 = vmatprep.subr.bf16.mxu0 0
  %5601 = vmatpush1.bf16.msra.mxu0 %v5581
  %5602 = vmatprep.subr.bf16.mxu0 0
  %5603 = vmatpush1.bf16.msra.mxu0 %v5582
  %5604 = vmatprep.subr.bf16.mxu0 0
  %5605 = vmatpush1.bf16.msra.mxu0 %v5583
  %5606 = vmatprep.subr.bf16.mxu0 0
  %5607 = vmatpush1.bf16.msra.mxu0 %v5584
  %5608 = vmatprep.subr.bf16.mxu0 0
  %5609 = vmatpush1.bf16.msra.mxu0 %v5585
  %5610 = vmatprep.subr.bf16.mxu0 0
  %5611 = vmatpush1.bf16.msra.mxu0 0
  %5612 = vmatprep.subr.bf16.mxu0 0
  %5613 = vmatpush1.bf16.msra.mxu0 0
  %5614 = vmatprep.subr.bf16.mxu0 0
  %5615 = vmatpush1.bf16.msra.mxu0 0
  %5616 = vmatprep.subr.bf16.mxu0 0
  %5617 = vmatpush1.bf16.msra.mxu0 0
  %5618 = vmatprep.subr.bf16.mxu0 0
  %5619 = vmatpush1.bf16.msra.mxu0 0
  %5620 = vmatprep.subr.bf16.mxu0 0
  %5621 = vmatpush1.bf16.msra.mxu0 0
  %5622 = vmatprep.subr.bf16.mxu0 0
  %5623 = vmatpush1.bf16.msra.mxu0 0
  %5624 = vmatprep.subr.bf16.mxu0 0
  %5625 = vmatpush1.bf16.msra.mxu0 0
  %5626 = vmatprep.mubr.bf16.mxu0 0
  %5627 = vmatmul.mubr.bf16.gmra.mrb[0].mxu0 %v5270
  %v5628 = vpop.f32.mrb[0].mxu0
  %v5629 = vadd.f32 0.0, %v5628
  %v5630 = vpop.f32.mrb[0].mxu0
  %v5631 = vpop.f32.mrb[0].mxu0
  %v5632 = vadd.f32 0.0, %v5631
  %v5633 = vpop.f32.mrb[0].mxu0
  %5634 = vmatprep.mubr.bf16.mxu0 0
  %5635 = vmatmul.mubr.bf16.gmra.mrb[0].mxu0 %v5278
  %v5636 = vpop.f32.mrb[0].mxu0
  %v5637 = vadd.f32 0.0, %v5636
  %v5638 = vpop.f32.mrb[0].mxu0
  %v5639 = vpop.f32.mrb[0].mxu0
  %v5640 = vadd.f32 0.0, %v5639
  %v5641 = vpop.f32.mrb[0].mxu0
  %5642 = vmatprep.mubr.bf16.mxu0 0
  %5643 = vmatmul.mubr.bf16.gmra.mrb[0].mxu0 %v5286
  %v5644 = vpop.f32.mrb[0].mxu0
  %v5645 = vadd.f32 0.0, %v5644
  %v5646 = vpop.f32.mrb[0].mxu0
  %v5647 = vpop.f32.mrb[0].mxu0
  %v5648 = vadd.f32 0.0, %v5647
  %v5649 = vpop.f32.mrb[0].mxu0
  %5650 = vmatprep.mubr.bf16.mxu0 0
  %5651 = vmatmul.mubr.bf16.gmra.mrb[0].mxu0 %v5294
  %v5652 = vpop.f32.mrb[0].mxu0
  %v5653 = vadd.f32 0.0, %v5652
  %v5654 = vpop.f32.mrb[0].mxu0
  %v5655 = vpop.f32.mrb[0].mxu0
  %v5656 = vadd.f32 0.0, %v5655
  %v5657 = vpop.f32.mrb[0].mxu0
  %5658 = vmatprep.mubr.bf16.mxu0 0
  %5659 = vmatmul.mubr.bf16.gmra.mrb[0].mxu0 %v5302
  %v5660 = vpop.f32.mrb[0].mxu0
  %v5661 = vadd.f32 0.0, %v5660
  %v5662 = vpop.f32.mrb[0].mxu0
  %v5663 = vpop.f32.mrb[0].mxu0
  %v5664 = vadd.f32 0.0, %v5663
  %v5665 = vpop.f32.mrb[0].mxu0
  %5666 = vmatprep.mubr.bf16.mxu0 0
  %5667 = vmatmul.mubr.bf16.gmra.mrb[0].mxu0 %v5310
  %v5668 = vpop.f32.mrb[0].mxu0
  %v5669 = vadd.f32 0.0, %v5668
  %v5670 = vpop.f32.mrb[0].mxu0
  %v5671 = vpop.f32.mrb[0].mxu0
  %v5672 = vadd.f32 0.0, %v5671
  %v5673 = vpop.f32.mrb[0].mxu0
  %5674 = vmatprep.mubr.bf16.mxu0 0
  %5675 = vmatmul.mubr.bf16.gmra.mrb[0].mxu0 %v5318
  %v5676 = vpop.f32.mrb[0].mxu0
  %v5677 = vadd.f32 0.0, %v5676
  %v5678 = vpop.f32.mrb[0].mxu0
  %v5679 = vpop.f32.mrb[0].mxu0
  %v5680 = vadd.f32 0.0, %v5679
  %v5681 = vpop.f32.mrb[0].mxu0
  %5682 = vmatprep.mubr.bf16.mxu0 0
  %5683 = vmatmul.mubr.bf16.gmra.mrb[0].mxu0 %v5326
  %v5684 = vpop.f32.mrb[0].mxu0
  %v5685 = vadd.f32 0.0, %v5684
  %v5686 = vpop.f32.mrb[0].mxu0
  %v5687 = vpop.f32.mrb[0].mxu0
  %v5688 = vadd.f32 0.0, %v5687
  %v5689 = vpop.f32.mrb[0].mxu0
  %5690 = vmatprep.mubr.bf16.mxu0 0
  %5691 = vmatmul.mubr.bf16.gmra.mrb[0].mxu0 %v5334
  %v5692 = vpop.f32.mrb[0].mxu0
  %v5693 = vadd.f32 0.0, %v5692
  %v5694 = vpop.f32.mrb[0].mxu0
  %v5695 = vpop.f32.mrb[0].mxu0
  %v5696 = vadd.f32 0.0, %v5695
  %v5697 = vpop.f32.mrb[0].mxu0
  %5698 = vmatprep.mubr.bf16.mxu0 0
  %5699 = vmatmul.mubr.bf16.gmra.mrb[0].mxu0 %v5342
  %v5700 = vpop.f32.mrb[0].mxu0
  %v5701 = vadd.f32 0.0, %v5700
  %v5702 = vpop.f32.mrb[0].mxu0
  %v5703 = vpop.f32.mrb[0].mxu0
  %v5704 = vadd.f32 0.0, %v5703
  %v5705 = vpop.f32.mrb[0].mxu0
  %5706 = vmatprep.mubr.bf16.mxu0 0
  %5707 = vmatmul.mubr.bf16.gmra.mrb[0].mxu0 %v5350
  %v5708 = vpop.f32.mrb[0].mxu0
  %v5709 = vadd.f32 0.0, %v5708
  %v5710 = vpop.f32.mrb[0].mxu0
  %v5711 = vpop.f32.mrb[0].mxu0
  %v5712 = vadd.f32 0.0, %v5711
  %v5713 = vpop.f32.mrb[0].mxu0
  %5714 = vmatprep.mubr.bf16.mxu0 0
  %5715 = vmatmul.mubr.bf16.gmra.mrb[0].mxu0 %v5358
  %v5716 = vpop.f32.mrb[0].mxu0
  %v5717 = vadd.f32 0.0, %v5716
  %v5718 = vpop.f32.mrb[0].mxu0
  %v5719 = vpop.f32.mrb[0].mxu0
  %v5720 = vadd.f32 0.0, %v5719
  %v5721 = vpop.f32.mrb[0].mxu0
  %5722 = vmatprep.mubr.bf16.mxu0 0
  %5723 = vmatmul.mubr.bf16.gmra.mrb[0].mxu0 %v5366
  %v5724 = vpop.f32.mrb[0].mxu0
  %v5725 = vadd.f32 0.0, %v5724
  %v5726 = vpop.f32.mrb[0].mxu0
  %v5727 = vpop.f32.mrb[0].mxu0
  %v5728 = vadd.f32 0.0, %v5727
  %v5729 = vpop.f32.mrb[0].mxu0
  %5730 = vmatprep.mubr.bf16.mxu0 0
  %5731 = vmatmul.mubr.bf16.gmra.mrb[0].mxu0 %v5374
  %v5732 = vpop.f32.mrb[0].mxu0
  %v5733 = vadd.f32 0.0, %v5732
  %v5734 = vpop.f32.mrb[0].mxu0
  %v5735 = vpop.f32.mrb[0].mxu0
  %v5736 = vadd.f32 0.0, %v5735
  %v5737 = vpop.f32.mrb[0].mxu0
  %5738 = vmatprep.mubr.bf16.mxu0 0
  %5739 = vmatmul.mubr.bf16.gmra.mrb[0].mxu0 %v5382
  %v5740 = vpop.f32.mrb[0].mxu0
  %v5741 = vadd.f32 0.0, %v5740
  %v5742 = vpop.f32.mrb[0].mxu0
  %v5743 = vpop.f32.mrb[0].mxu0
  %v5744 = vadd.f32 0.0, %v5743
  %v5745 = vpop.f32.mrb[0].mxu0
  %5746 = vmatprep.mubr.bf16.mxu0 0
  %5747 = vmatmul.mubr.bf16.gmra.mrb[0].mxu0 %v5390
  %v5748 = vpop.f32.mrb[0].mxu0
  %v5749 = vadd.f32 0.0, %v5748
  %v5750 = vpop.f32.mrb[0].mxu0
  %v5751 = vpop.f32.mrb[0].mxu0
  %v5752 = vadd.f32 0.0, %v5751
  %v5753 = vpop.f32.mrb[0].mxu0
  %5754 = vmatprep.mubr.bf16.mxu0 0
  %5755 = vmatmul.mubr.bf16.gmra.mrb[0].mxu0 %v5398
  %v5756 = vpop.f32.mrb[0].mxu0
  %v5757 = vadd.f32 0.0, %v5756
  %v5758 = vpop.f32.mrb[0].mxu0
  %v5759 = vpop.f32.mrb[0].mxu0
  %v5760 = vadd.f32 0.0, %v5759
  %v5761 = vpop.f32.mrb[0].mxu0
  %5762 = vmatprep.mubr.bf16.mxu0 0
  %5763 = vmatmul.mubr.bf16.gmra.mrb[0].mxu0 %v5406
  %v5764 = vpop.f32.mrb[0].mxu0
  %v5765 = vadd.f32 0.0, %v5764
  %v5766 = vpop.f32.mrb[0].mxu0
  %v5767 = vpop.f32.mrb[0].mxu0
  %v5768 = vadd.f32 0.0, %v5767
  %v5769 = vpop.f32.mrb[0].mxu0
  %5770 = vmatprep.mubr.bf16.mxu0 0
  %5771 = vmatmul.mubr.bf16.gmra.mrb[0].mxu0 %v5414
  %v5772 = vpop.f32.mrb[0].mxu0
  %v5773 = vadd.f32 0.0, %v5772
  %v5774 = vpop.f32.mrb[0].mxu0
  %v5775 = vpop.f32.mrb[0].mxu0
  %v5776 = vadd.f32 0.0, %v5775
  %v5777 = vpop.f32.mrb[0].mxu0
  %5778 = vmatprep.mubr.bf16.mxu0 0
  %5779 = vmatmul.mubr.bf16.gmra.mrb[0].mxu0 %v5422
  %v5780 = vpop.f32.mrb[0].mxu0
  %v5781 = vadd.f32 0.0, %v5780
  %v5782 = vpop.f32.mrb[0].mxu0
  %v5783 = vpop.f32.mrb[0].mxu0
  %v5784 = vadd.f32 0.0, %v5783
  %v5785 = vpop.f32.mrb[0].mxu0
  %5786 = vmatprep.mubr.bf16.mxu0 0
  %5787 = vmatmul.mubr.bf16.gmra.mrb[0].mxu0 %v5430
  %v5788 = vpop.f32.mrb[0].mxu0
  %v5789 = vadd.f32 0.0, %v5788
  %v5790 = vpop.f32.mrb[0].mxu0
  %v5791 = vpop.f32.mrb[0].mxu0
  %v5792 = vadd.f32 0.0, %v5791
  %v5793 = vpop.f32.mrb[0].mxu0
  %5794 = vmatprep.mubr.bf16.mxu0 0
  %5795 = vmatmul.mubr.bf16.gmra.mrb[0].mxu0 %v5438
  %v5796 = vpop.f32.mrb[0].mxu0
  %v5797 = vadd.f32 0.0, %v5796
  %v5798 = vpop.f32.mrb[0].mxu0
  %v5799 = vpop.f32.mrb[0].mxu0
  %v5800 = vadd.f32 0.0, %v5799
  %v5801 = vpop.f32.mrb[0].mxu0
  %5802 = vmatprep.mubr.bf16.mxu0 0
  %5803 = vmatmul.mubr.bf16.gmra.mrb[0].mxu0 %v5446
  %v5804 = vpop.f32.mrb[0].mxu0
  %v5805 = vadd.f32 0.0, %v5804
  %v5806 = vpop.f32.mrb[0].mxu0
  %v5807 = vpop.f32.mrb[0].mxu0
  %v5808 = vadd.f32 0.0, %v5807
  %v5809 = vpop.f32.mrb[0].mxu0
  %5810 = vmatprep.mubr.bf16.mxu0 0
  %5811 = vmatmul.mubr.bf16.gmra.mrb[0].mxu0 %v5454
  %v5812 = vpop.f32.mrb[0].mxu0
  %v5813 = vadd.f32 0.0, %v5812
  %v5814 = vpop.f32.mrb[0].mxu0
  %v5815 = vpop.f32.mrb[0].mxu0
  %v5816 = vadd.f32 0.0, %v5815
  %v5817 = vpop.f32.mrb[0].mxu0
  %5818 = vmatprep.mubr.bf16.mxu0 0
  %5819 = vmatmul.mubr.bf16.gmra.mrb[0].mxu0 %v5462
  %v5820 = vpop.f32.mrb[0].mxu0
  %v5821 = vadd.f32 0.0, %v5820
  %v5822 = vpop.f32.mrb[0].mxu0
  %v5823 = vpop.f32.mrb[0].mxu0
  %v5824 = vadd.f32 0.0, %v5823
  %v5825 = vpop.f32.mrb[0].mxu0
  %5826 = vmatprep.mubr.bf16.mxu0 0
  %5827 = vmatmul.mubr.bf16.gmra.mrb[0].mxu0 %v5470
  %v5828 = vpop.f32.mrb[0].mxu0
  %v5829 = vadd.f32 0.0, %v5828
  %v5830 = vpop.f32.mrb[0].mxu0
  %v5831 = vpop.f32.mrb[0].mxu0
  %v5832 = vadd.f32 0.0, %v5831
  %v5833 = vpop.f32.mrb[0].mxu0
  %5834 = vmatprep.mubr.bf16.mxu0 0
  %5835 = vmatmul.mubr.bf16.gmra.mrb[0].mxu0 %v5478
  %v5836 = vpop.f32.mrb[0].mxu0
  %v5837 = vadd.f32 0.0, %v5836
  %v5838 = vpop.f32.mrb[0].mxu0
  %v5839 = vpop.f32.mrb[0].mxu0
  %v5840 = vadd.f32 0.0, %v5839
  %v5841 = vpop.f32.mrb[0].mxu0
  %5842 = vmatprep.mubr.bf16.mxu0 0
  %5843 = vmatmul.mubr.bf16.gmra.mrb[0].mxu0 %v5486
  %v5844 = vpop.f32.mrb[0].mxu0
  %v5845 = vadd.f32 0.0, %v5844
  %v5846 = vpop.f32.mrb[0].mxu0
  %v5847 = vpop.f32.mrb[0].mxu0
  %v5848 = vadd.f32 0.0, %v5847
  %v5849 = vpop.f32.mrb[0].mxu0
  %5850 = vmatprep.mubr.bf16.mxu0 0
  %5851 = vmatmul.mubr.bf16.gmra.mrb[0].mxu0 %v5494
  %v5852 = vpop.f32.mrb[0].mxu0
  %v5853 = vadd.f32 0.0, %v5852
  %v5854 = vpop.f32.mrb[0].mxu0
  %v5855 = vpop.f32.mrb[0].mxu0
  %v5856 = vadd.f32 0.0, %v5855
  %v5857 = vpop.f32.mrb[0].mxu0
  %5858 = vmatprep.mubr.bf16.mxu0 0
  %5859 = vmatmul.mubr.bf16.gmra.mrb[0].mxu0 %v5502
  %v5860 = vpop.f32.mrb[0].mxu0
  %v5861 = vadd.f32 0.0, %v5860
  %v5862 = vpop.f32.mrb[0].mxu0
  %v5863 = vpop.f32.mrb[0].mxu0
  %v5864 = vadd.f32 0.0, %v5863
  %v5865 = vpop.f32.mrb[0].mxu0
  %5866 = vmatprep.mubr.bf16.mxu0 0
  %5867 = vmatmul.mubr.bf16.gmra.mrb[0].mxu0 %v5510
  %v5868 = vpop.f32.mrb[0].mxu0
  %v5869 = vadd.f32 0.0, %v5868
  %v5870 = vpop.f32.mrb[0].mxu0
  %v5871 = vpop.f32.mrb[0].mxu0
  %v5872 = vadd.f32 0.0, %v5871
  %v5873 = vpop.f32.mrb[0].mxu0
  %5874 = vmatprep.mubr.bf16.mxu0 0
  %5875 = vmatmul.mubr.bf16.gmra.mrb[0].mxu0 %v5513
  %v5876 = vpop.f32.mrb[0].mxu0
  %v5877 = vadd.f32 0.0, %v5876
  %v5878 = vpop.f32.mrb[0].mxu0
  %v5879 = vpop.f32.mrb[0].mxu0
  %v5880 = vpop.f32.mrb[0].mxu0
  %5881 = vdwg.mxu0
  %v5882 = vadd.f32 %v4958, %v5629
  %v5883 = vadd.f32 %v4959, %v5632
  %v5884 = vadd.f32 %v4960, %v5637
  %v5885 = vadd.f32 %v4961, %v5640
  %v5886 = vadd.f32 %v4962, %v5645
  %v5887 = vadd.f32 %v4963, %v5648
  %v5888 = vadd.f32 %v4964, %v5653
  %v5889 = vadd.f32 %v4965, %v5656
  %v5890 = vadd.f32 %v4966, %v5661
  %v5891 = vadd.f32 %v4967, %v5664
  %v5892 = vadd.f32 %v4968, %v5669
  %v5893 = vadd.f32 %v4969, %v5672
  %v5894 = vadd.f32 %v4970, %v5677
  %v5895 = vadd.f32 %v4971, %v5680
  %v5896 = vadd.f32 %v4972, %v5685
  %v5897 = vadd.f32 %v4973, %v5688
  %v5898 = vadd.f32 %v4974, %v5693
  %v5899 = vadd.f32 %v4975, %v5696
  %v5900 = vadd.f32 %v4976, %v5701
  %v5901 = vadd.f32 %v4977, %v5704
  %v5902 = vadd.f32 %v4978, %v5709
  %v5903 = vadd.f32 %v4979, %v5712
  %v5904 = vadd.f32 %v4980, %v5717
  %v5905 = vadd.f32 %v4981, %v5720
  %v5906 = vadd.f32 %v4982, %v5725
  %v5907 = vadd.f32 %v4983, %v5728
  %v5908 = vadd.f32 %v4984, %v5733
  %v5909 = vadd.f32 %v4985, %v5736
  %v5910 = vadd.f32 %v4986, %v5741
  %v5911 = vadd.f32 %v4987, %v5744
  %v5912 = vadd.f32 %v4988, %v5749
  %v5913 = vadd.f32 %v4989, %v5752
  %v5914 = vadd.f32 %v4990, %v5757
  %v5915 = vadd.f32 %v4991, %v5760
  %v5916 = vadd.f32 %v4992, %v5765
  %v5917 = vadd.f32 %v4993, %v5768
  %v5918 = vadd.f32 %v4994, %v5773
  %v5919 = vadd.f32 %v4995, %v5776
  %v5920 = vadd.f32 %v4996, %v5781
  %v5921 = vadd.f32 %v4997, %v5784
  %v5922 = vadd.f32 %v4998, %v5789
  %v5923 = vadd.f32 %v4999, %v5792
  %v5924 = vadd.f32 %v5000, %v5797
  %v5925 = vadd.f32 %v5001, %v5800
  %v5926 = vadd.f32 %v5002, %v5805
  %v5927 = vadd.f32 %v5003, %v5808
  %v5928 = vadd.f32 %v5004, %v5813
  %v5929 = vadd.f32 %v5005, %v5816
  %v5930 = vadd.f32 %v5006, %v5821
  %v5931 = vadd.f32 %v5007, %v5824
  %v5932 = vadd.f32 %v5008, %v5829
  %v5933 = vadd.f32 %v5009, %v5832
  %v5934 = vadd.f32 %v5010, %v5837
  %v5935 = vadd.f32 %v5011, %v5840
  %v5936 = vadd.f32 %v5012, %v5845
  %v5937 = vadd.f32 %v5013, %v5848
  %v5938 = vadd.f32 %v5014, %v5853
  %v5939 = vadd.f32 %v5015, %v5856
  %v5940 = vadd.f32 %v5016, %v5861
  %v5941 = vadd.f32 %v5017, %v5864
  %v5942 = vadd.f32 %v5018, %v5869
  %v5943 = vadd.f32 %v5019, %v5872
  %v5944 = vadd.f32 %v5020, %v5877
  %5945 = vst [vmem:[#allocation4] sm:$0xff] %v5882
  %5946 = vst [vmem:[#allocation4 + $0x8] sm:$0xff] %v5883
  %5947 = vst [vmem:[#allocation4 + $0x10] sm:$0xff] %v5884
  %5948 = vst [vmem:[#allocation4 + $0x18] sm:$0xff] %v5885
  %5949 = vst [vmem:[#allocation4 + $0x20] sm:$0xff] %v5886
  %5950 = vst [vmem:[#allocation4 + $0x28] sm:$0xff] %v5887
  %5951 = vst [vmem:[#allocation4 + $0x30] sm:$0xff] %v5888
  %5952 = vst [vmem:[#allocation4 + $0x38] sm:$0xff] %v5889
  %5953 = vst [vmem:[#allocation4 + $0x40] sm:$0xff] %v5890
  %5954 = vst [vmem:[#allocation4 + $0x48] sm:$0xff] %v5891
  %5955 = vst [vmem:[#allocation4 + $0x50] sm:$0xff] %v5892
  %5956 = vst [vmem:[#allocation4 + $0x58] sm:$0xff] %v5893
  %5957 = vst [vmem:[#allocation4 + $0x60] sm:$0xff] %v5894
  %5958 = vst [vmem:[#allocation4 + $0x68] sm:$0xff] %v5895
  %5959 = vst [vmem:[#allocation4 + $0x70] sm:$0xff] %v5896
  %5960 = vst [vmem:[#allocation4 + $0x78] sm:$0xff] %v5897
  %5961 = vst [vmem:[#allocation4 + $0x80] sm:$0xff] %v5898
  %5962 = vst [vmem:[#allocation4 + $0x88] sm:$0xff] %v5899
  %5963 = vst [vmem:[#allocation4 + $0x90] sm:$0xff] %v5900
  %5964 = vst [vmem:[#allocation4 + $0x98] sm:$0xff] %v5901
  %5965 = vst [vmem:[#allocation4 + $0xa0] sm:$0xff] %v5902
  %5966 = vst [vmem:[#allocation4 + $0xa8] sm:$0xff] %v5903
  %5967 = vst [vmem:[#allocation4 + $0xb0] sm:$0xff] %v5904
  %5968 = vst [vmem:[#allocation4 + $0xb8] sm:$0xff] %v5905
  %5969 = vst [vmem:[#allocation4 + $0xc0] sm:$0xff] %v5906
  %5970 = vst [vmem:[#allocation4 + $0xc8] sm:$0xff] %v5907
  %5971 = vst [vmem:[#allocation4 + $0xd0] sm:$0xff] %v5908
  %5972 = vst [vmem:[#allocation4 + $0xd8] sm:$0xff] %v5909
  %5973 = vst [vmem:[#allocation4 + $0xe0] sm:$0xff] %v5910
  %5974 = vst [vmem:[#allocation4 + $0xe8] sm:$0xff] %v5911
  %5975 = vst [vmem:[#allocation4 + $0xf0] sm:$0xff] %v5912
  %5976 = vst [vmem:[#allocation4 + $0xf8] sm:$0xff] %v5913
  %5977 = vst [vmem:[#allocation4 + $0x100] sm:$0xff] %v5914
  %5978 = vst [vmem:[#allocation4 + $0x108] sm:$0xff] %v5915
  %5979 = vst [vmem:[#allocation4 + $0x110] sm:$0xff] %v5916
  %5980 = vst [vmem:[#allocation4 + $0x118] sm:$0xff] %v5917
  %5981 = vst [vmem:[#allocation4 + $0x120] sm:$0xff] %v5918
  %5982 = vst [vmem:[#allocation4 + $0x128] sm:$0xff] %v5919
  %5983 = vst [vmem:[#allocation4 + $0x130] sm:$0xff] %v5920
  %5984 = vst [vmem:[#allocation4 + $0x138] sm:$0xff] %v5921
  %5985 = vst [vmem:[#allocation4 + $0x140] sm:$0xff] %v5922
  %5986 = vst [vmem:[#allocation4 + $0x148] sm:$0xff] %v5923
  %5987 = vst [vmem:[#allocation4 + $0x150] sm:$0xff] %v5924
  %5988 = vst [vmem:[#allocation4 + $0x158] sm:$0xff] %v5925
  %5989 = vst [vmem:[#allocation4 + $0x160] sm:$0xff] %v5926
  %5990 = vst [vmem:[#allocation4 + $0x168] sm:$0xff] %v5927
  %5991 = vst [vmem:[#allocation4 + $0x170] sm:$0xff] %v5928
  %5992 = vst [vmem:[#allocation4 + $0x178] sm:$0xff] %v5929
  %5993 = vst [vmem:[#allocation4 + $0x180] sm:$0xff] %v5930
  %5994 = vst [vmem:[#allocation4 + $0x188] sm:$0xff] %v5931
  %5995 = vst [vmem:[#allocation4 + $0x190] sm:$0xff] %v5932
  %5996 = vst [vmem:[#allocation4 + $0x198] sm:$0xff] %v5933
  %5997 = vst [vmem:[#allocation4 + $0x1a0] sm:$0xff] %v5934
  %5998 = vst [vmem:[#allocation4 + $0x1a8] sm:$0xff] %v5935
  %5999 = vst [vmem:[#allocation4 + $0x1b0] sm:$0xff] %v5936
  %6000 = vst [vmem:[#allocation4 + $0x1b8] sm:$0xff] %v5937
  %6001 = vst [vmem:[#allocation4 + $0x1c0] sm:$0xff] %v5938
  %6002 = vst [vmem:[#allocation4 + $0x1c8] sm:$0xff] %v5939
  %6003 = vst [vmem:[#allocation4 + $0x1d0] sm:$0xff] %v5940
  %6004 = vst [vmem:[#allocation4 + $0x1d8] sm:$0xff] %v5941
  %6005 = vst [vmem:[#allocation4 + $0x1e0] sm:$0xff] %v5942
  %6006 = vst [vmem:[#allocation4 + $0x1e8] sm:$0xff] %v5943
  %6007 = vst [vmem:[#allocation4 + $0x1f0] sm:$0x3f] %v5944
  %v6008 = vld [vmem:[#allocation4] sm:$0xff]
  %v6009 = vld [vmem:[#allocation4 + $0x8] sm:$0xff]
  %v6010 = vld [vmem:[#allocation4 + $0x10] sm:$0xff]
  %v6011 = vld [vmem:[#allocation4 + $0x18] sm:$0xff]
  %v6012 = vld [vmem:[#allocation4 + $0x20] sm:$0xff]
  %v6013 = vld [vmem:[#allocation4 + $0x28] sm:$0xff]
  %v6014 = vld [vmem:[#allocation4 + $0x30] sm:$0xff]
  %v6015 = vld [vmem:[#allocation4 + $0x38] sm:$0xff]
  %v6016 = vld [vmem:[#allocation4 + $0x40] sm:$0xff]
  %v6017 = vld [vmem:[#allocation4 + $0x48] sm:$0xff]
  %v6018 = vld [vmem:[#allocation4 + $0x50] sm:$0xff]
  %v6019 = vld [vmem:[#allocation4 + $0x58] sm:$0xff]
  %v6020 = vld [vmem:[#allocation4 + $0x60] sm:$0xff]
  %v6021 = vld [vmem:[#allocation4 + $0x68] sm:$0xff]
  %v6022 = vld [vmem:[#allocation4 + $0x70] sm:$0xff]
  %v6023 = vld [vmem:[#allocation4 + $0x78] sm:$0xff]
  %v6024 = vld [vmem:[#allocation4 + $0x80] sm:$0xff]
  %v6025 = vld [vmem:[#allocation4 + $0x88] sm:$0xff]
  %v6026 = vld [vmem:[#allocation4 + $0x90] sm:$0xff]
  %v6027 = vld [vmem:[#allocation4 + $0x98] sm:$0xff]
  %v6028 = vld [vmem:[#allocation4 + $0xa0] sm:$0xff]
  %v6029 = vld [vmem:[#allocation4 + $0xa8] sm:$0xff]
  %v6030 = vld [vmem:[#allocation4 + $0xb0] sm:$0xff]
  %v6031 = vld [vmem:[#allocation4 + $0xb8] sm:$0xff]
  %v6032 = vld [vmem:[#allocation4 + $0xc0] sm:$0xff]
  %v6033 = vld [vmem:[#allocation4 + $0xc8] sm:$0xff]
  %v6034 = vld [vmem:[#allocation4 + $0xd0] sm:$0xff]
  %v6035 = vld [vmem:[#allocation4 + $0xd8] sm:$0xff]
  %v6036 = vld [vmem:[#allocation4 + $0xe0] sm:$0xff]
  %v6037 = vld [vmem:[#allocation4 + $0xe8] sm:$0xff]
  %v6038 = vld [vmem:[#allocation4 + $0xf0] sm:$0xff]
  %v6039 = vld [vmem:[#allocation4 + $0xf8] sm:$0xff]
  %v6040 = vld [vmem:[#allocation4 + $0x100] sm:$0xff]
  %v6041 = vld [vmem:[#allocation4 + $0x108] sm:$0xff]
  %v6042 = vld [vmem:[#allocation4 + $0x110] sm:$0xff]
  %v6043 = vld [vmem:[#allocation4 + $0x118] sm:$0xff]
  %v6044 = vld [vmem:[#allocation4 + $0x120] sm:$0xff]
  %v6045 = vld [vmem:[#allocation4 + $0x128] sm:$0xff]
  %v6046 = vld [vmem:[#allocation4 + $0x130] sm:$0xff]
  %v6047 = vld [vmem:[#allocation4 + $0x138] sm:$0xff]
  %v6048 = vld [vmem:[#allocation4 + $0x140] sm:$0xff]
  %v6049 = vld [vmem:[#allocation4 + $0x148] sm:$0xff]
  %v6050 = vld [vmem:[#allocation4 + $0x150] sm:$0xff]
  %v6051 = vld [vmem:[#allocation4 + $0x158] sm:$0xff]
  %v6052 = vld [vmem:[#allocation4 + $0x160] sm:$0xff]
  %v6053 = vld [vmem:[#allocation4 + $0x168] sm:$0xff]
  %v6054 = vld [vmem:[#allocation4 + $0x170] sm:$0xff]
  %v6055 = vld [vmem:[#allocation4 + $0x178] sm:$0xff]
  %v6056 = vld [vmem:[#allocation4 + $0x180] sm:$0xff]
  %v6057 = vld [vmem:[#allocation4 + $0x188] sm:$0xff]
  %v6058 = vld [vmem:[#allocation4 + $0x190] sm:$0xff]
  %v6059 = vld [vmem:[#allocation4 + $0x198] sm:$0xff]
  %v6060 = vld [vmem:[#allocation4 + $0x1a0] sm:$0xff]
  %v6061 = vld [vmem:[#allocation4 + $0x1a8] sm:$0xff]
  %v6062 = vld [vmem:[#allocation4 + $0x1b0] sm:$0xff]
  %v6063 = vld [vmem:[#allocation4 + $0x1b8] sm:$0xff]
  %v6064 = vld [vmem:[#allocation4 + $0x1c0] sm:$0xff]
  %v6065 = vld [vmem:[#allocation4 + $0x1c8] sm:$0xff]
  %v6066 = vld [vmem:[#allocation4 + $0x1d0] sm:$0xff]
  %v6067 = vld [vmem:[#allocation4 + $0x1d8] sm:$0xff]
  %v6068 = vld [vmem:[#allocation4 + $0x1e0] sm:$0xff]
  %v6069 = vld [vmem:[#allocation4 + $0x1e8] sm:$0xff]
  %v6070 = vld [vmem:[#allocation4 + $0x1f0] sm:$0x3f]
  %v6071 = vld [vmem:[#allocation2] sm:$0xe]
  %v6072 = vld [vmem:[#allocation2 + $0x4] sm:$0xf]
  %v6073 = vld [vmem:[#allocation2 + $0x8] sm:$0xf]
  %v6074 = vld [vmem:[#allocation2 + $0xc] sm:$0xf]
  %v6075 = vld [vmem:[#allocation2 + $0x10] sm:$0xf]
  %v6076 = vld [vmem:[#allocation2 + $0x14] sm:$0xf]
  %v6077 = vld [vmem:[#allocation2 + $0x18] sm:$0xf]
  %v6078 = vld [vmem:[#allocation2 + $0x1c] sm:$0xf]
  %v6079 = vld [vmem:[#allocation2 + $0x20] sm:$0xf]
  %v6080 = vld [vmem:[#allocation2 + $0x24] sm:$0xf]
  %v6081 = vld [vmem:[#allocation2 + $0x28] sm:$0xf]
  %v6082 = vld [vmem:[#allocation2 + $0x2c] sm:$0xf]
  %v6083 = vld [vmem:[#allocation2 + $0x30] sm:$0xf]
  %v6084 = vld [vmem:[#allocation2 + $0x34] sm:$0xf]
  %v6085 = vld [vmem:[#allocation2 + $0x38] sm:$0xf]
  %v6086 = vld [vmem:[#allocation2 + $0x3c] sm:$0xf]
  %v6087 = vld [vmem:[#allocation2 + $0x40] sm:$0xf]
  %v6088 = vld [vmem:[#allocation2 + $0x44] sm:$0xf]
  %v6089 = vld [vmem:[#allocation2 + $0x48] sm:$0xf]
  %v6090 = vld [vmem:[#allocation2 + $0x4c] sm:$0xf]
  %v6091 = vld [vmem:[#allocation2 + $0x50] sm:$0xf]
  %v6092 = vld [vmem:[#allocation2 + $0x54] sm:$0xf]
  %v6093 = vld [vmem:[#allocation2 + $0x58] sm:$0xf]
  %v6094 = vld [vmem:[#allocation2 + $0x5c] sm:$0xf]
  %v6095 = vld [vmem:[#allocation2 + $0x60] sm:$0xf]
  %v6096 = vld [vmem:[#allocation2 + $0x64] sm:$0xf]
  %v6097 = vld [vmem:[#allocation2 + $0x68] sm:$0xf]
  %v6098 = vld [vmem:[#allocation2 + $0x6c] sm:$0xf]
  %v6099 = vld [vmem:[#allocation2 + $0x70] sm:$0xf]
  %v6100 = vld [vmem:[#allocation2 + $0x74] sm:$0xf]
  %v6101 = vld [vmem:[#allocation2 + $0x78] sm:$0xf]
  %v6102 = vld [vmem:[#allocation2 + $0x7c] sm:$0xf]
  %v6103 = vld [vmem:[#allocation2 + $0x80] sm:$0xf]
  %v6104 = vld [vmem:[#allocation2 + $0x84] sm:$0xf]
  %v6105 = vld [vmem:[#allocation2 + $0x88] sm:$0xf]
  %v6106 = vld [vmem:[#allocation2 + $0x8c] sm:$0xf]
  %v6107 = vld [vmem:[#allocation2 + $0x90] sm:$0xf]
  %v6108 = vld [vmem:[#allocation2 + $0x94] sm:$0xf]
  %v6109 = vld [vmem:[#allocation2 + $0x98] sm:$0xf]
  %v6110 = vld [vmem:[#allocation2 + $0x9c] sm:$0xf]
  %v6111 = vld [vmem:[#allocation2 + $0xa0] sm:$0xf]
  %v6112 = vld [vmem:[#allocation2 + $0xa4] sm:$0xf]
  %v6113 = vld [vmem:[#allocation2 + $0xa8] sm:$0xf]
  %v6114 = vld [vmem:[#allocation2 + $0xac] sm:$0xf]
  %v6115 = vld [vmem:[#allocation2 + $0xb0] sm:$0xf]
  %v6116 = vld [vmem:[#allocation2 + $0xb4] sm:$0xf]
  %v6117 = vld [vmem:[#allocation2 + $0xb8] sm:$0xf]
  %v6118 = vld [vmem:[#allocation2 + $0xbc] sm:$0xf]
  %v6119 = vld [vmem:[#allocation2 + $0xc0] sm:$0xf]
  %v6120 = vld [vmem:[#allocation2 + $0xc4] sm:$0xf]
  %v6121 = vld [vmem:[#allocation2 + $0xc8] sm:$0xf]
  %v6122 = vld [vmem:[#allocation2 + $0xcc] sm:$0xf]
  %v6123 = vld [vmem:[#allocation2 + $0xd0] sm:$0xf]
  %v6124 = vld [vmem:[#allocation2 + $0xd4] sm:$0xf]
  %v6125 = vld [vmem:[#allocation2 + $0xd8] sm:$0xf]
  %v6126 = vld [vmem:[#allocation2 + $0xdc] sm:$0xf]
  %v6127 = vld [vmem:[#allocation2 + $0xe0] sm:$0xf]
  %v6128 = vld [vmem:[#allocation2 + $0xe4] sm:$0xf]
  %v6129 = vld [vmem:[#allocation2 + $0xe8] sm:$0xf]
  %v6130 = vld [vmem:[#allocation2 + $0xec] sm:$0xf]
  %v6131 = vld [vmem:[#allocation2 + $0xf0] sm:$0xf]
  %v6132 = vld [vmem:[#allocation2 + $0xf4] sm:$0xf]
  %v6133 = vld [vmem:[#allocation2 + $0xf8] sm:$0xf]
  %s6134 = scalar_lea.vmem %s5, 128
  %v6135 = vld [vmem:[%s6134] sm:$0xf]
  %v6136 = vld [vmem:[%s6134 + $0x4] sm:$0xf]
  %v6137 = vld [vmem:[%s6134 + $0x8] sm:$0xf]
  %v6138 = vld [vmem:[%s6134 + $0xc] sm:$0xf]
  %v6139 = vld [vmem:[%s6134 + $0x10] sm:$0xf]
  %v6140 = vld [vmem:[%s6134 + $0x14] sm:$0xf]
  %v6141 = vld [vmem:[%s6134 + $0x18] sm:$0xf]
  %v6142 = vld [vmem:[%s6134 + $0x1c] sm:$0xf]
  %v6143 = vld [vmem:[%s6134 + $0x20] sm:$0xf]
  %v6144 = vld [vmem:[%s6134 + $0x24] sm:$0xf]
  %v6145 = vld [vmem:[%s6134 + $0x28] sm:$0xf]
  %v6146 = vld [vmem:[%s6134 + $0x2c] sm:$0xf]
  %v6147 = vld [vmem:[%s6134 + $0x30] sm:$0xf]
  %v6148 = vld [vmem:[%s6134 + $0x34] sm:$0xf]
  %v6149 = vld [vmem:[%s6134 + $0x38] sm:$0xf]
  %v6150 = vld [vmem:[%s6134 + $0x3c] sm:$0xf]
  %v6214 = vunpack.c.l.b16 %v6071
  %v6215 = vunpack.c.l.b16 %v6072
  %v6216 = vunpack.c.l.b16 %v6073
  %v6217 = vunpack.c.l.b16 %v6074
  %v6218 = vunpack.c.l.b16 %v6075
  %v6219 = vunpack.c.l.b16 %v6076
  %v6220 = vunpack.c.l.b16 %v6077
  %v6221 = vunpack.c.l.b16 %v6078
  %v6222 = vunpack.c.l.b16 %v6079
  %v6223 = vunpack.c.l.b16 %v6080
  %v6224 = vunpack.c.l.b16 %v6081
  %v6225 = vunpack.c.l.b16 %v6082
  %v6226 = vunpack.c.l.b16 %v6083
  %v6227 = vunpack.c.l.b16 %v6084
  %v6228 = vunpack.c.l.b16 %v6085
  %v6229 = vunpack.c.l.b16 %v6086
  %v6230 = vunpack.c.l.b16 %v6087
  %v6231 = vunpack.c.l.b16 %v6088
  %v6232 = vunpack.c.l.b16 %v6089
  %v6233 = vunpack.c.l.b16 %v6090
  %v6234 = vunpack.c.l.b16 %v6091
  %v6235 = vunpack.c.l.b16 %v6092
  %v6236 = vunpack.c.l.b16 %v6093
  %v6237 = vunpack.c.l.b16 %v6094
  %v6238 = vunpack.c.l.b16 %v6095
  %v6239 = vunpack.c.l.b16 %v6096
  %v6240 = vunpack.c.l.b16 %v6097
  %v6241 = vunpack.c.l.b16 %v6098
  %v6242 = vunpack.c.l.b16 %v6099
  %v6243 = vunpack.c.l.b16 %v6100
  %v6244 = vunpack.c.l.b16 %v6101
  %v6245 = vunpack.c.l.b16 %v6102
  %v6246 = vunpack.c.l.b16 %v6103
  %v6247 = vunpack.c.l.b16 %v6104
  %v6248 = vunpack.c.l.b16 %v6105
  %v6249 = vunpack.c.l.b16 %v6106
  %v6250 = vunpack.c.l.b16 %v6107
  %v6251 = vunpack.c.l.b16 %v6108
  %v6252 = vunpack.c.l.b16 %v6109
  %v6253 = vunpack.c.l.b16 %v6110
  %v6254 = vunpack.c.l.b16 %v6111
  %v6255 = vunpack.c.l.b16 %v6112
  %v6256 = vunpack.c.l.b16 %v6113
  %v6257 = vunpack.c.l.b16 %v6114
  %v6258 = vunpack.c.l.b16 %v6115
  %v6259 = vunpack.c.l.b16 %v6116
  %v6260 = vunpack.c.l.b16 %v6117
  %v6261 = vunpack.c.l.b16 %v6118
  %v6262 = vunpack.c.l.b16 %v6119
  %v6263 = vunpack.c.l.b16 %v6120
  %v6264 = vunpack.c.l.b16 %v6121
  %v6265 = vunpack.c.l.b16 %v6122
  %v6266 = vunpack.c.l.b16 %v6123
  %v6267 = vunpack.c.l.b16 %v6124
  %v6268 = vunpack.c.l.b16 %v6125
  %v6269 = vunpack.c.l.b16 %v6126
  %v6270 = vunpack.c.l.b16 %v6127
  %v6271 = vunpack.c.l.b16 %v6128
  %v6272 = vunpack.c.l.b16 %v6129
  %v6273 = vunpack.c.l.b16 %v6130
  %v6274 = vunpack.c.l.b16 %v6131
  %v6275 = vunpack.c.l.b16 %v6132
  %v6276 = vunpack.c.l.b16 %v6133
  %v6277 = vpack.c.b16 %v6215, %v6214
  %v6278 = vpack.c.b16 %v6217, %v6216
  %v6279 = vpack.c.b16 %v6219, %v6218
  %v6280 = vpack.c.b16 %v6221, %v6220
  %v6281 = vpack.c.b16 %v6223, %v6222
  %v6282 = vpack.c.b16 %v6225, %v6224
  %v6283 = vpack.c.b16 %v6227, %v6226
  %v6284 = vpack.c.b16 %v6229, %v6228
  %v6285 = vpack.c.b16 %v6231, %v6230
  %v6286 = vpack.c.b16 %v6233, %v6232
  %v6287 = vpack.c.b16 %v6235, %v6234
  %v6288 = vpack.c.b16 %v6237, %v6236
  %v6289 = vpack.c.b16 %v6239, %v6238
  %v6290 = vpack.c.b16 %v6241, %v6240
  %v6291 = vpack.c.b16 %v6243, %v6242
  %v6292 = vpack.c.b16 %v6245, %v6244
  %v6293 = vpack.c.b16 %v6247, %v6246
  %v6294 = vpack.c.b16 %v6249, %v6248
  %v6295 = vpack.c.b16 %v6251, %v6250
  %v6296 = vpack.c.b16 %v6253, %v6252
  %v6297 = vpack.c.b16 %v6255, %v6254
  %v6298 = vpack.c.b16 %v6257, %v6256
  %v6299 = vpack.c.b16 %v6259, %v6258
  %v6300 = vpack.c.b16 %v6261, %v6260
  %v6301 = vpack.c.b16 %v6263, %v6262
  %v6302 = vpack.c.b16 %v6265, %v6264
  %v6303 = vpack.c.b16 %v6267, %v6266
  %v6304 = vpack.c.b16 %v6269, %v6268
  %v6305 = vpack.c.b16 %v6271, %v6270
  %v6306 = vpack.c.b16 %v6273, %v6272
  %v6307 = vpack.c.b16 %v6275, %v6274
  %v6308 = vpack.c.b16 %v6276, %v6276
  %v6309 = vrot.slane %v6277, 1
  %v6310 = vrot.slane %v6278, 1
  %v6311 = vsel %vm2077, %v6309, %v6310
  %v6312 = vrot.slane %v6279, 1
  %v6313 = vsel %vm2077, %v6310, %v6312
  %v6314 = vrot.slane %v6280, 1
  %v6315 = vsel %vm2077, %v6312, %v6314
  %v6316 = vrot.slane %v6281, 1
  %v6317 = vsel %vm2077, %v6314, %v6316
  %v6318 = vrot.slane %v6282, 1
  %v6319 = vsel %vm2077, %v6316, %v6318
  %v6320 = vrot.slane %v6283, 1
  %v6321 = vsel %vm2077, %v6318, %v6320
  %v6322 = vrot.slane %v6284, 1
  %v6323 = vsel %vm2077, %v6320, %v6322
  %v6324 = vrot.slane %v6285, 1
  %v6325 = vsel %vm2077, %v6322, %v6324
  %v6326 = vrot.slane %v6286, 1
  %v6327 = vsel %vm2077, %v6324, %v6326
  %v6328 = vrot.slane %v6287, 1
  %v6329 = vsel %vm2077, %v6326, %v6328
  %v6330 = vrot.slane %v6288, 1
  %v6331 = vsel %vm2077, %v6328, %v6330
  %v6332 = vrot.slane %v6289, 1
  %v6333 = vsel %vm2077, %v6330, %v6332
  %v6334 = vrot.slane %v6290, 1
  %v6335 = vsel %vm2077, %v6332, %v6334
  %v6336 = vrot.slane %v6291, 1
  %v6337 = vsel %vm2077, %v6334, %v6336
  %v6338 = vrot.slane %v6292, 1
  %v6339 = vsel %vm2077, %v6336, %v6338
  %v6340 = vrot.slane %v6293, 1
  %v6341 = vsel %vm2077, %v6338, %v6340
  %v6342 = vrot.slane %v6294, 1
  %v6343 = vsel %vm2077, %v6340, %v6342
  %v6344 = vrot.slane %v6295, 1
  %v6345 = vsel %vm2077, %v6342, %v6344
  %v6346 = vrot.slane %v6296, 1
  %v6347 = vsel %vm2077, %v6344, %v6346
  %v6348 = vrot.slane %v6297, 1
  %v6349 = vsel %vm2077, %v6346, %v6348
  %v6350 = vrot.slane %v6298, 1
  %v6351 = vsel %vm2077, %v6348, %v6350
  %v6352 = vrot.slane %v6299, 1
  %v6353 = vsel %vm2077, %v6350, %v6352
  %v6354 = vrot.slane %v6300, 1
  %v6355 = vsel %vm2077, %v6352, %v6354
  %v6356 = vrot.slane %v6301, 1
  %v6357 = vsel %vm2077, %v6354, %v6356
  %v6358 = vrot.slane %v6302, 1
  %v6359 = vsel %vm2077, %v6356, %v6358
  %v6360 = vrot.slane %v6303, 1
  %v6361 = vsel %vm2077, %v6358, %v6360
  %v6362 = vrot.slane %v6304, 1
  %v6363 = vsel %vm2077, %v6360, %v6362
  %v6364 = vrot.slane %v6305, 1
  %v6365 = vsel %vm2077, %v6362, %v6364
  %v6366 = vrot.slane %v6306, 1
  %v6367 = vsel %vm2077, %v6364, %v6366
  %v6368 = vrot.slane %v6307, 1
  %v6369 = vsel %vm2077, %v6366, %v6368
  %v6370 = vrot.slane %v6308, 1
  %v6371 = vsel %vm2077, %v6368, %v6370
  %v6420 = vunpack.c.l.b16 %v6135
  %v6421 = vunpack.c.l.b16 %v6136
  %v6422 = vunpack.c.l.b16 %v6137
  %v6423 = vunpack.c.l.b16 %v6138
  %v6424 = vunpack.c.l.b16 %v6139
  %v6425 = vunpack.c.l.b16 %v6140
  %v6426 = vunpack.c.l.b16 %v6141
  %v6427 = vunpack.c.l.b16 %v6142
  %v6428 = vunpack.c.l.b16 %v6143
  %v6429 = vunpack.c.l.b16 %v6144
  %v6430 = vunpack.c.l.b16 %v6145
  %v6431 = vunpack.c.l.b16 %v6146
  %v6432 = vunpack.c.l.b16 %v6147
  %v6433 = vunpack.c.l.b16 %v6148
  %v6434 = vunpack.c.l.b16 %v6149
  %v6435 = vunpack.c.l.b16 %v6150
  %v6436 = vpack.c.b16 %v6421, %v6420
  %v6437 = vpack.c.b16 %v6423, %v6422
  %v6438 = vpack.c.b16 %v6425, %v6424
  %v6439 = vpack.c.b16 %v6427, %v6426
  %v6440 = vpack.c.b16 %v6429, %v6428
  %v6441 = vpack.c.b16 %v6431, %v6430
  %v6442 = vpack.c.b16 %v6433, %v6432
  %v6443 = vpack.c.b16 %v6435, %v6434
  %6452 = vmatprep.subr.bf16.mxu0 0
  %6453 = vmatpush1.bf16.msra.mxu0 %v6436
  %6454 = vmatprep.subr.bf16.mxu0 0
  %6455 = vmatpush1.bf16.msra.mxu0 %v6437
  %6456 = vmatprep.subr.bf16.mxu0 0
  %6457 = vmatpush1.bf16.msra.mxu0 %v6438
  %6458 = vmatprep.subr.bf16.mxu0 0
  %6459 = vmatpush1.bf16.msra.mxu0 %v6439
  %6460 = vmatprep.subr.bf16.mxu0 0
  %6461 = vmatpush1.bf16.msra.mxu0 %v6440
  %6462 = vmatprep.subr.bf16.mxu0 0
  %6463 = vmatpush1.bf16.msra.mxu0 %v6441
  %6464 = vmatprep.subr.bf16.mxu0 0
  %6465 = vmatpush1.bf16.msra.mxu0 %v6442
  %6466 = vmatprep.subr.bf16.mxu0 0
  %6467 = vmatpush1.bf16.msra.mxu0 %v6443
  %6468 = vmatprep.subr.bf16.mxu0 0
  %6469 = vmatpush1.bf16.msra.mxu0 0
  %6470 = vmatprep.subr.bf16.mxu0 0
  %6471 = vmatpush1.bf16.msra.mxu0 0
  %6472 = vmatprep.subr.bf16.mxu0 0
  %6473 = vmatpush1.bf16.msra.mxu0 0
  %6474 = vmatprep.subr.bf16.mxu0 0
  %6475 = vmatpush1.bf16.msra.mxu0 0
  %6476 = vmatprep.subr.bf16.mxu0 0
  %6477 = vmatpush1.bf16.msra.mxu0 0
  %6478 = vmatprep.subr.bf16.mxu0 0
  %6479 = vmatpush1.bf16.msra.mxu0 0
  %6480 = vmatprep.subr.bf16.mxu0 0
  %6481 = vmatpush1.bf16.msra.mxu0 0
  %6482 = vmatprep.subr.bf16.mxu0 0
  %6483 = vmatpush1.bf16.msra.mxu0 0
  %6484 = vmatprep.mubr.bf16.mxu0 0
  %6485 = vmatmul.mubr.bf16.gmra.mrb[0].mxu0 %v6311
  %v6486 = vpop.f32.mrb[0].mxu0
  %v6487 = vadd.f32 0.0, %v6486
  %v6488 = vpop.f32.mrb[0].mxu0
  %v6489 = vpop.f32.mrb[0].mxu0
  %v6490 = vadd.f32 0.0, %v6489
  %v6491 = vpop.f32.mrb[0].mxu0
  %6492 = vmatprep.mubr.bf16.mxu0 0
  %6493 = vmatmul.mubr.bf16.gmra.mrb[0].mxu0 %v6313
  %v6494 = vpop.f32.mrb[0].mxu0
  %v6495 = vadd.f32 0.0, %v6494
  %v6496 = vpop.f32.mrb[0].mxu0
  %v6497 = vpop.f32.mrb[0].mxu0
  %v6498 = vadd.f32 0.0, %v6497
  %v6499 = vpop.f32.mrb[0].mxu0
  %6500 = vmatprep.mubr.bf16.mxu0 0
  %6501 = vmatmul.mubr.bf16.gmra.mrb[0].mxu0 %v6315
  %v6502 = vpop.f32.mrb[0].mxu0
  %v6503 = vadd.f32 0.0, %v6502
  %v6504 = vpop.f32.mrb[0].mxu0
  %v6505 = vpop.f32.mrb[0].mxu0
  %v6506 = vadd.f32 0.0, %v6505
  %v6507 = vpop.f32.mrb[0].mxu0
  %6508 = vmatprep.mubr.bf16.mxu0 0
  %6509 = vmatmul.mubr.bf16.gmra.mrb[0].mxu0 %v6317
  %v6510 = vpop.f32.mrb[0].mxu0
  %v6511 = vadd.f32 0.0, %v6510
  %v6512 = vpop.f32.mrb[0].mxu0
  %v6513 = vpop.f32.mrb[0].mxu0
  %v6514 = vadd.f32 0.0, %v6513
  %v6515 = vpop.f32.mrb[0].mxu0
  %6516 = vmatprep.mubr.bf16.mxu0 0
  %6517 = vmatmul.mubr.bf16.gmra.mrb[0].mxu0 %v6319
  %v6518 = vpop.f32.mrb[0].mxu0
  %v6519 = vadd.f32 0.0, %v6518
  %v6520 = vpop.f32.mrb[0].mxu0
  %v6521 = vpop.f32.mrb[0].mxu0
  %v6522 = vadd.f32 0.0, %v6521
  %v6523 = vpop.f32.mrb[0].mxu0
  %6524 = vmatprep.mubr.bf16.mxu0 0
  %6525 = vmatmul.mubr.bf16.gmra.mrb[0].mxu0 %v6321
  %v6526 = vpop.f32.mrb[0].mxu0
  %v6527 = vadd.f32 0.0, %v6526
  %v6528 = vpop.f32.mrb[0].mxu0
  %v6529 = vpop.f32.mrb[0].mxu0
  %v6530 = vadd.f32 0.0, %v6529
  %v6531 = vpop.f32.mrb[0].mxu0
  %6532 = vmatprep.mubr.bf16.mxu0 0
  %6533 = vmatmul.mubr.bf16.gmra.mrb[0].mxu0 %v6323
  %v6534 = vpop.f32.mrb[0].mxu0
  %v6535 = vadd.f32 0.0, %v6534
  %v6536 = vpop.f32.mrb[0].mxu0
  %v6537 = vpop.f32.mrb[0].mxu0
  %v6538 = vadd.f32 0.0, %v6537
  %v6539 = vpop.f32.mrb[0].mxu0
  %6540 = vmatprep.mubr.bf16.mxu0 0
  %6541 = vmatmul.mubr.bf16.gmra.mrb[0].mxu0 %v6325
  %v6542 = vpop.f32.mrb[0].mxu0
  %v6543 = vadd.f32 0.0, %v6542
  %v6544 = vpop.f32.mrb[0].mxu0
  %v6545 = vpop.f32.mrb[0].mxu0
  %v6546 = vadd.f32 0.0, %v6545
  %v6547 = vpop.f32.mrb[0].mxu0
  %6548 = vmatprep.mubr.bf16.mxu0 0
  %6549 = vmatmul.mubr.bf16.gmra.mrb[0].mxu0 %v6327
  %v6550 = vpop.f32.mrb[0].mxu0
  %v6551 = vadd.f32 0.0, %v6550
  %v6552 = vpop.f32.mrb[0].mxu0
  %v6553 = vpop.f32.mrb[0].mxu0
  %v6554 = vadd.f32 0.0, %v6553
  %v6555 = vpop.f32.mrb[0].mxu0
  %6556 = vmatprep.mubr.bf16.mxu0 0
  %6557 = vmatmul.mubr.bf16.gmra.mrb[0].mxu0 %v6329
  %v6558 = vpop.f32.mrb[0].mxu0
  %v6559 = vadd.f32 0.0, %v6558
  %v6560 = vpop.f32.mrb[0].mxu0
  %v6561 = vpop.f32.mrb[0].mxu0
  %v6562 = vadd.f32 0.0, %v6561
  %v6563 = vpop.f32.mrb[0].mxu0
  %6564 = vmatprep.mubr.bf16.mxu0 0
  %6565 = vmatmul.mubr.bf16.gmra.mrb[0].mxu0 %v6331
  %v6566 = vpop.f32.mrb[0].mxu0
  %v6567 = vadd.f32 0.0, %v6566
  %v6568 = vpop.f32.mrb[0].mxu0
  %v6569 = vpop.f32.mrb[0].mxu0
  %v6570 = vadd.f32 0.0, %v6569
  %v6571 = vpop.f32.mrb[0].mxu0
  %6572 = vmatprep.mubr.bf16.mxu0 0
  %6573 = vmatmul.mubr.bf16.gmra.mrb[0].mxu0 %v6333
  %v6574 = vpop.f32.mrb[0].mxu0
  %v6575 = vadd.f32 0.0, %v6574
  %v6576 = vpop.f32.mrb[0].mxu0
  %v6577 = vpop.f32.mrb[0].mxu0
  %v6578 = vadd.f32 0.0, %v6577
  %v6579 = vpop.f32.mrb[0].mxu0
  %6580 = vmatprep.mubr.bf16.mxu0 0
  %6581 = vmatmul.mubr.bf16.gmra.mrb[0].mxu0 %v6335
  %v6582 = vpop.f32.mrb[0].mxu0
  %v6583 = vadd.f32 0.0, %v6582
  %v6584 = vpop.f32.mrb[0].mxu0
  %v6585 = vpop.f32.mrb[0].mxu0
  %v6586 = vadd.f32 0.0, %v6585
  %v6587 = vpop.f32.mrb[0].mxu0
  %6588 = vmatprep.mubr.bf16.mxu0 0
  %6589 = vmatmul.mubr.bf16.gmra.mrb[0].mxu0 %v6337
  %v6590 = vpop.f32.mrb[0].mxu0
  %v6591 = vadd.f32 0.0, %v6590
  %v6592 = vpop.f32.mrb[0].mxu0
  %v6593 = vpop.f32.mrb[0].mxu0
  %v6594 = vadd.f32 0.0, %v6593
  %v6595 = vpop.f32.mrb[0].mxu0
  %6596 = vmatprep.mubr.bf16.mxu0 0
  %6597 = vmatmul.mubr.bf16.gmra.mrb[0].mxu0 %v6339
  %v6598 = vpop.f32.mrb[0].mxu0
  %v6599 = vadd.f32 0.0, %v6598
  %v6600 = vpop.f32.mrb[0].mxu0
  %v6601 = vpop.f32.mrb[0].mxu0
  %v6602 = vadd.f32 0.0, %v6601
  %v6603 = vpop.f32.mrb[0].mxu0
  %6604 = vmatprep.mubr.bf16.mxu0 0
  %6605 = vmatmul.mubr.bf16.gmra.mrb[0].mxu0 %v6341
  %v6606 = vpop.f32.mrb[0].mxu0
  %v6607 = vadd.f32 0.0, %v6606
  %v6608 = vpop.f32.mrb[0].mxu0
  %v6609 = vpop.f32.mrb[0].mxu0
  %v6610 = vadd.f32 0.0, %v6609
  %v6611 = vpop.f32.mrb[0].mxu0
  %6612 = vmatprep.mubr.bf16.mxu0 0
  %6613 = vmatmul.mubr.bf16.gmra.mrb[0].mxu0 %v6343
  %v6614 = vpop.f32.mrb[0].mxu0
  %v6615 = vadd.f32 0.0, %v6614
  %v6616 = vpop.f32.mrb[0].mxu0
  %v6617 = vpop.f32.mrb[0].mxu0
  %v6618 = vadd.f32 0.0, %v6617
  %v6619 = vpop.f32.mrb[0].mxu0
  %6620 = vmatprep.mubr.bf16.mxu0 0
  %6621 = vmatmul.mubr.bf16.gmra.mrb[0].mxu0 %v6345
  %v6622 = vpop.f32.mrb[0].mxu0
  %v6623 = vadd.f32 0.0, %v6622
  %v6624 = vpop.f32.mrb[0].mxu0
  %v6625 = vpop.f32.mrb[0].mxu0
  %v6626 = vadd.f32 0.0, %v6625
  %v6627 = vpop.f32.mrb[0].mxu0
  %6628 = vmatprep.mubr.bf16.mxu0 0
  %6629 = vmatmul.mubr.bf16.gmra.mrb[0].mxu0 %v6347
  %v6630 = vpop.f32.mrb[0].mxu0
  %v6631 = vadd.f32 0.0, %v6630
  %v6632 = vpop.f32.mrb[0].mxu0
  %v6633 = vpop.f32.mrb[0].mxu0
  %v6634 = vadd.f32 0.0, %v6633
  %v6635 = vpop.f32.mrb[0].mxu0
  %6636 = vmatprep.mubr.bf16.mxu0 0
  %6637 = vmatmul.mubr.bf16.gmra.mrb[0].mxu0 %v6349
  %v6638 = vpop.f32.mrb[0].mxu0
  %v6639 = vadd.f32 0.0, %v6638
  %v6640 = vpop.f32.mrb[0].mxu0
  %v6641 = vpop.f32.mrb[0].mxu0
  %v6642 = vadd.f32 0.0, %v6641
  %v6643 = vpop.f32.mrb[0].mxu0
  %6644 = vmatprep.mubr.bf16.mxu0 0
  %6645 = vmatmul.mubr.bf16.gmra.mrb[0].mxu0 %v6351
  %v6646 = vpop.f32.mrb[0].mxu0
  %v6647 = vadd.f32 0.0, %v6646
  %v6648 = vpop.f32.mrb[0].mxu0
  %v6649 = vpop.f32.mrb[0].mxu0
  %v6650 = vadd.f32 0.0, %v6649
  %v6651 = vpop.f32.mrb[0].mxu0
  %6652 = vmatprep.mubr.bf16.mxu0 0
  %6653 = vmatmul.mubr.bf16.gmra.mrb[0].mxu0 %v6353
  %v6654 = vpop.f32.mrb[0].mxu0
  %v6655 = vadd.f32 0.0, %v6654
  %v6656 = vpop.f32.mrb[0].mxu0
  %v6657 = vpop.f32.mrb[0].mxu0
  %v6658 = vadd.f32 0.0, %v6657
  %v6659 = vpop.f32.mrb[0].mxu0
  %6660 = vmatprep.mubr.bf16.mxu0 0
  %6661 = vmatmul.mubr.bf16.gmra.mrb[0].mxu0 %v6355
  %v6662 = vpop.f32.mrb[0].mxu0
  %v6663 = vadd.f32 0.0, %v6662
  %v6664 = vpop.f32.mrb[0].mxu0
  %v6665 = vpop.f32.mrb[0].mxu0
  %v6666 = vadd.f32 0.0, %v6665
  %v6667 = vpop.f32.mrb[0].mxu0
  %6668 = vmatprep.mubr.bf16.mxu0 0
  %6669 = vmatmul.mubr.bf16.gmra.mrb[0].mxu0 %v6357
  %v6670 = vpop.f32.mrb[0].mxu0
  %v6671 = vadd.f32 0.0, %v6670
  %v6672 = vpop.f32.mrb[0].mxu0
  %v6673 = vpop.f32.mrb[0].mxu0
  %v6674 = vadd.f32 0.0, %v6673
  %v6675 = vpop.f32.mrb[0].mxu0
  %6676 = vmatprep.mubr.bf16.mxu0 0
  %6677 = vmatmul.mubr.bf16.gmra.mrb[0].mxu0 %v6359
  %v6678 = vpop.f32.mrb[0].mxu0
  %v6679 = vadd.f32 0.0, %v6678
  %v6680 = vpop.f32.mrb[0].mxu0
  %v6681 = vpop.f32.mrb[0].mxu0
  %v6682 = vadd.f32 0.0, %v6681
  %v6683 = vpop.f32.mrb[0].mxu0
  %6684 = vmatprep.mubr.bf16.mxu0 0
  %6685 = vmatmul.mubr.bf16.gmra.mrb[0].mxu0 %v6361
  %v6686 = vpop.f32.mrb[0].mxu0
  %v6687 = vadd.f32 0.0, %v6686
  %v6688 = vpop.f32.mrb[0].mxu0
  %v6689 = vpop.f32.mrb[0].mxu0
  %v6690 = vadd.f32 0.0, %v6689
  %v6691 = vpop.f32.mrb[0].mxu0
  %6692 = vmatprep.mubr.bf16.mxu0 0
  %6693 = vmatmul.mubr.bf16.gmra.mrb[0].mxu0 %v6363
  %v6694 = vpop.f32.mrb[0].mxu0
  %v6695 = vadd.f32 0.0, %v6694
  %v6696 = vpop.f32.mrb[0].mxu0
  %v6697 = vpop.f32.mrb[0].mxu0
  %v6698 = vadd.f32 0.0, %v6697
  %v6699 = vpop.f32.mrb[0].mxu0
  %6700 = vmatprep.mubr.bf16.mxu0 0
  %6701 = vmatmul.mubr.bf16.gmra.mrb[0].mxu0 %v6365
  %v6702 = vpop.f32.mrb[0].mxu0
  %v6703 = vadd.f32 0.0, %v6702
  %v6704 = vpop.f32.mrb[0].mxu0
  %v6705 = vpop.f32.mrb[0].mxu0
  %v6706 = vadd.f32 0.0, %v6705
  %v6707 = vpop.f32.mrb[0].mxu0
  %6708 = vmatprep.mubr.bf16.mxu0 0
  %6709 = vmatmul.mubr.bf16.gmra.mrb[0].mxu0 %v6367
  %v6710 = vpop.f32.mrb[0].mxu0
  %v6711 = vadd.f32 0.0, %v6710
  %v6712 = vpop.f32.mrb[0].mxu0
  %v6713 = vpop.f32.mrb[0].mxu0
  %v6714 = vadd.f32 0.0, %v6713
  %v6715 = vpop.f32.mrb[0].mxu0
  %6716 = vmatprep.mubr.bf16.mxu0 0
  %6717 = vmatmul.mubr.bf16.gmra.mrb[0].mxu0 %v6369
  %v6718 = vpop.f32.mrb[0].mxu0
  %v6719 = vadd.f32 0.0, %v6718
  %v6720 = vpop.f32.mrb[0].mxu0
  %v6721 = vpop.f32.mrb[0].mxu0
  %v6722 = vadd.f32 0.0, %v6721
  %v6723 = vpop.f32.mrb[0].mxu0
  %6724 = vmatprep.mubr.bf16.mxu0 0
  %6725 = vmatmul.mubr.bf16.gmra.mrb[0].mxu0 %v6371
  %v6726 = vpop.f32.mrb[0].mxu0
  %v6727 = vadd.f32 0.0, %v6726
  %v6728 = vpop.f32.mrb[0].mxu0
  %v6729 = vpop.f32.mrb[0].mxu0
  %v6730 = vadd.f32 0.0, %v6729
  %v6731 = vpop.f32.mrb[0].mxu0
  %6732 = vmatprep.mubr.bf16.mxu0 0
  %6733 = vmatmul.mubr.bf16.gmra.mrb[0].mxu0 %v6370
  %v6734 = vpop.f32.mrb[0].mxu0
  %v6735 = vadd.f32 0.0, %v6734
  %v6736 = vpop.f32.mrb[0].mxu0
  %v6737 = vpop.f32.mrb[0].mxu0
  %v6738 = vpop.f32.mrb[0].mxu0
  %6739 = vdwg.mxu0
  %v6740 = vadd.f32 %v6008, %v6487
  %v6741 = vadd.f32 %v6009, %v6490
  %v6742 = vadd.f32 %v6010, %v6495
  %v6743 = vadd.f32 %v6011, %v6498
  %v6744 = vadd.f32 %v6012, %v6503
  %v6745 = vadd.f32 %v6013, %v6506
  %v6746 = vadd.f32 %v6014, %v6511
  %v6747 = vadd.f32 %v6015, %v6514
  %v6748 = vadd.f32 %v6016, %v6519
  %v6749 = vadd.f32 %v6017, %v6522
  %v6750 = vadd.f32 %v6018, %v6527
  %v6751 = vadd.f32 %v6019, %v6530
  %v6752 = vadd.f32 %v6020, %v6535
  %v6753 = vadd.f32 %v6021, %v6538
  %v6754 = vadd.f32 %v6022, %v6543
  %v6755 = vadd.f32 %v6023, %v6546
  %v6756 = vadd.f32 %v6024, %v6551
  %v6757 = vadd.f32 %v6025, %v6554
  %v6758 = vadd.f32 %v6026, %v6559
  %v6759 = vadd.f32 %v6027, %v6562
  %v6760 = vadd.f32 %v6028, %v6567
  %v6761 = vadd.f32 %v6029, %v6570
  %v6762 = vadd.f32 %v6030, %v6575
  %v6763 = vadd.f32 %v6031, %v6578
  %v6764 = vadd.f32 %v6032, %v6583
  %v6765 = vadd.f32 %v6033, %v6586
  %v6766 = vadd.f32 %v6034, %v6591
  %v6767 = vadd.f32 %v6035, %v6594
  %v6768 = vadd.f32 %v6036, %v6599
  %v6769 = vadd.f32 %v6037, %v6602
  %v6770 = vadd.f32 %v6038, %v6607
  %v6771 = vadd.f32 %v6039, %v6610
  %v6772 = vadd.f32 %v6040, %v6615
  %v6773 = vadd.f32 %v6041, %v6618
  %v6774 = vadd.f32 %v6042, %v6623
  %v6775 = vadd.f32 %v6043, %v6626
  %v6776 = vadd.f32 %v6044, %v6631
  %v6777 = vadd.f32 %v6045, %v6634
  %v6778 = vadd.f32 %v6046, %v6639
  %v6779 = vadd.f32 %v6047, %v6642
  %v6780 = vadd.f32 %v6048, %v6647
  %v6781 = vadd.f32 %v6049, %v6650
  %v6782 = vadd.f32 %v6050, %v6655
  %v6783 = vadd.f32 %v6051, %v6658
  %v6784 = vadd.f32 %v6052, %v6663
  %v6785 = vadd.f32 %v6053, %v6666
  %v6786 = vadd.f32 %v6054, %v6671
  %v6787 = vadd.f32 %v6055, %v6674
  %v6788 = vadd.f32 %v6056, %v6679
  %v6789 = vadd.f32 %v6057, %v6682
  %v6790 = vadd.f32 %v6058, %v6687
  %v6791 = vadd.f32 %v6059, %v6690
  %v6792 = vadd.f32 %v6060, %v6695
  %v6793 = vadd.f32 %v6061, %v6698
  %v6794 = vadd.f32 %v6062, %v6703
  %v6795 = vadd.f32 %v6063, %v6706
  %v6796 = vadd.f32 %v6064, %v6711
  %v6797 = vadd.f32 %v6065, %v6714
  %v6798 = vadd.f32 %v6066, %v6719
  %v6799 = vadd.f32 %v6067, %v6722
  %v6800 = vadd.f32 %v6068, %v6727
  %v6801 = vadd.f32 %v6069, %v6730
  %v6802 = vadd.f32 %v6070, %v6735
  %6803 = vst [vmem:[#allocation4] sm:$0xff] %v6740
  %6804 = vst [vmem:[#allocation4 + $0x8] sm:$0xff] %v6741
  %6805 = vst [vmem:[#allocation4 + $0x10] sm:$0xff] %v6742
  %6806 = vst [vmem:[#allocation4 + $0x18] sm:$0xff] %v6743
  %6807 = vst [vmem:[#allocation4 + $0x20] sm:$0xff] %v6744
  %6808 = vst [vmem:[#allocation4 + $0x28] sm:$0xff] %v6745
  %6809 = vst [vmem:[#allocation4 + $0x30] sm:$0xff] %v6746
  %6810 = vst [vmem:[#allocation4 + $0x38] sm:$0xff] %v6747
  %6811 = vst [vmem:[#allocation4 + $0x40] sm:$0xff] %v6748
  %6812 = vst [vmem:[#allocation4 + $0x48] sm:$0xff] %v6749
  %6813 = vst [vmem:[#allocation4 + $0x50] sm:$0xff] %v6750
  %6814 = vst [vmem:[#allocation4 + $0x58] sm:$0xff] %v6751
  %6815 = vst [vmem:[#allocation4 + $0x60] sm:$0xff] %v6752
  %6816 = vst [vmem:[#allocation4 + $0x68] sm:$0xff] %v6753
  %6817 = vst [vmem:[#allocation4 + $0x70] sm:$0xff] %v6754
  %6818 = vst [vmem:[#allocation4 + $0x78] sm:$0xff] %v6755
  %6819 = vst [vmem:[#allocation4 + $0x80] sm:$0xff] %v6756
  %6820 = vst [vmem:[#allocation4 + $0x88] sm:$0xff] %v6757
  %6821 = vst [vmem:[#allocation4 + $0x90] sm:$0xff] %v6758
  %6822 = vst [vmem:[#allocation4 + $0x98] sm:$0xff] %v6759
  %6823 = vst [vmem:[#allocation4 + $0xa0] sm:$0xff] %v6760
  %6824 = vst [vmem:[#allocation4 + $0xa8] sm:$0xff] %v6761
  %6825 = vst [vmem:[#allocation4 + $0xb0] sm:$0xff] %v6762
  %6826 = vst [vmem:[#allocation4 + $0xb8] sm:$0xff] %v6763
  %6827 = vst [vmem:[#allocation4 + $0xc0] sm:$0xff] %v6764
  %6828 = vst [vmem:[#allocation4 + $0xc8] sm:$0xff] %v6765
  %6829 = vst [vmem:[#allocation4 + $0xd0] sm:$0xff] %v6766
  %6830 = vst [vmem:[#allocation4 + $0xd8] sm:$0xff] %v6767
  %6831 = vst [vmem:[#allocation4 + $0xe0] sm:$0xff] %v6768
  %6832 = vst [vmem:[#allocation4 + $0xe8] sm:$0xff] %v6769
  %6833 = vst [vmem:[#allocation4 + $0xf0] sm:$0xff] %v6770
  %6834 = vst [vmem:[#allocation4 + $0xf8] sm:$0xff] %v6771
  %6835 = vst [vmem:[#allocation4 + $0x100] sm:$0xff] %v6772
  %6836 = vst [vmem:[#allocation4 + $0x108] sm:$0xff] %v6773
  %6837 = vst [vmem:[#allocation4 + $0x110] sm:$0xff] %v6774
  %6838 = vst [vmem:[#allocation4 + $0x118] sm:$0xff] %v6775
  %6839 = vst [vmem:[#allocation4 + $0x120] sm:$0xff] %v6776
  %6840 = vst [vmem:[#allocation4 + $0x128] sm:$0xff] %v6777
  %6841 = vst [vmem:[#allocation4 + $0x130] sm:$0xff] %v6778
  %6842 = vst [vmem:[#allocation4 + $0x138] sm:$0xff] %v6779
  %6843 = vst [vmem:[#allocation4 + $0x140] sm:$0xff] %v6780
  %6844 = vst [vmem:[#allocation4 + $0x148] sm:$0xff] %v6781
  %6845 = vst [vmem:[#allocation4 + $0x150] sm:$0xff] %v6782
  %6846 = vst [vmem:[#allocation4 + $0x158] sm:$0xff] %v6783
  %6847 = vst [vmem:[#allocation4 + $0x160] sm:$0xff] %v6784
  %6848 = vst [vmem:[#allocation4 + $0x168] sm:$0xff] %v6785
  %6849 = vst [vmem:[#allocation4 + $0x170] sm:$0xff] %v6786
  %6850 = vst [vmem:[#allocation4 + $0x178] sm:$0xff] %v6787
  %6851 = vst [vmem:[#allocation4 + $0x180] sm:$0xff] %v6788
  %6852 = vst [vmem:[#allocation4 + $0x188] sm:$0xff] %v6789
  %6853 = vst [vmem:[#allocation4 + $0x190] sm:$0xff] %v6790
  %6854 = vst [vmem:[#allocation4 + $0x198] sm:$0xff] %v6791
  %6855 = vst [vmem:[#allocation4 + $0x1a0] sm:$0xff] %v6792
  %6856 = vst [vmem:[#allocation4 + $0x1a8] sm:$0xff] %v6793
  %6857 = vst [vmem:[#allocation4 + $0x1b0] sm:$0xff] %v6794
  %6858 = vst [vmem:[#allocation4 + $0x1b8] sm:$0xff] %v6795
  %6859 = vst [vmem:[#allocation4 + $0x1c0] sm:$0xff] %v6796
  %6860 = vst [vmem:[#allocation4 + $0x1c8] sm:$0xff] %v6797
  %6861 = vst [vmem:[#allocation4 + $0x1d0] sm:$0xff] %v6798
  %6862 = vst [vmem:[#allocation4 + $0x1d8] sm:$0xff] %v6799
  %6863 = vst [vmem:[#allocation4 + $0x1e0] sm:$0xff] %v6800
  %6864 = vst [vmem:[#allocation4 + $0x1e8] sm:$0xff] %v6801
  %6865 = vst [vmem:[#allocation4 + $0x1f0] sm:$0x3f] %v6802
  %v6866 = vld [vmem:[#allocation4] sm:$0xff]
  %v6867 = vld [vmem:[#allocation4 + $0x8] sm:$0xff]
  %v6868 = vld [vmem:[#allocation4 + $0x10] sm:$0xff]
  %v6869 = vld [vmem:[#allocation4 + $0x18] sm:$0xff]
  %v6870 = vld [vmem:[#allocation4 + $0x20] sm:$0xff]
  %v6871 = vld [vmem:[#allocation4 + $0x28] sm:$0xff]
  %v6872 = vld [vmem:[#allocation4 + $0x30] sm:$0xff]
  %v6873 = vld [vmem:[#allocation4 + $0x38] sm:$0xff]
  %v6874 = vld [vmem:[#allocation4 + $0x40] sm:$0xff]
  %v6875 = vld [vmem:[#allocation4 + $0x48] sm:$0xff]
  %v6876 = vld [vmem:[#allocation4 + $0x50] sm:$0xff]
  %v6877 = vld [vmem:[#allocation4 + $0x58] sm:$0xff]
  %v6878 = vld [vmem:[#allocation4 + $0x60] sm:$0xff]
  %v6879 = vld [vmem:[#allocation4 + $0x68] sm:$0xff]
  %v6880 = vld [vmem:[#allocation4 + $0x70] sm:$0xff]
  %v6881 = vld [vmem:[#allocation4 + $0x78] sm:$0xff]
  %v6882 = vld [vmem:[#allocation4 + $0x80] sm:$0xff]
  %v6883 = vld [vmem:[#allocation4 + $0x88] sm:$0xff]
  %v6884 = vld [vmem:[#allocation4 + $0x90] sm:$0xff]
  %v6885 = vld [vmem:[#allocation4 + $0x98] sm:$0xff]
  %v6886 = vld [vmem:[#allocation4 + $0xa0] sm:$0xff]
  %v6887 = vld [vmem:[#allocation4 + $0xa8] sm:$0xff]
  %v6888 = vld [vmem:[#allocation4 + $0xb0] sm:$0xff]
  %v6889 = vld [vmem:[#allocation4 + $0xb8] sm:$0xff]
  %v6890 = vld [vmem:[#allocation4 + $0xc0] sm:$0xff]
  %v6891 = vld [vmem:[#allocation4 + $0xc8] sm:$0xff]
  %v6892 = vld [vmem:[#allocation4 + $0xd0] sm:$0xff]
  %v6893 = vld [vmem:[#allocation4 + $0xd8] sm:$0xff]
  %v6894 = vld [vmem:[#allocation4 + $0xe0] sm:$0xff]
  %v6895 = vld [vmem:[#allocation4 + $0xe8] sm:$0xff]
  %v6896 = vld [vmem:[#allocation4 + $0xf0] sm:$0xff]
  %v6897 = vld [vmem:[#allocation4 + $0xf8] sm:$0xff]
  %v6898 = vld [vmem:[#allocation4 + $0x100] sm:$0xff]
  %v6899 = vld [vmem:[#allocation4 + $0x108] sm:$0xff]
  %v6900 = vld [vmem:[#allocation4 + $0x110] sm:$0xff]
  %v6901 = vld [vmem:[#allocation4 + $0x118] sm:$0xff]
  %v6902 = vld [vmem:[#allocation4 + $0x120] sm:$0xff]
  %v6903 = vld [vmem:[#allocation4 + $0x128] sm:$0xff]
  %v6904 = vld [vmem:[#allocation4 + $0x130] sm:$0xff]
  %v6905 = vld [vmem:[#allocation4 + $0x138] sm:$0xff]
  %v6906 = vld [vmem:[#allocation4 + $0x140] sm:$0xff]
  %v6907 = vld [vmem:[#allocation4 + $0x148] sm:$0xff]
  %v6908 = vld [vmem:[#allocation4 + $0x150] sm:$0xff]
  %v6909 = vld [vmem:[#allocation4 + $0x158] sm:$0xff]
  %v6910 = vld [vmem:[#allocation4 + $0x160] sm:$0xff]
  %v6911 = vld [vmem:[#allocation4 + $0x168] sm:$0xff]
  %v6912 = vld [vmem:[#allocation4 + $0x170] sm:$0xff]
  %v6913 = vld [vmem:[#allocation4 + $0x178] sm:$0xff]
  %v6914 = vld [vmem:[#allocation4 + $0x180] sm:$0xff]
  %v6915 = vld [vmem:[#allocation4 + $0x188] sm:$0xff]
  %v6916 = vld [vmem:[#allocation4 + $0x190] sm:$0xff]
  %v6917 = vld [vmem:[#allocation4 + $0x198] sm:$0xff]
  %v6918 = vld [vmem:[#allocation4 + $0x1a0] sm:$0xff]
  %v6919 = vld [vmem:[#allocation4 + $0x1a8] sm:$0xff]
  %v6920 = vld [vmem:[#allocation4 + $0x1b0] sm:$0xff]
  %v6921 = vld [vmem:[#allocation4 + $0x1b8] sm:$0xff]
  %v6922 = vld [vmem:[#allocation4 + $0x1c0] sm:$0xff]
  %v6923 = vld [vmem:[#allocation4 + $0x1c8] sm:$0xff]
  %v6924 = vld [vmem:[#allocation4 + $0x1d0] sm:$0xff]
  %v6925 = vld [vmem:[#allocation4 + $0x1d8] sm:$0xff]
  %v6926 = vld [vmem:[#allocation4 + $0x1e0] sm:$0xff]
  %v6927 = vld [vmem:[#allocation4 + $0x1e8] sm:$0xff]
  %v6928 = vld [vmem:[#allocation4 + $0x1f0] sm:$0x3f]
  %v6929 = vld [vmem:[%s6] sm:$0x1]
  %v6931 = vlaneseq
  %v6932 = vshrl.u32 %v6931, 7
  %v6933 = vsub.s32 0, %v6932
  %v6934 = vrot.slane %v6929, %v6933
  %v6936 = vadd.f32 %v6866, %v6934
  %v6937 = vadd.f32 %v6867, %v6934
  %v6938 = vadd.f32 %v6868, %v6934
  %v6939 = vadd.f32 %v6869, %v6934
  %v6940 = vadd.f32 %v6870, %v6934
  %v6941 = vadd.f32 %v6871, %v6934
  %v6942 = vadd.f32 %v6872, %v6934
  %v6943 = vadd.f32 %v6873, %v6934
  %v6944 = vadd.f32 %v6874, %v6934
  %v6945 = vadd.f32 %v6875, %v6934
  %v6946 = vadd.f32 %v6876, %v6934
  %v6947 = vadd.f32 %v6877, %v6934
  %v6948 = vadd.f32 %v6878, %v6934
  %v6949 = vadd.f32 %v6879, %v6934
  %v6950 = vadd.f32 %v6880, %v6934
  %v6951 = vadd.f32 %v6881, %v6934
  %v6952 = vadd.f32 %v6882, %v6934
  %v6953 = vadd.f32 %v6883, %v6934
  %v6954 = vadd.f32 %v6884, %v6934
  %v6955 = vadd.f32 %v6885, %v6934
  %v6956 = vadd.f32 %v6886, %v6934
  %v6957 = vadd.f32 %v6887, %v6934
  %v6958 = vadd.f32 %v6888, %v6934
  %v6959 = vadd.f32 %v6889, %v6934
  %v6960 = vadd.f32 %v6890, %v6934
  %v6961 = vadd.f32 %v6891, %v6934
  %v6962 = vadd.f32 %v6892, %v6934
  %v6963 = vadd.f32 %v6893, %v6934
  %v6964 = vadd.f32 %v6894, %v6934
  %v6965 = vadd.f32 %v6895, %v6934
  %v6966 = vadd.f32 %v6896, %v6934
  %v6967 = vadd.f32 %v6897, %v6934
  %v6968 = vadd.f32 %v6898, %v6934
  %v6969 = vadd.f32 %v6899, %v6934
  %v6970 = vadd.f32 %v6900, %v6934
  %v6971 = vadd.f32 %v6901, %v6934
  %v6972 = vadd.f32 %v6902, %v6934
  %v6973 = vadd.f32 %v6903, %v6934
  %v6974 = vadd.f32 %v6904, %v6934
  %v6975 = vadd.f32 %v6905, %v6934
  %v6976 = vadd.f32 %v6906, %v6934
  %v6977 = vadd.f32 %v6907, %v6934
  %v6978 = vadd.f32 %v6908, %v6934
  %v6979 = vadd.f32 %v6909, %v6934
  %v6980 = vadd.f32 %v6910, %v6934
  %v6981 = vadd.f32 %v6911, %v6934
  %v6982 = vadd.f32 %v6912, %v6934
  %v6983 = vadd.f32 %v6913, %v6934
  %v6984 = vadd.f32 %v6914, %v6934
  %v6985 = vadd.f32 %v6915, %v6934
  %v6986 = vadd.f32 %v6916, %v6934
  %v6987 = vadd.f32 %v6917, %v6934
  %v6988 = vadd.f32 %v6918, %v6934
  %v6989 = vadd.f32 %v6919, %v6934
  %v6990 = vadd.f32 %v6920, %v6934
  %v6991 = vadd.f32 %v6921, %v6934
  %v6992 = vadd.f32 %v6922, %v6934
  %v6993 = vadd.f32 %v6923, %v6934
  %v6994 = vadd.f32 %v6924, %v6934
  %v6995 = vadd.f32 %v6925, %v6934
  %v6996 = vadd.f32 %v6926, %v6934
  %v6997 = vadd.f32 %v6927, %v6934
  %v6998 = vadd.f32 %v6928, %v6934
  %v6999 = vmax.f32 %v6936, 0.0
  %v7000 = vmax.f32 %v6937, 0.0
  %v7001 = vmax.f32 %v6938, 0.0
  %v7002 = vmax.f32 %v6939, 0.0
  %v7003 = vmax.f32 %v6940, 0.0
  %v7004 = vmax.f32 %v6941, 0.0
  %v7005 = vmax.f32 %v6942, 0.0
  %v7006 = vmax.f32 %v6943, 0.0
  %v7007 = vmax.f32 %v6944, 0.0
  %v7008 = vmax.f32 %v6945, 0.0
  %v7009 = vmax.f32 %v6946, 0.0
  %v7010 = vmax.f32 %v6947, 0.0
  %v7011 = vmax.f32 %v6948, 0.0
  %v7012 = vmax.f32 %v6949, 0.0
  %v7013 = vmax.f32 %v6950, 0.0
  %v7014 = vmax.f32 %v6951, 0.0
  %v7015 = vmax.f32 %v6952, 0.0
  %v7016 = vmax.f32 %v6953, 0.0
  %v7017 = vmax.f32 %v6954, 0.0
  %v7018 = vmax.f32 %v6955, 0.0
  %v7019 = vmax.f32 %v6956, 0.0
  %v7020 = vmax.f32 %v6957, 0.0
  %v7021 = vmax.f32 %v6958, 0.0
  %v7022 = vmax.f32 %v6959, 0.0
  %v7023 = vmax.f32 %v6960, 0.0
  %v7024 = vmax.f32 %v6961, 0.0
  %v7025 = vmax.f32 %v6962, 0.0
  %v7026 = vmax.f32 %v6963, 0.0
  %v7027 = vmax.f32 %v6964, 0.0
  %v7028 = vmax.f32 %v6965, 0.0
  %v7029 = vmax.f32 %v6966, 0.0
  %v7030 = vmax.f32 %v6967, 0.0
  %v7031 = vmax.f32 %v6968, 0.0
  %v7032 = vmax.f32 %v6969, 0.0
  %v7033 = vmax.f32 %v6970, 0.0
  %v7034 = vmax.f32 %v6971, 0.0
  %v7035 = vmax.f32 %v6972, 0.0
  %v7036 = vmax.f32 %v6973, 0.0
  %v7037 = vmax.f32 %v6974, 0.0
  %v7038 = vmax.f32 %v6975, 0.0
  %v7039 = vmax.f32 %v6976, 0.0
  %v7040 = vmax.f32 %v6977, 0.0
  %v7041 = vmax.f32 %v6978, 0.0
  %v7042 = vmax.f32 %v6979, 0.0
  %v7043 = vmax.f32 %v6980, 0.0
  %v7044 = vmax.f32 %v6981, 0.0
  %v7045 = vmax.f32 %v6982, 0.0
  %v7046 = vmax.f32 %v6983, 0.0
  %v7047 = vmax.f32 %v6984, 0.0
  %v7048 = vmax.f32 %v6985, 0.0
  %v7049 = vmax.f32 %v6986, 0.0
  %v7050 = vmax.f32 %v6987, 0.0
  %v7051 = vmax.f32 %v6988, 0.0
  %v7052 = vmax.f32 %v6989, 0.0
  %v7053 = vmax.f32 %v6990, 0.0
  %v7054 = vmax.f32 %v6991, 0.0
  %v7055 = vmax.f32 %v6992, 0.0
  %v7056 = vmax.f32 %v6993, 0.0
  %v7057 = vmax.f32 %v6994, 0.0
  %v7058 = vmax.f32 %v6995, 0.0
  %v7059 = vmax.f32 %v6996, 0.0
  %v7060 = vmax.f32 %v6997, 0.0
  %v7061 = vmax.f32 %v6998, 0.0
  %v7062 = vld [vmem:[%s2] sm:$0xff]
  %v7063 = vld [vmem:[%s2 + $0x8] sm:$0xff]
  %v7064 = vld [vmem:[%s2 + $0x10] sm:$0xff]
  %v7065 = vld [vmem:[%s2 + $0x18] sm:$0xff]
  %v7066 = vld [vmem:[%s2 + $0x20] sm:$0xff]
  %v7067 = vld [vmem:[%s2 + $0x28] sm:$0xff]
  %v7068 = vld [vmem:[%s2 + $0x30] sm:$0xff]
  %v7069 = vld [vmem:[%s2 + $0x38] sm:$0xff]
  %v7070 = vld [vmem:[%s2 + $0x40] sm:$0xff]
  %v7071 = vld [vmem:[%s2 + $0x48] sm:$0xff]
  %v7072 = vld [vmem:[%s2 + $0x50] sm:$0xff]
  %v7073 = vld [vmem:[%s2 + $0x58] sm:$0xff]
  %v7074 = vld [vmem:[%s2 + $0x60] sm:$0xff]
  %v7075 = vld [vmem:[%s2 + $0x68] sm:$0xff]
  %v7076 = vld [vmem:[%s2 + $0x70] sm:$0xff]
  %v7077 = vld [vmem:[%s2 + $0x78] sm:$0xff]
  %v7078 = vld [vmem:[%s2 + $0x80] sm:$0xff]
  %v7079 = vld [vmem:[%s2 + $0x88] sm:$0xff]
  %v7080 = vld [vmem:[%s2 + $0x90] sm:$0xff]
  %v7081 = vld [vmem:[%s2 + $0x98] sm:$0xff]
  %v7082 = vld [vmem:[%s2 + $0xa0] sm:$0xff]
  %v7083 = vld [vmem:[%s2 + $0xa8] sm:$0xff]
  %v7084 = vld [vmem:[%s2 + $0xb0] sm:$0xff]
  %v7085 = vld [vmem:[%s2 + $0xb8] sm:$0xff]
  %v7086 = vld [vmem:[%s2 + $0xc0] sm:$0xff]
  %v7087 = vld [vmem:[%s2 + $0xc8] sm:$0xff]
  %v7088 = vld [vmem:[%s2 + $0xd0] sm:$0xff]
  %v7089 = vld [vmem:[%s2 + $0xd8] sm:$0xff]
  %v7090 = vld [vmem:[%s2 + $0xe0] sm:$0xff]
  %v7091 = vld [vmem:[%s2 + $0xe8] sm:$0xff]
  %v7092 = vld [vmem:[%s2 + $0xf0] sm:$0xff]
  %v7093 = vld [vmem:[%s2 + $0xf8] sm:$0xff]
  %v7094 = vld [vmem:[%s2 + $0x100] sm:$0xff]
  %v7095 = vld [vmem:[%s2 + $0x108] sm:$0xff]
  %v7096 = vld [vmem:[%s2 + $0x110] sm:$0xff]
  %v7097 = vld [vmem:[%s2 + $0x118] sm:$0xff]
  %v7098 = vld [vmem:[%s2 + $0x120] sm:$0xff]
  %v7099 = vld [vmem:[%s2 + $0x128] sm:$0xff]
  %v7100 = vld [vmem:[%s2 + $0x130] sm:$0xff]
  %v7101 = vld [vmem:[%s2 + $0x138] sm:$0xff]
  %v7102 = vld [vmem:[%s2 + $0x140] sm:$0xff]
  %v7103 = vld [vmem:[%s2 + $0x148] sm:$0xff]
  %v7104 = vld [vmem:[%s2 + $0x150] sm:$0xff]
  %v7105 = vld [vmem:[%s2 + $0x158] sm:$0xff]
  %v7106 = vld [vmem:[%s2 + $0x160] sm:$0xff]
  %v7107 = vld [vmem:[%s2 + $0x168] sm:$0xff]
  %v7108 = vld [vmem:[%s2 + $0x170] sm:$0xff]
  %v7109 = vld [vmem:[%s2 + $0x178] sm:$0xff]
  %v7110 = vld [vmem:[%s2 + $0x180] sm:$0xff]
  %v7111 = vld [vmem:[%s2 + $0x188] sm:$0xff]
  %v7112 = vld [vmem:[%s2 + $0x190] sm:$0xff]
  %v7113 = vld [vmem:[%s2 + $0x198] sm:$0xff]
  %v7114 = vld [vmem:[%s2 + $0x1a0] sm:$0xff]
  %v7115 = vld [vmem:[%s2 + $0x1a8] sm:$0xff]
  %v7116 = vld [vmem:[%s2 + $0x1b0] sm:$0xff]
  %v7117 = vld [vmem:[%s2 + $0x1b8] sm:$0xff]
  %v7118 = vld [vmem:[%s2 + $0x1c0] sm:$0xff]
  %v7119 = vld [vmem:[%s2 + $0x1c8] sm:$0xff]
  %v7120 = vld [vmem:[%s2 + $0x1d0] sm:$0xff]
  %v7121 = vld [vmem:[%s2 + $0x1d8] sm:$0xff]
  %v7122 = vld [vmem:[%s2 + $0x1e0] sm:$0xff]
  %v7123 = vld [vmem:[%s2 + $0x1e8] sm:$0xff]
  %v7124 = vld [vmem:[%s2 + $0x1f0] sm:$0x3f]
  %7126 = vset.pattern.permute.xlu0 0
  %7127 = vperm.xlu0 %7126, %v7062
  %v7128 = vpop.permute.xlu0 %7127
  %7131 = vset.pattern.permute.xlu0 0
  %7132 = vperm.xlu0 %7131, %v7063
  %v7133 = vpop.permute.xlu0 %7132
  %7136 = vset.pattern.permute.xlu0 0
  %7137 = vperm.xlu0 %7136, %v7064
  %v7138 = vpop.permute.xlu0 %7137
  %7141 = vset.pattern.permute.xlu0 0
  %7142 = vperm.xlu0 %7141, %v7065
  %v7143 = vpop.permute.xlu0 %7142
  %7146 = vset.pattern.permute.xlu0 0
  %7147 = vperm.xlu0 %7146, %v7066
  %v7148 = vpop.permute.xlu0 %7147
  %7151 = vset.pattern.permute.xlu0 0
  %7152 = vperm.xlu0 %7151, %v7067
  %v7153 = vpop.permute.xlu0 %7152
  %7156 = vset.pattern.permute.xlu0 0
  %7157 = vperm.xlu0 %7156, %v7068
  %v7158 = vpop.permute.xlu0 %7157
  %7161 = vset.pattern.permute.xlu0 0
  %7162 = vperm.xlu0 %7161, %v7069
  %v7163 = vpop.permute.xlu0 %7162
  %7166 = vset.pattern.permute.xlu0 0
  %7167 = vperm.xlu0 %7166, %v7070
  %v7168 = vpop.permute.xlu0 %7167
  %7171 = vset.pattern.permute.xlu0 0
  %7172 = vperm.xlu0 %7171, %v7071
  %v7173 = vpop.permute.xlu0 %7172
  %7176 = vset.pattern.permute.xlu0 0
  %7177 = vperm.xlu0 %7176, %v7072
  %v7178 = vpop.permute.xlu0 %7177
  %7181 = vset.pattern.permute.xlu0 0
  %7182 = vperm.xlu0 %7181, %v7073
  %v7183 = vpop.permute.xlu0 %7182
  %7186 = vset.pattern.permute.xlu0 0
  %7187 = vperm.xlu0 %7186, %v7074
  %v7188 = vpop.permute.xlu0 %7187
  %7191 = vset.pattern.permute.xlu0 0
  %7192 = vperm.xlu0 %7191, %v7075
  %v7193 = vpop.permute.xlu0 %7192
  %7196 = vset.pattern.permute.xlu0 0
  %7197 = vperm.xlu0 %7196, %v7076
  %v7198 = vpop.permute.xlu0 %7197
  %7201 = vset.pattern.permute.xlu0 0
  %7202 = vperm.xlu0 %7201, %v7077
  %v7203 = vpop.permute.xlu0 %7202
  %7206 = vset.pattern.permute.xlu0 0
  %7207 = vperm.xlu0 %7206, %v7078
  %v7208 = vpop.permute.xlu0 %7207
  %7211 = vset.pattern.permute.xlu0 0
  %7212 = vperm.xlu0 %7211, %v7079
  %v7213 = vpop.permute.xlu0 %7212
  %7216 = vset.pattern.permute.xlu0 0
  %7217 = vperm.xlu0 %7216, %v7080
  %v7218 = vpop.permute.xlu0 %7217
  %7221 = vset.pattern.permute.xlu0 0
  %7222 = vperm.xlu0 %7221, %v7081
  %v7223 = vpop.permute.xlu0 %7222
  %7226 = vset.pattern.permute.xlu0 0
  %7227 = vperm.xlu0 %7226, %v7082
  %v7228 = vpop.permute.xlu0 %7227
  %7231 = vset.pattern.permute.xlu0 0
  %7232 = vperm.xlu0 %7231, %v7083
  %v7233 = vpop.permute.xlu0 %7232
  %7236 = vset.pattern.permute.xlu0 0
  %7237 = vperm.xlu0 %7236, %v7084
  %v7238 = vpop.permute.xlu0 %7237
  %7241 = vset.pattern.permute.xlu0 0
  %7242 = vperm.xlu0 %7241, %v7085
  %v7243 = vpop.permute.xlu0 %7242
  %7246 = vset.pattern.permute.xlu0 0
  %7247 = vperm.xlu0 %7246, %v7086
  %v7248 = vpop.permute.xlu0 %7247
  %7251 = vset.pattern.permute.xlu0 0
  %7252 = vperm.xlu0 %7251, %v7087
  %v7253 = vpop.permute.xlu0 %7252
  %7256 = vset.pattern.permute.xlu0 0
  %7257 = vperm.xlu0 %7256, %v7088
  %v7258 = vpop.permute.xlu0 %7257
  %7261 = vset.pattern.permute.xlu0 0
  %7262 = vperm.xlu0 %7261, %v7089
  %v7263 = vpop.permute.xlu0 %7262
  %7266 = vset.pattern.permute.xlu0 0
  %7267 = vperm.xlu0 %7266, %v7090
  %v7268 = vpop.permute.xlu0 %7267
  %7271 = vset.pattern.permute.xlu0 0
  %7272 = vperm.xlu0 %7271, %v7091
  %v7273 = vpop.permute.xlu0 %7272
  %7276 = vset.pattern.permute.xlu0 0
  %7277 = vperm.xlu0 %7276, %v7092
  %v7278 = vpop.permute.xlu0 %7277
  %7281 = vset.pattern.permute.xlu0 0
  %7282 = vperm.xlu0 %7281, %v7093
  %v7283 = vpop.permute.xlu0 %7282
  %7286 = vset.pattern.permute.xlu0 0
  %7287 = vperm.xlu0 %7286, %v7094
  %v7288 = vpop.permute.xlu0 %7287
  %7291 = vset.pattern.permute.xlu0 0
  %7292 = vperm.xlu0 %7291, %v7095
  %v7293 = vpop.permute.xlu0 %7292
  %7296 = vset.pattern.permute.xlu0 0
  %7297 = vperm.xlu0 %7296, %v7096
  %v7298 = vpop.permute.xlu0 %7297
  %7301 = vset.pattern.permute.xlu0 0
  %7302 = vperm.xlu0 %7301, %v7097
  %v7303 = vpop.permute.xlu0 %7302
  %7306 = vset.pattern.permute.xlu0 0
  %7307 = vperm.xlu0 %7306, %v7098
  %v7308 = vpop.permute.xlu0 %7307
  %7311 = vset.pattern.permute.xlu0 0
  %7312 = vperm.xlu0 %7311, %v7099
  %v7313 = vpop.permute.xlu0 %7312
  %7316 = vset.pattern.permute.xlu0 0
  %7317 = vperm.xlu0 %7316, %v7100
  %v7318 = vpop.permute.xlu0 %7317
  %7321 = vset.pattern.permute.xlu0 0
  %7322 = vperm.xlu0 %7321, %v7101
  %v7323 = vpop.permute.xlu0 %7322
  %7326 = vset.pattern.permute.xlu0 0
  %7327 = vperm.xlu0 %7326, %v7102
  %v7328 = vpop.permute.xlu0 %7327
  %7331 = vset.pattern.permute.xlu0 0
  %7332 = vperm.xlu0 %7331, %v7103
  %v7333 = vpop.permute.xlu0 %7332
  %7336 = vset.pattern.permute.xlu0 0
  %7337 = vperm.xlu0 %7336, %v7104
  %v7338 = vpop.permute.xlu0 %7337
  %7341 = vset.pattern.permute.xlu0 0
  %7342 = vperm.xlu0 %7341, %v7105
  %v7343 = vpop.permute.xlu0 %7342
  %7346 = vset.pattern.permute.xlu0 0
  %7347 = vperm.xlu0 %7346, %v7106
  %v7348 = vpop.permute.xlu0 %7347
  %7351 = vset.pattern.permute.xlu0 0
  %7352 = vperm.xlu0 %7351, %v7107
  %v7353 = vpop.permute.xlu0 %7352
  %7356 = vset.pattern.permute.xlu0 0
  %7357 = vperm.xlu0 %7356, %v7108
  %v7358 = vpop.permute.xlu0 %7357
  %7361 = vset.pattern.permute.xlu0 0
  %7362 = vperm.xlu0 %7361, %v7109
  %v7363 = vpop.permute.xlu0 %7362
  %7366 = vset.pattern.permute.xlu0 0
  %7367 = vperm.xlu0 %7366, %v7110
  %v7368 = vpop.permute.xlu0 %7367
  %7371 = vset.pattern.permute.xlu0 0
  %7372 = vperm.xlu0 %7371, %v7111
  %v7373 = vpop.permute.xlu0 %7372
  %7376 = vset.pattern.permute.xlu0 0
  %7377 = vperm.xlu0 %7376, %v7112
  %v7378 = vpop.permute.xlu0 %7377
  %7381 = vset.pattern.permute.xlu0 0
  %7382 = vperm.xlu0 %7381, %v7113
  %v7383 = vpop.permute.xlu0 %7382
  %7386 = vset.pattern.permute.xlu0 0
  %7387 = vperm.xlu0 %7386, %v7114
  %v7388 = vpop.permute.xlu0 %7387
  %7391 = vset.pattern.permute.xlu0 0
  %7392 = vperm.xlu0 %7391, %v7115
  %v7393 = vpop.permute.xlu0 %7392
  %7396 = vset.pattern.permute.xlu0 0
  %7397 = vperm.xlu0 %7396, %v7116
  %v7398 = vpop.permute.xlu0 %7397
  %7401 = vset.pattern.permute.xlu0 0
  %7402 = vperm.xlu0 %7401, %v7117
  %v7403 = vpop.permute.xlu0 %7402
  %7406 = vset.pattern.permute.xlu0 0
  %7407 = vperm.xlu0 %7406, %v7118
  %v7408 = vpop.permute.xlu0 %7407
  %7411 = vset.pattern.permute.xlu0 0
  %7412 = vperm.xlu0 %7411, %v7119
  %v7413 = vpop.permute.xlu0 %7412
  %7416 = vset.pattern.permute.xlu0 0
  %7417 = vperm.xlu0 %7416, %v7120
  %v7418 = vpop.permute.xlu0 %7417
  %7421 = vset.pattern.permute.xlu0 0
  %7422 = vperm.xlu0 %7421, %v7121
  %v7423 = vpop.permute.xlu0 %7422
  %7426 = vset.pattern.permute.xlu0 0
  %7427 = vperm.xlu0 %7426, %v7122
  %v7428 = vpop.permute.xlu0 %7427
  %7431 = vset.pattern.permute.xlu0 0
  %7432 = vperm.xlu0 %7431, %v7123
  %v7433 = vpop.permute.xlu0 %7432
  %7436 = vset.pattern.permute.xlu0 0
  %7437 = vperm.xlu0 %7436, %v7124
  %v7438 = vpop.permute.xlu0 %7437
  %v7440 = vmul.f32 %v6999, %v7128
  %v7441 = vmul.f32 %v7000, %v7133
  %v7442 = vmul.f32 %v7001, %v7138
  %v7443 = vmul.f32 %v7002, %v7143
  %v7444 = vmul.f32 %v7003, %v7148
  %v7445 = vmul.f32 %v7004, %v7153
  %v7446 = vmul.f32 %v7005, %v7158
  %v7447 = vmul.f32 %v7006, %v7163
  %v7448 = vmul.f32 %v7007, %v7168
  %v7449 = vmul.f32 %v7008, %v7173
  %v7450 = vmul.f32 %v7009, %v7178
  %v7451 = vmul.f32 %v7010, %v7183
  %v7452 = vmul.f32 %v7011, %v7188
  %v7453 = vmul.f32 %v7012, %v7193
  %v7454 = vmul.f32 %v7013, %v7198
  %v7455 = vmul.f32 %v7014, %v7203
  %v7456 = vmul.f32 %v7015, %v7208
  %v7457 = vmul.f32 %v7016, %v7213
  %v7458 = vmul.f32 %v7017, %v7218
  %v7459 = vmul.f32 %v7018, %v7223
  %v7460 = vmul.f32 %v7019, %v7228
  %v7461 = vmul.f32 %v7020, %v7233
  %v7462 = vmul.f32 %v7021, %v7238
  %v7463 = vmul.f32 %v7022, %v7243
  %v7464 = vmul.f32 %v7023, %v7248
  %v7465 = vmul.f32 %v7024, %v7253
  %v7466 = vmul.f32 %v7025, %v7258
  %v7467 = vmul.f32 %v7026, %v7263
  %v7468 = vmul.f32 %v7027, %v7268
  %v7469 = vmul.f32 %v7028, %v7273
  %v7470 = vmul.f32 %v7029, %v7278
  %v7471 = vmul.f32 %v7030, %v7283
  %v7472 = vmul.f32 %v7031, %v7288
  %v7473 = vmul.f32 %v7032, %v7293
  %v7474 = vmul.f32 %v7033, %v7298
  %v7475 = vmul.f32 %v7034, %v7303
  %v7476 = vmul.f32 %v7035, %v7308
  %v7477 = vmul.f32 %v7036, %v7313
  %v7478 = vmul.f32 %v7037, %v7318
  %v7479 = vmul.f32 %v7038, %v7323
  %v7480 = vmul.f32 %v7039, %v7328
  %v7481 = vmul.f32 %v7040, %v7333
  %v7482 = vmul.f32 %v7041, %v7338
  %v7483 = vmul.f32 %v7042, %v7343
  %v7484 = vmul.f32 %v7043, %v7348
  %v7485 = vmul.f32 %v7044, %v7353
  %v7486 = vmul.f32 %v7045, %v7358
  %v7487 = vmul.f32 %v7046, %v7363
  %v7488 = vmul.f32 %v7047, %v7368
  %v7489 = vmul.f32 %v7048, %v7373
  %v7490 = vmul.f32 %v7049, %v7378
  %v7491 = vmul.f32 %v7050, %v7383
  %v7492 = vmul.f32 %v7051, %v7388
  %v7493 = vmul.f32 %v7052, %v7393
  %v7494 = vmul.f32 %v7053, %v7398
  %v7495 = vmul.f32 %v7054, %v7403
  %v7496 = vmul.f32 %v7055, %v7408
  %v7497 = vmul.f32 %v7056, %v7413
  %v7498 = vmul.f32 %v7057, %v7418
  %v7499 = vmul.f32 %v7058, %v7423
  %v7500 = vmul.f32 %v7059, %v7428
  %v7501 = vmul.f32 %v7060, %v7433
  %v7502 = vmul.f32 %v7061, %v7438
  %v7503 = vpack.c.bf16 %v7441, %v7440
  %v7504 = vpack.c.bf16 %v7443, %v7442
  %v7505 = vpack.c.bf16 %v7445, %v7444
  %v7506 = vpack.c.bf16 %v7447, %v7446
  %v7507 = vpack.c.bf16 %v7449, %v7448
  %v7508 = vpack.c.bf16 %v7451, %v7450
  %v7509 = vpack.c.bf16 %v7453, %v7452
  %v7510 = vpack.c.bf16 %v7455, %v7454
  %v7511 = vpack.c.bf16 %v7457, %v7456
  %v7512 = vpack.c.bf16 %v7459, %v7458
  %v7513 = vpack.c.bf16 %v7461, %v7460
  %v7514 = vpack.c.bf16 %v7463, %v7462
  %v7515 = vpack.c.bf16 %v7465, %v7464
  %v7516 = vpack.c.bf16 %v7467, %v7466
  %v7517 = vpack.c.bf16 %v7469, %v7468
  %v7518 = vpack.c.bf16 %v7471, %v7470
  %v7519 = vpack.c.bf16 %v7473, %v7472
  %v7520 = vpack.c.bf16 %v7475, %v7474
  %v7521 = vpack.c.bf16 %v7477, %v7476
  %v7522 = vpack.c.bf16 %v7479, %v7478
  %v7523 = vpack.c.bf16 %v7481, %v7480
  %v7524 = vpack.c.bf16 %v7483, %v7482
  %v7525 = vpack.c.bf16 %v7485, %v7484
  %v7526 = vpack.c.bf16 %v7487, %v7486
  %v7527 = vpack.c.bf16 %v7489, %v7488
  %v7528 = vpack.c.bf16 %v7491, %v7490
  %v7529 = vpack.c.bf16 %v7493, %v7492
  %v7530 = vpack.c.bf16 %v7495, %v7494
  %v7531 = vpack.c.bf16 %v7497, %v7496
  %v7532 = vpack.c.bf16 %v7499, %v7498
  %v7533 = vpack.c.bf16 %v7501, %v7500
  %v7534 = vpack.c.bf16 %v7502, %v7502
  %v7567 = vunpack.c.l.b16 %v7503
  %v7568 = vunpack.c.h.b16 %v7503
  %v7569 = vunpack.c.l.b16 %v7504
  %v7570 = vunpack.c.h.b16 %v7504
  %v7571 = vunpack.c.l.b16 %v7505
  %v7572 = vunpack.c.h.b16 %v7505
  %v7573 = vunpack.c.l.b16 %v7506
  %v7574 = vunpack.c.h.b16 %v7506
  %v7575 = vunpack.c.l.b16 %v7507
  %v7576 = vunpack.c.h.b16 %v7507
  %v7577 = vunpack.c.l.b16 %v7508
  %v7578 = vunpack.c.h.b16 %v7508
  %v7579 = vunpack.c.l.b16 %v7509
  %v7580 = vunpack.c.h.b16 %v7509
  %v7581 = vunpack.c.l.b16 %v7510
  %v7582 = vunpack.c.h.b16 %v7510
  %v7583 = vunpack.c.l.b16 %v7511
  %v7584 = vunpack.c.h.b16 %v7511
  %v7585 = vunpack.c.l.b16 %v7512
  %v7586 = vunpack.c.h.b16 %v7512
  %v7587 = vunpack.c.l.b16 %v7513
  %v7588 = vunpack.c.h.b16 %v7513
  %v7589 = vunpack.c.l.b16 %v7514
  %v7590 = vunpack.c.h.b16 %v7514
  %v7591 = vunpack.c.l.b16 %v7515
  %v7592 = vunpack.c.h.b16 %v7515
  %v7593 = vunpack.c.l.b16 %v7516
  %v7594 = vunpack.c.h.b16 %v7516
  %v7595 = vunpack.c.l.b16 %v7517
  %v7596 = vunpack.c.h.b16 %v7517
  %v7597 = vunpack.c.l.b16 %v7518
  %v7598 = vunpack.c.h.b16 %v7518
  %v7599 = vunpack.c.l.b16 %v7519
  %v7600 = vunpack.c.h.b16 %v7519
  %v7601 = vunpack.c.l.b16 %v7520
  %v7602 = vunpack.c.h.b16 %v7520
  %v7603 = vunpack.c.l.b16 %v7521
  %v7604 = vunpack.c.h.b16 %v7521
  %v7605 = vunpack.c.l.b16 %v7522
  %v7606 = vunpack.c.h.b16 %v7522
  %v7607 = vunpack.c.l.b16 %v7523
  %v7608 = vunpack.c.h.b16 %v7523
  %v7609 = vunpack.c.l.b16 %v7524
  %v7610 = vunpack.c.h.b16 %v7524
  %v7611 = vunpack.c.l.b16 %v7525
  %v7612 = vunpack.c.h.b16 %v7525
  %v7613 = vunpack.c.l.b16 %v7526
  %v7614 = vunpack.c.h.b16 %v7526
  %v7615 = vunpack.c.l.b16 %v7527
  %v7616 = vunpack.c.h.b16 %v7527
  %v7617 = vunpack.c.l.b16 %v7528
  %v7618 = vunpack.c.h.b16 %v7528
  %v7619 = vunpack.c.l.b16 %v7529
  %v7620 = vunpack.c.h.b16 %v7529
  %v7621 = vunpack.c.l.b16 %v7530
  %v7622 = vunpack.c.h.b16 %v7530
  %v7623 = vunpack.c.l.b16 %v7531
  %v7624 = vunpack.c.h.b16 %v7531
  %v7625 = vunpack.c.l.b16 %v7532
  %v7626 = vunpack.c.h.b16 %v7532
  %v7627 = vunpack.c.l.b16 %v7533
  %v7628 = vunpack.c.h.b16 %v7533
  %v7629 = vunpack.c.l.b16 %v7534
  %v7630 = vpack.c.b16 %v7567, %v7567
  %v7631 = vpack.c.b16 %v7568, %v7568
  %v7632 = vpack.c.b16 %v7569, %v7569
  %v7633 = vpack.c.b16 %v7570, %v7570
  %v7634 = vpack.c.b16 %v7571, %v7571
  %v7635 = vpack.c.b16 %v7572, %v7572
  %v7636 = vpack.c.b16 %v7573, %v7573
  %v7637 = vpack.c.b16 %v7574, %v7574
  %v7638 = vpack.c.b16 %v7575, %v7575
  %v7639 = vpack.c.b16 %v7576, %v7576
  %v7640 = vpack.c.b16 %v7577, %v7577
  %v7641 = vpack.c.b16 %v7578, %v7578
  %v7642 = vpack.c.b16 %v7579, %v7579
  %v7643 = vpack.c.b16 %v7580, %v7580
  %v7644 = vpack.c.b16 %v7581, %v7581
  %v7645 = vpack.c.b16 %v7582, %v7582
  %v7646 = vpack.c.b16 %v7583, %v7583
  %v7647 = vpack.c.b16 %v7584, %v7584
  %v7648 = vpack.c.b16 %v7585, %v7585
  %v7649 = vpack.c.b16 %v7586, %v7586
  %v7650 = vpack.c.b16 %v7587, %v7587
  %v7651 = vpack.c.b16 %v7588, %v7588
  %v7652 = vpack.c.b16 %v7589, %v7589
  %v7653 = vpack.c.b16 %v7590, %v7590
  %v7654 = vpack.c.b16 %v7591, %v7591
  %v7655 = vpack.c.b16 %v7592, %v7592
  %v7656 = vpack.c.b16 %v7593, %v7593
  %v7657 = vpack.c.b16 %v7594, %v7594
  %v7658 = vpack.c.b16 %v7595, %v7595
  %v7659 = vpack.c.b16 %v7596, %v7596
  %v7660 = vpack.c.b16 %v7597, %v7597
  %v7661 = vpack.c.b16 %v7598, %v7598
  %v7662 = vpack.c.b16 %v7599, %v7599
  %v7663 = vpack.c.b16 %v7600, %v7600
  %v7664 = vpack.c.b16 %v7601, %v7601
  %v7665 = vpack.c.b16 %v7602, %v7602
  %v7666 = vpack.c.b16 %v7603, %v7603
  %v7667 = vpack.c.b16 %v7604, %v7604
  %v7668 = vpack.c.b16 %v7605, %v7605
  %v7669 = vpack.c.b16 %v7606, %v7606
  %v7670 = vpack.c.b16 %v7607, %v7607
  %v7671 = vpack.c.b16 %v7608, %v7608
  %v7672 = vpack.c.b16 %v7609, %v7609
  %v7673 = vpack.c.b16 %v7610, %v7610
  %v7674 = vpack.c.b16 %v7611, %v7611
  %v7675 = vpack.c.b16 %v7612, %v7612
  %v7676 = vpack.c.b16 %v7613, %v7613
  %v7677 = vpack.c.b16 %v7614, %v7614
  %v7678 = vpack.c.b16 %v7615, %v7615
  %v7679 = vpack.c.b16 %v7616, %v7616
  %v7680 = vpack.c.b16 %v7617, %v7617
  %v7681 = vpack.c.b16 %v7618, %v7618
  %v7682 = vpack.c.b16 %v7619, %v7619
  %v7683 = vpack.c.b16 %v7620, %v7620
  %v7684 = vpack.c.b16 %v7621, %v7621
  %v7685 = vpack.c.b16 %v7622, %v7622
  %v7686 = vpack.c.b16 %v7623, %v7623
  %v7687 = vpack.c.b16 %v7624, %v7624
  %v7688 = vpack.c.b16 %v7625, %v7625
  %v7689 = vpack.c.b16 %v7626, %v7626
  %v7690 = vpack.c.b16 %v7627, %v7627
  %v7691 = vpack.c.b16 %v7628, %v7628
  %v7692 = vpack.c.b16 %v7629, %v7629
  %v7694 = vshrl.u32 %v7630, 16
  %v7696 = vrot.slane %v7694, 7
  %v7697 = vshll.u32 %v7630, 16
  %v7699 = vor.u32 %v7696, %v7697
  %v7700 = vrot.slane %v7696, 4
  %v7702 = vshrl.u32 %v7631, 16
  %v7704 = vrot.slane %v7702, 7
  %v7705 = vshll.u32 %v7631, 16
  %v7707 = vor.u32 %v7704, %v7705
  %v7708 = vsel %vm3463, %v7700, %v7707
  %v7709 = vrot.slane %v7704, 4
  %v7711 = vshrl.u32 %v7632, 16
  %v7713 = vrot.slane %v7711, 7
  %v7714 = vshll.u32 %v7632, 16
  %v7716 = vor.u32 %v7713, %v7714
  %v7717 = vsel %vm3463, %v7709, %v7716
  %v7718 = vrot.slane %v7713, 4
  %v7720 = vshrl.u32 %v7633, 16
  %v7722 = vrot.slane %v7720, 7
  %v7723 = vshll.u32 %v7633, 16
  %v7725 = vor.u32 %v7722, %v7723
  %v7726 = vsel %vm3463, %v7718, %v7725
  %v7727 = vrot.slane %v7722, 4
  %v7729 = vshrl.u32 %v7634, 16
  %v7731 = vrot.slane %v7729, 7
  %v7732 = vshll.u32 %v7634, 16
  %v7734 = vor.u32 %v7731, %v7732
  %v7735 = vsel %vm3463, %v7727, %v7734
  %v7736 = vrot.slane %v7731, 4
  %v7738 = vshrl.u32 %v7635, 16
  %v7740 = vrot.slane %v7738, 7
  %v7741 = vshll.u32 %v7635, 16
  %v7743 = vor.u32 %v7740, %v7741
  %v7744 = vsel %vm3463, %v7736, %v7743
  %v7745 = vrot.slane %v7740, 4
  %v7747 = vshrl.u32 %v7636, 16
  %v7749 = vrot.slane %v7747, 7
  %v7750 = vshll.u32 %v7636, 16
  %v7752 = vor.u32 %v7749, %v7750
  %v7753 = vsel %vm3463, %v7745, %v7752
  %v7754 = vrot.slane %v7749, 4
  %v7756 = vshrl.u32 %v7637, 16
  %v7758 = vrot.slane %v7756, 7
  %v7759 = vshll.u32 %v7637, 16
  %v7761 = vor.u32 %v7758, %v7759
  %v7762 = vsel %vm3463, %v7754, %v7761
  %v7763 = vrot.slane %v7758, 4
  %v7765 = vshrl.u32 %v7638, 16
  %v7767 = vrot.slane %v7765, 7
  %v7768 = vshll.u32 %v7638, 16
  %v7770 = vor.u32 %v7767, %v7768
  %v7771 = vsel %vm3463, %v7763, %v7770
  %v7772 = vrot.slane %v7767, 4
  %v7774 = vshrl.u32 %v7639, 16
  %v7776 = vrot.slane %v7774, 7
  %v7777 = vshll.u32 %v7639, 16
  %v7779 = vor.u32 %v7776, %v7777
  %v7780 = vsel %vm3463, %v7772, %v7779
  %v7781 = vrot.slane %v7776, 4
  %v7783 = vshrl.u32 %v7640, 16
  %v7785 = vrot.slane %v7783, 7
  %v7786 = vshll.u32 %v7640, 16
  %v7788 = vor.u32 %v7785, %v7786
  %v7789 = vsel %vm3463, %v7781, %v7788
  %v7790 = vrot.slane %v7785, 4
  %v7792 = vshrl.u32 %v7641, 16
  %v7794 = vrot.slane %v7792, 7
  %v7795 = vshll.u32 %v7641, 16
  %v7797 = vor.u32 %v7794, %v7795
  %v7798 = vsel %vm3463, %v7790, %v7797
  %v7799 = vrot.slane %v7794, 4
  %v7801 = vshrl.u32 %v7642, 16
  %v7803 = vrot.slane %v7801, 7
  %v7804 = vshll.u32 %v7642, 16
  %v7806 = vor.u32 %v7803, %v7804
  %v7807 = vsel %vm3463, %v7799, %v7806
  %v7808 = vrot.slane %v7803, 4
  %v7810 = vshrl.u32 %v7643, 16
  %v7812 = vrot.slane %v7810, 7
  %v7813 = vshll.u32 %v7643, 16
  %v7815 = vor.u32 %v7812, %v7813
  %v7816 = vsel %vm3463, %v7808, %v7815
  %v7817 = vrot.slane %v7812, 4
  %v7819 = vshrl.u32 %v7644, 16
  %v7821 = vrot.slane %v7819, 7
  %v7822 = vshll.u32 %v7644, 16
  %v7824 = vor.u32 %v7821, %v7822
  %v7825 = vsel %vm3463, %v7817, %v7824
  %v7826 = vrot.slane %v7821, 4
  %v7828 = vshrl.u32 %v7645, 16
  %v7830 = vrot.slane %v7828, 7
  %v7831 = vshll.u32 %v7645, 16
  %v7833 = vor.u32 %v7830, %v7831
  %v7834 = vsel %vm3463, %v7826, %v7833
  %v7835 = vrot.slane %v7830, 4
  %v7837 = vshrl.u32 %v7646, 16
  %v7839 = vrot.slane %v7837, 7
  %v7840 = vshll.u32 %v7646, 16
  %v7842 = vor.u32 %v7839, %v7840
  %v7843 = vsel %vm3463, %v7835, %v7842
  %v7844 = vrot.slane %v7839, 4
  %v7846 = vshrl.u32 %v7647, 16
  %v7848 = vrot.slane %v7846, 7
  %v7849 = vshll.u32 %v7647, 16
  %v7851 = vor.u32 %v7848, %v7849
  %v7852 = vsel %vm3463, %v7844, %v7851
  %v7853 = vrot.slane %v7848, 4
  %v7855 = vshrl.u32 %v7648, 16
  %v7857 = vrot.slane %v7855, 7
  %v7858 = vshll.u32 %v7648, 16
  %v7860 = vor.u32 %v7857, %v7858
  %v7861 = vsel %vm3463, %v7853, %v7860
  %v7862 = vrot.slane %v7857, 4
  %v7864 = vshrl.u32 %v7649, 16
  %v7866 = vrot.slane %v7864, 7
  %v7867 = vshll.u32 %v7649, 16
  %v7869 = vor.u32 %v7866, %v7867
  %v7870 = vsel %vm3463, %v7862, %v7869
  %v7871 = vrot.slane %v7866, 4
  %v7873 = vshrl.u32 %v7650, 16
  %v7875 = vrot.slane %v7873, 7
  %v7876 = vshll.u32 %v7650, 16
  %v7878 = vor.u32 %v7875, %v7876
  %v7879 = vsel %vm3463, %v7871, %v7878
  %v7880 = vrot.slane %v7875, 4
  %v7882 = vshrl.u32 %v7651, 16
  %v7884 = vrot.slane %v7882, 7
  %v7885 = vshll.u32 %v7651, 16
  %v7887 = vor.u32 %v7884, %v7885
  %v7888 = vsel %vm3463, %v7880, %v7887
  %v7889 = vrot.slane %v7884, 4
  %v7891 = vshrl.u32 %v7652, 16
  %v7893 = vrot.slane %v7891, 7
  %v7894 = vshll.u32 %v7652, 16
  %v7896 = vor.u32 %v7893, %v7894
  %v7897 = vsel %vm3463, %v7889, %v7896
  %v7898 = vrot.slane %v7893, 4
  %v7900 = vshrl.u32 %v7653, 16
  %v7902 = vrot.slane %v7900, 7
  %v7903 = vshll.u32 %v7653, 16
  %v7905 = vor.u32 %v7902, %v7903
  %v7906 = vsel %vm3463, %v7898, %v7905
  %v7907 = vrot.slane %v7902, 4
  %v7909 = vshrl.u32 %v7654, 16
  %v7911 = vrot.slane %v7909, 7
  %v7912 = vshll.u32 %v7654, 16
  %v7914 = vor.u32 %v7911, %v7912
  %v7915 = vsel %vm3463, %v7907, %v7914
  %v7916 = vrot.slane %v7911, 4
  %v7918 = vshrl.u32 %v7655, 16
  %v7920 = vrot.slane %v7918, 7
  %v7921 = vshll.u32 %v7655, 16
  %v7923 = vor.u32 %v7920, %v7921
  %v7924 = vsel %vm3463, %v7916, %v7923
  %v7925 = vrot.slane %v7920, 4
  %v7927 = vshrl.u32 %v7656, 16
  %v7929 = vrot.slane %v7927, 7
  %v7930 = vshll.u32 %v7656, 16
  %v7932 = vor.u32 %v7929, %v7930
  %v7933 = vsel %vm3463, %v7925, %v7932
  %v7934 = vrot.slane %v7929, 4
  %v7936 = vshrl.u32 %v7657, 16
  %v7938 = vrot.slane %v7936, 7
  %v7939 = vshll.u32 %v7657, 16
  %v7941 = vor.u32 %v7938, %v7939
  %v7942 = vsel %vm3463, %v7934, %v7941
  %v7943 = vrot.slane %v7938, 4
  %v7945 = vshrl.u32 %v7658, 16
  %v7947 = vrot.slane %v7945, 7
  %v7948 = vshll.u32 %v7658, 16
  %v7950 = vor.u32 %v7947, %v7948
  %v7951 = vsel %vm3463, %v7943, %v7950
  %v7952 = vrot.slane %v7947, 4
  %v7954 = vshrl.u32 %v7659, 16
  %v7956 = vrot.slane %v7954, 7
  %v7957 = vshll.u32 %v7659, 16
  %v7959 = vor.u32 %v7956, %v7957
  %v7960 = vsel %vm3463, %v7952, %v7959
  %v7961 = vrot.slane %v7956, 4
  %v7963 = vshrl.u32 %v7660, 16
  %v7965 = vrot.slane %v7963, 7
  %v7966 = vshll.u32 %v7660, 16
  %v7968 = vor.u32 %v7965, %v7966
  %v7969 = vsel %vm3463, %v7961, %v7968
  %v7970 = vrot.slane %v7965, 4
  %v7972 = vshrl.u32 %v7661, 16
  %v7974 = vrot.slane %v7972, 7
  %v7975 = vshll.u32 %v7661, 16
  %v7977 = vor.u32 %v7974, %v7975
  %v7978 = vsel %vm3463, %v7970, %v7977
  %v7979 = vrot.slane %v7974, 4
  %v7981 = vshrl.u32 %v7662, 16
  %v7983 = vrot.slane %v7981, 7
  %v7984 = vshll.u32 %v7662, 16
  %v7986 = vor.u32 %v7983, %v7984
  %v7987 = vsel %vm3463, %v7979, %v7986
  %v7988 = vrot.slane %v7983, 4
  %v7990 = vshrl.u32 %v7663, 16
  %v7992 = vrot.slane %v7990, 7
  %v7993 = vshll.u32 %v7663, 16
  %v7995 = vor.u32 %v7992, %v7993
  %v7996 = vsel %vm3463, %v7988, %v7995
  %v7997 = vrot.slane %v7992, 4
  %v7999 = vshrl.u32 %v7664, 16
  %v8001 = vrot.slane %v7999, 7
  %v8002 = vshll.u32 %v7664, 16
  %v8004 = vor.u32 %v8001, %v8002
  %v8005 = vsel %vm3463, %v7997, %v8004
  %v8006 = vrot.slane %v8001, 4
  %v8008 = vshrl.u32 %v7665, 16
  %v8010 = vrot.slane %v8008, 7
  %v8011 = vshll.u32 %v7665, 16
  %v8013 = vor.u32 %v8010, %v8011
  %v8014 = vsel %vm3463, %v8006, %v8013
  %v8015 = vrot.slane %v8010, 4
  %v8017 = vshrl.u32 %v7666, 16
  %v8019 = vrot.slane %v8017, 7
  %v8020 = vshll.u32 %v7666, 16
  %v8022 = vor.u32 %v8019, %v8020
  %v8023 = vsel %vm3463, %v8015, %v8022
  %v8024 = vrot.slane %v8019, 4
  %v8026 = vshrl.u32 %v7667, 16
  %v8028 = vrot.slane %v8026, 7
  %v8029 = vshll.u32 %v7667, 16
  %v8031 = vor.u32 %v8028, %v8029
  %v8032 = vsel %vm3463, %v8024, %v8031
  %v8033 = vrot.slane %v8028, 4
  %v8035 = vshrl.u32 %v7668, 16
  %v8037 = vrot.slane %v8035, 7
  %v8038 = vshll.u32 %v7668, 16
  %v8040 = vor.u32 %v8037, %v8038
  %v8041 = vsel %vm3463, %v8033, %v8040
  %v8042 = vrot.slane %v8037, 4
  %v8044 = vshrl.u32 %v7669, 16
  %v8046 = vrot.slane %v8044, 7
  %v8047 = vshll.u32 %v7669, 16
  %v8049 = vor.u32 %v8046, %v8047
  %v8050 = vsel %vm3463, %v8042, %v8049
  %v8051 = vrot.slane %v8046, 4
  %v8053 = vshrl.u32 %v7670, 16
  %v8055 = vrot.slane %v8053, 7
  %v8056 = vshll.u32 %v7670, 16
  %v8058 = vor.u32 %v8055, %v8056
  %v8059 = vsel %vm3463, %v8051, %v8058
  %v8060 = vrot.slane %v8055, 4
  %v8062 = vshrl.u32 %v7671, 16
  %v8064 = vrot.slane %v8062, 7
  %v8065 = vshll.u32 %v7671, 16
  %v8067 = vor.u32 %v8064, %v8065
  %v8068 = vsel %vm3463, %v8060, %v8067
  %v8069 = vrot.slane %v8064, 4
  %v8071 = vshrl.u32 %v7672, 16
  %v8073 = vrot.slane %v8071, 7
  %v8074 = vshll.u32 %v7672, 16
  %v8076 = vor.u32 %v8073, %v8074
  %v8077 = vsel %vm3463, %v8069, %v8076
  %v8078 = vrot.slane %v8073, 4
  %v8080 = vshrl.u32 %v7673, 16
  %v8082 = vrot.slane %v8080, 7
  %v8083 = vshll.u32 %v7673, 16
  %v8085 = vor.u32 %v8082, %v8083
  %v8086 = vsel %vm3463, %v8078, %v8085
  %v8087 = vrot.slane %v8082, 4
  %v8089 = vshrl.u32 %v7674, 16
  %v8091 = vrot.slane %v8089, 7
  %v8092 = vshll.u32 %v7674, 16
  %v8094 = vor.u32 %v8091, %v8092
  %v8095 = vsel %vm3463, %v8087, %v8094
  %v8096 = vrot.slane %v8091, 4
  %v8098 = vshrl.u32 %v7675, 16
  %v8100 = vrot.slane %v8098, 7
  %v8101 = vshll.u32 %v7675, 16
  %v8103 = vor.u32 %v8100, %v8101
  %v8104 = vsel %vm3463, %v8096, %v8103
  %v8105 = vrot.slane %v8100, 4
  %v8107 = vshrl.u32 %v7676, 16
  %v8109 = vrot.slane %v8107, 7
  %v8110 = vshll.u32 %v7676, 16
  %v8112 = vor.u32 %v8109, %v8110
  %v8113 = vsel %vm3463, %v8105, %v8112
  %v8114 = vrot.slane %v8109, 4
  %v8116 = vshrl.u32 %v7677, 16
  %v8118 = vrot.slane %v8116, 7
  %v8119 = vshll.u32 %v7677, 16
  %v8121 = vor.u32 %v8118, %v8119
  %v8122 = vsel %vm3463, %v8114, %v8121
  %v8123 = vrot.slane %v8118, 4
  %v8125 = vshrl.u32 %v7678, 16
  %v8127 = vrot.slane %v8125, 7
  %v8128 = vshll.u32 %v7678, 16
  %v8130 = vor.u32 %v8127, %v8128
  %v8131 = vsel %vm3463, %v8123, %v8130
  %v8132 = vrot.slane %v8127, 4
  %v8134 = vshrl.u32 %v7679, 16
  %v8136 = vrot.slane %v8134, 7
  %v8137 = vshll.u32 %v7679, 16
  %v8139 = vor.u32 %v8136, %v8137
  %v8140 = vsel %vm3463, %v8132, %v8139
  %v8141 = vrot.slane %v8136, 4
  %v8143 = vshrl.u32 %v7680, 16
  %v8145 = vrot.slane %v8143, 7
  %v8146 = vshll.u32 %v7680, 16
  %v8148 = vor.u32 %v8145, %v8146
  %v8149 = vsel %vm3463, %v8141, %v8148
  %v8150 = vrot.slane %v8145, 4
  %v8152 = vshrl.u32 %v7681, 16
  %v8154 = vrot.slane %v8152, 7
  %v8155 = vshll.u32 %v7681, 16
  %v8157 = vor.u32 %v8154, %v8155
  %v8158 = vsel %vm3463, %v8150, %v8157
  %v8159 = vrot.slane %v8154, 4
  %v8161 = vshrl.u32 %v7682, 16
  %v8163 = vrot.slane %v8161, 7
  %v8164 = vshll.u32 %v7682, 16
  %v8166 = vor.u32 %v8163, %v8164
  %v8167 = vsel %vm3463, %v8159, %v8166
  %v8168 = vrot.slane %v8163, 4
  %v8170 = vshrl.u32 %v7683, 16
  %v8172 = vrot.slane %v8170, 7
  %v8173 = vshll.u32 %v7683, 16
  %v8175 = vor.u32 %v8172, %v8173
  %v8176 = vsel %vm3463, %v8168, %v8175
  %v8177 = vrot.slane %v8172, 4
  %v8179 = vshrl.u32 %v7684, 16
  %v8181 = vrot.slane %v8179, 7
  %v8182 = vshll.u32 %v7684, 16
  %v8184 = vor.u32 %v8181, %v8182
  %v8185 = vsel %vm3463, %v8177, %v8184
  %v8186 = vrot.slane %v8181, 4
  %v8188 = vshrl.u32 %v7685, 16
  %v8190 = vrot.slane %v8188, 7
  %v8191 = vshll.u32 %v7685, 16
  %v8193 = vor.u32 %v8190, %v8191
  %v8194 = vsel %vm3463, %v8186, %v8193
  %v8195 = vrot.slane %v8190, 4
  %v8197 = vshrl.u32 %v7686, 16
  %v8199 = vrot.slane %v8197, 7
  %v8200 = vshll.u32 %v7686, 16
  %v8202 = vor.u32 %v8199, %v8200
  %v8203 = vsel %vm3463, %v8195, %v8202
  %v8204 = vrot.slane %v8199, 4
  %v8206 = vshrl.u32 %v7687, 16
  %v8208 = vrot.slane %v8206, 7
  %v8209 = vshll.u32 %v7687, 16
  %v8211 = vor.u32 %v8208, %v8209
  %v8212 = vsel %vm3463, %v8204, %v8211
  %v8213 = vrot.slane %v8208, 4
  %v8215 = vshrl.u32 %v7688, 16
  %v8217 = vrot.slane %v8215, 7
  %v8218 = vshll.u32 %v7688, 16
  %v8220 = vor.u32 %v8217, %v8218
  %v8221 = vsel %vm3463, %v8213, %v8220
  %v8222 = vrot.slane %v8217, 4
  %v8224 = vshrl.u32 %v7689, 16
  %v8226 = vrot.slane %v8224, 7
  %v8227 = vshll.u32 %v7689, 16
  %v8229 = vor.u32 %v8226, %v8227
  %v8230 = vsel %vm3463, %v8222, %v8229
  %v8231 = vrot.slane %v8226, 4
  %v8233 = vshrl.u32 %v7690, 16
  %v8235 = vrot.slane %v8233, 7
  %v8236 = vshll.u32 %v7690, 16
  %v8238 = vor.u32 %v8235, %v8236
  %v8239 = vsel %vm3463, %v8231, %v8238
  %v8240 = vrot.slane %v8235, 4
  %v8242 = vshrl.u32 %v7691, 16
  %v8244 = vrot.slane %v8242, 7
  %v8245 = vshll.u32 %v7691, 16
  %v8247 = vor.u32 %v8244, %v8245
  %v8248 = vsel %vm3463, %v8240, %v8247
  %v8249 = vrot.slane %v8244, 4
  %v8251 = vshrl.u32 %v7692, 16
  %v8253 = vrot.slane %v8251, 7
  %v8254 = vshll.u32 %v7692, 16
  %v8256 = vor.u32 %v8253, %v8254
  %v8257 = vsel %vm3463, %v8249, %v8256
  %v8321 = vld [vmem:[#allocation2] sm:$0xf]
  %v8322 = vsel %vm4094, %v7699, %v8321
  %8323 = vst [vmem:[#allocation2] sm:$0xf] %v8322
  %8324 = vst [vmem:[#allocation2 + $0x4] sm:$0xf] %v7708
  %8325 = vst [vmem:[#allocation2 + $0x8] sm:$0xf] %v7717
  %8326 = vst [vmem:[#allocation2 + $0xc] sm:$0xf] %v7726
  %8327 = vst [vmem:[#allocation2 + $0x10] sm:$0xf] %v7735
  %8328 = vst [vmem:[#allocation2 + $0x14] sm:$0xf] %v7744
  %8329 = vst [vmem:[#allocation2 + $0x18] sm:$0xf] %v7753
  %8330 = vst [vmem:[#allocation2 + $0x1c] sm:$0xf] %v7762
  %8331 = vst [vmem:[#allocation2 + $0x20] sm:$0xf] %v7771
  %8332 = vst [vmem:[#allocation2 + $0x24] sm:$0xf] %v7780
  %8333 = vst [vmem:[#allocation2 + $0x28] sm:$0xf] %v7789
  %8334 = vst [vmem:[#allocation2 + $0x2c] sm:$0xf] %v7798
  %8335 = vst [vmem:[#allocation2 + $0x30] sm:$0xf] %v7807
  %8336 = vst [vmem:[#allocation2 + $0x34] sm:$0xf] %v7816
  %8337 = vst [vmem:[#allocation2 + $0x38] sm:$0xf] %v7825
  %8338 = vst [vmem:[#allocation2 + $0x3c] sm:$0xf] %v7834
  %8339 = vst [vmem:[#allocation2 + $0x40] sm:$0xf] %v7843
  %8340 = vst [vmem:[#allocation2 + $0x44] sm:$0xf] %v7852
  %8341 = vst [vmem:[#allocation2 + $0x48] sm:$0xf] %v7861
  %8342 = vst [vmem:[#allocation2 + $0x4c] sm:$0xf] %v7870
  %8343 = vst [vmem:[#allocation2 + $0x50] sm:$0xf] %v7879
  %8344 = vst [vmem:[#allocation2 + $0x54] sm:$0xf] %v7888
  %8345 = vst [vmem:[#allocation2 + $0x58] sm:$0xf] %v7897
  %8346 = vst [vmem:[#allocation2 + $0x5c] sm:$0xf] %v7906
  %8347 = vst [vmem:[#allocation2 + $0x60] sm:$0xf] %v7915
  %8348 = vst [vmem:[#allocation2 + $0x64] sm:$0xf] %v7924
  %8349 = vst [vmem:[#allocation2 + $0x68] sm:$0xf] %v7933
  %8350 = vst [vmem:[#allocation2 + $0x6c] sm:$0xf] %v7942
  %8351 = vst [vmem:[#allocation2 + $0x70] sm:$0xf] %v7951
  %8352 = vst [vmem:[#allocation2 + $0x74] sm:$0xf] %v7960
  %8353 = vst [vmem:[#allocation2 + $0x78] sm:$0xf] %v7969
  %8354 = vst [vmem:[#allocation2 + $0x7c] sm:$0xf] %v7978
  %8355 = vst [vmem:[#allocation2 + $0x80] sm:$0xf] %v7987
  %8356 = vst [vmem:[#allocation2 + $0x84] sm:$0xf] %v7996
  %8357 = vst [vmem:[#allocation2 + $0x88] sm:$0xf] %v8005
  %8358 = vst [vmem:[#allocation2 + $0x8c] sm:$0xf] %v8014
  %8359 = vst [vmem:[#allocation2 + $0x90] sm:$0xf] %v8023
  %8360 = vst [vmem:[#allocation2 + $0x94] sm:$0xf] %v8032
  %8361 = vst [vmem:[#allocation2 + $0x98] sm:$0xf] %v8041
  %8362 = vst [vmem:[#allocation2 + $0x9c] sm:$0xf] %v8050
  %8363 = vst [vmem:[#allocation2 + $0xa0] sm:$0xf] %v8059
  %8364 = vst [vmem:[#allocation2 + $0xa4] sm:$0xf] %v8068
  %8365 = vst [vmem:[#allocation2 + $0xa8] sm:$0xf] %v8077
  %8366 = vst [vmem:[#allocation2 + $0xac] sm:$0xf] %v8086
  %8367 = vst [vmem:[#allocation2 + $0xb0] sm:$0xf] %v8095
  %8368 = vst [vmem:[#allocation2 + $0xb4] sm:$0xf] %v8104
  %8369 = vst [vmem:[#allocation2 + $0xb8] sm:$0xf] %v8113
  %8370 = vst [vmem:[#allocation2 + $0xbc] sm:$0xf] %v8122
  %8371 = vst [vmem:[#allocation2 + $0xc0] sm:$0xf] %v8131
  %8372 = vst [vmem:[#allocation2 + $0xc4] sm:$0xf] %v8140
  %8373 = vst [vmem:[#allocation2 + $0xc8] sm:$0xf] %v8149
  %8374 = vst [vmem:[#allocation2 + $0xcc] sm:$0xf] %v8158
  %8375 = vst [vmem:[#allocation2 + $0xd0] sm:$0xf] %v8167
  %8376 = vst [vmem:[#allocation2 + $0xd4] sm:$0xf] %v8176
  %8377 = vst [vmem:[#allocation2 + $0xd8] sm:$0xf] %v8185
  %8378 = vst [vmem:[#allocation2 + $0xdc] sm:$0xf] %v8194
  %8379 = vst [vmem:[#allocation2 + $0xe0] sm:$0xf] %v8203
  %8380 = vst [vmem:[#allocation2 + $0xe4] sm:$0xf] %v8212
  %8381 = vst [vmem:[#allocation2 + $0xe8] sm:$0xf] %v8221
  %8382 = vst [vmem:[#allocation2 + $0xec] sm:$0xf] %v8230
  %8383 = vst [vmem:[#allocation2 + $0xf0] sm:$0xf] %v8239
  %8384 = vst [vmem:[#allocation2 + $0xf4] sm:$0xf] %v8248
  %v8385 = vld [vmem:[#allocation2 + $0xf8] sm:$0xf]
  %v8386 = vsel %vm4160, %v8257, %v8385
  %8387 = vst [vmem:[#allocation2 + $0xf8] sm:$0xf] %v8386
  %v8388 = vld [vmem:[#allocation2] sm:$0xf]
  %v8389 = vld [vmem:[#allocation2 + $0x4] sm:$0xf]
  %v8390 = vld [vmem:[#allocation2 + $0x8] sm:$0xf]
  %v8391 = vld [vmem:[#allocation2 + $0xc] sm:$0xf]
  %v8392 = vld [vmem:[#allocation2 + $0x10] sm:$0xf]
  %v8393 = vld [vmem:[#allocation2 + $0x14] sm:$0xf]
  %v8394 = vld [vmem:[#allocation2 + $0x18] sm:$0xf]
  %v8395 = vld [vmem:[#allocation2 + $0x1c] sm:$0xf]
  %v8396 = vld [vmem:[#allocation2 + $0x20] sm:$0xf]
  %v8397 = vld [vmem:[#allocation2 + $0x24] sm:$0xf]
  %v8398 = vld [vmem:[#allocation2 + $0x28] sm:$0xf]
  %v8399 = vld [vmem:[#allocation2 + $0x2c] sm:$0xf]
  %v8400 = vld [vmem:[#allocation2 + $0x30] sm:$0xf]
  %v8401 = vld [vmem:[#allocation2 + $0x34] sm:$0xf]
  %v8402 = vld [vmem:[#allocation2 + $0x38] sm:$0xf]
  %v8403 = vld [vmem:[#allocation2 + $0x3c] sm:$0xf]
  %v8404 = vld [vmem:[#allocation2 + $0x40] sm:$0xf]
  %v8405 = vld [vmem:[#allocation2 + $0x44] sm:$0xf]
  %v8406 = vld [vmem:[#allocation2 + $0x48] sm:$0xf]
  %v8407 = vld [vmem:[#allocation2 + $0x4c] sm:$0xf]
  %v8408 = vld [vmem:[#allocation2 + $0x50] sm:$0xf]
  %v8409 = vld [vmem:[#allocation2 + $0x54] sm:$0xf]
  %v8410 = vld [vmem:[#allocation2 + $0x58] sm:$0xf]
  %v8411 = vld [vmem:[#allocation2 + $0x5c] sm:$0xf]
  %v8412 = vld [vmem:[#allocation2 + $0x60] sm:$0xf]
  %v8413 = vld [vmem:[#allocation2 + $0x64] sm:$0xf]
  %v8414 = vld [vmem:[#allocation2 + $0x68] sm:$0xf]
  %v8415 = vld [vmem:[#allocation2 + $0x6c] sm:$0xf]
  %v8416 = vld [vmem:[#allocation2 + $0x70] sm:$0xf]
  %v8417 = vld [vmem:[#allocation2 + $0x74] sm:$0xf]
  %v8418 = vld [vmem:[#allocation2 + $0x78] sm:$0xf]
  %v8419 = vld [vmem:[#allocation2 + $0x7c] sm:$0xf]
  %v8420 = vld [vmem:[#allocation2 + $0x80] sm:$0xf]
  %v8421 = vld [vmem:[#allocation2 + $0x84] sm:$0xf]
  %v8422 = vld [vmem:[#allocation2 + $0x88] sm:$0xf]
  %v8423 = vld [vmem:[#allocation2 + $0x8c] sm:$0xf]
  %v8424 = vld [vmem:[#allocation2 + $0x90] sm:$0xf]
  %v8425 = vld [vmem:[#allocation2 + $0x94] sm:$0xf]
  %v8426 = vld [vmem:[#allocation2 + $0x98] sm:$0xf]
  %v8427 = vld [vmem:[#allocation2 + $0x9c] sm:$0xf]
  %v8428 = vld [vmem:[#allocation2 + $0xa0] sm:$0xf]
  %v8429 = vld [vmem:[#allocation2 + $0xa4] sm:$0xf]
  %v8430 = vld [vmem:[#allocation2 + $0xa8] sm:$0xf]
  %v8431 = vld [vmem:[#allocation2 + $0xac] sm:$0xf]
  %v8432 = vld [vmem:[#allocation2 + $0xb0] sm:$0xf]
  %v8433 = vld [vmem:[#allocation2 + $0xb4] sm:$0xf]
  %v8434 = vld [vmem:[#allocation2 + $0xb8] sm:$0xf]
  %v8435 = vld [vmem:[#allocation2 + $0xbc] sm:$0xf]
  %v8436 = vld [vmem:[#allocation2 + $0xc0] sm:$0xf]
  %v8437 = vld [vmem:[#allocation2 + $0xc4] sm:$0xf]
  %v8438 = vld [vmem:[#allocation2 + $0xc8] sm:$0xf]
  %v8439 = vld [vmem:[#allocation2 + $0xcc] sm:$0xf]
  %v8440 = vld [vmem:[#allocation2 + $0xd0] sm:$0xf]
  %v8441 = vld [vmem:[#allocation2 + $0xd4] sm:$0xf]
  %v8442 = vld [vmem:[#allocation2 + $0xd8] sm:$0xf]
  %v8443 = vld [vmem:[#allocation2 + $0xdc] sm:$0xf]
  %v8444 = vld [vmem:[#allocation2 + $0xe0] sm:$0xf]
  %v8445 = vld [vmem:[#allocation2 + $0xe4] sm:$0xf]
  %v8446 = vld [vmem:[#allocation2 + $0xe8] sm:$0xf]
  %v8447 = vld [vmem:[#allocation2 + $0xec] sm:$0xf]
  %v8448 = vld [vmem:[#allocation2 + $0xf0] sm:$0xf]
  %v8449 = vld [vmem:[#allocation2 + $0xf4] sm:$0xf]
  %v8450 = vld [vmem:[#allocation2 + $0xf8] sm:$0x7]
  %v8451 = vld [vmem:[%s7] sm:$0xf]
  %v8452 = vld [vmem:[%s7 + $0x4] sm:$0xf]
  %v8453 = vld [vmem:[%s7 + $0x8] sm:$0xf]
  %v8454 = vld [vmem:[%s7 + $0xc] sm:$0xf]
  %v8455 = vld [vmem:[%s7 + $0x10] sm:$0xf]
  %v8456 = vld [vmem:[%s7 + $0x14] sm:$0xf]
  %v8457 = vld [vmem:[%s7 + $0x18] sm:$0xf]
  %v8458 = vld [vmem:[%s7 + $0x1c] sm:$0xf]
  %v8459 = vld [vmem:[%s7 + $0x20] sm:$0xf]
  %v8460 = vld [vmem:[%s7 + $0x24] sm:$0xf]
  %v8461 = vld [vmem:[%s7 + $0x28] sm:$0xf]
  %v8462 = vld [vmem:[%s7 + $0x2c] sm:$0xf]
  %v8463 = vld [vmem:[%s7 + $0x30] sm:$0xf]
  %v8464 = vld [vmem:[%s7 + $0x34] sm:$0xf]
  %v8465 = vld [vmem:[%s7 + $0x38] sm:$0xf]
  %v8466 = vld [vmem:[%s7 + $0x3c] sm:$0xf]
  %v8530 = vunpack.c.l.b16 %v8388
  %v8531 = vunpack.c.l.b16 %v8389
  %v8532 = vunpack.c.l.b16 %v8390
  %v8533 = vunpack.c.l.b16 %v8391
  %v8534 = vunpack.c.l.b16 %v8392
  %v8535 = vunpack.c.l.b16 %v8393
  %v8536 = vunpack.c.l.b16 %v8394
  %v8537 = vunpack.c.l.b16 %v8395
  %v8538 = vunpack.c.l.b16 %v8396
  %v8539 = vunpack.c.l.b16 %v8397
  %v8540 = vunpack.c.l.b16 %v8398
  %v8541 = vunpack.c.l.b16 %v8399
  %v8542 = vunpack.c.l.b16 %v8400
  %v8543 = vunpack.c.l.b16 %v8401
  %v8544 = vunpack.c.l.b16 %v8402
  %v8545 = vunpack.c.l.b16 %v8403
  %v8546 = vunpack.c.l.b16 %v8404
  %v8547 = vunpack.c.l.b16 %v8405
  %v8548 = vunpack.c.l.b16 %v8406
  %v8549 = vunpack.c.l.b16 %v8407
  %v8550 = vunpack.c.l.b16 %v8408
  %v8551 = vunpack.c.l.b16 %v8409
  %v8552 = vunpack.c.l.b16 %v8410
  %v8553 = vunpack.c.l.b16 %v8411
  %v8554 = vunpack.c.l.b16 %v8412
  %v8555 = vunpack.c.l.b16 %v8413
  %v8556 = vunpack.c.l.b16 %v8414
  %v8557 = vunpack.c.l.b16 %v8415
  %v8558 = vunpack.c.l.b16 %v8416
  %v8559 = vunpack.c.l.b16 %v8417
  %v8560 = vunpack.c.l.b16 %v8418
  %v8561 = vunpack.c.l.b16 %v8419
  %v8562 = vunpack.c.l.b16 %v8420
  %v8563 = vunpack.c.l.b16 %v8421
  %v8564 = vunpack.c.l.b16 %v8422
  %v8565 = vunpack.c.l.b16 %v8423
  %v8566 = vunpack.c.l.b16 %v8424
  %v8567 = vunpack.c.l.b16 %v8425
  %v8568 = vunpack.c.l.b16 %v8426
  %v8569 = vunpack.c.l.b16 %v8427
  %v8570 = vunpack.c.l.b16 %v8428
  %v8571 = vunpack.c.l.b16 %v8429
  %v8572 = vunpack.c.l.b16 %v8430
  %v8573 = vunpack.c.l.b16 %v8431
  %v8574 = vunpack.c.l.b16 %v8432
  %v8575 = vunpack.c.l.b16 %v8433
  %v8576 = vunpack.c.l.b16 %v8434
  %v8577 = vunpack.c.l.b16 %v8435
  %v8578 = vunpack.c.l.b16 %v8436
  %v8579 = vunpack.c.l.b16 %v8437
  %v8580 = vunpack.c.l.b16 %v8438
  %v8581 = vunpack.c.l.b16 %v8439
  %v8582 = vunpack.c.l.b16 %v8440
  %v8583 = vunpack.c.l.b16 %v8441
  %v8584 = vunpack.c.l.b16 %v8442
  %v8585 = vunpack.c.l.b16 %v8443
  %v8586 = vunpack.c.l.b16 %v8444
  %v8587 = vunpack.c.l.b16 %v8445
  %v8588 = vunpack.c.l.b16 %v8446
  %v8589 = vunpack.c.l.b16 %v8447
  %v8590 = vunpack.c.l.b16 %v8448
  %v8591 = vunpack.c.l.b16 %v8449
  %v8592 = vunpack.c.l.b16 %v8450
  %v8593 = vpack.c.b16 %v8531, %v8530
  %v8594 = vpack.c.b16 %v8533, %v8532
  %v8595 = vpack.c.b16 %v8535, %v8534
  %v8596 = vpack.c.b16 %v8537, %v8536
  %v8597 = vpack.c.b16 %v8539, %v8538
  %v8598 = vpack.c.b16 %v8541, %v8540
  %v8599 = vpack.c.b16 %v8543, %v8542
  %v8600 = vpack.c.b16 %v8545, %v8544
  %v8601 = vpack.c.b16 %v8547, %v8546
  %v8602 = vpack.c.b16 %v8549, %v8548
  %v8603 = vpack.c.b16 %v8551, %v8550
  %v8604 = vpack.c.b16 %v8553, %v8552
  %v8605 = vpack.c.b16 %v8555, %v8554
  %v8606 = vpack.c.b16 %v8557, %v8556
  %v8607 = vpack.c.b16 %v8559, %v8558
  %v8608 = vpack.c.b16 %v8561, %v8560
  %v8609 = vpack.c.b16 %v8563, %v8562
  %v8610 = vpack.c.b16 %v8565, %v8564
  %v8611 = vpack.c.b16 %v8567, %v8566
  %v8612 = vpack.c.b16 %v8569, %v8568
  %v8613 = vpack.c.b16 %v8571, %v8570
  %v8614 = vpack.c.b16 %v8573, %v8572
  %v8615 = vpack.c.b16 %v8575, %v8574
  %v8616 = vpack.c.b16 %v8577, %v8576
  %v8617 = vpack.c.b16 %v8579, %v8578
  %v8618 = vpack.c.b16 %v8581, %v8580
  %v8619 = vpack.c.b16 %v8583, %v8582
  %v8620 = vpack.c.b16 %v8585, %v8584
  %v8621 = vpack.c.b16 %v8587, %v8586
  %v8622 = vpack.c.b16 %v8589, %v8588
  %v8623 = vpack.c.b16 %v8591, %v8590
  %v8624 = vpack.c.b16 %v8592, %v8592
  %v8673 = vunpack.c.l.b16 %v8451
  %v8674 = vunpack.c.l.b16 %v8452
  %v8675 = vunpack.c.l.b16 %v8453
  %v8676 = vunpack.c.l.b16 %v8454
  %v8677 = vunpack.c.l.b16 %v8455
  %v8678 = vunpack.c.l.b16 %v8456
  %v8679 = vunpack.c.l.b16 %v8457
  %v8680 = vunpack.c.l.b16 %v8458
  %v8681 = vunpack.c.l.b16 %v8459
  %v8682 = vunpack.c.l.b16 %v8460
  %v8683 = vunpack.c.l.b16 %v8461
  %v8684 = vunpack.c.l.b16 %v8462
  %v8685 = vunpack.c.l.b16 %v8463
  %v8686 = vunpack.c.l.b16 %v8464
  %v8687 = vunpack.c.l.b16 %v8465
  %v8688 = vunpack.c.l.b16 %v8466
  %v8689 = vpack.c.b16 %v8674, %v8673
  %v8690 = vpack.c.b16 %v8676, %v8675
  %v8691 = vpack.c.b16 %v8678, %v8677
  %v8692 = vpack.c.b16 %v8680, %v8679
  %v8693 = vpack.c.b16 %v8682, %v8681
  %v8694 = vpack.c.b16 %v8684, %v8683
  %v8695 = vpack.c.b16 %v8686, %v8685
  %v8696 = vpack.c.b16 %v8688, %v8687
  %8705 = vmatprep.subr.bf16.mxu0 0
  %8706 = vmatpush1.bf16.msra.mxu0 %v8689
  %8707 = vmatprep.subr.bf16.mxu0 0
  %8708 = vmatpush1.bf16.msra.mxu0 %v8690
  %8709 = vmatprep.subr.bf16.mxu0 0
  %8710 = vmatpush1.bf16.msra.mxu0 %v8691
  %8711 = vmatprep.subr.bf16.mxu0 0
  %8712 = vmatpush1.bf16.msra.mxu0 %v8692
  %8713 = vmatprep.subr.bf16.mxu0 0
  %8714 = vmatpush1.bf16.msra.mxu0 %v8693
  %8715 = vmatprep.subr.bf16.mxu0 0
  %8716 = vmatpush1.bf16.msra.mxu0 %v8694
  %8717 = vmatprep.subr.bf16.mxu0 0
  %8718 = vmatpush1.bf16.msra.mxu0 %v8695
  %8719 = vmatprep.subr.bf16.mxu0 0
  %8720 = vmatpush1.bf16.msra.mxu0 %v8696
  %8721 = vmatprep.subr.bf16.mxu0 0
  %8722 = vmatpush1.bf16.msra.mxu0 0
  %8723 = vmatprep.subr.bf16.mxu0 0
  %8724 = vmatpush1.bf16.msra.mxu0 0
  %8725 = vmatprep.subr.bf16.mxu0 0
  %8726 = vmatpush1.bf16.msra.mxu0 0
  %8727 = vmatprep.subr.bf16.mxu0 0
  %8728 = vmatpush1.bf16.msra.mxu0 0
  %8729 = vmatprep.subr.bf16.mxu0 0
  %8730 = vmatpush1.bf16.msra.mxu0 0
  %8731 = vmatprep.subr.bf16.mxu0 0
  %8732 = vmatpush1.bf16.msra.mxu0 0
  %8733 = vmatprep.subr.bf16.mxu0 0
  %8734 = vmatpush1.bf16.msra.mxu0 0
  %8735 = vmatprep.subr.bf16.mxu0 0
  %8736 = vmatpush1.bf16.msra.mxu0 0
  %8737 = vmatprep.mubr.bf16.mxu0 0
  %8738 = vmatmul.mubr.bf16.gmra.mrb[0].mxu0 %v8593
  %v8739 = vpop.f32.mrb[0].mxu0
  %v8740 = vadd.f32 0.0, %v8739
  %v8741 = vpop.f32.mrb[0].mxu0
  %v8742 = vpop.f32.mrb[0].mxu0
  %v8743 = vadd.f32 0.0, %v8742
  %v8744 = vpop.f32.mrb[0].mxu0
  %8745 = vmatprep.mubr.bf16.mxu0 0
  %8746 = vmatmul.mubr.bf16.gmra.mrb[0].mxu0 %v8594
  %v8747 = vpop.f32.mrb[0].mxu0
  %v8748 = vadd.f32 0.0, %v8747
  %v8749 = vpop.f32.mrb[0].mxu0
  %v8750 = vpop.f32.mrb[0].mxu0
  %v8751 = vadd.f32 0.0, %v8750
  %v8752 = vpop.f32.mrb[0].mxu0
  %8753 = vmatprep.mubr.bf16.mxu0 0
  %8754 = vmatmul.mubr.bf16.gmra.mrb[0].mxu0 %v8595
  %v8755 = vpop.f32.mrb[0].mxu0
  %v8756 = vadd.f32 0.0, %v8755
  %v8757 = vpop.f32.mrb[0].mxu0
  %v8758 = vpop.f32.mrb[0].mxu0
  %v8759 = vadd.f32 0.0, %v8758
  %v8760 = vpop.f32.mrb[0].mxu0
  %8761 = vmatprep.mubr.bf16.mxu0 0
  %8762 = vmatmul.mubr.bf16.gmra.mrb[0].mxu0 %v8596
  %v8763 = vpop.f32.mrb[0].mxu0
  %v8764 = vadd.f32 0.0, %v8763
  %v8765 = vpop.f32.mrb[0].mxu0
  %v8766 = vpop.f32.mrb[0].mxu0
  %v8767 = vadd.f32 0.0, %v8766
  %v8768 = vpop.f32.mrb[0].mxu0
  %8769 = vmatprep.mubr.bf16.mxu0 0
  %8770 = vmatmul.mubr.bf16.gmra.mrb[0].mxu0 %v8597
  %v8771 = vpop.f32.mrb[0].mxu0
  %v8772 = vadd.f32 0.0, %v8771
  %v8773 = vpop.f32.mrb[0].mxu0
  %v8774 = vpop.f32.mrb[0].mxu0
  %v8775 = vadd.f32 0.0, %v8774
  %v8776 = vpop.f32.mrb[0].mxu0
  %8777 = vmatprep.mubr.bf16.mxu0 0
  %8778 = vmatmul.mubr.bf16.gmra.mrb[0].mxu0 %v8598
  %v8779 = vpop.f32.mrb[0].mxu0
  %v8780 = vadd.f32 0.0, %v8779
  %v8781 = vpop.f32.mrb[0].mxu0
  %v8782 = vpop.f32.mrb[0].mxu0
  %v8783 = vadd.f32 0.0, %v8782
  %v8784 = vpop.f32.mrb[0].mxu0
  %8785 = vmatprep.mubr.bf16.mxu0 0
  %8786 = vmatmul.mubr.bf16.gmra.mrb[0].mxu0 %v8599
  %v8787 = vpop.f32.mrb[0].mxu0
  %v8788 = vadd.f32 0.0, %v8787
  %v8789 = vpop.f32.mrb[0].mxu0
  %v8790 = vpop.f32.mrb[0].mxu0
  %v8791 = vadd.f32 0.0, %v8790
  %v8792 = vpop.f32.mrb[0].mxu0
  %8793 = vmatprep.mubr.bf16.mxu0 0
  %8794 = vmatmul.mubr.bf16.gmra.mrb[0].mxu0 %v8600
  %v8795 = vpop.f32.mrb[0].mxu0
  %v8796 = vadd.f32 0.0, %v8795
  %v8797 = vpop.f32.mrb[0].mxu0
  %v8798 = vpop.f32.mrb[0].mxu0
  %v8799 = vadd.f32 0.0, %v8798
  %v8800 = vpop.f32.mrb[0].mxu0
  %8801 = vmatprep.mubr.bf16.mxu0 0
  %8802 = vmatmul.mubr.bf16.gmra.mrb[0].mxu0 %v8601
  %v8803 = vpop.f32.mrb[0].mxu0
  %v8804 = vadd.f32 0.0, %v8803
  %v8805 = vpop.f32.mrb[0].mxu0
  %v8806 = vpop.f32.mrb[0].mxu0
  %v8807 = vadd.f32 0.0, %v8806
  %v8808 = vpop.f32.mrb[0].mxu0
  %8809 = vmatprep.mubr.bf16.mxu0 0
  %8810 = vmatmul.mubr.bf16.gmra.mrb[0].mxu0 %v8602
  %v8811 = vpop.f32.mrb[0].mxu0
  %v8812 = vadd.f32 0.0, %v8811
  %v8813 = vpop.f32.mrb[0].mxu0
  %v8814 = vpop.f32.mrb[0].mxu0
  %v8815 = vadd.f32 0.0, %v8814
  %v8816 = vpop.f32.mrb[0].mxu0
  %8817 = vmatprep.mubr.bf16.mxu0 0
  %8818 = vmatmul.mubr.bf16.gmra.mrb[0].mxu0 %v8603
  %v8819 = vpop.f32.mrb[0].mxu0
  %v8820 = vadd.f32 0.0, %v8819
  %v8821 = vpop.f32.mrb[0].mxu0
  %v8822 = vpop.f32.mrb[0].mxu0
  %v8823 = vadd.f32 0.0, %v8822
  %v8824 = vpop.f32.mrb[0].mxu0
  %8825 = vmatprep.mubr.bf16.mxu0 0
  %8826 = vmatmul.mubr.bf16.gmra.mrb[0].mxu0 %v8604
  %v8827 = vpop.f32.mrb[0].mxu0
  %v8828 = vadd.f32 0.0, %v8827
  %v8829 = vpop.f32.mrb[0].mxu0
  %v8830 = vpop.f32.mrb[0].mxu0
  %v8831 = vadd.f32 0.0, %v8830
  %v8832 = vpop.f32.mrb[0].mxu0
  %8833 = vmatprep.mubr.bf16.mxu0 0
  %8834 = vmatmul.mubr.bf16.gmra.mrb[0].mxu0 %v8605
  %v8835 = vpop.f32.mrb[0].mxu0
  %v8836 = vadd.f32 0.0, %v8835
  %v8837 = vpop.f32.mrb[0].mxu0
  %v8838 = vpop.f32.mrb[0].mxu0
  %v8839 = vadd.f32 0.0, %v8838
  %v8840 = vpop.f32.mrb[0].mxu0
  %8841 = vmatprep.mubr.bf16.mxu0 0
  %8842 = vmatmul.mubr.bf16.gmra.mrb[0].mxu0 %v8606
  %v8843 = vpop.f32.mrb[0].mxu0
  %v8844 = vadd.f32 0.0, %v8843
  %v8845 = vpop.f32.mrb[0].mxu0
  %v8846 = vpop.f32.mrb[0].mxu0
  %v8847 = vadd.f32 0.0, %v8846
  %v8848 = vpop.f32.mrb[0].mxu0
  %8849 = vmatprep.mubr.bf16.mxu0 0
  %8850 = vmatmul.mubr.bf16.gmra.mrb[0].mxu0 %v8607
  %v8851 = vpop.f32.mrb[0].mxu0
  %v8852 = vadd.f32 0.0, %v8851
  %v8853 = vpop.f32.mrb[0].mxu0
  %v8854 = vpop.f32.mrb[0].mxu0
  %v8855 = vadd.f32 0.0, %v8854
  %v8856 = vpop.f32.mrb[0].mxu0
  %8857 = vmatprep.mubr.bf16.mxu0 0
  %8858 = vmatmul.mubr.bf16.gmra.mrb[0].mxu0 %v8608
  %v8859 = vpop.f32.mrb[0].mxu0
  %v8860 = vadd.f32 0.0, %v8859
  %v8861 = vpop.f32.mrb[0].mxu0
  %v8862 = vpop.f32.mrb[0].mxu0
  %v8863 = vadd.f32 0.0, %v8862
  %v8864 = vpop.f32.mrb[0].mxu0
  %8865 = vmatprep.mubr.bf16.mxu0 0
  %8866 = vmatmul.mubr.bf16.gmra.mrb[0].mxu0 %v8609
  %v8867 = vpop.f32.mrb[0].mxu0
  %v8868 = vadd.f32 0.0, %v8867
  %v8869 = vpop.f32.mrb[0].mxu0
  %v8870 = vpop.f32.mrb[0].mxu0
  %v8871 = vadd.f32 0.0, %v8870
  %v8872 = vpop.f32.mrb[0].mxu0
  %8873 = vmatprep.mubr.bf16.mxu0 0
  %8874 = vmatmul.mubr.bf16.gmra.mrb[0].mxu0 %v8610
  %v8875 = vpop.f32.mrb[0].mxu0
  %v8876 = vadd.f32 0.0, %v8875
  %v8877 = vpop.f32.mrb[0].mxu0
  %v8878 = vpop.f32.mrb[0].mxu0
  %v8879 = vadd.f32 0.0, %v8878
  %v8880 = vpop.f32.mrb[0].mxu0
  %8881 = vmatprep.mubr.bf16.mxu0 0
  %8882 = vmatmul.mubr.bf16.gmra.mrb[0].mxu0 %v8611
  %v8883 = vpop.f32.mrb[0].mxu0
  %v8884 = vadd.f32 0.0, %v8883
  %v8885 = vpop.f32.mrb[0].mxu0
  %v8886 = vpop.f32.mrb[0].mxu0
  %v8887 = vadd.f32 0.0, %v8886
  %v8888 = vpop.f32.mrb[0].mxu0
  %8889 = vmatprep.mubr.bf16.mxu0 0
  %8890 = vmatmul.mubr.bf16.gmra.mrb[0].mxu0 %v8612
  %v8891 = vpop.f32.mrb[0].mxu0
  %v8892 = vadd.f32 0.0, %v8891
  %v8893 = vpop.f32.mrb[0].mxu0
  %v8894 = vpop.f32.mrb[0].mxu0
  %v8895 = vadd.f32 0.0, %v8894
  %v8896 = vpop.f32.mrb[0].mxu0
  %8897 = vmatprep.mubr.bf16.mxu0 0
  %8898 = vmatmul.mubr.bf16.gmra.mrb[0].mxu0 %v8613
  %v8899 = vpop.f32.mrb[0].mxu0
  %v8900 = vadd.f32 0.0, %v8899
  %v8901 = vpop.f32.mrb[0].mxu0
  %v8902 = vpop.f32.mrb[0].mxu0
  %v8903 = vadd.f32 0.0, %v8902
  %v8904 = vpop.f32.mrb[0].mxu0
  %8905 = vmatprep.mubr.bf16.mxu0 0
  %8906 = vmatmul.mubr.bf16.gmra.mrb[0].mxu0 %v8614
  %v8907 = vpop.f32.mrb[0].mxu0
  %v8908 = vadd.f32 0.0, %v8907
  %v8909 = vpop.f32.mrb[0].mxu0
  %v8910 = vpop.f32.mrb[0].mxu0
  %v8911 = vadd.f32 0.0, %v8910
  %v8912 = vpop.f32.mrb[0].mxu0
  %8913 = vmatprep.mubr.bf16.mxu0 0
  %8914 = vmatmul.mubr.bf16.gmra.mrb[0].mxu0 %v8615
  %v8915 = vpop.f32.mrb[0].mxu0
  %v8916 = vadd.f32 0.0, %v8915
  %v8917 = vpop.f32.mrb[0].mxu0
  %v8918 = vpop.f32.mrb[0].mxu0
  %v8919 = vadd.f32 0.0, %v8918
  %v8920 = vpop.f32.mrb[0].mxu0
  %8921 = vmatprep.mubr.bf16.mxu0 0
  %8922 = vmatmul.mubr.bf16.gmra.mrb[0].mxu0 %v8616
  %v8923 = vpop.f32.mrb[0].mxu0
  %v8924 = vadd.f32 0.0, %v8923
  %v8925 = vpop.f32.mrb[0].mxu0
  %v8926 = vpop.f32.mrb[0].mxu0
  %v8927 = vadd.f32 0.0, %v8926
  %v8928 = vpop.f32.mrb[0].mxu0
  %8929 = vmatprep.mubr.bf16.mxu0 0
  %8930 = vmatmul.mubr.bf16.gmra.mrb[0].mxu0 %v8617
  %v8931 = vpop.f32.mrb[0].mxu0
  %v8932 = vadd.f32 0.0, %v8931
  %v8933 = vpop.f32.mrb[0].mxu0
  %v8934 = vpop.f32.mrb[0].mxu0
  %v8935 = vadd.f32 0.0, %v8934
  %v8936 = vpop.f32.mrb[0].mxu0
  %8937 = vmatprep.mubr.bf16.mxu0 0
  %8938 = vmatmul.mubr.bf16.gmra.mrb[0].mxu0 %v8618
  %v8939 = vpop.f32.mrb[0].mxu0
  %v8940 = vadd.f32 0.0, %v8939
  %v8941 = vpop.f32.mrb[0].mxu0
  %v8942 = vpop.f32.mrb[0].mxu0
  %v8943 = vadd.f32 0.0, %v8942
  %v8944 = vpop.f32.mrb[0].mxu0
  %8945 = vmatprep.mubr.bf16.mxu0 0
  %8946 = vmatmul.mubr.bf16.gmra.mrb[0].mxu0 %v8619
  %v8947 = vpop.f32.mrb[0].mxu0
  %v8948 = vadd.f32 0.0, %v8947
  %v8949 = vpop.f32.mrb[0].mxu0
  %v8950 = vpop.f32.mrb[0].mxu0
  %v8951 = vadd.f32 0.0, %v8950
  %v8952 = vpop.f32.mrb[0].mxu0
  %8953 = vmatprep.mubr.bf16.mxu0 0
  %8954 = vmatmul.mubr.bf16.gmra.mrb[0].mxu0 %v8620
  %v8955 = vpop.f32.mrb[0].mxu0
  %v8956 = vadd.f32 0.0, %v8955
  %v8957 = vpop.f32.mrb[0].mxu0
  %v8958 = vpop.f32.mrb[0].mxu0
  %v8959 = vadd.f32 0.0, %v8958
  %v8960 = vpop.f32.mrb[0].mxu0
  %8961 = vmatprep.mubr.bf16.mxu0 0
  %8962 = vmatmul.mubr.bf16.gmra.mrb[0].mxu0 %v8621
  %v8963 = vpop.f32.mrb[0].mxu0
  %v8964 = vadd.f32 0.0, %v8963
  %v8965 = vpop.f32.mrb[0].mxu0
  %v8966 = vpop.f32.mrb[0].mxu0
  %v8967 = vadd.f32 0.0, %v8966
  %v8968 = vpop.f32.mrb[0].mxu0
  %8969 = vmatprep.mubr.bf16.mxu0 0
  %8970 = vmatmul.mubr.bf16.gmra.mrb[0].mxu0 %v8622
  %v8971 = vpop.f32.mrb[0].mxu0
  %v8972 = vadd.f32 0.0, %v8971
  %v8973 = vpop.f32.mrb[0].mxu0
  %v8974 = vpop.f32.mrb[0].mxu0
  %v8975 = vadd.f32 0.0, %v8974
  %v8976 = vpop.f32.mrb[0].mxu0
  %8977 = vmatprep.mubr.bf16.mxu0 0
  %8978 = vmatmul.mubr.bf16.gmra.mrb[0].mxu0 %v8623
  %v8979 = vpop.f32.mrb[0].mxu0
  %v8980 = vadd.f32 0.0, %v8979
  %v8981 = vpop.f32.mrb[0].mxu0
  %v8982 = vpop.f32.mrb[0].mxu0
  %v8983 = vadd.f32 0.0, %v8982
  %v8984 = vpop.f32.mrb[0].mxu0
  %8985 = vmatprep.mubr.bf16.mxu0 0
  %8986 = vmatmul.mubr.bf16.gmra.mrb[0].mxu0 %v8624
  %v8987 = vpop.f32.mrb[0].mxu0
  %v8988 = vadd.f32 0.0, %v8987
  %v8989 = vpop.f32.mrb[0].mxu0
  %v8990 = vpop.f32.mrb[0].mxu0
  %v8991 = vpop.f32.mrb[0].mxu0
  %8992 = vdwg.mxu0
  %8993 = vst [vmem:[#allocation4] sm:$0xff] %v8740
  %8994 = vst [vmem:[#allocation4 + $0x8] sm:$0xff] %v8743
  %8995 = vst [vmem:[#allocation4 + $0x10] sm:$0xff] %v8748
  %8996 = vst [vmem:[#allocation4 + $0x18] sm:$0xff] %v8751
  %8997 = vst [vmem:[#allocation4 + $0x20] sm:$0xff] %v8756
  %8998 = vst [vmem:[#allocation4 + $0x28] sm:$0xff] %v8759
  %8999 = vst [vmem:[#allocation4 + $0x30] sm:$0xff] %v8764
  %9000 = vst [vmem:[#allocation4 + $0x38] sm:$0xff] %v8767
  %9001 = vst [vmem:[#allocation4 + $0x40] sm:$0xff] %v8772
  %9002 = vst [vmem:[#allocation4 + $0x48] sm:$0xff] %v8775
  %9003 = vst [vmem:[#allocation4 + $0x50] sm:$0xff] %v8780
  %9004 = vst [vmem:[#allocation4 + $0x58] sm:$0xff] %v8783
  %9005 = vst [vmem:[#allocation4 + $0x60] sm:$0xff] %v8788
  %9006 = vst [vmem:[#allocation4 + $0x68] sm:$0xff] %v8791
  %9007 = vst [vmem:[#allocation4 + $0x70] sm:$0xff] %v8796
  %9008 = vst [vmem:[#allocation4 + $0x78] sm:$0xff] %v8799
  %9009 = vst [vmem:[#allocation4 + $0x80] sm:$0xff] %v8804
  %9010 = vst [vmem:[#allocation4 + $0x88] sm:$0xff] %v8807
  %9011 = vst [vmem:[#allocation4 + $0x90] sm:$0xff] %v8812
  %9012 = vst [vmem:[#allocation4 + $0x98] sm:$0xff] %v8815
  %9013 = vst [vmem:[#allocation4 + $0xa0] sm:$0xff] %v8820
  %9014 = vst [vmem:[#allocation4 + $0xa8] sm:$0xff] %v8823
  %9015 = vst [vmem:[#allocation4 + $0xb0] sm:$0xff] %v8828
  %9016 = vst [vmem:[#allocation4 + $0xb8] sm:$0xff] %v8831
  %9017 = vst [vmem:[#allocation4 + $0xc0] sm:$0xff] %v8836
  %9018 = vst [vmem:[#allocation4 + $0xc8] sm:$0xff] %v8839
  %9019 = vst [vmem:[#allocation4 + $0xd0] sm:$0xff] %v8844
  %9020 = vst [vmem:[#allocation4 + $0xd8] sm:$0xff] %v8847
  %9021 = vst [vmem:[#allocation4 + $0xe0] sm:$0xff] %v8852
  %9022 = vst [vmem:[#allocation4 + $0xe8] sm:$0xff] %v8855
  %9023 = vst [vmem:[#allocation4 + $0xf0] sm:$0xff] %v8860
  %9024 = vst [vmem:[#allocation4 + $0xf8] sm:$0xff] %v8863
  %9025 = vst [vmem:[#allocation4 + $0x100] sm:$0xff] %v8868
  %9026 = vst [vmem:[#allocation4 + $0x108] sm:$0xff] %v8871
  %9027 = vst [vmem:[#allocation4 + $0x110] sm:$0xff] %v8876
  %9028 = vst [vmem:[#allocation4 + $0x118] sm:$0xff] %v8879
  %9029 = vst [vmem:[#allocation4 + $0x120] sm:$0xff] %v8884
  %9030 = vst [vmem:[#allocation4 + $0x128] sm:$0xff] %v8887
  %9031 = vst [vmem:[#allocation4 + $0x130] sm:$0xff] %v8892
  %9032 = vst [vmem:[#allocation4 + $0x138] sm:$0xff] %v8895
  %9033 = vst [vmem:[#allocation4 + $0x140] sm:$0xff] %v8900
  %9034 = vst [vmem:[#allocation4 + $0x148] sm:$0xff] %v8903
  %9035 = vst [vmem:[#allocation4 + $0x150] sm:$0xff] %v8908
  %9036 = vst [vmem:[#allocation4 + $0x158] sm:$0xff] %v8911
  %9037 = vst [vmem:[#allocation4 + $0x160] sm:$0xff] %v8916
  %9038 = vst [vmem:[#allocation4 + $0x168] sm:$0xff] %v8919
  %9039 = vst [vmem:[#allocation4 + $0x170] sm:$0xff] %v8924
  %9040 = vst [vmem:[#allocation4 + $0x178] sm:$0xff] %v8927
  %9041 = vst [vmem:[#allocation4 + $0x180] sm:$0xff] %v8932
  %9042 = vst [vmem:[#allocation4 + $0x188] sm:$0xff] %v8935
  %9043 = vst [vmem:[#allocation4 + $0x190] sm:$0xff] %v8940
  %9044 = vst [vmem:[#allocation4 + $0x198] sm:$0xff] %v8943
  %9045 = vst [vmem:[#allocation4 + $0x1a0] sm:$0xff] %v8948
  %9046 = vst [vmem:[#allocation4 + $0x1a8] sm:$0xff] %v8951
  %9047 = vst [vmem:[#allocation4 + $0x1b0] sm:$0xff] %v8956
  %9048 = vst [vmem:[#allocation4 + $0x1b8] sm:$0xff] %v8959
  %9049 = vst [vmem:[#allocation4 + $0x1c0] sm:$0xff] %v8964
  %9050 = vst [vmem:[#allocation4 + $0x1c8] sm:$0xff] %v8967
  %9051 = vst [vmem:[#allocation4 + $0x1d0] sm:$0xff] %v8972
  %9052 = vst [vmem:[#allocation4 + $0x1d8] sm:$0xff] %v8975
  %9053 = vst [vmem:[#allocation4 + $0x1e0] sm:$0xff] %v8980
  %9054 = vst [vmem:[#allocation4 + $0x1e8] sm:$0xff] %v8983
  %9055 = vst [vmem:[#allocation4 + $0x1f0] sm:$0x3f] %v8988
  %v9056 = vld [vmem:[#allocation4] sm:$0xff]
  %v9057 = vld [vmem:[#allocation4 + $0x8] sm:$0xff]
  %v9058 = vld [vmem:[#allocation4 + $0x10] sm:$0xff]
  %v9059 = vld [vmem:[#allocation4 + $0x18] sm:$0xff]
  %v9060 = vld [vmem:[#allocation4 + $0x20] sm:$0xff]
  %v9061 = vld [vmem:[#allocation4 + $0x28] sm:$0xff]
  %v9062 = vld [vmem:[#allocation4 + $0x30] sm:$0xff]
  %v9063 = vld [vmem:[#allocation4 + $0x38] sm:$0xff]
  %v9064 = vld [vmem:[#allocation4 + $0x40] sm:$0xff]
  %v9065 = vld [vmem:[#allocation4 + $0x48] sm:$0xff]
  %v9066 = vld [vmem:[#allocation4 + $0x50] sm:$0xff]
  %v9067 = vld [vmem:[#allocation4 + $0x58] sm:$0xff]
  %v9068 = vld [vmem:[#allocation4 + $0x60] sm:$0xff]
  %v9069 = vld [vmem:[#allocation4 + $0x68] sm:$0xff]
  %v9070 = vld [vmem:[#allocation4 + $0x70] sm:$0xff]
  %v9071 = vld [vmem:[#allocation4 + $0x78] sm:$0xff]
  %v9072 = vld [vmem:[#allocation4 + $0x80] sm:$0xff]
  %v9073 = vld [vmem:[#allocation4 + $0x88] sm:$0xff]
  %v9074 = vld [vmem:[#allocation4 + $0x90] sm:$0xff]
  %v9075 = vld [vmem:[#allocation4 + $0x98] sm:$0xff]
  %v9076 = vld [vmem:[#allocation4 + $0xa0] sm:$0xff]
  %v9077 = vld [vmem:[#allocation4 + $0xa8] sm:$0xff]
  %v9078 = vld [vmem:[#allocation4 + $0xb0] sm:$0xff]
  %v9079 = vld [vmem:[#allocation4 + $0xb8] sm:$0xff]
  %v9080 = vld [vmem:[#allocation4 + $0xc0] sm:$0xff]
  %v9081 = vld [vmem:[#allocation4 + $0xc8] sm:$0xff]
  %v9082 = vld [vmem:[#allocation4 + $0xd0] sm:$0xff]
  %v9083 = vld [vmem:[#allocation4 + $0xd8] sm:$0xff]
  %v9084 = vld [vmem:[#allocation4 + $0xe0] sm:$0xff]
  %v9085 = vld [vmem:[#allocation4 + $0xe8] sm:$0xff]
  %v9086 = vld [vmem:[#allocation4 + $0xf0] sm:$0xff]
  %v9087 = vld [vmem:[#allocation4 + $0xf8] sm:$0xff]
  %v9088 = vld [vmem:[#allocation4 + $0x100] sm:$0xff]
  %v9089 = vld [vmem:[#allocation4 + $0x108] sm:$0xff]
  %v9090 = vld [vmem:[#allocation4 + $0x110] sm:$0xff]
  %v9091 = vld [vmem:[#allocation4 + $0x118] sm:$0xff]
  %v9092 = vld [vmem:[#allocation4 + $0x120] sm:$0xff]
  %v9093 = vld [vmem:[#allocation4 + $0x128] sm:$0xff]
  %v9094 = vld [vmem:[#allocation4 + $0x130] sm:$0xff]
  %v9095 = vld [vmem:[#allocation4 + $0x138] sm:$0xff]
  %v9096 = vld [vmem:[#allocation4 + $0x140] sm:$0xff]
  %v9097 = vld [vmem:[#allocation4 + $0x148] sm:$0xff]
  %v9098 = vld [vmem:[#allocation4 + $0x150] sm:$0xff]
  %v9099 = vld [vmem:[#allocation4 + $0x158] sm:$0xff]
  %v9100 = vld [vmem:[#allocation4 + $0x160] sm:$0xff]
  %v9101 = vld [vmem:[#allocation4 + $0x168] sm:$0xff]
  %v9102 = vld [vmem:[#allocation4 + $0x170] sm:$0xff]
  %v9103 = vld [vmem:[#allocation4 + $0x178] sm:$0xff]
  %v9104 = vld [vmem:[#allocation4 + $0x180] sm:$0xff]
  %v9105 = vld [vmem:[#allocation4 + $0x188] sm:$0xff]
  %v9106 = vld [vmem:[#allocation4 + $0x190] sm:$0xff]
  %v9107 = vld [vmem:[#allocation4 + $0x198] sm:$0xff]
  %v9108 = vld [vmem:[#allocation4 + $0x1a0] sm:$0xff]
  %v9109 = vld [vmem:[#allocation4 + $0x1a8] sm:$0xff]
  %v9110 = vld [vmem:[#allocation4 + $0x1b0] sm:$0xff]
  %v9111 = vld [vmem:[#allocation4 + $0x1b8] sm:$0xff]
  %v9112 = vld [vmem:[#allocation4 + $0x1c0] sm:$0xff]
  %v9113 = vld [vmem:[#allocation4 + $0x1c8] sm:$0xff]
  %v9114 = vld [vmem:[#allocation4 + $0x1d0] sm:$0xff]
  %v9115 = vld [vmem:[#allocation4 + $0x1d8] sm:$0xff]
  %v9116 = vld [vmem:[#allocation4 + $0x1e0] sm:$0xff]
  %v9117 = vld [vmem:[#allocation4 + $0x1e8] sm:$0xff]
  %v9118 = vld [vmem:[#allocation4 + $0x1f0] sm:$0x3f]
  %v9119 = vld [vmem:[#allocation2] sm:$0xf]
  %v9120 = vld [vmem:[#allocation2 + $0x4] sm:$0xf]
  %v9121 = vld [vmem:[#allocation2 + $0x8] sm:$0xf]
  %v9122 = vld [vmem:[#allocation2 + $0xc] sm:$0xf]
  %v9123 = vld [vmem:[#allocation2 + $0x10] sm:$0xf]
  %v9124 = vld [vmem:[#allocation2 + $0x14] sm:$0xf]
  %v9125 = vld [vmem:[#allocation2 + $0x18] sm:$0xf]
  %v9126 = vld [vmem:[#allocation2 + $0x1c] sm:$0xf]
  %v9127 = vld [vmem:[#allocation2 + $0x20] sm:$0xf]
  %v9128 = vld [vmem:[#allocation2 + $0x24] sm:$0xf]
  %v9129 = vld [vmem:[#allocation2 + $0x28] sm:$0xf]
  %v9130 = vld [vmem:[#allocation2 + $0x2c] sm:$0xf]
  %v9131 = vld [vmem:[#allocation2 + $0x30] sm:$0xf]
  %v9132 = vld [vmem:[#allocation2 + $0x34] sm:$0xf]
  %v9133 = vld [vmem:[#allocation2 + $0x38] sm:$0xf]
  %v9134 = vld [vmem:[#allocation2 + $0x3c] sm:$0xf]
  %v9135 = vld [vmem:[#allocation2 + $0x40] sm:$0xf]
  %v9136 = vld [vmem:[#allocation2 + $0x44] sm:$0xf]
  %v9137 = vld [vmem:[#allocation2 + $0x48] sm:$0xf]
  %v9138 = vld [vmem:[#allocation2 + $0x4c] sm:$0xf]
  %v9139 = vld [vmem:[#allocation2 + $0x50] sm:$0xf]
  %v9140 = vld [vmem:[#allocation2 + $0x54] sm:$0xf]
  %v9141 = vld [vmem:[#allocation2 + $0x58] sm:$0xf]
  %v9142 = vld [vmem:[#allocation2 + $0x5c] sm:$0xf]
  %v9143 = vld [vmem:[#allocation2 + $0x60] sm:$0xf]
  %v9144 = vld [vmem:[#allocation2 + $0x64] sm:$0xf]
  %v9145 = vld [vmem:[#allocation2 + $0x68] sm:$0xf]
  %v9146 = vld [vmem:[#allocation2 + $0x6c] sm:$0xf]
  %v9147 = vld [vmem:[#allocation2 + $0x70] sm:$0xf]
  %v9148 = vld [vmem:[#allocation2 + $0x74] sm:$0xf]
  %v9149 = vld [vmem:[#allocation2 + $0x78] sm:$0xf]
  %v9150 = vld [vmem:[#allocation2 + $0x7c] sm:$0xf]
  %v9151 = vld [vmem:[#allocation2 + $0x80] sm:$0xf]
  %v9152 = vld [vmem:[#allocation2 + $0x84] sm:$0xf]
  %v9153 = vld [vmem:[#allocation2 + $0x88] sm:$0xf]
  %v9154 = vld [vmem:[#allocation2 + $0x8c] sm:$0xf]
  %v9155 = vld [vmem:[#allocation2 + $0x90] sm:$0xf]
  %v9156 = vld [vmem:[#allocation2 + $0x94] sm:$0xf]
  %v9157 = vld [vmem:[#allocation2 + $0x98] sm:$0xf]
  %v9158 = vld [vmem:[#allocation2 + $0x9c] sm:$0xf]
  %v9159 = vld [vmem:[#allocation2 + $0xa0] sm:$0xf]
  %v9160 = vld [vmem:[#allocation2 + $0xa4] sm:$0xf]
  %v9161 = vld [vmem:[#allocation2 + $0xa8] sm:$0xf]
  %v9162 = vld [vmem:[#allocation2 + $0xac] sm:$0xf]
  %v9163 = vld [vmem:[#allocation2 + $0xb0] sm:$0xf]
  %v9164 = vld [vmem:[#allocation2 + $0xb4] sm:$0xf]
  %v9165 = vld [vmem:[#allocation2 + $0xb8] sm:$0xf]
  %v9166 = vld [vmem:[#allocation2 + $0xbc] sm:$0xf]
  %v9167 = vld [vmem:[#allocation2 + $0xc0] sm:$0xf]
  %v9168 = vld [vmem:[#allocation2 + $0xc4] sm:$0xf]
  %v9169 = vld [vmem:[#allocation2 + $0xc8] sm:$0xf]
  %v9170 = vld [vmem:[#allocation2 + $0xcc] sm:$0xf]
  %v9171 = vld [vmem:[#allocation2 + $0xd0] sm:$0xf]
  %v9172 = vld [vmem:[#allocation2 + $0xd4] sm:$0xf]
  %v9173 = vld [vmem:[#allocation2 + $0xd8] sm:$0xf]
  %v9174 = vld [vmem:[#allocation2 + $0xdc] sm:$0xf]
  %v9175 = vld [vmem:[#allocation2 + $0xe0] sm:$0xf]
  %v9176 = vld [vmem:[#allocation2 + $0xe4] sm:$0xf]
  %v9177 = vld [vmem:[#allocation2 + $0xe8] sm:$0xf]
  %v9178 = vld [vmem:[#allocation2 + $0xec] sm:$0xf]
  %v9179 = vld [vmem:[#allocation2 + $0xf0] sm:$0xf]
  %v9180 = vld [vmem:[#allocation2 + $0xf4] sm:$0xf]
  %v9181 = vld [vmem:[#allocation2 + $0xf8] sm:$0xf]
  %s9182 = scalar_lea.vmem %s7, 64
  %v9183 = vld [vmem:[%s9182] sm:$0xf]
  %v9184 = vld [vmem:[%s9182 + $0x4] sm:$0xf]
  %v9185 = vld [vmem:[%s9182 + $0x8] sm:$0xf]
  %v9186 = vld [vmem:[%s9182 + $0xc] sm:$0xf]
  %v9187 = vld [vmem:[%s9182 + $0x10] sm:$0xf]
  %v9188 = vld [vmem:[%s9182 + $0x14] sm:$0xf]
  %v9189 = vld [vmem:[%s9182 + $0x18] sm:$0xf]
  %v9190 = vld [vmem:[%s9182 + $0x1c] sm:$0xf]
  %v9191 = vld [vmem:[%s9182 + $0x20] sm:$0xf]
  %v9192 = vld [vmem:[%s9182 + $0x24] sm:$0xf]
  %v9193 = vld [vmem:[%s9182 + $0x28] sm:$0xf]
  %v9194 = vld [vmem:[%s9182 + $0x2c] sm:$0xf]
  %v9195 = vld [vmem:[%s9182 + $0x30] sm:$0xf]
  %v9196 = vld [vmem:[%s9182 + $0x34] sm:$0xf]
  %v9197 = vld [vmem:[%s9182 + $0x38] sm:$0xf]
  %v9198 = vld [vmem:[%s9182 + $0x3c] sm:$0xf]
  %v9262 = vunpack.c.l.b16 %v9119
  %v9263 = vunpack.c.l.b16 %v9120
  %v9264 = vunpack.c.l.b16 %v9121
  %v9265 = vunpack.c.l.b16 %v9122
  %v9266 = vunpack.c.l.b16 %v9123
  %v9267 = vunpack.c.l.b16 %v9124
  %v9268 = vunpack.c.l.b16 %v9125
  %v9269 = vunpack.c.l.b16 %v9126
  %v9270 = vunpack.c.l.b16 %v9127
  %v9271 = vunpack.c.l.b16 %v9128
  %v9272 = vunpack.c.l.b16 %v9129
  %v9273 = vunpack.c.l.b16 %v9130
  %v9274 = vunpack.c.l.b16 %v9131
  %v9275 = vunpack.c.l.b16 %v9132
  %v9276 = vunpack.c.l.b16 %v9133
  %v9277 = vunpack.c.l.b16 %v9134
  %v9278 = vunpack.c.l.b16 %v9135
  %v9279 = vunpack.c.l.b16 %v9136
  %v9280 = vunpack.c.l.b16 %v9137
  %v9281 = vunpack.c.l.b16 %v9138
  %v9282 = vunpack.c.l.b16 %v9139
  %v9283 = vunpack.c.l.b16 %v9140
  %v9284 = vunpack.c.l.b16 %v9141
  %v9285 = vunpack.c.l.b16 %v9142
  %v9286 = vunpack.c.l.b16 %v9143
  %v9287 = vunpack.c.l.b16 %v9144
  %v9288 = vunpack.c.l.b16 %v9145
  %v9289 = vunpack.c.l.b16 %v9146
  %v9290 = vunpack.c.l.b16 %v9147
  %v9291 = vunpack.c.l.b16 %v9148
  %v9292 = vunpack.c.l.b16 %v9149
  %v9293 = vunpack.c.l.b16 %v9150
  %v9294 = vunpack.c.l.b16 %v9151
  %v9295 = vunpack.c.l.b16 %v9152
  %v9296 = vunpack.c.l.b16 %v9153
  %v9297 = vunpack.c.l.b16 %v9154
  %v9298 = vunpack.c.l.b16 %v9155
  %v9299 = vunpack.c.l.b16 %v9156
  %v9300 = vunpack.c.l.b16 %v9157
  %v9301 = vunpack.c.l.b16 %v9158
  %v9302 = vunpack.c.l.b16 %v9159
  %v9303 = vunpack.c.l.b16 %v9160
  %v9304 = vunpack.c.l.b16 %v9161
  %v9305 = vunpack.c.l.b16 %v9162
  %v9306 = vunpack.c.l.b16 %v9163
  %v9307 = vunpack.c.l.b16 %v9164
  %v9308 = vunpack.c.l.b16 %v9165
  %v9309 = vunpack.c.l.b16 %v9166
  %v9310 = vunpack.c.l.b16 %v9167
  %v9311 = vunpack.c.l.b16 %v9168
  %v9312 = vunpack.c.l.b16 %v9169
  %v9313 = vunpack.c.l.b16 %v9170
  %v9314 = vunpack.c.l.b16 %v9171
  %v9315 = vunpack.c.l.b16 %v9172
  %v9316 = vunpack.c.l.b16 %v9173
  %v9317 = vunpack.c.l.b16 %v9174
  %v9318 = vunpack.c.l.b16 %v9175
  %v9319 = vunpack.c.l.b16 %v9176
  %v9320 = vunpack.c.l.b16 %v9177
  %v9321 = vunpack.c.l.b16 %v9178
  %v9322 = vunpack.c.l.b16 %v9179
  %v9323 = vunpack.c.l.b16 %v9180
  %v9324 = vunpack.c.l.b16 %v9181
  %v9325 = vpack.c.b16 %v9263, %v9262
  %v9326 = vpack.c.b16 %v9265, %v9264
  %v9327 = vpack.c.b16 %v9267, %v9266
  %v9328 = vpack.c.b16 %v9269, %v9268
  %v9329 = vpack.c.b16 %v9271, %v9270
  %v9330 = vpack.c.b16 %v9273, %v9272
  %v9331 = vpack.c.b16 %v9275, %v9274
  %v9332 = vpack.c.b16 %v9277, %v9276
  %v9333 = vpack.c.b16 %v9279, %v9278
  %v9334 = vpack.c.b16 %v9281, %v9280
  %v9335 = vpack.c.b16 %v9283, %v9282
  %v9336 = vpack.c.b16 %v9285, %v9284
  %v9337 = vpack.c.b16 %v9287, %v9286
  %v9338 = vpack.c.b16 %v9289, %v9288
  %v9339 = vpack.c.b16 %v9291, %v9290
  %v9340 = vpack.c.b16 %v9293, %v9292
  %v9341 = vpack.c.b16 %v9295, %v9294
  %v9342 = vpack.c.b16 %v9297, %v9296
  %v9343 = vpack.c.b16 %v9299, %v9298
  %v9344 = vpack.c.b16 %v9301, %v9300
  %v9345 = vpack.c.b16 %v9303, %v9302
  %v9346 = vpack.c.b16 %v9305, %v9304
  %v9347 = vpack.c.b16 %v9307, %v9306
  %v9348 = vpack.c.b16 %v9309, %v9308
  %v9349 = vpack.c.b16 %v9311, %v9310
  %v9350 = vpack.c.b16 %v9313, %v9312
  %v9351 = vpack.c.b16 %v9315, %v9314
  %v9352 = vpack.c.b16 %v9317, %v9316
  %v9353 = vpack.c.b16 %v9319, %v9318
  %v9354 = vpack.c.b16 %v9321, %v9320
  %v9355 = vpack.c.b16 %v9323, %v9322
  %v9356 = vpack.c.b16 %v9324, %v9324
  %v9358 = vshrl.u32 %v9325, 16
  %v9360 = vshll.u32 %v9325, 16
  %v9362 = vrot.slane %v9360, 1
  %v9363 = vor.u32 %v9358, %v9362
  %v9365 = vshll.u32 %v9326, 16
  %v9367 = vrot.slane %v9365, 1
  %v9368 = vsel %vm1026, %v9363, %v9367
  %v9369 = vshrl.u32 %v9326, 16
  %v9371 = vor.u32 %v9369, %v9367
  %v9373 = vshll.u32 %v9327, 16
  %v9375 = vrot.slane %v9373, 1
  %v9376 = vsel %vm1026, %v9371, %v9375
  %v9377 = vshrl.u32 %v9327, 16
  %v9379 = vor.u32 %v9377, %v9375
  %v9381 = vshll.u32 %v9328, 16
  %v9383 = vrot.slane %v9381, 1
  %v9384 = vsel %vm1026, %v9379, %v9383
  %v9385 = vshrl.u32 %v9328, 16
  %v9387 = vor.u32 %v9385, %v9383
  %v9389 = vshll.u32 %v9329, 16
  %v9391 = vrot.slane %v9389, 1
  %v9392 = vsel %vm1026, %v9387, %v9391
  %v9393 = vshrl.u32 %v9329, 16
  %v9395 = vor.u32 %v9393, %v9391
  %v9397 = vshll.u32 %v9330, 16
  %v9399 = vrot.slane %v9397, 1
  %v9400 = vsel %vm1026, %v9395, %v9399
  %v9401 = vshrl.u32 %v9330, 16
  %v9403 = vor.u32 %v9401, %v9399
  %v9405 = vshll.u32 %v9331, 16
  %v9407 = vrot.slane %v9405, 1
  %v9408 = vsel %vm1026, %v9403, %v9407
  %v9409 = vshrl.u32 %v9331, 16
  %v9411 = vor.u32 %v9409, %v9407
  %v9413 = vshll.u32 %v9332, 16
  %v9415 = vrot.slane %v9413, 1
  %v9416 = vsel %vm1026, %v9411, %v9415
  %v9417 = vshrl.u32 %v9332, 16
  %v9419 = vor.u32 %v9417, %v9415
  %v9421 = vshll.u32 %v9333, 16
  %v9423 = vrot.slane %v9421, 1
  %v9424 = vsel %vm1026, %v9419, %v9423
  %v9425 = vshrl.u32 %v9333, 16
  %v9427 = vor.u32 %v9425, %v9423
  %v9429 = vshll.u32 %v9334, 16
  %v9431 = vrot.slane %v9429, 1
  %v9432 = vsel %vm1026, %v9427, %v9431
  %v9433 = vshrl.u32 %v9334, 16
  %v9435 = vor.u32 %v9433, %v9431
  %v9437 = vshll.u32 %v9335, 16
  %v9439 = vrot.slane %v9437, 1
  %v9440 = vsel %vm1026, %v9435, %v9439
  %v9441 = vshrl.u32 %v9335, 16
  %v9443 = vor.u32 %v9441, %v9439
  %v9445 = vshll.u32 %v9336, 16
  %v9447 = vrot.slane %v9445, 1
  %v9448 = vsel %vm1026, %v9443, %v9447
  %v9449 = vshrl.u32 %v9336, 16
  %v9451 = vor.u32 %v9449, %v9447
  %v9453 = vshll.u32 %v9337, 16
  %v9455 = vrot.slane %v9453, 1
  %v9456 = vsel %vm1026, %v9451, %v9455
  %v9457 = vshrl.u32 %v9337, 16
  %v9459 = vor.u32 %v9457, %v9455
  %v9461 = vshll.u32 %v9338, 16
  %v9463 = vrot.slane %v9461, 1
  %v9464 = vsel %vm1026, %v9459, %v9463
  %v9465 = vshrl.u32 %v9338, 16
  %v9467 = vor.u32 %v9465, %v9463
  %v9469 = vshll.u32 %v9339, 16
  %v9471 = vrot.slane %v9469, 1
  %v9472 = vsel %vm1026, %v9467, %v9471
  %v9473 = vshrl.u32 %v9339, 16
  %v9475 = vor.u32 %v9473, %v9471
  %v9477 = vshll.u32 %v9340, 16
  %v9479 = vrot.slane %v9477, 1
  %v9480 = vsel %vm1026, %v9475, %v9479
  %v9481 = vshrl.u32 %v9340, 16
  %v9483 = vor.u32 %v9481, %v9479
  %v9485 = vshll.u32 %v9341, 16
  %v9487 = vrot.slane %v9485, 1
  %v9488 = vsel %vm1026, %v9483, %v9487
  %v9489 = vshrl.u32 %v9341, 16
  %v9491 = vor.u32 %v9489, %v9487
  %v9493 = vshll.u32 %v9342, 16
  %v9495 = vrot.slane %v9493, 1
  %v9496 = vsel %vm1026, %v9491, %v9495
  %v9497 = vshrl.u32 %v9342, 16
  %v9499 = vor.u32 %v9497, %v9495
  %v9501 = vshll.u32 %v9343, 16
  %v9503 = vrot.slane %v9501, 1
  %v9504 = vsel %vm1026, %v9499, %v9503
  %v9505 = vshrl.u32 %v9343, 16
  %v9507 = vor.u32 %v9505, %v9503
  %v9509 = vshll.u32 %v9344, 16
  %v9511 = vrot.slane %v9509, 1
  %v9512 = vsel %vm1026, %v9507, %v9511
  %v9513 = vshrl.u32 %v9344, 16
  %v9515 = vor.u32 %v9513, %v9511
  %v9517 = vshll.u32 %v9345, 16
  %v9519 = vrot.slane %v9517, 1
  %v9520 = vsel %vm1026, %v9515, %v9519
  %v9521 = vshrl.u32 %v9345, 16
  %v9523 = vor.u32 %v9521, %v9519
  %v9525 = vshll.u32 %v9346, 16
  %v9527 = vrot.slane %v9525, 1
  %v9528 = vsel %vm1026, %v9523, %v9527
  %v9529 = vshrl.u32 %v9346, 16
  %v9531 = vor.u32 %v9529, %v9527
  %v9533 = vshll.u32 %v9347, 16
  %v9535 = vrot.slane %v9533, 1
  %v9536 = vsel %vm1026, %v9531, %v9535
  %v9537 = vshrl.u32 %v9347, 16
  %v9539 = vor.u32 %v9537, %v9535
  %v9541 = vshll.u32 %v9348, 16
  %v9543 = vrot.slane %v9541, 1
  %v9544 = vsel %vm1026, %v9539, %v9543
  %v9545 = vshrl.u32 %v9348, 16
  %v9547 = vor.u32 %v9545, %v9543
  %v9549 = vshll.u32 %v9349, 16
  %v9551 = vrot.slane %v9549, 1
  %v9552 = vsel %vm1026, %v9547, %v9551
  %v9553 = vshrl.u32 %v9349, 16
  %v9555 = vor.u32 %v9553, %v9551
  %v9557 = vshll.u32 %v9350, 16
  %v9559 = vrot.slane %v9557, 1
  %v9560 = vsel %vm1026, %v9555, %v9559
  %v9561 = vshrl.u32 %v9350, 16
  %v9563 = vor.u32 %v9561, %v9559
  %v9565 = vshll.u32 %v9351, 16
  %v9567 = vrot.slane %v9565, 1
  %v9568 = vsel %vm1026, %v9563, %v9567
  %v9569 = vshrl.u32 %v9351, 16
  %v9571 = vor.u32 %v9569, %v9567
  %v9573 = vshll.u32 %v9352, 16
  %v9575 = vrot.slane %v9573, 1
  %v9576 = vsel %vm1026, %v9571, %v9575
  %v9577 = vshrl.u32 %v9352, 16
  %v9579 = vor.u32 %v9577, %v9575
  %v9581 = vshll.u32 %v9353, 16
  %v9583 = vrot.slane %v9581, 1
  %v9584 = vsel %vm1026, %v9579, %v9583
  %v9585 = vshrl.u32 %v9353, 16
  %v9587 = vor.u32 %v9585, %v9583
  %v9589 = vshll.u32 %v9354, 16
  %v9591 = vrot.slane %v9589, 1
  %v9592 = vsel %vm1026, %v9587, %v9591
  %v9593 = vshrl.u32 %v9354, 16
  %v9595 = vor.u32 %v9593, %v9591
  %v9597 = vshll.u32 %v9355, 16
  %v9599 = vrot.slane %v9597, 1
  %v9600 = vsel %vm1026, %v9595, %v9599
  %v9601 = vshrl.u32 %v9355, 16
  %v9603 = vor.u32 %v9601, %v9599
  %v9605 = vshll.u32 %v9356, 16
  %v9607 = vrot.slane %v9605, 1
  %v9608 = vsel %vm1026, %v9603, %v9607
  %v9609 = vshrl.u32 %v9356, 16
  %v9611 = vor.u32 %v9609, %v9607
  %v9660 = vunpack.c.l.b16 %v9183
  %v9661 = vunpack.c.l.b16 %v9184
  %v9662 = vunpack.c.l.b16 %v9185
  %v9663 = vunpack.c.l.b16 %v9186
  %v9664 = vunpack.c.l.b16 %v9187
  %v9665 = vunpack.c.l.b16 %v9188
  %v9666 = vunpack.c.l.b16 %v9189
  %v9667 = vunpack.c.l.b16 %v9190
  %v9668 = vunpack.c.l.b16 %v9191
  %v9669 = vunpack.c.l.b16 %v9192
  %v9670 = vunpack.c.l.b16 %v9193
  %v9671 = vunpack.c.l.b16 %v9194
  %v9672 = vunpack.c.l.b16 %v9195
  %v9673 = vunpack.c.l.b16 %v9196
  %v9674 = vunpack.c.l.b16 %v9197
  %v9675 = vunpack.c.l.b16 %v9198
  %v9676 = vpack.c.b16 %v9661, %v9660
  %v9677 = vpack.c.b16 %v9663, %v9662
  %v9678 = vpack.c.b16 %v9665, %v9664
  %v9679 = vpack.c.b16 %v9667, %v9666
  %v9680 = vpack.c.b16 %v9669, %v9668
  %v9681 = vpack.c.b16 %v9671, %v9670
  %v9682 = vpack.c.b16 %v9673, %v9672
  %v9683 = vpack.c.b16 %v9675, %v9674
  %9692 = vmatprep.subr.bf16.mxu0 0
  %9693 = vmatpush1.bf16.msra.mxu0 %v9676
  %9694 = vmatprep.subr.bf16.mxu0 0
  %9695 = vmatpush1.bf16.msra.mxu0 %v9677
  %9696 = vmatprep.subr.bf16.mxu0 0
  %9697 = vmatpush1.bf16.msra.mxu0 %v9678
  %9698 = vmatprep.subr.bf16.mxu0 0
  %9699 = vmatpush1.bf16.msra.mxu0 %v9679
  %9700 = vmatprep.subr.bf16.mxu0 0
  %9701 = vmatpush1.bf16.msra.mxu0 %v9680
  %9702 = vmatprep.subr.bf16.mxu0 0
  %9703 = vmatpush1.bf16.msra.mxu0 %v9681
  %9704 = vmatprep.subr.bf16.mxu0 0
  %9705 = vmatpush1.bf16.msra.mxu0 %v9682
  %9706 = vmatprep.subr.bf16.mxu0 0
  %9707 = vmatpush1.bf16.msra.mxu0 %v9683
  %9708 = vmatprep.subr.bf16.mxu0 0
  %9709 = vmatpush1.bf16.msra.mxu0 0
  %9710 = vmatprep.subr.bf16.mxu0 0
  %9711 = vmatpush1.bf16.msra.mxu0 0
  %9712 = vmatprep.subr.bf16.mxu0 0
  %9713 = vmatpush1.bf16.msra.mxu0 0
  %9714 = vmatprep.subr.bf16.mxu0 0
  %9715 = vmatpush1.bf16.msra.mxu0 0
  %9716 = vmatprep.subr.bf16.mxu0 0
  %9717 = vmatpush1.bf16.msra.mxu0 0
  %9718 = vmatprep.subr.bf16.mxu0 0
  %9719 = vmatpush1.bf16.msra.mxu0 0
  %9720 = vmatprep.subr.bf16.mxu0 0
  %9721 = vmatpush1.bf16.msra.mxu0 0
  %9722 = vmatprep.subr.bf16.mxu0 0
  %9723 = vmatpush1.bf16.msra.mxu0 0
  %9724 = vmatprep.mubr.bf16.mxu0 0
  %9725 = vmatmul.mubr.bf16.gmra.mrb[0].mxu0 %v9368
  %v9726 = vpop.f32.mrb[0].mxu0
  %v9727 = vadd.f32 0.0, %v9726
  %v9728 = vpop.f32.mrb[0].mxu0
  %v9729 = vpop.f32.mrb[0].mxu0
  %v9730 = vadd.f32 0.0, %v9729
  %v9731 = vpop.f32.mrb[0].mxu0
  %9732 = vmatprep.mubr.bf16.mxu0 0
  %9733 = vmatmul.mubr.bf16.gmra.mrb[0].mxu0 %v9376
  %v9734 = vpop.f32.mrb[0].mxu0
  %v9735 = vadd.f32 0.0, %v9734
  %v9736 = vpop.f32.mrb[0].mxu0
  %v9737 = vpop.f32.mrb[0].mxu0
  %v9738 = vadd.f32 0.0, %v9737
  %v9739 = vpop.f32.mrb[0].mxu0
  %9740 = vmatprep.mubr.bf16.mxu0 0
  %9741 = vmatmul.mubr.bf16.gmra.mrb[0].mxu0 %v9384
  %v9742 = vpop.f32.mrb[0].mxu0
  %v9743 = vadd.f32 0.0, %v9742
  %v9744 = vpop.f32.mrb[0].mxu0
  %v9745 = vpop.f32.mrb[0].mxu0
  %v9746 = vadd.f32 0.0, %v9745
  %v9747 = vpop.f32.mrb[0].mxu0
  %9748 = vmatprep.mubr.bf16.mxu0 0
  %9749 = vmatmul.mubr.bf16.gmra.mrb[0].mxu0 %v9392
  %v9750 = vpop.f32.mrb[0].mxu0
  %v9751 = vadd.f32 0.0, %v9750
  %v9752 = vpop.f32.mrb[0].mxu0
  %v9753 = vpop.f32.mrb[0].mxu0
  %v9754 = vadd.f32 0.0, %v9753
  %v9755 = vpop.f32.mrb[0].mxu0
  %9756 = vmatprep.mubr.bf16.mxu0 0
  %9757 = vmatmul.mubr.bf16.gmra.mrb[0].mxu0 %v9400
  %v9758 = vpop.f32.mrb[0].mxu0
  %v9759 = vadd.f32 0.0, %v9758
  %v9760 = vpop.f32.mrb[0].mxu0
  %v9761 = vpop.f32.mrb[0].mxu0
  %v9762 = vadd.f32 0.0, %v9761
  %v9763 = vpop.f32.mrb[0].mxu0
  %9764 = vmatprep.mubr.bf16.mxu0 0
  %9765 = vmatmul.mubr.bf16.gmra.mrb[0].mxu0 %v9408
  %v9766 = vpop.f32.mrb[0].mxu0
  %v9767 = vadd.f32 0.0, %v9766
  %v9768 = vpop.f32.mrb[0].mxu0
  %v9769 = vpop.f32.mrb[0].mxu0
  %v9770 = vadd.f32 0.0, %v9769
  %v9771 = vpop.f32.mrb[0].mxu0
  %9772 = vmatprep.mubr.bf16.mxu0 0
  %9773 = vmatmul.mubr.bf16.gmra.mrb[0].mxu0 %v9416
  %v9774 = vpop.f32.mrb[0].mxu0
  %v9775 = vadd.f32 0.0, %v9774
  %v9776 = vpop.f32.mrb[0].mxu0
  %v9777 = vpop.f32.mrb[0].mxu0
  %v9778 = vadd.f32 0.0, %v9777
  %v9779 = vpop.f32.mrb[0].mxu0
  %9780 = vmatprep.mubr.bf16.mxu0 0
  %9781 = vmatmul.mubr.bf16.gmra.mrb[0].mxu0 %v9424
  %v9782 = vpop.f32.mrb[0].mxu0
  %v9783 = vadd.f32 0.0, %v9782
  %v9784 = vpop.f32.mrb[0].mxu0
  %v9785 = vpop.f32.mrb[0].mxu0
  %v9786 = vadd.f32 0.0, %v9785
  %v9787 = vpop.f32.mrb[0].mxu0
  %9788 = vmatprep.mubr.bf16.mxu0 0
  %9789 = vmatmul.mubr.bf16.gmra.mrb[0].mxu0 %v9432
  %v9790 = vpop.f32.mrb[0].mxu0
  %v9791 = vadd.f32 0.0, %v9790
  %v9792 = vpop.f32.mrb[0].mxu0
  %v9793 = vpop.f32.mrb[0].mxu0
  %v9794 = vadd.f32 0.0, %v9793
  %v9795 = vpop.f32.mrb[0].mxu0
  %9796 = vmatprep.mubr.bf16.mxu0 0
  %9797 = vmatmul.mubr.bf16.gmra.mrb[0].mxu0 %v9440
  %v9798 = vpop.f32.mrb[0].mxu0
  %v9799 = vadd.f32 0.0, %v9798
  %v9800 = vpop.f32.mrb[0].mxu0
  %v9801 = vpop.f32.mrb[0].mxu0
  %v9802 = vadd.f32 0.0, %v9801
  %v9803 = vpop.f32.mrb[0].mxu0
  %9804 = vmatprep.mubr.bf16.mxu0 0
  %9805 = vmatmul.mubr.bf16.gmra.mrb[0].mxu0 %v9448
  %v9806 = vpop.f32.mrb[0].mxu0
  %v9807 = vadd.f32 0.0, %v9806
  %v9808 = vpop.f32.mrb[0].mxu0
  %v9809 = vpop.f32.mrb[0].mxu0
  %v9810 = vadd.f32 0.0, %v9809
  %v9811 = vpop.f32.mrb[0].mxu0
  %9812 = vmatprep.mubr.bf16.mxu0 0
  %9813 = vmatmul.mubr.bf16.gmra.mrb[0].mxu0 %v9456
  %v9814 = vpop.f32.mrb[0].mxu0
  %v9815 = vadd.f32 0.0, %v9814
  %v9816 = vpop.f32.mrb[0].mxu0
  %v9817 = vpop.f32.mrb[0].mxu0
  %v9818 = vadd.f32 0.0, %v9817
  %v9819 = vpop.f32.mrb[0].mxu0
  %9820 = vmatprep.mubr.bf16.mxu0 0
  %9821 = vmatmul.mubr.bf16.gmra.mrb[0].mxu0 %v9464
  %v9822 = vpop.f32.mrb[0].mxu0
  %v9823 = vadd.f32 0.0, %v9822
  %v9824 = vpop.f32.mrb[0].mxu0
  %v9825 = vpop.f32.mrb[0].mxu0
  %v9826 = vadd.f32 0.0, %v9825
  %v9827 = vpop.f32.mrb[0].mxu0
  %9828 = vmatprep.mubr.bf16.mxu0 0
  %9829 = vmatmul.mubr.bf16.gmra.mrb[0].mxu0 %v9472
  %v9830 = vpop.f32.mrb[0].mxu0
  %v9831 = vadd.f32 0.0, %v9830
  %v9832 = vpop.f32.mrb[0].mxu0
  %v9833 = vpop.f32.mrb[0].mxu0
  %v9834 = vadd.f32 0.0, %v9833
  %v9835 = vpop.f32.mrb[0].mxu0
  %9836 = vmatprep.mubr.bf16.mxu0 0
  %9837 = vmatmul.mubr.bf16.gmra.mrb[0].mxu0 %v9480
  %v9838 = vpop.f32.mrb[0].mxu0
  %v9839 = vadd.f32 0.0, %v9838
  %v9840 = vpop.f32.mrb[0].mxu0
  %v9841 = vpop.f32.mrb[0].mxu0
  %v9842 = vadd.f32 0.0, %v9841
  %v9843 = vpop.f32.mrb[0].mxu0
  %9844 = vmatprep.mubr.bf16.mxu0 0
  %9845 = vmatmul.mubr.bf16.gmra.mrb[0].mxu0 %v9488
  %v9846 = vpop.f32.mrb[0].mxu0
  %v9847 = vadd.f32 0.0, %v9846
  %v9848 = vpop.f32.mrb[0].mxu0
  %v9849 = vpop.f32.mrb[0].mxu0
  %v9850 = vadd.f32 0.0, %v9849
  %v9851 = vpop.f32.mrb[0].mxu0
  %9852 = vmatprep.mubr.bf16.mxu0 0
  %9853 = vmatmul.mubr.bf16.gmra.mrb[0].mxu0 %v9496
  %v9854 = vpop.f32.mrb[0].mxu0
  %v9855 = vadd.f32 0.0, %v9854
  %v9856 = vpop.f32.mrb[0].mxu0
  %v9857 = vpop.f32.mrb[0].mxu0
  %v9858 = vadd.f32 0.0, %v9857
  %v9859 = vpop.f32.mrb[0].mxu0
  %9860 = vmatprep.mubr.bf16.mxu0 0
  %9861 = vmatmul.mubr.bf16.gmra.mrb[0].mxu0 %v9504
  %v9862 = vpop.f32.mrb[0].mxu0
  %v9863 = vadd.f32 0.0, %v9862
  %v9864 = vpop.f32.mrb[0].mxu0
  %v9865 = vpop.f32.mrb[0].mxu0
  %v9866 = vadd.f32 0.0, %v9865
  %v9867 = vpop.f32.mrb[0].mxu0
  %9868 = vmatprep.mubr.bf16.mxu0 0
  %9869 = vmatmul.mubr.bf16.gmra.mrb[0].mxu0 %v9512
  %v9870 = vpop.f32.mrb[0].mxu0
  %v9871 = vadd.f32 0.0, %v9870
  %v9872 = vpop.f32.mrb[0].mxu0
  %v9873 = vpop.f32.mrb[0].mxu0
  %v9874 = vadd.f32 0.0, %v9873
  %v9875 = vpop.f32.mrb[0].mxu0
  %9876 = vmatprep.mubr.bf16.mxu0 0
  %9877 = vmatmul.mubr.bf16.gmra.mrb[0].mxu0 %v9520
  %v9878 = vpop.f32.mrb[0].mxu0
  %v9879 = vadd.f32 0.0, %v9878
  %v9880 = vpop.f32.mrb[0].mxu0
  %v9881 = vpop.f32.mrb[0].mxu0
  %v9882 = vadd.f32 0.0, %v9881
  %v9883 = vpop.f32.mrb[0].mxu0
  %9884 = vmatprep.mubr.bf16.mxu0 0
  %9885 = vmatmul.mubr.bf16.gmra.mrb[0].mxu0 %v9528
  %v9886 = vpop.f32.mrb[0].mxu0
  %v9887 = vadd.f32 0.0, %v9886
  %v9888 = vpop.f32.mrb[0].mxu0
  %v9889 = vpop.f32.mrb[0].mxu0
  %v9890 = vadd.f32 0.0, %v9889
  %v9891 = vpop.f32.mrb[0].mxu0
  %9892 = vmatprep.mubr.bf16.mxu0 0
  %9893 = vmatmul.mubr.bf16.gmra.mrb[0].mxu0 %v9536
  %v9894 = vpop.f32.mrb[0].mxu0
  %v9895 = vadd.f32 0.0, %v9894
  %v9896 = vpop.f32.mrb[0].mxu0
  %v9897 = vpop.f32.mrb[0].mxu0
  %v9898 = vadd.f32 0.0, %v9897
  %v9899 = vpop.f32.mrb[0].mxu0
  %9900 = vmatprep.mubr.bf16.mxu0 0
  %9901 = vmatmul.mubr.bf16.gmra.mrb[0].mxu0 %v9544
  %v9902 = vpop.f32.mrb[0].mxu0
  %v9903 = vadd.f32 0.0, %v9902
  %v9904 = vpop.f32.mrb[0].mxu0
  %v9905 = vpop.f32.mrb[0].mxu0
  %v9906 = vadd.f32 0.0, %v9905
  %v9907 = vpop.f32.mrb[0].mxu0
  %9908 = vmatprep.mubr.bf16.mxu0 0
  %9909 = vmatmul.mubr.bf16.gmra.mrb[0].mxu0 %v9552
  %v9910 = vpop.f32.mrb[0].mxu0
  %v9911 = vadd.f32 0.0, %v9910
  %v9912 = vpop.f32.mrb[0].mxu0
  %v9913 = vpop.f32.mrb[0].mxu0
  %v9914 = vadd.f32 0.0, %v9913
  %v9915 = vpop.f32.mrb[0].mxu0
  %9916 = vmatprep.mubr.bf16.mxu0 0
  %9917 = vmatmul.mubr.bf16.gmra.mrb[0].mxu0 %v9560
  %v9918 = vpop.f32.mrb[0].mxu0
  %v9919 = vadd.f32 0.0, %v9918
  %v9920 = vpop.f32.mrb[0].mxu0
  %v9921 = vpop.f32.mrb[0].mxu0
  %v9922 = vadd.f32 0.0, %v9921
  %v9923 = vpop.f32.mrb[0].mxu0
  %9924 = vmatprep.mubr.bf16.mxu0 0
  %9925 = vmatmul.mubr.bf16.gmra.mrb[0].mxu0 %v9568
  %v9926 = vpop.f32.mrb[0].mxu0
  %v9927 = vadd.f32 0.0, %v9926
  %v9928 = vpop.f32.mrb[0].mxu0
  %v9929 = vpop.f32.mrb[0].mxu0
  %v9930 = vadd.f32 0.0, %v9929
  %v9931 = vpop.f32.mrb[0].mxu0
  %9932 = vmatprep.mubr.bf16.mxu0 0
  %9933 = vmatmul.mubr.bf16.gmra.mrb[0].mxu0 %v9576
  %v9934 = vpop.f32.mrb[0].mxu0
  %v9935 = vadd.f32 0.0, %v9934
  %v9936 = vpop.f32.mrb[0].mxu0
  %v9937 = vpop.f32.mrb[0].mxu0
  %v9938 = vadd.f32 0.0, %v9937
  %v9939 = vpop.f32.mrb[0].mxu0
  %9940 = vmatprep.mubr.bf16.mxu0 0
  %9941 = vmatmul.mubr.bf16.gmra.mrb[0].mxu0 %v9584
  %v9942 = vpop.f32.mrb[0].mxu0
  %v9943 = vadd.f32 0.0, %v9942
  %v9944 = vpop.f32.mrb[0].mxu0
  %v9945 = vpop.f32.mrb[0].mxu0
  %v9946 = vadd.f32 0.0, %v9945
  %v9947 = vpop.f32.mrb[0].mxu0
  %9948 = vmatprep.mubr.bf16.mxu0 0
  %9949 = vmatmul.mubr.bf16.gmra.mrb[0].mxu0 %v9592
  %v9950 = vpop.f32.mrb[0].mxu0
  %v9951 = vadd.f32 0.0, %v9950
  %v9952 = vpop.f32.mrb[0].mxu0
  %v9953 = vpop.f32.mrb[0].mxu0
  %v9954 = vadd.f32 0.0, %v9953
  %v9955 = vpop.f32.mrb[0].mxu0
  %9956 = vmatprep.mubr.bf16.mxu0 0
  %9957 = vmatmul.mubr.bf16.gmra.mrb[0].mxu0 %v9600
  %v9958 = vpop.f32.mrb[0].mxu0
  %v9959 = vadd.f32 0.0, %v9958
  %v9960 = vpop.f32.mrb[0].mxu0
  %v9961 = vpop.f32.mrb[0].mxu0
  %v9962 = vadd.f32 0.0, %v9961
  %v9963 = vpop.f32.mrb[0].mxu0
  %9964 = vmatprep.mubr.bf16.mxu0 0
  %9965 = vmatmul.mubr.bf16.gmra.mrb[0].mxu0 %v9608
  %v9966 = vpop.f32.mrb[0].mxu0
  %v9967 = vadd.f32 0.0, %v9966
  %v9968 = vpop.f32.mrb[0].mxu0
  %v9969 = vpop.f32.mrb[0].mxu0
  %v9970 = vadd.f32 0.0, %v9969
  %v9971 = vpop.f32.mrb[0].mxu0
  %9972 = vmatprep.mubr.bf16.mxu0 0
  %9973 = vmatmul.mubr.bf16.gmra.mrb[0].mxu0 %v9611
  %v9974 = vpop.f32.mrb[0].mxu0
  %v9975 = vadd.f32 0.0, %v9974
  %v9976 = vpop.f32.mrb[0].mxu0
  %v9977 = vpop.f32.mrb[0].mxu0
  %v9978 = vpop.f32.mrb[0].mxu0
  %9979 = vdwg.mxu0
  %v9980 = vadd.f32 %v9056, %v9727
  %v9981 = vadd.f32 %v9057, %v9730
  %v9982 = vadd.f32 %v9058, %v9735
  %v9983 = vadd.f32 %v9059, %v9738
  %v9984 = vadd.f32 %v9060, %v9743
  %v9985 = vadd.f32 %v9061, %v9746
  %v9986 = vadd.f32 %v9062, %v9751
  %v9987 = vadd.f32 %v9063, %v9754
  %v9988 = vadd.f32 %v9064, %v9759
  %v9989 = vadd.f32 %v9065, %v9762
  %v9990 = vadd.f32 %v9066, %v9767
  %v9991 = vadd.f32 %v9067, %v9770
  %v9992 = vadd.f32 %v9068, %v9775
  %v9993 = vadd.f32 %v9069, %v9778
  %v9994 = vadd.f32 %v9070, %v9783
  %v9995 = vadd.f32 %v9071, %v9786
  %v9996 = vadd.f32 %v9072, %v9791
  %v9997 = vadd.f32 %v9073, %v9794
  %v9998 = vadd.f32 %v9074, %v9799
  %v9999 = vadd.f32 %v9075, %v9802
  %v10000 = vadd.f32 %v9076, %v9807
  %v10001 = vadd.f32 %v9077, %v9810
  %v10002 = vadd.f32 %v9078, %v9815
  %v10003 = vadd.f32 %v9079, %v9818
  %v10004 = vadd.f32 %v9080, %v9823
  %v10005 = vadd.f32 %v9081, %v9826
  %v10006 = vadd.f32 %v9082, %v9831
  %v10007 = vadd.f32 %v9083, %v9834
  %v10008 = vadd.f32 %v9084, %v9839
  %v10009 = vadd.f32 %v9085, %v9842
  %v10010 = vadd.f32 %v9086, %v9847
  %v10011 = vadd.f32 %v9087, %v9850
  %v10012 = vadd.f32 %v9088, %v9855
  %v10013 = vadd.f32 %v9089, %v9858
  %v10014 = vadd.f32 %v9090, %v9863
  %v10015 = vadd.f32 %v9091, %v9866
  %v10016 = vadd.f32 %v9092, %v9871
  %v10017 = vadd.f32 %v9093, %v9874
  %v10018 = vadd.f32 %v9094, %v9879
  %v10019 = vadd.f32 %v9095, %v9882
  %v10020 = vadd.f32 %v9096, %v9887
  %v10021 = vadd.f32 %v9097, %v9890
  %v10022 = vadd.f32 %v9098, %v9895
  %v10023 = vadd.f32 %v9099, %v9898
  %v10024 = vadd.f32 %v9100, %v9903
  %v10025 = vadd.f32 %v9101, %v9906
  %v10026 = vadd.f32 %v9102, %v9911
  %v10027 = vadd.f32 %v9103, %v9914
  %v10028 = vadd.f32 %v9104, %v9919
  %v10029 = vadd.f32 %v9105, %v9922
  %v10030 = vadd.f32 %v9106, %v9927
  %v10031 = vadd.f32 %v9107, %v9930
  %v10032 = vadd.f32 %v9108, %v9935
  %v10033 = vadd.f32 %v9109, %v9938
  %v10034 = vadd.f32 %v9110, %v9943
  %v10035 = vadd.f32 %v9111, %v9946
  %v10036 = vadd.f32 %v9112, %v9951
  %v10037 = vadd.f32 %v9113, %v9954
  %v10038 = vadd.f32 %v9114, %v9959
  %v10039 = vadd.f32 %v9115, %v9962
  %v10040 = vadd.f32 %v9116, %v9967
  %v10041 = vadd.f32 %v9117, %v9970
  %v10042 = vadd.f32 %v9118, %v9975
  %10043 = vst [vmem:[#allocation4] sm:$0xff] %v9980
  %10044 = vst [vmem:[#allocation4 + $0x8] sm:$0xff] %v9981
  %10045 = vst [vmem:[#allocation4 + $0x10] sm:$0xff] %v9982
  %10046 = vst [vmem:[#allocation4 + $0x18] sm:$0xff] %v9983
  %10047 = vst [vmem:[#allocation4 + $0x20] sm:$0xff] %v9984
  %10048 = vst [vmem:[#allocation4 + $0x28] sm:$0xff] %v9985
  %10049 = vst [vmem:[#allocation4 + $0x30] sm:$0xff] %v9986
  %10050 = vst [vmem:[#allocation4 + $0x38] sm:$0xff] %v9987
  %10051 = vst [vmem:[#allocation4 + $0x40] sm:$0xff] %v9988
  %10052 = vst [vmem:[#allocation4 + $0x48] sm:$0xff] %v9989
  %10053 = vst [vmem:[#allocation4 + $0x50] sm:$0xff] %v9990
  %10054 = vst [vmem:[#allocation4 + $0x58] sm:$0xff] %v9991
  %10055 = vst [vmem:[#allocation4 + $0x60] sm:$0xff] %v9992
  %10056 = vst [vmem:[#allocation4 + $0x68] sm:$0xff] %v9993
  %10057 = vst [vmem:[#allocation4 + $0x70] sm:$0xff] %v9994
  %10058 = vst [vmem:[#allocation4 + $0x78] sm:$0xff] %v9995
  %10059 = vst [vmem:[#allocation4 + $0x80] sm:$0xff] %v9996
  %10060 = vst [vmem:[#allocation4 + $0x88] sm:$0xff] %v9997
  %10061 = vst [vmem:[#allocation4 + $0x90] sm:$0xff] %v9998
  %10062 = vst [vmem:[#allocation4 + $0x98] sm:$0xff] %v9999
  %10063 = vst [vmem:[#allocation4 + $0xa0] sm:$0xff] %v10000
  %10064 = vst [vmem:[#allocation4 + $0xa8] sm:$0xff] %v10001
  %10065 = vst [vmem:[#allocation4 + $0xb0] sm:$0xff] %v10002
  %10066 = vst [vmem:[#allocation4 + $0xb8] sm:$0xff] %v10003
  %10067 = vst [vmem:[#allocation4 + $0xc0] sm:$0xff] %v10004
  %10068 = vst [vmem:[#allocation4 + $0xc8] sm:$0xff] %v10005
  %10069 = vst [vmem:[#allocation4 + $0xd0] sm:$0xff] %v10006
  %10070 = vst [vmem:[#allocation4 + $0xd8] sm:$0xff] %v10007
  %10071 = vst [vmem:[#allocation4 + $0xe0] sm:$0xff] %v10008
  %10072 = vst [vmem:[#allocation4 + $0xe8] sm:$0xff] %v10009
  %10073 = vst [vmem:[#allocation4 + $0xf0] sm:$0xff] %v10010
  %10074 = vst [vmem:[#allocation4 + $0xf8] sm:$0xff] %v10011
  %10075 = vst [vmem:[#allocation4 + $0x100] sm:$0xff] %v10012
  %10076 = vst [vmem:[#allocation4 + $0x108] sm:$0xff] %v10013
  %10077 = vst [vmem:[#allocation4 + $0x110] sm:$0xff] %v10014
  %10078 = vst [vmem:[#allocation4 + $0x118] sm:$0xff] %v10015
  %10079 = vst [vmem:[#allocation4 + $0x120] sm:$0xff] %v10016
  %10080 = vst [vmem:[#allocation4 + $0x128] sm:$0xff] %v10017
  %10081 = vst [vmem:[#allocation4 + $0x130] sm:$0xff] %v10018
  %10082 = vst [vmem:[#allocation4 + $0x138] sm:$0xff] %v10019
  %10083 = vst [vmem:[#allocation4 + $0x140] sm:$0xff] %v10020
  %10084 = vst [vmem:[#allocation4 + $0x148] sm:$0xff] %v10021
  %10085 = vst [vmem:[#allocation4 + $0x150] sm:$0xff] %v10022
  %10086 = vst [vmem:[#allocation4 + $0x158] sm:$0xff] %v10023
  %10087 = vst [vmem:[#allocation4 + $0x160] sm:$0xff] %v10024
  %10088 = vst [vmem:[#allocation4 + $0x168] sm:$0xff] %v10025
  %10089 = vst [vmem:[#allocation4 + $0x170] sm:$0xff] %v10026
  %10090 = vst [vmem:[#allocation4 + $0x178] sm:$0xff] %v10027
  %10091 = vst [vmem:[#allocation4 + $0x180] sm:$0xff] %v10028
  %10092 = vst [vmem:[#allocation4 + $0x188] sm:$0xff] %v10029
  %10093 = vst [vmem:[#allocation4 + $0x190] sm:$0xff] %v10030
  %10094 = vst [vmem:[#allocation4 + $0x198] sm:$0xff] %v10031
  %10095 = vst [vmem:[#allocation4 + $0x1a0] sm:$0xff] %v10032
  %10096 = vst [vmem:[#allocation4 + $0x1a8] sm:$0xff] %v10033
  %10097 = vst [vmem:[#allocation4 + $0x1b0] sm:$0xff] %v10034
  %10098 = vst [vmem:[#allocation4 + $0x1b8] sm:$0xff] %v10035
  %10099 = vst [vmem:[#allocation4 + $0x1c0] sm:$0xff] %v10036
  %10100 = vst [vmem:[#allocation4 + $0x1c8] sm:$0xff] %v10037
  %10101 = vst [vmem:[#allocation4 + $0x1d0] sm:$0xff] %v10038
  %10102 = vst [vmem:[#allocation4 + $0x1d8] sm:$0xff] %v10039
  %10103 = vst [vmem:[#allocation4 + $0x1e0] sm:$0xff] %v10040
  %10104 = vst [vmem:[#allocation4 + $0x1e8] sm:$0xff] %v10041
  %10105 = vst [vmem:[#allocation4 + $0x1f0] sm:$0x3f] %v10042
  %v10106 = vld [vmem:[#allocation4] sm:$0xff]
  %v10107 = vld [vmem:[#allocation4 + $0x8] sm:$0xff]
  %v10108 = vld [vmem:[#allocation4 + $0x10] sm:$0xff]
  %v10109 = vld [vmem:[#allocation4 + $0x18] sm:$0xff]
  %v10110 = vld [vmem:[#allocation4 + $0x20] sm:$0xff]
  %v10111 = vld [vmem:[#allocation4 + $0x28] sm:$0xff]
  %v10112 = vld [vmem:[#allocation4 + $0x30] sm:$0xff]
  %v10113 = vld [vmem:[#allocation4 + $0x38] sm:$0xff]
  %v10114 = vld [vmem:[#allocation4 + $0x40] sm:$0xff]
  %v10115 = vld [vmem:[#allocation4 + $0x48] sm:$0xff]
  %v10116 = vld [vmem:[#allocation4 + $0x50] sm:$0xff]
  %v10117 = vld [vmem:[#allocation4 + $0x58] sm:$0xff]
  %v10118 = vld [vmem:[#allocation4 + $0x60] sm:$0xff]
  %v10119 = vld [vmem:[#allocation4 + $0x68] sm:$0xff]
  %v10120 = vld [vmem:[#allocation4 + $0x70] sm:$0xff]
  %v10121 = vld [vmem:[#allocation4 + $0x78] sm:$0xff]
  %v10122 = vld [vmem:[#allocation4 + $0x80] sm:$0xff]
  %v10123 = vld [vmem:[#allocation4 + $0x88] sm:$0xff]
  %v10124 = vld [vmem:[#allocation4 + $0x90] sm:$0xff]
  %v10125 = vld [vmem:[#allocation4 + $0x98] sm:$0xff]
  %v10126 = vld [vmem:[#allocation4 + $0xa0] sm:$0xff]
  %v10127 = vld [vmem:[#allocation4 + $0xa8] sm:$0xff]
  %v10128 = vld [vmem:[#allocation4 + $0xb0] sm:$0xff]
  %v10129 = vld [vmem:[#allocation4 + $0xb8] sm:$0xff]
  %v10130 = vld [vmem:[#allocation4 + $0xc0] sm:$0xff]
  %v10131 = vld [vmem:[#allocation4 + $0xc8] sm:$0xff]
  %v10132 = vld [vmem:[#allocation4 + $0xd0] sm:$0xff]
  %v10133 = vld [vmem:[#allocation4 + $0xd8] sm:$0xff]
  %v10134 = vld [vmem:[#allocation4 + $0xe0] sm:$0xff]
  %v10135 = vld [vmem:[#allocation4 + $0xe8] sm:$0xff]
  %v10136 = vld [vmem:[#allocation4 + $0xf0] sm:$0xff]
  %v10137 = vld [vmem:[#allocation4 + $0xf8] sm:$0xff]
  %v10138 = vld [vmem:[#allocation4 + $0x100] sm:$0xff]
  %v10139 = vld [vmem:[#allocation4 + $0x108] sm:$0xff]
  %v10140 = vld [vmem:[#allocation4 + $0x110] sm:$0xff]
  %v10141 = vld [vmem:[#allocation4 + $0x118] sm:$0xff]
  %v10142 = vld [vmem:[#allocation4 + $0x120] sm:$0xff]
  %v10143 = vld [vmem:[#allocation4 + $0x128] sm:$0xff]
  %v10144 = vld [vmem:[#allocation4 + $0x130] sm:$0xff]
  %v10145 = vld [vmem:[#allocation4 + $0x138] sm:$0xff]
  %v10146 = vld [vmem:[#allocation4 + $0x140] sm:$0xff]
  %v10147 = vld [vmem:[#allocation4 + $0x148] sm:$0xff]
  %v10148 = vld [vmem:[#allocation4 + $0x150] sm:$0xff]
  %v10149 = vld [vmem:[#allocation4 + $0x158] sm:$0xff]
  %v10150 = vld [vmem:[#allocation4 + $0x160] sm:$0xff]
  %v10151 = vld [vmem:[#allocation4 + $0x168] sm:$0xff]
  %v10152 = vld [vmem:[#allocation4 + $0x170] sm:$0xff]
  %v10153 = vld [vmem:[#allocation4 + $0x178] sm:$0xff]
  %v10154 = vld [vmem:[#allocation4 + $0x180] sm:$0xff]
  %v10155 = vld [vmem:[#allocation4 + $0x188] sm:$0xff]
  %v10156 = vld [vmem:[#allocation4 + $0x190] sm:$0xff]
  %v10157 = vld [vmem:[#allocation4 + $0x198] sm:$0xff]
  %v10158 = vld [vmem:[#allocation4 + $0x1a0] sm:$0xff]
  %v10159 = vld [vmem:[#allocation4 + $0x1a8] sm:$0xff]
  %v10160 = vld [vmem:[#allocation4 + $0x1b0] sm:$0xff]
  %v10161 = vld [vmem:[#allocation4 + $0x1b8] sm:$0xff]
  %v10162 = vld [vmem:[#allocation4 + $0x1c0] sm:$0xff]
  %v10163 = vld [vmem:[#allocation4 + $0x1c8] sm:$0xff]
  %v10164 = vld [vmem:[#allocation4 + $0x1d0] sm:$0xff]
  %v10165 = vld [vmem:[#allocation4 + $0x1d8] sm:$0xff]
  %v10166 = vld [vmem:[#allocation4 + $0x1e0] sm:$0xff]
  %v10167 = vld [vmem:[#allocation4 + $0x1e8] sm:$0xff]
  %v10168 = vld [vmem:[#allocation4 + $0x1f0] sm:$0x3f]
  %v10169 = vld [vmem:[#allocation2] sm:$0xe]
  %v10170 = vld [vmem:[#allocation2 + $0x4] sm:$0xf]
  %v10171 = vld [vmem:[#allocation2 + $0x8] sm:$0xf]
  %v10172 = vld [vmem:[#allocation2 + $0xc] sm:$0xf]
  %v10173 = vld [vmem:[#allocation2 + $0x10] sm:$0xf]
  %v10174 = vld [vmem:[#allocation2 + $0x14] sm:$0xf]
  %v10175 = vld [vmem:[#allocation2 + $0x18] sm:$0xf]
  %v10176 = vld [vmem:[#allocation2 + $0x1c] sm:$0xf]
  %v10177 = vld [vmem:[#allocation2 + $0x20] sm:$0xf]
  %v10178 = vld [vmem:[#allocation2 + $0x24] sm:$0xf]
  %v10179 = vld [vmem:[#allocation2 + $0x28] sm:$0xf]
  %v10180 = vld [vmem:[#allocation2 + $0x2c] sm:$0xf]
  %v10181 = vld [vmem:[#allocation2 + $0x30] sm:$0xf]
  %v10182 = vld [vmem:[#allocation2 + $0x34] sm:$0xf]
  %v10183 = vld [vmem:[#allocation2 + $0x38] sm:$0xf]
  %v10184 = vld [vmem:[#allocation2 + $0x3c] sm:$0xf]
  %v10185 = vld [vmem:[#allocation2 + $0x40] sm:$0xf]
  %v10186 = vld [vmem:[#allocation2 + $0x44] sm:$0xf]
  %v10187 = vld [vmem:[#allocation2 + $0x48] sm:$0xf]
  %v10188 = vld [vmem:[#allocation2 + $0x4c] sm:$0xf]
  %v10189 = vld [vmem:[#allocation2 + $0x50] sm:$0xf]
  %v10190 = vld [vmem:[#allocation2 + $0x54] sm:$0xf]
  %v10191 = vld [vmem:[#allocation2 + $0x58] sm:$0xf]
  %v10192 = vld [vmem:[#allocation2 + $0x5c] sm:$0xf]
  %v10193 = vld [vmem:[#allocation2 + $0x60] sm:$0xf]
  %v10194 = vld [vmem:[#allocation2 + $0x64] sm:$0xf]
  %v10195 = vld [vmem:[#allocation2 + $0x68] sm:$0xf]
  %v10196 = vld [vmem:[#allocation2 + $0x6c] sm:$0xf]
  %v10197 = vld [vmem:[#allocation2 + $0x70] sm:$0xf]
  %v10198 = vld [vmem:[#allocation2 + $0x74] sm:$0xf]
  %v10199 = vld [vmem:[#allocation2 + $0x78] sm:$0xf]
  %v10200 = vld [vmem:[#allocation2 + $0x7c] sm:$0xf]
  %v10201 = vld [vmem:[#allocation2 + $0x80] sm:$0xf]
  %v10202 = vld [vmem:[#allocation2 + $0x84] sm:$0xf]
  %v10203 = vld [vmem:[#allocation2 + $0x88] sm:$0xf]
  %v10204 = vld [vmem:[#allocation2 + $0x8c] sm:$0xf]
  %v10205 = vld [vmem:[#allocation2 + $0x90] sm:$0xf]
  %v10206 = vld [vmem:[#allocation2 + $0x94] sm:$0xf]
  %v10207 = vld [vmem:[#allocation2 + $0x98] sm:$0xf]
  %v10208 = vld [vmem:[#allocation2 + $0x9c] sm:$0xf]
  %v10209 = vld [vmem:[#allocation2 + $0xa0] sm:$0xf]
  %v10210 = vld [vmem:[#allocation2 + $0xa4] sm:$0xf]
  %v10211 = vld [vmem:[#allocation2 + $0xa8] sm:$0xf]
  %v10212 = vld [vmem:[#allocation2 + $0xac] sm:$0xf]
  %v10213 = vld [vmem:[#allocation2 + $0xb0] sm:$0xf]
  %v10214 = vld [vmem:[#allocation2 + $0xb4] sm:$0xf]
  %v10215 = vld [vmem:[#allocation2 + $0xb8] sm:$0xf]
  %v10216 = vld [vmem:[#allocation2 + $0xbc] sm:$0xf]
  %v10217 = vld [vmem:[#allocation2 + $0xc0] sm:$0xf]
  %v10218 = vld [vmem:[#allocation2 + $0xc4] sm:$0xf]
  %v10219 = vld [vmem:[#allocation2 + $0xc8] sm:$0xf]
  %v10220 = vld [vmem:[#allocation2 + $0xcc] sm:$0xf]
  %v10221 = vld [vmem:[#allocation2 + $0xd0] sm:$0xf]
  %v10222 = vld [vmem:[#allocation2 + $0xd4] sm:$0xf]
  %v10223 = vld [vmem:[#allocation2 + $0xd8] sm:$0xf]
  %v10224 = vld [vmem:[#allocation2 + $0xdc] sm:$0xf]
  %v10225 = vld [vmem:[#allocation2 + $0xe0] sm:$0xf]
  %v10226 = vld [vmem:[#allocation2 + $0xe4] sm:$0xf]
  %v10227 = vld [vmem:[#allocation2 + $0xe8] sm:$0xf]
  %v10228 = vld [vmem:[#allocation2 + $0xec] sm:$0xf]
  %v10229 = vld [vmem:[#allocation2 + $0xf0] sm:$0xf]
  %v10230 = vld [vmem:[#allocation2 + $0xf4] sm:$0xf]
  %v10231 = vld [vmem:[#allocation2 + $0xf8] sm:$0xf]
  %s10232 = scalar_lea.vmem %s7, 128
  %v10233 = vld [vmem:[%s10232] sm:$0xf]
  %v10234 = vld [vmem:[%s10232 + $0x4] sm:$0xf]
  %v10235 = vld [vmem:[%s10232 + $0x8] sm:$0xf]
  %v10236 = vld [vmem:[%s10232 + $0xc] sm:$0xf]
  %v10237 = vld [vmem:[%s10232 + $0x10] sm:$0xf]
  %v10238 = vld [vmem:[%s10232 + $0x14] sm:$0xf]
  %v10239 = vld [vmem:[%s10232 + $0x18] sm:$0xf]
  %v10240 = vld [vmem:[%s10232 + $0x1c] sm:$0xf]
  %v10241 = vld [vmem:[%s10232 + $0x20] sm:$0xf]
  %v10242 = vld [vmem:[%s10232 + $0x24] sm:$0xf]
  %v10243 = vld [vmem:[%s10232 + $0x28] sm:$0xf]
  %v10244 = vld [vmem:[%s10232 + $0x2c] sm:$0xf]
  %v10245 = vld [vmem:[%s10232 + $0x30] sm:$0xf]
  %v10246 = vld [vmem:[%s10232 + $0x34] sm:$0xf]
  %v10247 = vld [vmem:[%s10232 + $0x38] sm:$0xf]
  %v10248 = vld [vmem:[%s10232 + $0x3c] sm:$0xf]
  %v10312 = vunpack.c.l.b16 %v10169
  %v10313 = vunpack.c.l.b16 %v10170
  %v10314 = vunpack.c.l.b16 %v10171
  %v10315 = vunpack.c.l.b16 %v10172
  %v10316 = vunpack.c.l.b16 %v10173
  %v10317 = vunpack.c.l.b16 %v10174
  %v10318 = vunpack.c.l.b16 %v10175
  %v10319 = vunpack.c.l.b16 %v10176
  %v10320 = vunpack.c.l.b16 %v10177
  %v10321 = vunpack.c.l.b16 %v10178
  %v10322 = vunpack.c.l.b16 %v10179
  %v10323 = vunpack.c.l.b16 %v10180
  %v10324 = vunpack.c.l.b16 %v10181
  %v10325 = vunpack.c.l.b16 %v10182
  %v10326 = vunpack.c.l.b16 %v10183
  %v10327 = vunpack.c.l.b16 %v10184
  %v10328 = vunpack.c.l.b16 %v10185
  %v10329 = vunpack.c.l.b16 %v10186
  %v10330 = vunpack.c.l.b16 %v10187
  %v10331 = vunpack.c.l.b16 %v10188
  %v10332 = vunpack.c.l.b16 %v10189
  %v10333 = vunpack.c.l.b16 %v10190
  %v10334 = vunpack.c.l.b16 %v10191
  %v10335 = vunpack.c.l.b16 %v10192
  %v10336 = vunpack.c.l.b16 %v10193
  %v10337 = vunpack.c.l.b16 %v10194
  %v10338 = vunpack.c.l.b16 %v10195
  %v10339 = vunpack.c.l.b16 %v10196
  %v10340 = vunpack.c.l.b16 %v10197
  %v10341 = vunpack.c.l.b16 %v10198
  %v10342 = vunpack.c.l.b16 %v10199
  %v10343 = vunpack.c.l.b16 %v10200
  %v10344 = vunpack.c.l.b16 %v10201
  %v10345 = vunpack.c.l.b16 %v10202
  %v10346 = vunpack.c.l.b16 %v10203
  %v10347 = vunpack.c.l.b16 %v10204
  %v10348 = vunpack.c.l.b16 %v10205
  %v10349 = vunpack.c.l.b16 %v10206
  %v10350 = vunpack.c.l.b16 %v10207
  %v10351 = vunpack.c.l.b16 %v10208
  %v10352 = vunpack.c.l.b16 %v10209
  %v10353 = vunpack.c.l.b16 %v10210
  %v10354 = vunpack.c.l.b16 %v10211
  %v10355 = vunpack.c.l.b16 %v10212
  %v10356 = vunpack.c.l.b16 %v10213
  %v10357 = vunpack.c.l.b16 %v10214
  %v10358 = vunpack.c.l.b16 %v10215
  %v10359 = vunpack.c.l.b16 %v10216
  %v10360 = vunpack.c.l.b16 %v10217
  %v10361 = vunpack.c.l.b16 %v10218
  %v10362 = vunpack.c.l.b16 %v10219
  %v10363 = vunpack.c.l.b16 %v10220
  %v10364 = vunpack.c.l.b16 %v10221
  %v10365 = vunpack.c.l.b16 %v10222
  %v10366 = vunpack.c.l.b16 %v10223
  %v10367 = vunpack.c.l.b16 %v10224
  %v10368 = vunpack.c.l.b16 %v10225
  %v10369 = vunpack.c.l.b16 %v10226
  %v10370 = vunpack.c.l.b16 %v10227
  %v10371 = vunpack.c.l.b16 %v10228
  %v10372 = vunpack.c.l.b16 %v10229
  %v10373 = vunpack.c.l.b16 %v10230
  %v10374 = vunpack.c.l.b16 %v10231
  %v10375 = vpack.c.b16 %v10313, %v10312
  %v10376 = vpack.c.b16 %v10315, %v10314
  %v10377 = vpack.c.b16 %v10317, %v10316
  %v10378 = vpack.c.b16 %v10319, %v10318
  %v10379 = vpack.c.b16 %v10321, %v10320
  %v10380 = vpack.c.b16 %v10323, %v10322
  %v10381 = vpack.c.b16 %v10325, %v10324
  %v10382 = vpack.c.b16 %v10327, %v10326
  %v10383 = vpack.c.b16 %v10329, %v10328
  %v10384 = vpack.c.b16 %v10331, %v10330
  %v10385 = vpack.c.b16 %v10333, %v10332
  %v10386 = vpack.c.b16 %v10335, %v10334
  %v10387 = vpack.c.b16 %v10337, %v10336
  %v10388 = vpack.c.b16 %v10339, %v10338
  %v10389 = vpack.c.b16 %v10341, %v10340
  %v10390 = vpack.c.b16 %v10343, %v10342
  %v10391 = vpack.c.b16 %v10345, %v10344
  %v10392 = vpack.c.b16 %v10347, %v10346
  %v10393 = vpack.c.b16 %v10349, %v10348
  %v10394 = vpack.c.b16 %v10351, %v10350
  %v10395 = vpack.c.b16 %v10353, %v10352
  %v10396 = vpack.c.b16 %v10355, %v10354
  %v10397 = vpack.c.b16 %v10357, %v10356
  %v10398 = vpack.c.b16 %v10359, %v10358
  %v10399 = vpack.c.b16 %v10361, %v10360
  %v10400 = vpack.c.b16 %v10363, %v10362
  %v10401 = vpack.c.b16 %v10365, %v10364
  %v10402 = vpack.c.b16 %v10367, %v10366
  %v10403 = vpack.c.b16 %v10369, %v10368
  %v10404 = vpack.c.b16 %v10371, %v10370
  %v10405 = vpack.c.b16 %v10373, %v10372
  %v10406 = vpack.c.b16 %v10374, %v10374
  %v10407 = vrot.slane %v10375, 1
  %v10408 = vrot.slane %v10376, 1
  %v10409 = vsel %vm2077, %v10407, %v10408
  %v10410 = vrot.slane %v10377, 1
  %v10411 = vsel %vm2077, %v10408, %v10410
  %v10412 = vrot.slane %v10378, 1
  %v10413 = vsel %vm2077, %v10410, %v10412
  %v10414 = vrot.slane %v10379, 1
  %v10415 = vsel %vm2077, %v10412, %v10414
  %v10416 = vrot.slane %v10380, 1
  %v10417 = vsel %vm2077, %v10414, %v10416
  %v10418 = vrot.slane %v10381, 1
  %v10419 = vsel %vm2077, %v10416, %v10418
  %v10420 = vrot.slane %v10382, 1
  %v10421 = vsel %vm2077, %v10418, %v10420
  %v10422 = vrot.slane %v10383, 1
  %v10423 = vsel %vm2077, %v10420, %v10422
  %v10424 = vrot.slane %v10384, 1
  %v10425 = vsel %vm2077, %v10422, %v10424
  %v10426 = vrot.slane %v10385, 1
  %v10427 = vsel %vm2077, %v10424, %v10426
  %v10428 = vrot.slane %v10386, 1
  %v10429 = vsel %vm2077, %v10426, %v10428
  %v10430 = vrot.slane %v10387, 1
  %v10431 = vsel %vm2077, %v10428, %v10430
  %v10432 = vrot.slane %v10388, 1
  %v10433 = vsel %vm2077, %v10430, %v10432
  %v10434 = vrot.slane %v10389, 1
  %v10435 = vsel %vm2077, %v10432, %v10434
  %v10436 = vrot.slane %v10390, 1
  %v10437 = vsel %vm2077, %v10434, %v10436
  %v10438 = vrot.slane %v10391, 1
  %v10439 = vsel %vm2077, %v10436, %v10438
  %v10440 = vrot.slane %v10392, 1
  %v10441 = vsel %vm2077, %v10438, %v10440
  %v10442 = vrot.slane %v10393, 1
  %v10443 = vsel %vm2077, %v10440, %v10442
  %v10444 = vrot.slane %v10394, 1
  %v10445 = vsel %vm2077, %v10442, %v10444
  %v10446 = vrot.slane %v10395, 1
  %v10447 = vsel %vm2077, %v10444, %v10446
  %v10448 = vrot.slane %v10396, 1
  %v10449 = vsel %vm2077, %v10446, %v10448
  %v10450 = vrot.slane %v10397, 1
  %v10451 = vsel %vm2077, %v10448, %v10450
  %v10452 = vrot.slane %v10398, 1
  %v10453 = vsel %vm2077, %v10450, %v10452
  %v10454 = vrot.slane %v10399, 1
  %v10455 = vsel %vm2077, %v10452, %v10454
  %v10456 = vrot.slane %v10400, 1
  %v10457 = vsel %vm2077, %v10454, %v10456
  %v10458 = vrot.slane %v10401, 1
  %v10459 = vsel %vm2077, %v10456, %v10458
  %v10460 = vrot.slane %v10402, 1
  %v10461 = vsel %vm2077, %v10458, %v10460
  %v10462 = vrot.slane %v10403, 1
  %v10463 = vsel %vm2077, %v10460, %v10462
  %v10464 = vrot.slane %v10404, 1
  %v10465 = vsel %vm2077, %v10462, %v10464
  %v10466 = vrot.slane %v10405, 1
  %v10467 = vsel %vm2077, %v10464, %v10466
  %v10468 = vrot.slane %v10406, 1
  %v10469 = vsel %vm2077, %v10466, %v10468
  %v10518 = vunpack.c.l.b16 %v10233
  %v10519 = vunpack.c.l.b16 %v10234
  %v10520 = vunpack.c.l.b16 %v10235
  %v10521 = vunpack.c.l.b16 %v10236
  %v10522 = vunpack.c.l.b16 %v10237
  %v10523 = vunpack.c.l.b16 %v10238
  %v10524 = vunpack.c.l.b16 %v10239
  %v10525 = vunpack.c.l.b16 %v10240
  %v10526 = vunpack.c.l.b16 %v10241
  %v10527 = vunpack.c.l.b16 %v10242
  %v10528 = vunpack.c.l.b16 %v10243
  %v10529 = vunpack.c.l.b16 %v10244
  %v10530 = vunpack.c.l.b16 %v10245
  %v10531 = vunpack.c.l.b16 %v10246
  %v10532 = vunpack.c.l.b16 %v10247
  %v10533 = vunpack.c.l.b16 %v10248
  %v10534 = vpack.c.b16 %v10519, %v10518
  %v10535 = vpack.c.b16 %v10521, %v10520
  %v10536 = vpack.c.b16 %v10523, %v10522
  %v10537 = vpack.c.b16 %v10525, %v10524
  %v10538 = vpack.c.b16 %v10527, %v10526
  %v10539 = vpack.c.b16 %v10529, %v10528
  %v10540 = vpack.c.b16 %v10531, %v10530
  %v10541 = vpack.c.b16 %v10533, %v10532
  %10550 = vmatprep.subr.bf16.mxu0 0
  %10551 = vmatpush1.bf16.msra.mxu0 %v10534
  %10552 = vmatprep.subr.bf16.mxu0 0
  %10553 = vmatpush1.bf16.msra.mxu0 %v10535
  %10554 = vmatprep.subr.bf16.mxu0 0
  %10555 = vmatpush1.bf16.msra.mxu0 %v10536
  %10556 = vmatprep.subr.bf16.mxu0 0
  %10557 = vmatpush1.bf16.msra.mxu0 %v10537
  %10558 = vmatprep.subr.bf16.mxu0 0
  %10559 = vmatpush1.bf16.msra.mxu0 %v10538
  %10560 = vmatprep.subr.bf16.mxu0 0
  %10561 = vmatpush1.bf16.msra.mxu0 %v10539
  %10562 = vmatprep.subr.bf16.mxu0 0
  %10563 = vmatpush1.bf16.msra.mxu0 %v10540
  %10564 = vmatprep.subr.bf16.mxu0 0
  %10565 = vmatpush1.bf16.msra.mxu0 %v10541
  %10566 = vmatprep.subr.bf16.mxu0 0
  %10567 = vmatpush1.bf16.msra.mxu0 0
  %10568 = vmatprep.subr.bf16.mxu0 0
  %10569 = vmatpush1.bf16.msra.mxu0 0
  %10570 = vmatprep.subr.bf16.mxu0 0
  %10571 = vmatpush1.bf16.msra.mxu0 0
  %10572 = vmatprep.subr.bf16.mxu0 0
  %10573 = vmatpush1.bf16.msra.mxu0 0
  %10574 = vmatprep.subr.bf16.mxu0 0
  %10575 = vmatpush1.bf16.msra.mxu0 0
  %10576 = vmatprep.subr.bf16.mxu0 0
  %10577 = vmatpush1.bf16.msra.mxu0 0
  %10578 = vmatprep.subr.bf16.mxu0 0
  %10579 = vmatpush1.bf16.msra.mxu0 0
  %10580 = vmatprep.subr.bf16.mxu0 0
  %10581 = vmatpush1.bf16.msra.mxu0 0
  %10582 = vmatprep.mubr.bf16.mxu0 0
  %10583 = vmatmul.mubr.bf16.gmra.mrb[0].mxu0 %v10409
  %v10584 = vpop.f32.mrb[0].mxu0
  %v10585 = vadd.f32 0.0, %v10584
  %v10586 = vpop.f32.mrb[0].mxu0
  %v10587 = vpop.f32.mrb[0].mxu0
  %v10588 = vadd.f32 0.0, %v10587
  %v10589 = vpop.f32.mrb[0].mxu0
  %10590 = vmatprep.mubr.bf16.mxu0 0
  %10591 = vmatmul.mubr.bf16.gmra.mrb[0].mxu0 %v10411
  %v10592 = vpop.f32.mrb[0].mxu0
  %v10593 = vadd.f32 0.0, %v10592
  %v10594 = vpop.f32.mrb[0].mxu0
  %v10595 = vpop.f32.mrb[0].mxu0
  %v10596 = vadd.f32 0.0, %v10595
  %v10597 = vpop.f32.mrb[0].mxu0
  %10598 = vmatprep.mubr.bf16.mxu0 0
  %10599 = vmatmul.mubr.bf16.gmra.mrb[0].mxu0 %v10413
  %v10600 = vpop.f32.mrb[0].mxu0
  %v10601 = vadd.f32 0.0, %v10600
  %v10602 = vpop.f32.mrb[0].mxu0
  %v10603 = vpop.f32.mrb[0].mxu0
  %v10604 = vadd.f32 0.0, %v10603
  %v10605 = vpop.f32.mrb[0].mxu0
  %10606 = vmatprep.mubr.bf16.mxu0 0
  %10607 = vmatmul.mubr.bf16.gmra.mrb[0].mxu0 %v10415
  %v10608 = vpop.f32.mrb[0].mxu0
  %v10609 = vadd.f32 0.0, %v10608
  %v10610 = vpop.f32.mrb[0].mxu0
  %v10611 = vpop.f32.mrb[0].mxu0
  %v10612 = vadd.f32 0.0, %v10611
  %v10613 = vpop.f32.mrb[0].mxu0
  %10614 = vmatprep.mubr.bf16.mxu0 0
  %10615 = vmatmul.mubr.bf16.gmra.mrb[0].mxu0 %v10417
  %v10616 = vpop.f32.mrb[0].mxu0
  %v10617 = vadd.f32 0.0, %v10616
  %v10618 = vpop.f32.mrb[0].mxu0
  %v10619 = vpop.f32.mrb[0].mxu0
  %v10620 = vadd.f32 0.0, %v10619
  %v10621 = vpop.f32.mrb[0].mxu0
  %10622 = vmatprep.mubr.bf16.mxu0 0
  %10623 = vmatmul.mubr.bf16.gmra.mrb[0].mxu0 %v10419
  %v10624 = vpop.f32.mrb[0].mxu0
  %v10625 = vadd.f32 0.0, %v10624
  %v10626 = vpop.f32.mrb[0].mxu0
  %v10627 = vpop.f32.mrb[0].mxu0
  %v10628 = vadd.f32 0.0, %v10627
  %v10629 = vpop.f32.mrb[0].mxu0
  %10630 = vmatprep.mubr.bf16.mxu0 0
  %10631 = vmatmul.mubr.bf16.gmra.mrb[0].mxu0 %v10421
  %v10632 = vpop.f32.mrb[0].mxu0
  %v10633 = vadd.f32 0.0, %v10632
  %v10634 = vpop.f32.mrb[0].mxu0
  %v10635 = vpop.f32.mrb[0].mxu0
  %v10636 = vadd.f32 0.0, %v10635
  %v10637 = vpop.f32.mrb[0].mxu0
  %10638 = vmatprep.mubr.bf16.mxu0 0
  %10639 = vmatmul.mubr.bf16.gmra.mrb[0].mxu0 %v10423
  %v10640 = vpop.f32.mrb[0].mxu0
  %v10641 = vadd.f32 0.0, %v10640
  %v10642 = vpop.f32.mrb[0].mxu0
  %v10643 = vpop.f32.mrb[0].mxu0
  %v10644 = vadd.f32 0.0, %v10643
  %v10645 = vpop.f32.mrb[0].mxu0
  %10646 = vmatprep.mubr.bf16.mxu0 0
  %10647 = vmatmul.mubr.bf16.gmra.mrb[0].mxu0 %v10425
  %v10648 = vpop.f32.mrb[0].mxu0
  %v10649 = vadd.f32 0.0, %v10648
  %v10650 = vpop.f32.mrb[0].mxu0
  %v10651 = vpop.f32.mrb[0].mxu0
  %v10652 = vadd.f32 0.0, %v10651
  %v10653 = vpop.f32.mrb[0].mxu0
  %10654 = vmatprep.mubr.bf16.mxu0 0
  %10655 = vmatmul.mubr.bf16.gmra.mrb[0].mxu0 %v10427
  %v10656 = vpop.f32.mrb[0].mxu0
  %v10657 = vadd.f32 0.0, %v10656
  %v10658 = vpop.f32.mrb[0].mxu0
  %v10659 = vpop.f32.mrb[0].mxu0
  %v10660 = vadd.f32 0.0, %v10659
  %v10661 = vpop.f32.mrb[0].mxu0
  %10662 = vmatprep.mubr.bf16.mxu0 0
  %10663 = vmatmul.mubr.bf16.gmra.mrb[0].mxu0 %v10429
  %v10664 = vpop.f32.mrb[0].mxu0
  %v10665 = vadd.f32 0.0, %v10664
  %v10666 = vpop.f32.mrb[0].mxu0
  %v10667 = vpop.f32.mrb[0].mxu0
  %v10668 = vadd.f32 0.0, %v10667
  %v10669 = vpop.f32.mrb[0].mxu0
  %10670 = vmatprep.mubr.bf16.mxu0 0
  %10671 = vmatmul.mubr.bf16.gmra.mrb[0].mxu0 %v10431
  %v10672 = vpop.f32.mrb[0].mxu0
  %v10673 = vadd.f32 0.0, %v10672
  %v10674 = vpop.f32.mrb[0].mxu0
  %v10675 = vpop.f32.mrb[0].mxu0
  %v10676 = vadd.f32 0.0, %v10675
  %v10677 = vpop.f32.mrb[0].mxu0
  %10678 = vmatprep.mubr.bf16.mxu0 0
  %10679 = vmatmul.mubr.bf16.gmra.mrb[0].mxu0 %v10433
  %v10680 = vpop.f32.mrb[0].mxu0
  %v10681 = vadd.f32 0.0, %v10680
  %v10682 = vpop.f32.mrb[0].mxu0
  %v10683 = vpop.f32.mrb[0].mxu0
  %v10684 = vadd.f32 0.0, %v10683
  %v10685 = vpop.f32.mrb[0].mxu0
  %10686 = vmatprep.mubr.bf16.mxu0 0
  %10687 = vmatmul.mubr.bf16.gmra.mrb[0].mxu0 %v10435
  %v10688 = vpop.f32.mrb[0].mxu0
  %v10689 = vadd.f32 0.0, %v10688
  %v10690 = vpop.f32.mrb[0].mxu0
  %v10691 = vpop.f32.mrb[0].mxu0
  %v10692 = vadd.f32 0.0, %v10691
  %v10693 = vpop.f32.mrb[0].mxu0
  %10694 = vmatprep.mubr.bf16.mxu0 0
  %10695 = vmatmul.mubr.bf16.gmra.mrb[0].mxu0 %v10437
  %v10696 = vpop.f32.mrb[0].mxu0
  %v10697 = vadd.f32 0.0, %v10696
  %v10698 = vpop.f32.mrb[0].mxu0
  %v10699 = vpop.f32.mrb[0].mxu0
  %v10700 = vadd.f32 0.0, %v10699
  %v10701 = vpop.f32.mrb[0].mxu0
  %10702 = vmatprep.mubr.bf16.mxu0 0
  %10703 = vmatmul.mubr.bf16.gmra.mrb[0].mxu0 %v10439
  %v10704 = vpop.f32.mrb[0].mxu0
  %v10705 = vadd.f32 0.0, %v10704
  %v10706 = vpop.f32.mrb[0].mxu0
  %v10707 = vpop.f32.mrb[0].mxu0
  %v10708 = vadd.f32 0.0, %v10707
  %v10709 = vpop.f32.mrb[0].mxu0
  %10710 = vmatprep.mubr.bf16.mxu0 0
  %10711 = vmatmul.mubr.bf16.gmra.mrb[0].mxu0 %v10441
  %v10712 = vpop.f32.mrb[0].mxu0
  %v10713 = vadd.f32 0.0, %v10712
  %v10714 = vpop.f32.mrb[0].mxu0
  %v10715 = vpop.f32.mrb[0].mxu0
  %v10716 = vadd.f32 0.0, %v10715
  %v10717 = vpop.f32.mrb[0].mxu0
  %10718 = vmatprep.mubr.bf16.mxu0 0
  %10719 = vmatmul.mubr.bf16.gmra.mrb[0].mxu0 %v10443
  %v10720 = vpop.f32.mrb[0].mxu0
  %v10721 = vadd.f32 0.0, %v10720
  %v10722 = vpop.f32.mrb[0].mxu0
  %v10723 = vpop.f32.mrb[0].mxu0
  %v10724 = vadd.f32 0.0, %v10723
  %v10725 = vpop.f32.mrb[0].mxu0
  %10726 = vmatprep.mubr.bf16.mxu0 0
  %10727 = vmatmul.mubr.bf16.gmra.mrb[0].mxu0 %v10445
  %v10728 = vpop.f32.mrb[0].mxu0
  %v10729 = vadd.f32 0.0, %v10728
  %v10730 = vpop.f32.mrb[0].mxu0
  %v10731 = vpop.f32.mrb[0].mxu0
  %v10732 = vadd.f32 0.0, %v10731
  %v10733 = vpop.f32.mrb[0].mxu0
  %10734 = vmatprep.mubr.bf16.mxu0 0
  %10735 = vmatmul.mubr.bf16.gmra.mrb[0].mxu0 %v10447
  %v10736 = vpop.f32.mrb[0].mxu0
  %v10737 = vadd.f32 0.0, %v10736
  %v10738 = vpop.f32.mrb[0].mxu0
  %v10739 = vpop.f32.mrb[0].mxu0
  %v10740 = vadd.f32 0.0, %v10739
  %v10741 = vpop.f32.mrb[0].mxu0
  %10742 = vmatprep.mubr.bf16.mxu0 0
  %10743 = vmatmul.mubr.bf16.gmra.mrb[0].mxu0 %v10449
  %v10744 = vpop.f32.mrb[0].mxu0
  %v10745 = vadd.f32 0.0, %v10744
  %v10746 = vpop.f32.mrb[0].mxu0
  %v10747 = vpop.f32.mrb[0].mxu0
  %v10748 = vadd.f32 0.0, %v10747
  %v10749 = vpop.f32.mrb[0].mxu0
  %10750 = vmatprep.mubr.bf16.mxu0 0
  %10751 = vmatmul.mubr.bf16.gmra.mrb[0].mxu0 %v10451
  %v10752 = vpop.f32.mrb[0].mxu0
  %v10753 = vadd.f32 0.0, %v10752
  %v10754 = vpop.f32.mrb[0].mxu0
  %v10755 = vpop.f32.mrb[0].mxu0
  %v10756 = vadd.f32 0.0, %v10755
  %v10757 = vpop.f32.mrb[0].mxu0
  %10758 = vmatprep.mubr.bf16.mxu0 0
  %10759 = vmatmul.mubr.bf16.gmra.mrb[0].mxu0 %v10453
  %v10760 = vpop.f32.mrb[0].mxu0
  %v10761 = vadd.f32 0.0, %v10760
  %v10762 = vpop.f32.mrb[0].mxu0
  %v10763 = vpop.f32.mrb[0].mxu0
  %v10764 = vadd.f32 0.0, %v10763
  %v10765 = vpop.f32.mrb[0].mxu0
  %10766 = vmatprep.mubr.bf16.mxu0 0
  %10767 = vmatmul.mubr.bf16.gmra.mrb[0].mxu0 %v10455
  %v10768 = vpop.f32.mrb[0].mxu0
  %v10769 = vadd.f32 0.0, %v10768
  %v10770 = vpop.f32.mrb[0].mxu0
  %v10771 = vpop.f32.mrb[0].mxu0
  %v10772 = vadd.f32 0.0, %v10771
  %v10773 = vpop.f32.mrb[0].mxu0
  %10774 = vmatprep.mubr.bf16.mxu0 0
  %10775 = vmatmul.mubr.bf16.gmra.mrb[0].mxu0 %v10457
  %v10776 = vpop.f32.mrb[0].mxu0
  %v10777 = vadd.f32 0.0, %v10776
  %v10778 = vpop.f32.mrb[0].mxu0
  %v10779 = vpop.f32.mrb[0].mxu0
  %v10780 = vadd.f32 0.0, %v10779
  %v10781 = vpop.f32.mrb[0].mxu0
  %10782 = vmatprep.mubr.bf16.mxu0 0
  %10783 = vmatmul.mubr.bf16.gmra.mrb[0].mxu0 %v10459
  %v10784 = vpop.f32.mrb[0].mxu0
  %v10785 = vadd.f32 0.0, %v10784
  %v10786 = vpop.f32.mrb[0].mxu0
  %v10787 = vpop.f32.mrb[0].mxu0
  %v10788 = vadd.f32 0.0, %v10787
  %v10789 = vpop.f32.mrb[0].mxu0
  %10790 = vmatprep.mubr.bf16.mxu0 0
  %10791 = vmatmul.mubr.bf16.gmra.mrb[0].mxu0 %v10461
  %v10792 = vpop.f32.mrb[0].mxu0
  %v10793 = vadd.f32 0.0, %v10792
  %v10794 = vpop.f32.mrb[0].mxu0
  %v10795 = vpop.f32.mrb[0].mxu0
  %v10796 = vadd.f32 0.0, %v10795
  %v10797 = vpop.f32.mrb[0].mxu0
  %10798 = vmatprep.mubr.bf16.mxu0 0
  %10799 = vmatmul.mubr.bf16.gmra.mrb[0].mxu0 %v10463
  %v10800 = vpop.f32.mrb[0].mxu0
  %v10801 = vadd.f32 0.0, %v10800
  %v10802 = vpop.f32.mrb[0].mxu0
  %v10803 = vpop.f32.mrb[0].mxu0
  %v10804 = vadd.f32 0.0, %v10803
  %v10805 = vpop.f32.mrb[0].mxu0
  %10806 = vmatprep.mubr.bf16.mxu0 0
  %10807 = vmatmul.mubr.bf16.gmra.mrb[0].mxu0 %v10465
  %v10808 = vpop.f32.mrb[0].mxu0
  %v10809 = vadd.f32 0.0, %v10808
  %v10810 = vpop.f32.mrb[0].mxu0
  %v10811 = vpop.f32.mrb[0].mxu0
  %v10812 = vadd.f32 0.0, %v10811
  %v10813 = vpop.f32.mrb[0].mxu0
  %10814 = vmatprep.mubr.bf16.mxu0 0
  %10815 = vmatmul.mubr.bf16.gmra.mrb[0].mxu0 %v10467
  %v10816 = vpop.f32.mrb[0].mxu0
  %v10817 = vadd.f32 0.0, %v10816
  %v10818 = vpop.f32.mrb[0].mxu0
  %v10819 = vpop.f32.mrb[0].mxu0
  %v10820 = vadd.f32 0.0, %v10819
  %v10821 = vpop.f32.mrb[0].mxu0
  %10822 = vmatprep.mubr.bf16.mxu0 0
  %10823 = vmatmul.mubr.bf16.gmra.mrb[0].mxu0 %v10469
  %v10824 = vpop.f32.mrb[0].mxu0
  %v10825 = vadd.f32 0.0, %v10824
  %v10826 = vpop.f32.mrb[0].mxu0
  %v10827 = vpop.f32.mrb[0].mxu0
  %v10828 = vadd.f32 0.0, %v10827
  %v10829 = vpop.f32.mrb[0].mxu0
  %10830 = vmatprep.mubr.bf16.mxu0 0
  %10831 = vmatmul.mubr.bf16.gmra.mrb[0].mxu0 %v10468
  %v10832 = vpop.f32.mrb[0].mxu0
  %v10833 = vadd.f32 0.0, %v10832
  %v10834 = vpop.f32.mrb[0].mxu0
  %v10835 = vpop.f32.mrb[0].mxu0
  %v10836 = vpop.f32.mrb[0].mxu0
  %10837 = vdwg.mxu0
  %v10838 = vadd.f32 %v10106, %v10585
  %v10839 = vadd.f32 %v10107, %v10588
  %v10840 = vadd.f32 %v10108, %v10593
  %v10841 = vadd.f32 %v10109, %v10596
  %v10842 = vadd.f32 %v10110, %v10601
  %v10843 = vadd.f32 %v10111, %v10604
  %v10844 = vadd.f32 %v10112, %v10609
  %v10845 = vadd.f32 %v10113, %v10612
  %v10846 = vadd.f32 %v10114, %v10617
  %v10847 = vadd.f32 %v10115, %v10620
  %v10848 = vadd.f32 %v10116, %v10625
  %v10849 = vadd.f32 %v10117, %v10628
  %v10850 = vadd.f32 %v10118, %v10633
  %v10851 = vadd.f32 %v10119, %v10636
  %v10852 = vadd.f32 %v10120, %v10641
  %v10853 = vadd.f32 %v10121, %v10644
  %v10854 = vadd.f32 %v10122, %v10649
  %v10855 = vadd.f32 %v10123, %v10652
  %v10856 = vadd.f32 %v10124, %v10657
  %v10857 = vadd.f32 %v10125, %v10660
  %v10858 = vadd.f32 %v10126, %v10665
  %v10859 = vadd.f32 %v10127, %v10668
  %v10860 = vadd.f32 %v10128, %v10673
  %v10861 = vadd.f32 %v10129, %v10676
  %v10862 = vadd.f32 %v10130, %v10681
  %v10863 = vadd.f32 %v10131, %v10684
  %v10864 = vadd.f32 %v10132, %v10689
  %v10865 = vadd.f32 %v10133, %v10692
  %v10866 = vadd.f32 %v10134, %v10697
  %v10867 = vadd.f32 %v10135, %v10700
  %v10868 = vadd.f32 %v10136, %v10705
  %v10869 = vadd.f32 %v10137, %v10708
  %v10870 = vadd.f32 %v10138, %v10713
  %v10871 = vadd.f32 %v10139, %v10716
  %v10872 = vadd.f32 %v10140, %v10721
  %v10873 = vadd.f32 %v10141, %v10724
  %v10874 = vadd.f32 %v10142, %v10729
  %v10875 = vadd.f32 %v10143, %v10732
  %v10876 = vadd.f32 %v10144, %v10737
  %v10877 = vadd.f32 %v10145, %v10740
  %v10878 = vadd.f32 %v10146, %v10745
  %v10879 = vadd.f32 %v10147, %v10748
  %v10880 = vadd.f32 %v10148, %v10753
  %v10881 = vadd.f32 %v10149, %v10756
  %v10882 = vadd.f32 %v10150, %v10761
  %v10883 = vadd.f32 %v10151, %v10764
  %v10884 = vadd.f32 %v10152, %v10769
  %v10885 = vadd.f32 %v10153, %v10772
  %v10886 = vadd.f32 %v10154, %v10777
  %v10887 = vadd.f32 %v10155, %v10780
  %v10888 = vadd.f32 %v10156, %v10785
  %v10889 = vadd.f32 %v10157, %v10788
  %v10890 = vadd.f32 %v10158, %v10793
  %v10891 = vadd.f32 %v10159, %v10796
  %v10892 = vadd.f32 %v10160, %v10801
  %v10893 = vadd.f32 %v10161, %v10804
  %v10894 = vadd.f32 %v10162, %v10809
  %v10895 = vadd.f32 %v10163, %v10812
  %v10896 = vadd.f32 %v10164, %v10817
  %v10897 = vadd.f32 %v10165, %v10820
  %v10898 = vadd.f32 %v10166, %v10825
  %v10899 = vadd.f32 %v10167, %v10828
  %v10900 = vadd.f32 %v10168, %v10833
  %10901 = vst [vmem:[#allocation4] sm:$0xff] %v10838
  %10902 = vst [vmem:[#allocation4 + $0x8] sm:$0xff] %v10839
  %10903 = vst [vmem:[#allocation4 + $0x10] sm:$0xff] %v10840
  %10904 = vst [vmem:[#allocation4 + $0x18] sm:$0xff] %v10841
  %10905 = vst [vmem:[#allocation4 + $0x20] sm:$0xff] %v10842
  %10906 = vst [vmem:[#allocation4 + $0x28] sm:$0xff] %v10843
  %10907 = vst [vmem:[#allocation4 + $0x30] sm:$0xff] %v10844
  %10908 = vst [vmem:[#allocation4 + $0x38] sm:$0xff] %v10845
  %10909 = vst [vmem:[#allocation4 + $0x40] sm:$0xff] %v10846
  %10910 = vst [vmem:[#allocation4 + $0x48] sm:$0xff] %v10847
  %10911 = vst [vmem:[#allocation4 + $0x50] sm:$0xff] %v10848
  %10912 = vst [vmem:[#allocation4 + $0x58] sm:$0xff] %v10849
  %10913 = vst [vmem:[#allocation4 + $0x60] sm:$0xff] %v10850
  %10914 = vst [vmem:[#allocation4 + $0x68] sm:$0xff] %v10851
  %10915 = vst [vmem:[#allocation4 + $0x70] sm:$0xff] %v10852
  %10916 = vst [vmem:[#allocation4 + $0x78] sm:$0xff] %v10853
  %10917 = vst [vmem:[#allocation4 + $0x80] sm:$0xff] %v10854
  %10918 = vst [vmem:[#allocation4 + $0x88] sm:$0xff] %v10855
  %10919 = vst [vmem:[#allocation4 + $0x90] sm:$0xff] %v10856
  %10920 = vst [vmem:[#allocation4 + $0x98] sm:$0xff] %v10857
  %10921 = vst [vmem:[#allocation4 + $0xa0] sm:$0xff] %v10858
  %10922 = vst [vmem:[#allocation4 + $0xa8] sm:$0xff] %v10859
  %10923 = vst [vmem:[#allocation4 + $0xb0] sm:$0xff] %v10860
  %10924 = vst [vmem:[#allocation4 + $0xb8] sm:$0xff] %v10861
  %10925 = vst [vmem:[#allocation4 + $0xc0] sm:$0xff] %v10862
  %10926 = vst [vmem:[#allocation4 + $0xc8] sm:$0xff] %v10863
  %10927 = vst [vmem:[#allocation4 + $0xd0] sm:$0xff] %v10864
  %10928 = vst [vmem:[#allocation4 + $0xd8] sm:$0xff] %v10865
  %10929 = vst [vmem:[#allocation4 + $0xe0] sm:$0xff] %v10866
  %10930 = vst [vmem:[#allocation4 + $0xe8] sm:$0xff] %v10867
  %10931 = vst [vmem:[#allocation4 + $0xf0] sm:$0xff] %v10868
  %10932 = vst [vmem:[#allocation4 + $0xf8] sm:$0xff] %v10869
  %10933 = vst [vmem:[#allocation4 + $0x100] sm:$0xff] %v10870
  %10934 = vst [vmem:[#allocation4 + $0x108] sm:$0xff] %v10871
  %10935 = vst [vmem:[#allocation4 + $0x110] sm:$0xff] %v10872
  %10936 = vst [vmem:[#allocation4 + $0x118] sm:$0xff] %v10873
  %10937 = vst [vmem:[#allocation4 + $0x120] sm:$0xff] %v10874
  %10938 = vst [vmem:[#allocation4 + $0x128] sm:$0xff] %v10875
  %10939 = vst [vmem:[#allocation4 + $0x130] sm:$0xff] %v10876
  %10940 = vst [vmem:[#allocation4 + $0x138] sm:$0xff] %v10877
  %10941 = vst [vmem:[#allocation4 + $0x140] sm:$0xff] %v10878
  %10942 = vst [vmem:[#allocation4 + $0x148] sm:$0xff] %v10879
  %10943 = vst [vmem:[#allocation4 + $0x150] sm:$0xff] %v10880
  %10944 = vst [vmem:[#allocation4 + $0x158] sm:$0xff] %v10881
  %10945 = vst [vmem:[#allocation4 + $0x160] sm:$0xff] %v10882
  %10946 = vst [vmem:[#allocation4 + $0x168] sm:$0xff] %v10883
  %10947 = vst [vmem:[#allocation4 + $0x170] sm:$0xff] %v10884
  %10948 = vst [vmem:[#allocation4 + $0x178] sm:$0xff] %v10885
  %10949 = vst [vmem:[#allocation4 + $0x180] sm:$0xff] %v10886
  %10950 = vst [vmem:[#allocation4 + $0x188] sm:$0xff] %v10887
  %10951 = vst [vmem:[#allocation4 + $0x190] sm:$0xff] %v10888
  %10952 = vst [vmem:[#allocation4 + $0x198] sm:$0xff] %v10889
  %10953 = vst [vmem:[#allocation4 + $0x1a0] sm:$0xff] %v10890
  %10954 = vst [vmem:[#allocation4 + $0x1a8] sm:$0xff] %v10891
  %10955 = vst [vmem:[#allocation4 + $0x1b0] sm:$0xff] %v10892
  %10956 = vst [vmem:[#allocation4 + $0x1b8] sm:$0xff] %v10893
  %10957 = vst [vmem:[#allocation4 + $0x1c0] sm:$0xff] %v10894
  %10958 = vst [vmem:[#allocation4 + $0x1c8] sm:$0xff] %v10895
  %10959 = vst [vmem:[#allocation4 + $0x1d0] sm:$0xff] %v10896
  %10960 = vst [vmem:[#allocation4 + $0x1d8] sm:$0xff] %v10897
  %10961 = vst [vmem:[#allocation4 + $0x1e0] sm:$0xff] %v10898
  %10962 = vst [vmem:[#allocation4 + $0x1e8] sm:$0xff] %v10899
  %10963 = vst [vmem:[#allocation4 + $0x1f0] sm:$0x3f] %v10900
  %v10964 = vld [vmem:[#allocation4] sm:$0xff]
  %v10965 = vld [vmem:[#allocation4 + $0x8] sm:$0xff]
  %v10966 = vld [vmem:[#allocation4 + $0x10] sm:$0xff]
  %v10967 = vld [vmem:[#allocation4 + $0x18] sm:$0xff]
  %v10968 = vld [vmem:[#allocation4 + $0x20] sm:$0xff]
  %v10969 = vld [vmem:[#allocation4 + $0x28] sm:$0xff]
  %v10970 = vld [vmem:[#allocation4 + $0x30] sm:$0xff]
  %v10971 = vld [vmem:[#allocation4 + $0x38] sm:$0xff]
  %v10972 = vld [vmem:[#allocation4 + $0x40] sm:$0xff]
  %v10973 = vld [vmem:[#allocation4 + $0x48] sm:$0xff]
  %v10974 = vld [vmem:[#allocation4 + $0x50] sm:$0xff]
  %v10975 = vld [vmem:[#allocation4 + $0x58] sm:$0xff]
  %v10976 = vld [vmem:[#allocation4 + $0x60] sm:$0xff]
  %v10977 = vld [vmem:[#allocation4 + $0x68] sm:$0xff]
  %v10978 = vld [vmem:[#allocation4 + $0x70] sm:$0xff]
  %v10979 = vld [vmem:[#allocation4 + $0x78] sm:$0xff]
  %v10980 = vld [vmem:[#allocation4 + $0x80] sm:$0xff]
  %v10981 = vld [vmem:[#allocation4 + $0x88] sm:$0xff]
  %v10982 = vld [vmem:[#allocation4 + $0x90] sm:$0xff]
  %v10983 = vld [vmem:[#allocation4 + $0x98] sm:$0xff]
  %v10984 = vld [vmem:[#allocation4 + $0xa0] sm:$0xff]
  %v10985 = vld [vmem:[#allocation4 + $0xa8] sm:$0xff]
  %v10986 = vld [vmem:[#allocation4 + $0xb0] sm:$0xff]
  %v10987 = vld [vmem:[#allocation4 + $0xb8] sm:$0xff]
  %v10988 = vld [vmem:[#allocation4 + $0xc0] sm:$0xff]
  %v10989 = vld [vmem:[#allocation4 + $0xc8] sm:$0xff]
  %v10990 = vld [vmem:[#allocation4 + $0xd0] sm:$0xff]
  %v10991 = vld [vmem:[#allocation4 + $0xd8] sm:$0xff]
  %v10992 = vld [vmem:[#allocation4 + $0xe0] sm:$0xff]
  %v10993 = vld [vmem:[#allocation4 + $0xe8] sm:$0xff]
  %v10994 = vld [vmem:[#allocation4 + $0xf0] sm:$0xff]
  %v10995 = vld [vmem:[#allocation4 + $0xf8] sm:$0xff]
  %v10996 = vld [vmem:[#allocation4 + $0x100] sm:$0xff]
  %v10997 = vld [vmem:[#allocation4 + $0x108] sm:$0xff]
  %v10998 = vld [vmem:[#allocation4 + $0x110] sm:$0xff]
  %v10999 = vld [vmem:[#allocation4 + $0x118] sm:$0xff]
  %v11000 = vld [vmem:[#allocation4 + $0x120] sm:$0xff]
  %v11001 = vld [vmem:[#allocation4 + $0x128] sm:$0xff]
  %v11002 = vld [vmem:[#allocation4 + $0x130] sm:$0xff]
  %v11003 = vld [vmem:[#allocation4 + $0x138] sm:$0xff]
  %v11004 = vld [vmem:[#allocation4 + $0x140] sm:$0xff]
  %v11005 = vld [vmem:[#allocation4 + $0x148] sm:$0xff]
  %v11006 = vld [vmem:[#allocation4 + $0x150] sm:$0xff]
  %v11007 = vld [vmem:[#allocation4 + $0x158] sm:$0xff]
  %v11008 = vld [vmem:[#allocation4 + $0x160] sm:$0xff]
  %v11009 = vld [vmem:[#allocation4 + $0x168] sm:$0xff]
  %v11010 = vld [vmem:[#allocation4 + $0x170] sm:$0xff]
  %v11011 = vld [vmem:[#allocation4 + $0x178] sm:$0xff]
  %v11012 = vld [vmem:[#allocation4 + $0x180] sm:$0xff]
  %v11013 = vld [vmem:[#allocation4 + $0x188] sm:$0xff]
  %v11014 = vld [vmem:[#allocation4 + $0x190] sm:$0xff]
  %v11015 = vld [vmem:[#allocation4 + $0x198] sm:$0xff]
  %v11016 = vld [vmem:[#allocation4 + $0x1a0] sm:$0xff]
  %v11017 = vld [vmem:[#allocation4 + $0x1a8] sm:$0xff]
  %v11018 = vld [vmem:[#allocation4 + $0x1b0] sm:$0xff]
  %v11019 = vld [vmem:[#allocation4 + $0x1b8] sm:$0xff]
  %v11020 = vld [vmem:[#allocation4 + $0x1c0] sm:$0xff]
  %v11021 = vld [vmem:[#allocation4 + $0x1c8] sm:$0xff]
  %v11022 = vld [vmem:[#allocation4 + $0x1d0] sm:$0xff]
  %v11023 = vld [vmem:[#allocation4 + $0x1d8] sm:$0xff]
  %v11024 = vld [vmem:[#allocation4 + $0x1e0] sm:$0xff]
  %v11025 = vld [vmem:[#allocation4 + $0x1e8] sm:$0xff]
  %v11026 = vld [vmem:[#allocation4 + $0x1f0] sm:$0x3f]
  %v11027 = vld [vmem:[%s8] sm:$0x1]
  %v11029 = vlaneseq
  %v11030 = vshrl.u32 %v11029, 7
  %v11031 = vsub.s32 0, %v11030
  %v11032 = vrot.slane %v11027, %v11031
  %v11034 = vadd.f32 %v10964, %v11032
  %v11035 = vadd.f32 %v10965, %v11032
  %v11036 = vadd.f32 %v10966, %v11032
  %v11037 = vadd.f32 %v10967, %v11032
  %v11038 = vadd.f32 %v10968, %v11032
  %v11039 = vadd.f32 %v10969, %v11032
  %v11040 = vadd.f32 %v10970, %v11032
  %v11041 = vadd.f32 %v10971, %v11032
  %v11042 = vadd.f32 %v10972, %v11032
  %v11043 = vadd.f32 %v10973, %v11032
  %v11044 = vadd.f32 %v10974, %v11032
  %v11045 = vadd.f32 %v10975, %v11032
  %v11046 = vadd.f32 %v10976, %v11032
  %v11047 = vadd.f32 %v10977, %v11032
  %v11048 = vadd.f32 %v10978, %v11032
  %v11049 = vadd.f32 %v10979, %v11032
  %v11050 = vadd.f32 %v10980, %v11032
  %v11051 = vadd.f32 %v10981, %v11032
  %v11052 = vadd.f32 %v10982, %v11032
  %v11053 = vadd.f32 %v10983, %v11032
  %v11054 = vadd.f32 %v10984, %v11032
  %v11055 = vadd.f32 %v10985, %v11032
  %v11056 = vadd.f32 %v10986, %v11032
  %v11057 = vadd.f32 %v10987, %v11032
  %v11058 = vadd.f32 %v10988, %v11032
  %v11059 = vadd.f32 %v10989, %v11032
  %v11060 = vadd.f32 %v10990, %v11032
  %v11061 = vadd.f32 %v10991, %v11032
  %v11062 = vadd.f32 %v10992, %v11032
  %v11063 = vadd.f32 %v10993, %v11032
  %v11064 = vadd.f32 %v10994, %v11032
  %v11065 = vadd.f32 %v10995, %v11032
  %v11066 = vadd.f32 %v10996, %v11032
  %v11067 = vadd.f32 %v10997, %v11032
  %v11068 = vadd.f32 %v10998, %v11032
  %v11069 = vadd.f32 %v10999, %v11032
  %v11070 = vadd.f32 %v11000, %v11032
  %v11071 = vadd.f32 %v11001, %v11032
  %v11072 = vadd.f32 %v11002, %v11032
  %v11073 = vadd.f32 %v11003, %v11032
  %v11074 = vadd.f32 %v11004, %v11032
  %v11075 = vadd.f32 %v11005, %v11032
  %v11076 = vadd.f32 %v11006, %v11032
  %v11077 = vadd.f32 %v11007, %v11032
  %v11078 = vadd.f32 %v11008, %v11032
  %v11079 = vadd.f32 %v11009, %v11032
  %v11080 = vadd.f32 %v11010, %v11032
  %v11081 = vadd.f32 %v11011, %v11032
  %v11082 = vadd.f32 %v11012, %v11032
  %v11083 = vadd.f32 %v11013, %v11032
  %v11084 = vadd.f32 %v11014, %v11032
  %v11085 = vadd.f32 %v11015, %v11032
  %v11086 = vadd.f32 %v11016, %v11032
  %v11087 = vadd.f32 %v11017, %v11032
  %v11088 = vadd.f32 %v11018, %v11032
  %v11089 = vadd.f32 %v11019, %v11032
  %v11090 = vadd.f32 %v11020, %v11032
  %v11091 = vadd.f32 %v11021, %v11032
  %v11092 = vadd.f32 %v11022, %v11032
  %v11093 = vadd.f32 %v11023, %v11032
  %v11094 = vadd.f32 %v11024, %v11032
  %v11095 = vadd.f32 %v11025, %v11032
  %v11096 = vadd.f32 %v11026, %v11032
  %v11097 = vld [vmem:[#allocation3] sm:$0xf]
  %v11098 = vld [vmem:[#allocation3 + $0x4] sm:$0xf]
  %v11099 = vld [vmem:[#allocation3 + $0x8] sm:$0xf]
  %v11100 = vld [vmem:[#allocation3 + $0xc] sm:$0xf]
  %v11101 = vld [vmem:[#allocation3 + $0x10] sm:$0xf]
  %v11102 = vld [vmem:[#allocation3 + $0x14] sm:$0xf]
  %v11103 = vld [vmem:[#allocation3 + $0x18] sm:$0xf]
  %v11104 = vld [vmem:[#allocation3 + $0x1c] sm:$0xf]
  %v11105 = vld [vmem:[#allocation3 + $0x20] sm:$0xf]
  %v11106 = vld [vmem:[#allocation3 + $0x24] sm:$0xf]
  %v11107 = vld [vmem:[#allocation3 + $0x28] sm:$0xf]
  %v11108 = vld [vmem:[#allocation3 + $0x2c] sm:$0xf]
  %v11109 = vld [vmem:[#allocation3 + $0x30] sm:$0xf]
  %v11110 = vld [vmem:[#allocation3 + $0x34] sm:$0xf]
  %v11111 = vld [vmem:[#allocation3 + $0x38] sm:$0xf]
  %v11112 = vld [vmem:[#allocation3 + $0x3c] sm:$0xf]
  %v11113 = vld [vmem:[#allocation3 + $0x40] sm:$0xf]
  %v11114 = vld [vmem:[#allocation3 + $0x44] sm:$0xf]
  %v11115 = vld [vmem:[#allocation3 + $0x48] sm:$0xf]
  %v11116 = vld [vmem:[#allocation3 + $0x4c] sm:$0xf]
  %v11117 = vld [vmem:[#allocation3 + $0x50] sm:$0xf]
  %v11118 = vld [vmem:[#allocation3 + $0x54] sm:$0xf]
  %v11119 = vld [vmem:[#allocation3 + $0x58] sm:$0xf]
  %v11120 = vld [vmem:[#allocation3 + $0x5c] sm:$0xf]
  %v11121 = vld [vmem:[#allocation3 + $0x60] sm:$0xf]
  %v11122 = vld [vmem:[#allocation3 + $0x64] sm:$0xf]
  %v11123 = vld [vmem:[#allocation3 + $0x68] sm:$0xf]
  %v11124 = vld [vmem:[#allocation3 + $0x6c] sm:$0xf]
  %v11125 = vld [vmem:[#allocation3 + $0x70] sm:$0xf]
  %v11126 = vld [vmem:[#allocation3 + $0x74] sm:$0xf]
  %v11127 = vld [vmem:[#allocation3 + $0x78] sm:$0xf]
  %v11128 = vld [vmem:[#allocation3 + $0x7c] sm:$0xf]
  %v11129 = vld [vmem:[#allocation3 + $0x80] sm:$0xf]
  %v11130 = vld [vmem:[#allocation3 + $0x84] sm:$0xf]
  %v11131 = vld [vmem:[#allocation3 + $0x88] sm:$0xf]
  %v11132 = vld [vmem:[#allocation3 + $0x8c] sm:$0xf]
  %v11133 = vld [vmem:[#allocation3 + $0x90] sm:$0xf]
  %v11134 = vld [vmem:[#allocation3 + $0x94] sm:$0xf]
  %v11135 = vld [vmem:[#allocation3 + $0x98] sm:$0xf]
  %v11136 = vld [vmem:[#allocation3 + $0x9c] sm:$0xf]
  %v11137 = vld [vmem:[#allocation3 + $0xa0] sm:$0xf]
  %v11138 = vld [vmem:[#allocation3 + $0xa4] sm:$0xf]
  %v11139 = vld [vmem:[#allocation3 + $0xa8] sm:$0xf]
  %v11140 = vld [vmem:[#allocation3 + $0xac] sm:$0xf]
  %v11141 = vld [vmem:[#allocation3 + $0xb0] sm:$0xf]
  %v11142 = vld [vmem:[#allocation3 + $0xb4] sm:$0xf]
  %v11143 = vld [vmem:[#allocation3 + $0xb8] sm:$0xf]
  %v11144 = vld [vmem:[#allocation3 + $0xbc] sm:$0xf]
  %v11145 = vld [vmem:[#allocation3 + $0xc0] sm:$0xf]
  %v11146 = vld [vmem:[#allocation3 + $0xc4] sm:$0xf]
  %v11147 = vld [vmem:[#allocation3 + $0xc8] sm:$0xf]
  %v11148 = vld [vmem:[#allocation3 + $0xcc] sm:$0xf]
  %v11149 = vld [vmem:[#allocation3 + $0xd0] sm:$0xf]
  %v11150 = vld [vmem:[#allocation3 + $0xd4] sm:$0xf]
  %v11151 = vld [vmem:[#allocation3 + $0xd8] sm:$0xf]
  %v11152 = vld [vmem:[#allocation3 + $0xdc] sm:$0xf]
  %v11153 = vld [vmem:[#allocation3 + $0xe0] sm:$0xf]
  %v11154 = vld [vmem:[#allocation3 + $0xe4] sm:$0xf]
  %v11155 = vld [vmem:[#allocation3 + $0xe8] sm:$0xf]
  %v11156 = vld [vmem:[#allocation3 + $0xec] sm:$0xf]
  %v11157 = vld [vmem:[#allocation3 + $0xf0] sm:$0xf]
  %v11158 = vld [vmem:[#allocation3 + $0xf4] sm:$0xf]
  %v11159 = vld [vmem:[#allocation3 + $0xf8] sm:$0x7]
  %v11160 = vunpack.c.l.bf16 %v11097
  %v11161 = vunpack.c.l.bf16 %v11098
  %v11162 = vunpack.c.l.bf16 %v11099
  %v11163 = vunpack.c.l.bf16 %v11100
  %v11164 = vunpack.c.l.bf16 %v11101
  %v11165 = vunpack.c.l.bf16 %v11102
  %v11166 = vunpack.c.l.bf16 %v11103
  %v11167 = vunpack.c.l.bf16 %v11104
  %v11168 = vunpack.c.l.bf16 %v11105
  %v11169 = vunpack.c.l.bf16 %v11106
  %v11170 = vunpack.c.l.bf16 %v11107
  %v11171 = vunpack.c.l.bf16 %v11108
  %v11172 = vunpack.c.l.bf16 %v11109
  %v11173 = vunpack.c.l.bf16 %v11110
  %v11174 = vunpack.c.l.bf16 %v11111
  %v11175 = vunpack.c.l.bf16 %v11112
  %v11176 = vunpack.c.l.bf16 %v11113
  %v11177 = vunpack.c.l.bf16 %v11114
  %v11178 = vunpack.c.l.bf16 %v11115
  %v11179 = vunpack.c.l.bf16 %v11116
  %v11180 = vunpack.c.l.bf16 %v11117
  %v11181 = vunpack.c.l.bf16 %v11118
  %v11182 = vunpack.c.l.bf16 %v11119
  %v11183 = vunpack.c.l.bf16 %v11120
  %v11184 = vunpack.c.l.bf16 %v11121
  %v11185 = vunpack.c.l.bf16 %v11122
  %v11186 = vunpack.c.l.bf16 %v11123
  %v11187 = vunpack.c.l.bf16 %v11124
  %v11188 = vunpack.c.l.bf16 %v11125
  %v11189 = vunpack.c.l.bf16 %v11126
  %v11190 = vunpack.c.l.bf16 %v11127
  %v11191 = vunpack.c.l.bf16 %v11128
  %v11192 = vunpack.c.l.bf16 %v11129
  %v11193 = vunpack.c.l.bf16 %v11130
  %v11194 = vunpack.c.l.bf16 %v11131
  %v11195 = vunpack.c.l.bf16 %v11132
  %v11196 = vunpack.c.l.bf16 %v11133
  %v11197 = vunpack.c.l.bf16 %v11134
  %v11198 = vunpack.c.l.bf16 %v11135
  %v11199 = vunpack.c.l.bf16 %v11136
  %v11200 = vunpack.c.l.bf16 %v11137
  %v11201 = vunpack.c.l.bf16 %v11138
  %v11202 = vunpack.c.l.bf16 %v11139
  %v11203 = vunpack.c.l.bf16 %v11140
  %v11204 = vunpack.c.l.bf16 %v11141
  %v11205 = vunpack.c.l.bf16 %v11142
  %v11206 = vunpack.c.l.bf16 %v11143
  %v11207 = vunpack.c.l.bf16 %v11144
  %v11208 = vunpack.c.l.bf16 %v11145
  %v11209 = vunpack.c.l.bf16 %v11146
  %v11210 = vunpack.c.l.bf16 %v11147
  %v11211 = vunpack.c.l.bf16 %v11148
  %v11212 = vunpack.c.l.bf16 %v11149
  %v11213 = vunpack.c.l.bf16 %v11150
  %v11214 = vunpack.c.l.bf16 %v11151
  %v11215 = vunpack.c.l.bf16 %v11152
  %v11216 = vunpack.c.l.bf16 %v11153
  %v11217 = vunpack.c.l.bf16 %v11154
  %v11218 = vunpack.c.l.bf16 %v11155
  %v11219 = vunpack.c.l.bf16 %v11156
  %v11220 = vunpack.c.l.bf16 %v11157
  %v11221 = vunpack.c.l.bf16 %v11158
  %v11222 = vunpack.c.l.bf16 %v11159
  %v11223 = vadd.f32 %v11034, %v11160
  %v11224 = vadd.f32 %v11035, %v11161
  %v11225 = vadd.f32 %v11036, %v11162
  %v11226 = vadd.f32 %v11037, %v11163
  %v11227 = vadd.f32 %v11038, %v11164
  %v11228 = vadd.f32 %v11039, %v11165
  %v11229 = vadd.f32 %v11040, %v11166
  %v11230 = vadd.f32 %v11041, %v11167
  %v11231 = vadd.f32 %v11042, %v11168
  %v11232 = vadd.f32 %v11043, %v11169
  %v11233 = vadd.f32 %v11044, %v11170
  %v11234 = vadd.f32 %v11045, %v11171
  %v11235 = vadd.f32 %v11046, %v11172
  %v11236 = vadd.f32 %v11047, %v11173
  %v11237 = vadd.f32 %v11048, %v11174
  %v11238 = vadd.f32 %v11049, %v11175
  %v11239 = vadd.f32 %v11050, %v11176
  %v11240 = vadd.f32 %v11051, %v11177
  %v11241 = vadd.f32 %v11052, %v11178
  %v11242 = vadd.f32 %v11053, %v11179
  %v11243 = vadd.f32 %v11054, %v11180
  %v11244 = vadd.f32 %v11055, %v11181
  %v11245 = vadd.f32 %v11056, %v11182
  %v11246 = vadd.f32 %v11057, %v11183
  %v11247 = vadd.f32 %v11058, %v11184
  %v11248 = vadd.f32 %v11059, %v11185
  %v11249 = vadd.f32 %v11060, %v11186
  %v11250 = vadd.f32 %v11061, %v11187
  %v11251 = vadd.f32 %v11062, %v11188
  %v11252 = vadd.f32 %v11063, %v11189
  %v11253 = vadd.f32 %v11064, %v11190
  %v11254 = vadd.f32 %v11065, %v11191
  %v11255 = vadd.f32 %v11066, %v11192
  %v11256 = vadd.f32 %v11067, %v11193
  %v11257 = vadd.f32 %v11068, %v11194
  %v11258 = vadd.f32 %v11069, %v11195
  %v11259 = vadd.f32 %v11070, %v11196
  %v11260 = vadd.f32 %v11071, %v11197
  %v11261 = vadd.f32 %v11072, %v11198
  %v11262 = vadd.f32 %v11073, %v11199
  %v11263 = vadd.f32 %v11074, %v11200
  %v11264 = vadd.f32 %v11075, %v11201
  %v11265 = vadd.f32 %v11076, %v11202
  %v11266 = vadd.f32 %v11077, %v11203
  %v11267 = vadd.f32 %v11078, %v11204
  %v11268 = vadd.f32 %v11079, %v11205
  %v11269 = vadd.f32 %v11080, %v11206
  %v11270 = vadd.f32 %v11081, %v11207
  %v11271 = vadd.f32 %v11082, %v11208
  %v11272 = vadd.f32 %v11083, %v11209
  %v11273 = vadd.f32 %v11084, %v11210
  %v11274 = vadd.f32 %v11085, %v11211
  %v11275 = vadd.f32 %v11086, %v11212
  %v11276 = vadd.f32 %v11087, %v11213
  %v11277 = vadd.f32 %v11088, %v11214
  %v11278 = vadd.f32 %v11089, %v11215
  %v11279 = vadd.f32 %v11090, %v11216
  %v11280 = vadd.f32 %v11091, %v11217
  %v11281 = vadd.f32 %v11092, %v11218
  %v11282 = vadd.f32 %v11093, %v11219
  %v11283 = vadd.f32 %v11094, %v11220
  %v11284 = vadd.f32 %v11095, %v11221
  %v11285 = vadd.f32 %v11096, %v11222
  %v11286 = vmax.f32 %v11223, 0.0
  %v11287 = vmax.f32 %v11224, 0.0
  %v11288 = vmax.f32 %v11225, 0.0
  %v11289 = vmax.f32 %v11226, 0.0
  %v11290 = vmax.f32 %v11227, 0.0
  %v11291 = vmax.f32 %v11228, 0.0
  %v11292 = vmax.f32 %v11229, 0.0
  %v11293 = vmax.f32 %v11230, 0.0
  %v11294 = vmax.f32 %v11231, 0.0
  %v11295 = vmax.f32 %v11232, 0.0
  %v11296 = vmax.f32 %v11233, 0.0
  %v11297 = vmax.f32 %v11234, 0.0
  %v11298 = vmax.f32 %v11235, 0.0
  %v11299 = vmax.f32 %v11236, 0.0
  %v11300 = vmax.f32 %v11237, 0.0
  %v11301 = vmax.f32 %v11238, 0.0
  %v11302 = vmax.f32 %v11239, 0.0
  %v11303 = vmax.f32 %v11240, 0.0
  %v11304 = vmax.f32 %v11241, 0.0
  %v11305 = vmax.f32 %v11242, 0.0
  %v11306 = vmax.f32 %v11243, 0.0
  %v11307 = vmax.f32 %v11244, 0.0
  %v11308 = vmax.f32 %v11245, 0.0
  %v11309 = vmax.f32 %v11246, 0.0
  %v11310 = vmax.f32 %v11247, 0.0
  %v11311 = vmax.f32 %v11248, 0.0
  %v11312 = vmax.f32 %v11249, 0.0
  %v11313 = vmax.f32 %v11250, 0.0
  %v11314 = vmax.f32 %v11251, 0.0
  %v11315 = vmax.f32 %v11252, 0.0
  %v11316 = vmax.f32 %v11253, 0.0
  %v11317 = vmax.f32 %v11254, 0.0
  %v11318 = vmax.f32 %v11255, 0.0
  %v11319 = vmax.f32 %v11256, 0.0
  %v11320 = vmax.f32 %v11257, 0.0
  %v11321 = vmax.f32 %v11258, 0.0
  %v11322 = vmax.f32 %v11259, 0.0
  %v11323 = vmax.f32 %v11260, 0.0
  %v11324 = vmax.f32 %v11261, 0.0
  %v11325 = vmax.f32 %v11262, 0.0
  %v11326 = vmax.f32 %v11263, 0.0
  %v11327 = vmax.f32 %v11264, 0.0
  %v11328 = vmax.f32 %v11265, 0.0
  %v11329 = vmax.f32 %v11266, 0.0
  %v11330 = vmax.f32 %v11267, 0.0
  %v11331 = vmax.f32 %v11268, 0.0
  %v11332 = vmax.f32 %v11269, 0.0
  %v11333 = vmax.f32 %v11270, 0.0
  %v11334 = vmax.f32 %v11271, 0.0
  %v11335 = vmax.f32 %v11272, 0.0
  %v11336 = vmax.f32 %v11273, 0.0
  %v11337 = vmax.f32 %v11274, 0.0
  %v11338 = vmax.f32 %v11275, 0.0
  %v11339 = vmax.f32 %v11276, 0.0
  %v11340 = vmax.f32 %v11277, 0.0
  %v11341 = vmax.f32 %v11278, 0.0
  %v11342 = vmax.f32 %v11279, 0.0
  %v11343 = vmax.f32 %v11280, 0.0
  %v11344 = vmax.f32 %v11281, 0.0
  %v11345 = vmax.f32 %v11282, 0.0
  %v11346 = vmax.f32 %v11283, 0.0
  %v11347 = vmax.f32 %v11284, 0.0
  %v11348 = vmax.f32 %v11285, 0.0
  %v11349 = vpack.c.bf16 %v11287, %v11286
  %v11350 = vpack.c.bf16 %v11289, %v11288
  %v11351 = vpack.c.bf16 %v11291, %v11290
  %v11352 = vpack.c.bf16 %v11293, %v11292
  %v11353 = vpack.c.bf16 %v11295, %v11294
  %v11354 = vpack.c.bf16 %v11297, %v11296
  %v11355 = vpack.c.bf16 %v11299, %v11298
  %v11356 = vpack.c.bf16 %v11301, %v11300
  %v11357 = vpack.c.bf16 %v11303, %v11302
  %v11358 = vpack.c.bf16 %v11305, %v11304
  %v11359 = vpack.c.bf16 %v11307, %v11306
  %v11360 = vpack.c.bf16 %v11309, %v11308
  %v11361 = vpack.c.bf16 %v11311, %v11310
  %v11362 = vpack.c.bf16 %v11313, %v11312
  %v11363 = vpack.c.bf16 %v11315, %v11314
  %v11364 = vpack.c.bf16 %v11317, %v11316
  %v11365 = vpack.c.bf16 %v11319, %v11318
  %v11366 = vpack.c.bf16 %v11321, %v11320
  %v11367 = vpack.c.bf16 %v11323, %v11322
  %v11368 = vpack.c.bf16 %v11325, %v11324
  %v11369 = vpack.c.bf16 %v11327, %v11326
  %v11370 = vpack.c.bf16 %v11329, %v11328
  %v11371 = vpack.c.bf16 %v11331, %v11330
  %v11372 = vpack.c.bf16 %v11333, %v11332
  %v11373 = vpack.c.bf16 %v11335, %v11334
  %v11374 = vpack.c.bf16 %v11337, %v11336
  %v11375 = vpack.c.bf16 %v11339, %v11338
  %v11376 = vpack.c.bf16 %v11341, %v11340
  %v11377 = vpack.c.bf16 %v11343, %v11342
  %v11378 = vpack.c.bf16 %v11345, %v11344
  %v11379 = vpack.c.bf16 %v11347, %v11346
  %v11380 = vpack.c.bf16 %v11348, %v11348
  %v11413 = vunpack.c.l.b16 %v11349
  %v11414 = vunpack.c.h.b16 %v11349
  %v11415 = vunpack.c.l.b16 %v11350
  %v11416 = vunpack.c.h.b16 %v11350
  %v11417 = vunpack.c.l.b16 %v11351
  %v11418 = vunpack.c.h.b16 %v11351
  %v11419 = vunpack.c.l.b16 %v11352
  %v11420 = vunpack.c.h.b16 %v11352
  %v11421 = vunpack.c.l.b16 %v11353
  %v11422 = vunpack.c.h.b16 %v11353
  %v11423 = vunpack.c.l.b16 %v11354
  %v11424 = vunpack.c.h.b16 %v11354
  %v11425 = vunpack.c.l.b16 %v11355
  %v11426 = vunpack.c.h.b16 %v11355
  %v11427 = vunpack.c.l.b16 %v11356
  %v11428 = vunpack.c.h.b16 %v11356
  %v11429 = vunpack.c.l.b16 %v11357
  %v11430 = vunpack.c.h.b16 %v11357
  %v11431 = vunpack.c.l.b16 %v11358
  %v11432 = vunpack.c.h.b16 %v11358
  %v11433 = vunpack.c.l.b16 %v11359
  %v11434 = vunpack.c.h.b16 %v11359
  %v11435 = vunpack.c.l.b16 %v11360
  %v11436 = vunpack.c.h.b16 %v11360
  %v11437 = vunpack.c.l.b16 %v11361
  %v11438 = vunpack.c.h.b16 %v11361
  %v11439 = vunpack.c.l.b16 %v11362
  %v11440 = vunpack.c.h.b16 %v11362
  %v11441 = vunpack.c.l.b16 %v11363
  %v11442 = vunpack.c.h.b16 %v11363
  %v11443 = vunpack.c.l.b16 %v11364
  %v11444 = vunpack.c.h.b16 %v11364
  %v11445 = vunpack.c.l.b16 %v11365
  %v11446 = vunpack.c.h.b16 %v11365
  %v11447 = vunpack.c.l.b16 %v11366
  %v11448 = vunpack.c.h.b16 %v11366
  %v11449 = vunpack.c.l.b16 %v11367
  %v11450 = vunpack.c.h.b16 %v11367
  %v11451 = vunpack.c.l.b16 %v11368
  %v11452 = vunpack.c.h.b16 %v11368
  %v11453 = vunpack.c.l.b16 %v11369
  %v11454 = vunpack.c.h.b16 %v11369
  %v11455 = vunpack.c.l.b16 %v11370
  %v11456 = vunpack.c.h.b16 %v11370
  %v11457 = vunpack.c.l.b16 %v11371
  %v11458 = vunpack.c.h.b16 %v11371
  %v11459 = vunpack.c.l.b16 %v11372
  %v11460 = vunpack.c.h.b16 %v11372
  %v11461 = vunpack.c.l.b16 %v11373
  %v11462 = vunpack.c.h.b16 %v11373
  %v11463 = vunpack.c.l.b16 %v11374
  %v11464 = vunpack.c.h.b16 %v11374
  %v11465 = vunpack.c.l.b16 %v11375
  %v11466 = vunpack.c.h.b16 %v11375
  %v11467 = vunpack.c.l.b16 %v11376
  %v11468 = vunpack.c.h.b16 %v11376
  %v11469 = vunpack.c.l.b16 %v11377
  %v11470 = vunpack.c.h.b16 %v11377
  %v11471 = vunpack.c.l.b16 %v11378
  %v11472 = vunpack.c.h.b16 %v11378
  %v11473 = vunpack.c.l.b16 %v11379
  %v11474 = vunpack.c.h.b16 %v11379
  %v11475 = vunpack.c.l.b16 %v11380
  %v11476 = vpack.c.b16 %v11413, %v11413
  %v11477 = vpack.c.b16 %v11414, %v11414
  %v11478 = vpack.c.b16 %v11415, %v11415
  %v11479 = vpack.c.b16 %v11416, %v11416
  %v11480 = vpack.c.b16 %v11417, %v11417
  %v11481 = vpack.c.b16 %v11418, %v11418
  %v11482 = vpack.c.b16 %v11419, %v11419
  %v11483 = vpack.c.b16 %v11420, %v11420
  %v11484 = vpack.c.b16 %v11421, %v11421
  %v11485 = vpack.c.b16 %v11422, %v11422
  %v11486 = vpack.c.b16 %v11423, %v11423
  %v11487 = vpack.c.b16 %v11424, %v11424
  %v11488 = vpack.c.b16 %v11425, %v11425
  %v11489 = vpack.c.b16 %v11426, %v11426
  %v11490 = vpack.c.b16 %v11427, %v11427
  %v11491 = vpack.c.b16 %v11428, %v11428
  %v11492 = vpack.c.b16 %v11429, %v11429
  %v11493 = vpack.c.b16 %v11430, %v11430
  %v11494 = vpack.c.b16 %v11431, %v11431
  %v11495 = vpack.c.b16 %v11432, %v11432
  %v11496 = vpack.c.b16 %v11433, %v11433
  %v11497 = vpack.c.b16 %v11434, %v11434
  %v11498 = vpack.c.b16 %v11435, %v11435
  %v11499 = vpack.c.b16 %v11436, %v11436
  %v11500 = vpack.c.b16 %v11437, %v11437
  %v11501 = vpack.c.b16 %v11438, %v11438
  %v11502 = vpack.c.b16 %v11439, %v11439
  %v11503 = vpack.c.b16 %v11440, %v11440
  %v11504 = vpack.c.b16 %v11441, %v11441
  %v11505 = vpack.c.b16 %v11442, %v11442
  %v11506 = vpack.c.b16 %v11443, %v11443
  %v11507 = vpack.c.b16 %v11444, %v11444
  %v11508 = vpack.c.b16 %v11445, %v11445
  %v11509 = vpack.c.b16 %v11446, %v11446
  %v11510 = vpack.c.b16 %v11447, %v11447
  %v11511 = vpack.c.b16 %v11448, %v11448
  %v11512 = vpack.c.b16 %v11449, %v11449
  %v11513 = vpack.c.b16 %v11450, %v11450
  %v11514 = vpack.c.b16 %v11451, %v11451
  %v11515 = vpack.c.b16 %v11452, %v11452
  %v11516 = vpack.c.b16 %v11453, %v11453
  %v11517 = vpack.c.b16 %v11454, %v11454
  %v11518 = vpack.c.b16 %v11455, %v11455
  %v11519 = vpack.c.b16 %v11456, %v11456
  %v11520 = vpack.c.b16 %v11457, %v11457
  %v11521 = vpack.c.b16 %v11458, %v11458
  %v11522 = vpack.c.b16 %v11459, %v11459
  %v11523 = vpack.c.b16 %v11460, %v11460
  %v11524 = vpack.c.b16 %v11461, %v11461
  %v11525 = vpack.c.b16 %v11462, %v11462
  %v11526 = vpack.c.b16 %v11463, %v11463
  %v11527 = vpack.c.b16 %v11464, %v11464
  %v11528 = vpack.c.b16 %v11465, %v11465
  %v11529 = vpack.c.b16 %v11466, %v11466
  %v11530 = vpack.c.b16 %v11467, %v11467
  %v11531 = vpack.c.b16 %v11468, %v11468
  %v11532 = vpack.c.b16 %v11469, %v11469
  %v11533 = vpack.c.b16 %v11470, %v11470
  %v11534 = vpack.c.b16 %v11471, %v11471
  %v11535 = vpack.c.b16 %v11472, %v11472
  %v11536 = vpack.c.b16 %v11473, %v11473
  %v11537 = vpack.c.b16 %v11474, %v11474
  %v11538 = vpack.c.b16 %v11475, %v11475
  %v11540 = vshrl.u32 %v11476, 16
  %v11542 = vrot.slane %v11540, 7
  %v11543 = vshll.u32 %v11476, 16
  %v11545 = vor.u32 %v11542, %v11543
  %v11546 = vrot.slane %v11542, 4
  %v11548 = vshrl.u32 %v11477, 16
  %v11550 = vrot.slane %v11548, 7
  %v11551 = vshll.u32 %v11477, 16
  %v11553 = vor.u32 %v11550, %v11551
  %v11554 = vsel %vm3463, %v11546, %v11553
  %v11555 = vrot.slane %v11550, 4
  %v11557 = vshrl.u32 %v11478, 16
  %v11559 = vrot.slane %v11557, 7
  %v11560 = vshll.u32 %v11478, 16
  %v11562 = vor.u32 %v11559, %v11560
  %v11563 = vsel %vm3463, %v11555, %v11562
  %v11564 = vrot.slane %v11559, 4
  %v11566 = vshrl.u32 %v11479, 16
  %v11568 = vrot.slane %v11566, 7
  %v11569 = vshll.u32 %v11479, 16
  %v11571 = vor.u32 %v11568, %v11569
  %v11572 = vsel %vm3463, %v11564, %v11571
  %v11573 = vrot.slane %v11568, 4
  %v11575 = vshrl.u32 %v11480, 16
  %v11577 = vrot.slane %v11575, 7
  %v11578 = vshll.u32 %v11480, 16
  %v11580 = vor.u32 %v11577, %v11578
  %v11581 = vsel %vm3463, %v11573, %v11580
  %v11582 = vrot.slane %v11577, 4
  %v11584 = vshrl.u32 %v11481, 16
  %v11586 = vrot.slane %v11584, 7
  %v11587 = vshll.u32 %v11481, 16
  %v11589 = vor.u32 %v11586, %v11587
  %v11590 = vsel %vm3463, %v11582, %v11589
  %v11591 = vrot.slane %v11586, 4
  %v11593 = vshrl.u32 %v11482, 16
  %v11595 = vrot.slane %v11593, 7
  %v11596 = vshll.u32 %v11482, 16
  %v11598 = vor.u32 %v11595, %v11596
  %v11599 = vsel %vm3463, %v11591, %v11598
  %v11600 = vrot.slane %v11595, 4
  %v11602 = vshrl.u32 %v11483, 16
  %v11604 = vrot.slane %v11602, 7
  %v11605 = vshll.u32 %v11483, 16
  %v11607 = vor.u32 %v11604, %v11605
  %v11608 = vsel %vm3463, %v11600, %v11607
  %v11609 = vrot.slane %v11604, 4
  %v11611 = vshrl.u32 %v11484, 16
  %v11613 = vrot.slane %v11611, 7
  %v11614 = vshll.u32 %v11484, 16
  %v11616 = vor.u32 %v11613, %v11614
  %v11617 = vsel %vm3463, %v11609, %v11616
  %v11618 = vrot.slane %v11613, 4
  %v11620 = vshrl.u32 %v11485, 16
  %v11622 = vrot.slane %v11620, 7
  %v11623 = vshll.u32 %v11485, 16
  %v11625 = vor.u32 %v11622, %v11623
  %v11626 = vsel %vm3463, %v11618, %v11625
  %v11627 = vrot.slane %v11622, 4
  %v11629 = vshrl.u32 %v11486, 16
  %v11631 = vrot.slane %v11629, 7
  %v11632 = vshll.u32 %v11486, 16
  %v11634 = vor.u32 %v11631, %v11632
  %v11635 = vsel %vm3463, %v11627, %v11634
  %v11636 = vrot.slane %v11631, 4
  %v11638 = vshrl.u32 %v11487, 16
  %v11640 = vrot.slane %v11638, 7
  %v11641 = vshll.u32 %v11487, 16
  %v11643 = vor.u32 %v11640, %v11641
  %v11644 = vsel %vm3463, %v11636, %v11643
  %v11645 = vrot.slane %v11640, 4
  %v11647 = vshrl.u32 %v11488, 16
  %v11649 = vrot.slane %v11647, 7
  %v11650 = vshll.u32 %v11488, 16
  %v11652 = vor.u32 %v11649, %v11650
  %v11653 = vsel %vm3463, %v11645, %v11652
  %v11654 = vrot.slane %v11649, 4
  %v11656 = vshrl.u32 %v11489, 16
  %v11658 = vrot.slane %v11656, 7
  %v11659 = vshll.u32 %v11489, 16
  %v11661 = vor.u32 %v11658, %v11659
  %v11662 = vsel %vm3463, %v11654, %v11661
  %v11663 = vrot.slane %v11658, 4
  %v11665 = vshrl.u32 %v11490, 16
  %v11667 = vrot.slane %v11665, 7
  %v11668 = vshll.u32 %v11490, 16
  %v11670 = vor.u32 %v11667, %v11668
  %v11671 = vsel %vm3463, %v11663, %v11670
  %v11672 = vrot.slane %v11667, 4
  %v11674 = vshrl.u32 %v11491, 16
  %v11676 = vrot.slane %v11674, 7
  %v11677 = vshll.u32 %v11491, 16
  %v11679 = vor.u32 %v11676, %v11677
  %v11680 = vsel %vm3463, %v11672, %v11679
  %v11681 = vrot.slane %v11676, 4
  %v11683 = vshrl.u32 %v11492, 16
  %v11685 = vrot.slane %v11683, 7
  %v11686 = vshll.u32 %v11492, 16
  %v11688 = vor.u32 %v11685, %v11686
  %v11689 = vsel %vm3463, %v11681, %v11688
  %v11690 = vrot.slane %v11685, 4
  %v11692 = vshrl.u32 %v11493, 16
  %v11694 = vrot.slane %v11692, 7
  %v11695 = vshll.u32 %v11493, 16
  %v11697 = vor.u32 %v11694, %v11695
  %v11698 = vsel %vm3463, %v11690, %v11697
  %v11699 = vrot.slane %v11694, 4
  %v11701 = vshrl.u32 %v11494, 16
  %v11703 = vrot.slane %v11701, 7
  %v11704 = vshll.u32 %v11494, 16
  %v11706 = vor.u32 %v11703, %v11704
  %v11707 = vsel %vm3463, %v11699, %v11706
  %v11708 = vrot.slane %v11703, 4
  %v11710 = vshrl.u32 %v11495, 16
  %v11712 = vrot.slane %v11710, 7
  %v11713 = vshll.u32 %v11495, 16
  %v11715 = vor.u32 %v11712, %v11713
  %v11716 = vsel %vm3463, %v11708, %v11715
  %v11717 = vrot.slane %v11712, 4
  %v11719 = vshrl.u32 %v11496, 16
  %v11721 = vrot.slane %v11719, 7
  %v11722 = vshll.u32 %v11496, 16
  %v11724 = vor.u32 %v11721, %v11722
  %v11725 = vsel %vm3463, %v11717, %v11724
  %v11726 = vrot.slane %v11721, 4
  %v11728 = vshrl.u32 %v11497, 16
  %v11730 = vrot.slane %v11728, 7
  %v11731 = vshll.u32 %v11497, 16
  %v11733 = vor.u32 %v11730, %v11731
  %v11734 = vsel %vm3463, %v11726, %v11733
  %v11735 = vrot.slane %v11730, 4
  %v11737 = vshrl.u32 %v11498, 16
  %v11739 = vrot.slane %v11737, 7
  %v11740 = vshll.u32 %v11498, 16
  %v11742 = vor.u32 %v11739, %v11740
  %v11743 = vsel %vm3463, %v11735, %v11742
  %v11744 = vrot.slane %v11739, 4
  %v11746 = vshrl.u32 %v11499, 16
  %v11748 = vrot.slane %v11746, 7
  %v11749 = vshll.u32 %v11499, 16
  %v11751 = vor.u32 %v11748, %v11749
  %v11752 = vsel %vm3463, %v11744, %v11751
  %v11753 = vrot.slane %v11748, 4
  %v11755 = vshrl.u32 %v11500, 16
  %v11757 = vrot.slane %v11755, 7
  %v11758 = vshll.u32 %v11500, 16
  %v11760 = vor.u32 %v11757, %v11758
  %v11761 = vsel %vm3463, %v11753, %v11760
  %v11762 = vrot.slane %v11757, 4
  %v11764 = vshrl.u32 %v11501, 16
  %v11766 = vrot.slane %v11764, 7
  %v11767 = vshll.u32 %v11501, 16
  %v11769 = vor.u32 %v11766, %v11767
  %v11770 = vsel %vm3463, %v11762, %v11769
  %v11771 = vrot.slane %v11766, 4
  %v11773 = vshrl.u32 %v11502, 16
  %v11775 = vrot.slane %v11773, 7
  %v11776 = vshll.u32 %v11502, 16
  %v11778 = vor.u32 %v11775, %v11776
  %v11779 = vsel %vm3463, %v11771, %v11778
  %v11780 = vrot.slane %v11775, 4
  %v11782 = vshrl.u32 %v11503, 16
  %v11784 = vrot.slane %v11782, 7
  %v11785 = vshll.u32 %v11503, 16
  %v11787 = vor.u32 %v11784, %v11785
  %v11788 = vsel %vm3463, %v11780, %v11787
  %v11789 = vrot.slane %v11784, 4
  %v11791 = vshrl.u32 %v11504, 16
  %v11793 = vrot.slane %v11791, 7
  %v11794 = vshll.u32 %v11504, 16
  %v11796 = vor.u32 %v11793, %v11794
  %v11797 = vsel %vm3463, %v11789, %v11796
  %v11798 = vrot.slane %v11793, 4
  %v11800 = vshrl.u32 %v11505, 16
  %v11802 = vrot.slane %v11800, 7
  %v11803 = vshll.u32 %v11505, 16
  %v11805 = vor.u32 %v11802, %v11803
  %v11806 = vsel %vm3463, %v11798, %v11805
  %v11807 = vrot.slane %v11802, 4
  %v11809 = vshrl.u32 %v11506, 16
  %v11811 = vrot.slane %v11809, 7
  %v11812 = vshll.u32 %v11506, 16
  %v11814 = vor.u32 %v11811, %v11812
  %v11815 = vsel %vm3463, %v11807, %v11814
  %v11816 = vrot.slane %v11811, 4
  %v11818 = vshrl.u32 %v11507, 16
  %v11820 = vrot.slane %v11818, 7
  %v11821 = vshll.u32 %v11507, 16
  %v11823 = vor.u32 %v11820, %v11821
  %v11824 = vsel %vm3463, %v11816, %v11823
  %v11825 = vrot.slane %v11820, 4
  %v11827 = vshrl.u32 %v11508, 16
  %v11829 = vrot.slane %v11827, 7
  %v11830 = vshll.u32 %v11508, 16
  %v11832 = vor.u32 %v11829, %v11830
  %v11833 = vsel %vm3463, %v11825, %v11832
  %v11834 = vrot.slane %v11829, 4
  %v11836 = vshrl.u32 %v11509, 16
  %v11838 = vrot.slane %v11836, 7
  %v11839 = vshll.u32 %v11509, 16
  %v11841 = vor.u32 %v11838, %v11839
  %v11842 = vsel %vm3463, %v11834, %v11841
  %v11843 = vrot.slane %v11838, 4
  %v11845 = vshrl.u32 %v11510, 16
  %v11847 = vrot.slane %v11845, 7
  %v11848 = vshll.u32 %v11510, 16
  %v11850 = vor.u32 %v11847, %v11848
  %v11851 = vsel %vm3463, %v11843, %v11850
  %v11852 = vrot.slane %v11847, 4
  %v11854 = vshrl.u32 %v11511, 16
  %v11856 = vrot.slane %v11854, 7
  %v11857 = vshll.u32 %v11511, 16
  %v11859 = vor.u32 %v11856, %v11857
  %v11860 = vsel %vm3463, %v11852, %v11859
  %v11861 = vrot.slane %v11856, 4
  %v11863 = vshrl.u32 %v11512, 16
  %v11865 = vrot.slane %v11863, 7
  %v11866 = vshll.u32 %v11512, 16
  %v11868 = vor.u32 %v11865, %v11866
  %v11869 = vsel %vm3463, %v11861, %v11868
  %v11870 = vrot.slane %v11865, 4
  %v11872 = vshrl.u32 %v11513, 16
  %v11874 = vrot.slane %v11872, 7
  %v11875 = vshll.u32 %v11513, 16
  %v11877 = vor.u32 %v11874, %v11875
  %v11878 = vsel %vm3463, %v11870, %v11877
  %v11879 = vrot.slane %v11874, 4
  %v11881 = vshrl.u32 %v11514, 16
  %v11883 = vrot.slane %v11881, 7
  %v11884 = vshll.u32 %v11514, 16
  %v11886 = vor.u32 %v11883, %v11884
  %v11887 = vsel %vm3463, %v11879, %v11886
  %v11888 = vrot.slane %v11883, 4
  %v11890 = vshrl.u32 %v11515, 16
  %v11892 = vrot.slane %v11890, 7
  %v11893 = vshll.u32 %v11515, 16
  %v11895 = vor.u32 %v11892, %v11893
  %v11896 = vsel %vm3463, %v11888, %v11895
  %v11897 = vrot.slane %v11892, 4
  %v11899 = vshrl.u32 %v11516, 16
  %v11901 = vrot.slane %v11899, 7
  %v11902 = vshll.u32 %v11516, 16
  %v11904 = vor.u32 %v11901, %v11902
  %v11905 = vsel %vm3463, %v11897, %v11904
  %v11906 = vrot.slane %v11901, 4
  %v11908 = vshrl.u32 %v11517, 16
  %v11910 = vrot.slane %v11908, 7
  %v11911 = vshll.u32 %v11517, 16
  %v11913 = vor.u32 %v11910, %v11911
  %v11914 = vsel %vm3463, %v11906, %v11913
  %v11915 = vrot.slane %v11910, 4
  %v11917 = vshrl.u32 %v11518, 16
  %v11919 = vrot.slane %v11917, 7
  %v11920 = vshll.u32 %v11518, 16
  %v11922 = vor.u32 %v11919, %v11920
  %v11923 = vsel %vm3463, %v11915, %v11922
  %v11924 = vrot.slane %v11919, 4
  %v11926 = vshrl.u32 %v11519, 16
  %v11928 = vrot.slane %v11926, 7
  %v11929 = vshll.u32 %v11519, 16
  %v11931 = vor.u32 %v11928, %v11929
  %v11932 = vsel %vm3463, %v11924, %v11931
  %v11933 = vrot.slane %v11928, 4
  %v11935 = vshrl.u32 %v11520, 16
  %v11937 = vrot.slane %v11935, 7
  %v11938 = vshll.u32 %v11520, 16
  %v11940 = vor.u32 %v11937, %v11938
  %v11941 = vsel %vm3463, %v11933, %v11940
  %v11942 = vrot.slane %v11937, 4
  %v11944 = vshrl.u32 %v11521, 16
  %v11946 = vrot.slane %v11944, 7
  %v11947 = vshll.u32 %v11521, 16
  %v11949 = vor.u32 %v11946, %v11947
  %v11950 = vsel %vm3463, %v11942, %v11949
  %v11951 = vrot.slane %v11946, 4
  %v11953 = vshrl.u32 %v11522, 16
  %v11955 = vrot.slane %v11953, 7
  %v11956 = vshll.u32 %v11522, 16
  %v11958 = vor.u32 %v11955, %v11956
  %v11959 = vsel %vm3463, %v11951, %v11958
  %v11960 = vrot.slane %v11955, 4
  %v11962 = vshrl.u32 %v11523, 16
  %v11964 = vrot.slane %v11962, 7
  %v11965 = vshll.u32 %v11523, 16
  %v11967 = vor.u32 %v11964, %v11965
  %v11968 = vsel %vm3463, %v11960, %v11967
  %v11969 = vrot.slane %v11964, 4
  %v11971 = vshrl.u32 %v11524, 16
  %v11973 = vrot.slane %v11971, 7
  %v11974 = vshll.u32 %v11524, 16
  %v11976 = vor.u32 %v11973, %v11974
  %v11977 = vsel %vm3463, %v11969, %v11976
  %v11978 = vrot.slane %v11973, 4
  %v11980 = vshrl.u32 %v11525, 16
  %v11982 = vrot.slane %v11980, 7
  %v11983 = vshll.u32 %v11525, 16
  %v11985 = vor.u32 %v11982, %v11983
  %v11986 = vsel %vm3463, %v11978, %v11985
  %v11987 = vrot.slane %v11982, 4
  %v11989 = vshrl.u32 %v11526, 16
  %v11991 = vrot.slane %v11989, 7
  %v11992 = vshll.u32 %v11526, 16
  %v11994 = vor.u32 %v11991, %v11992
  %v11995 = vsel %vm3463, %v11987, %v11994
  %v11996 = vrot.slane %v11991, 4
  %v11998 = vshrl.u32 %v11527, 16
  %v12000 = vrot.slane %v11998, 7
  %v12001 = vshll.u32 %v11527, 16
  %v12003 = vor.u32 %v12000, %v12001
  %v12004 = vsel %vm3463, %v11996, %v12003
  %v12005 = vrot.slane %v12000, 4
  %v12007 = vshrl.u32 %v11528, 16
  %v12009 = vrot.slane %v12007, 7
  %v12010 = vshll.u32 %v11528, 16
  %v12012 = vor.u32 %v12009, %v12010
  %v12013 = vsel %vm3463, %v12005, %v12012
  %v12014 = vrot.slane %v12009, 4
  %v12016 = vshrl.u32 %v11529, 16
  %v12018 = vrot.slane %v12016, 7
  %v12019 = vshll.u32 %v11529, 16
  %v12021 = vor.u32 %v12018, %v12019
  %v12022 = vsel %vm3463, %v12014, %v12021
  %v12023 = vrot.slane %v12018, 4
  %v12025 = vshrl.u32 %v11530, 16
  %v12027 = vrot.slane %v12025, 7
  %v12028 = vshll.u32 %v11530, 16
  %v12030 = vor.u32 %v12027, %v12028
  %v12031 = vsel %vm3463, %v12023, %v12030
  %v12032 = vrot.slane %v12027, 4
  %v12034 = vshrl.u32 %v11531, 16
  %v12036 = vrot.slane %v12034, 7
  %v12037 = vshll.u32 %v11531, 16
  %v12039 = vor.u32 %v12036, %v12037
  %v12040 = vsel %vm3463, %v12032, %v12039
  %v12041 = vrot.slane %v12036, 4
  %v12043 = vshrl.u32 %v11532, 16
  %v12045 = vrot.slane %v12043, 7
  %v12046 = vshll.u32 %v11532, 16
  %v12048 = vor.u32 %v12045, %v12046
  %v12049 = vsel %vm3463, %v12041, %v12048
  %v12050 = vrot.slane %v12045, 4
  %v12052 = vshrl.u32 %v11533, 16
  %v12054 = vrot.slane %v12052, 7
  %v12055 = vshll.u32 %v11533, 16
  %v12057 = vor.u32 %v12054, %v12055
  %v12058 = vsel %vm3463, %v12050, %v12057
  %v12059 = vrot.slane %v12054, 4
  %v12061 = vshrl.u32 %v11534, 16
  %v12063 = vrot.slane %v12061, 7
  %v12064 = vshll.u32 %v11534, 16
  %v12066 = vor.u32 %v12063, %v12064
  %v12067 = vsel %vm3463, %v12059, %v12066
  %v12068 = vrot.slane %v12063, 4
  %v12070 = vshrl.u32 %v11535, 16
  %v12072 = vrot.slane %v12070, 7
  %v12073 = vshll.u32 %v11535, 16
  %v12075 = vor.u32 %v12072, %v12073
  %v12076 = vsel %vm3463, %v12068, %v12075
  %v12077 = vrot.slane %v12072, 4
  %v12079 = vshrl.u32 %v11536, 16
  %v12081 = vrot.slane %v12079, 7
  %v12082 = vshll.u32 %v11536, 16
  %v12084 = vor.u32 %v12081, %v12082
  %v12085 = vsel %vm3463, %v12077, %v12084
  %v12086 = vrot.slane %v12081, 4
  %v12088 = vshrl.u32 %v11537, 16
  %v12090 = vrot.slane %v12088, 7
  %v12091 = vshll.u32 %v11537, 16
  %v12093 = vor.u32 %v12090, %v12091
  %v12094 = vsel %vm3463, %v12086, %v12093
  %v12095 = vrot.slane %v12090, 4
  %v12097 = vshrl.u32 %v11538, 16
  %v12099 = vrot.slane %v12097, 7
  %v12100 = vshll.u32 %v11538, 16
  %v12102 = vor.u32 %v12099, %v12100
  %v12103 = vsel %vm3463, %v12095, %v12102
  %v12167 = vld [vmem:[#allocation2] sm:$0xf]
  %v12168 = vsel %vm4094, %v11545, %v12167
  %12169 = vst [vmem:[#allocation2] sm:$0xf] %v12168
  %12170 = vst [vmem:[#allocation2 + $0x4] sm:$0xf] %v11554
  %12171 = vst [vmem:[#allocation2 + $0x8] sm:$0xf] %v11563
  %12172 = vst [vmem:[#allocation2 + $0xc] sm:$0xf] %v11572
  %12173 = vst [vmem:[#allocation2 + $0x10] sm:$0xf] %v11581
  %12174 = vst [vmem:[#allocation2 + $0x14] sm:$0xf] %v11590
  %12175 = vst [vmem:[#allocation2 + $0x18] sm:$0xf] %v11599
  %12176 = vst [vmem:[#allocation2 + $0x1c] sm:$0xf] %v11608
  %12177 = vst [vmem:[#allocation2 + $0x20] sm:$0xf] %v11617
  %12178 = vst [vmem:[#allocation2 + $0x24] sm:$0xf] %v11626
  %12179 = vst [vmem:[#allocation2 + $0x28] sm:$0xf] %v11635
  %12180 = vst [vmem:[#allocation2 + $0x2c] sm:$0xf] %v11644
  %12181 = vst [vmem:[#allocation2 + $0x30] sm:$0xf] %v11653
  %12182 = vst [vmem:[#allocation2 + $0x34] sm:$0xf] %v11662
  %12183 = vst [vmem:[#allocation2 + $0x38] sm:$0xf] %v11671
  %12184 = vst [vmem:[#allocation2 + $0x3c] sm:$0xf] %v11680
  %12185 = vst [vmem:[#allocation2 + $0x40] sm:$0xf] %v11689
  %12186 = vst [vmem:[#allocation2 + $0x44] sm:$0xf] %v11698
  %12187 = vst [vmem:[#allocation2 + $0x48] sm:$0xf] %v11707
  %12188 = vst [vmem:[#allocation2 + $0x4c] sm:$0xf] %v11716
  %12189 = vst [vmem:[#allocation2 + $0x50] sm:$0xf] %v11725
  %12190 = vst [vmem:[#allocation2 + $0x54] sm:$0xf] %v11734
  %12191 = vst [vmem:[#allocation2 + $0x58] sm:$0xf] %v11743
  %12192 = vst [vmem:[#allocation2 + $0x5c] sm:$0xf] %v11752
  %12193 = vst [vmem:[#allocation2 + $0x60] sm:$0xf] %v11761
  %12194 = vst [vmem:[#allocation2 + $0x64] sm:$0xf] %v11770
  %12195 = vst [vmem:[#allocation2 + $0x68] sm:$0xf] %v11779
  %12196 = vst [vmem:[#allocation2 + $0x6c] sm:$0xf] %v11788
  %12197 = vst [vmem:[#allocation2 + $0x70] sm:$0xf] %v11797
  %12198 = vst [vmem:[#allocation2 + $0x74] sm:$0xf] %v11806
  %12199 = vst [vmem:[#allocation2 + $0x78] sm:$0xf] %v11815
  %12200 = vst [vmem:[#allocation2 + $0x7c] sm:$0xf] %v11824
  %12201 = vst [vmem:[#allocation2 + $0x80] sm:$0xf] %v11833
  %12202 = vst [vmem:[#allocation2 + $0x84] sm:$0xf] %v11842
  %12203 = vst [vmem:[#allocation2 + $0x88] sm:$0xf] %v11851
  %12204 = vst [vmem:[#allocation2 + $0x8c] sm:$0xf] %v11860
  %12205 = vst [vmem:[#allocation2 + $0x90] sm:$0xf] %v11869
  %12206 = vst [vmem:[#allocation2 + $0x94] sm:$0xf] %v11878
  %12207 = vst [vmem:[#allocation2 + $0x98] sm:$0xf] %v11887
  %12208 = vst [vmem:[#allocation2 + $0x9c] sm:$0xf] %v11896
  %12209 = vst [vmem:[#allocation2 + $0xa0] sm:$0xf] %v11905
  %12210 = vst [vmem:[#allocation2 + $0xa4] sm:$0xf] %v11914
  %12211 = vst [vmem:[#allocation2 + $0xa8] sm:$0xf] %v11923
  %12212 = vst [vmem:[#allocation2 + $0xac] sm:$0xf] %v11932
  %12213 = vst [vmem:[#allocation2 + $0xb0] sm:$0xf] %v11941
  %12214 = vst [vmem:[#allocation2 + $0xb4] sm:$0xf] %v11950
  %12215 = vst [vmem:[#allocation2 + $0xb8] sm:$0xf] %v11959
  %12216 = vst [vmem:[#allocation2 + $0xbc] sm:$0xf] %v11968
  %12217 = vst [vmem:[#allocation2 + $0xc0] sm:$0xf] %v11977
  %12218 = vst [vmem:[#allocation2 + $0xc4] sm:$0xf] %v11986
  %12219 = vst [vmem:[#allocation2 + $0xc8] sm:$0xf] %v11995
  %12220 = vst [vmem:[#allocation2 + $0xcc] sm:$0xf] %v12004
  %12221 = vst [vmem:[#allocation2 + $0xd0] sm:$0xf] %v12013
  %12222 = vst [vmem:[#allocation2 + $0xd4] sm:$0xf] %v12022
  %12223 = vst [vmem:[#allocation2 + $0xd8] sm:$0xf] %v12031
  %12224 = vst [vmem:[#allocation2 + $0xdc] sm:$0xf] %v12040
  %12225 = vst [vmem:[#allocation2 + $0xe0] sm:$0xf] %v12049
  %12226 = vst [vmem:[#allocation2 + $0xe4] sm:$0xf] %v12058
  %12227 = vst [vmem:[#allocation2 + $0xe8] sm:$0xf] %v12067
  %12228 = vst [vmem:[#allocation2 + $0xec] sm:$0xf] %v12076
  %12229 = vst [vmem:[#allocation2 + $0xf0] sm:$0xf] %v12085
  %12230 = vst [vmem:[#allocation2 + $0xf4] sm:$0xf] %v12094
  %v12231 = vld [vmem:[#allocation2 + $0xf8] sm:$0xf]
  %v12232 = vsel %vm4160, %v12103, %v12231
  %12233 = vst [vmem:[#allocation2 + $0xf8] sm:$0xf] %v12232
  %v12234 = vld [vmem:[%s9] sm:$0xff]
  %v12235 = vld [vmem:[%s9 + $0x8] sm:$0xff]
  %v12236 = vld [vmem:[%s9 + $0x10] sm:$0xff]
  %v12237 = vld [vmem:[%s9 + $0x18] sm:$0xff]
  %v12238 = vld [vmem:[%s9 + $0x20] sm:$0xff]
  %v12239 = vld [vmem:[%s9 + $0x28] sm:$0xff]
  %v12240 = vld [vmem:[%s9 + $0x30] sm:$0x33]
  %v12241 = vld [vmem:[%s9 + $0x38] sm:$0x33]
  %v12242 = vld [vmem:[#allocation2] sm:$0xf]
  %v12243 = vld [vmem:[#allocation2 + $0x4] sm:$0xf]
  %v12244 = vld [vmem:[#allocation2 + $0x8] sm:$0xf]
  %v12245 = vld [vmem:[#allocation2 + $0xc] sm:$0xf]
  %v12246 = vld [vmem:[#allocation2 + $0x10] sm:$0xf]
  %v12247 = vld [vmem:[#allocation2 + $0x14] sm:$0xf]
  %v12248 = vld [vmem:[#allocation2 + $0x18] sm:$0xf]
  %v12249 = vld [vmem:[#allocation2 + $0x1c] sm:$0xf]
  %v12250 = vld [vmem:[#allocation2 + $0x20] sm:$0xf]
  %v12251 = vld [vmem:[#allocation2 + $0x24] sm:$0xf]
  %v12252 = vld [vmem:[#allocation2 + $0x28] sm:$0xf]
  %v12253 = vld [vmem:[#allocation2 + $0x2c] sm:$0xf]
  %v12254 = vld [vmem:[#allocation2 + $0x30] sm:$0xf]
  %v12255 = vld [vmem:[#allocation2 + $0x34] sm:$0xf]
  %v12256 = vld [vmem:[#allocation2 + $0x38] sm:$0xf]
  %v12257 = vld [vmem:[#allocation2 + $0x3c] sm:$0xf]
  %v12258 = vld [vmem:[#allocation2 + $0x40] sm:$0xf]
  %v12259 = vld [vmem:[#allocation2 + $0x44] sm:$0xf]
  %v12260 = vld [vmem:[#allocation2 + $0x48] sm:$0xf]
  %v12261 = vld [vmem:[#allocation2 + $0x4c] sm:$0xf]
  %v12262 = vld [vmem:[#allocation2 + $0x50] sm:$0xf]
  %v12263 = vld [vmem:[#allocation2 + $0x54] sm:$0xf]
  %v12264 = vld [vmem:[#allocation2 + $0x58] sm:$0xf]
  %v12265 = vld [vmem:[#allocation2 + $0x5c] sm:$0xf]
  %v12266 = vld [vmem:[#allocation2 + $0x60] sm:$0xf]
  %v12267 = vld [vmem:[#allocation2 + $0x64] sm:$0xf]
  %v12268 = vld [vmem:[#allocation2 + $0x68] sm:$0xf]
  %v12269 = vld [vmem:[#allocation2 + $0x6c] sm:$0xf]
  %v12270 = vld [vmem:[#allocation2 + $0x70] sm:$0xf]
  %v12271 = vld [vmem:[#allocation2 + $0x74] sm:$0xf]
  %v12272 = vld [vmem:[#allocation2 + $0x78] sm:$0xf]
  %v12273 = vld [vmem:[#allocation2 + $0x7c] sm:$0xf]
  %v12274 = vld [vmem:[#allocation2 + $0x80] sm:$0xf]
  %v12275 = vld [vmem:[#allocation2 + $0x84] sm:$0xf]
  %v12276 = vld [vmem:[#allocation2 + $0x88] sm:$0xf]
  %v12277 = vld [vmem:[#allocation2 + $0x8c] sm:$0xf]
  %v12278 = vld [vmem:[#allocation2 + $0x90] sm:$0xf]
  %v12279 = vld [vmem:[#allocation2 + $0x94] sm:$0xf]
  %v12280 = vld [vmem:[#allocation2 + $0x98] sm:$0xf]
  %v12281 = vld [vmem:[#allocation2 + $0x9c] sm:$0xf]
  %v12282 = vld [vmem:[#allocation2 + $0xa0] sm:$0xf]
  %v12283 = vld [vmem:[#allocation2 + $0xa4] sm:$0xf]
  %v12284 = vld [vmem:[#allocation2 + $0xa8] sm:$0xf]
  %v12285 = vld [vmem:[#allocation2 + $0xac] sm:$0xf]
  %v12286 = vld [vmem:[#allocation2 + $0xb0] sm:$0xf]
  %v12287 = vld [vmem:[#allocation2 + $0xb4] sm:$0xf]
  %v12288 = vld [vmem:[#allocation2 + $0xb8] sm:$0xf]
  %v12289 = vld [vmem:[#allocation2 + $0xbc] sm:$0xf]
  %v12290 = vld [vmem:[#allocation2 + $0xc0] sm:$0xf]
  %v12291 = vld [vmem:[#allocation2 + $0xc4] sm:$0xf]
  %v12292 = vld [vmem:[#allocation2 + $0xc8] sm:$0xf]
  %v12293 = vld [vmem:[#allocation2 + $0xcc] sm:$0xf]
  %v12294 = vld [vmem:[#allocation2 + $0xd0] sm:$0xf]
  %v12295 = vld [vmem:[#allocation2 + $0xd4] sm:$0xf]
  %v12296 = vld [vmem:[#allocation2 + $0xd8] sm:$0xf]
  %v12297 = vld [vmem:[#allocation2 + $0xdc] sm:$0xf]
  %v12298 = vld [vmem:[#allocation2 + $0xe0] sm:$0xf]
  %v12299 = vld [vmem:[#allocation2 + $0xe4] sm:$0xf]
  %v12300 = vld [vmem:[#allocation2 + $0xe8] sm:$0xf]
  %v12301 = vld [vmem:[#allocation2 + $0xec] sm:$0xf]
  %v12302 = vld [vmem:[#allocation2 + $0xf0] sm:$0xf]
  %v12303 = vld [vmem:[#allocation2 + $0xf4] sm:$0xf]
  %v12304 = vld [vmem:[#allocation2 + $0xf8] sm:$0xf]
  %v12313 = vunpack.c.l.b16 %v12234
  %v12314 = vunpack.c.h.b16 %v12234
  %v12315 = vunpack.c.l.b16 %v12235
  %v12316 = vunpack.c.h.b16 %v12235
  %v12317 = vunpack.c.l.b16 %v12236
  %v12318 = vunpack.c.h.b16 %v12236
  %v12319 = vunpack.c.l.b16 %v12237
  %v12320 = vunpack.c.h.b16 %v12237
  %v12321 = vunpack.c.l.b16 %v12238
  %v12322 = vunpack.c.h.b16 %v12238
  %v12323 = vunpack.c.l.b16 %v12239
  %v12324 = vunpack.c.h.b16 %v12239
  %v12325 = vunpack.c.l.b16 %v12240
  %v12326 = vunpack.c.h.b16 %v12240
  %v12327 = vunpack.c.l.b16 %v12241
  %v12328 = vunpack.c.h.b16 %v12241
  %v12329 = vpack.c.b16 %v12317, %v12313
  %v12330 = vpack.c.b16 %v12318, %v12314
  %v12331 = vpack.c.b16 %v12319, %v12315
  %v12332 = vpack.c.b16 %v12320, %v12316
  %v12333 = vpack.c.b16 %v12325, %v12321
  %v12334 = vpack.c.b16 %v12326, %v12322
  %v12335 = vpack.c.b16 %v12327, %v12323
  %v12336 = vpack.c.b16 %v12328, %v12324
  %v12406 = vunpack.c.l.b16 %v12242
  %v12407 = vunpack.c.l.b16 %v12243
  %v12408 = vunpack.c.l.b16 %v12244
  %v12409 = vunpack.c.l.b16 %v12245
  %v12410 = vunpack.c.l.b16 %v12246
  %v12411 = vunpack.c.l.b16 %v12247
  %v12412 = vunpack.c.l.b16 %v12248
  %v12413 = vunpack.c.l.b16 %v12249
  %v12414 = vunpack.c.l.b16 %v12250
  %v12415 = vunpack.c.l.b16 %v12251
  %v12416 = vunpack.c.l.b16 %v12252
  %v12417 = vunpack.c.l.b16 %v12253
  %v12418 = vunpack.c.l.b16 %v12254
  %v12419 = vunpack.c.l.b16 %v12255
  %v12420 = vunpack.c.l.b16 %v12256
  %v12421 = vunpack.c.l.b16 %v12257
  %v12422 = vunpack.c.l.b16 %v12258
  %v12423 = vunpack.c.l.b16 %v12259
  %v12424 = vunpack.c.l.b16 %v12260
  %v12425 = vunpack.c.l.b16 %v12261
  %v12426 = vunpack.c.l.b16 %v12262
  %v12427 = vunpack.c.l.b16 %v12263
  %v12428 = vunpack.c.l.b16 %v12264
  %v12429 = vunpack.c.l.b16 %v12265
  %v12430 = vunpack.c.l.b16 %v12266
  %v12431 = vunpack.c.l.b16 %v12267
  %v12432 = vunpack.c.l.b16 %v12268
  %v12433 = vunpack.c.l.b16 %v12269
  %v12434 = vunpack.c.l.b16 %v12270
  %v12435 = vunpack.c.l.b16 %v12271
  %v12436 = vunpack.c.l.b16 %v12272
  %v12437 = vunpack.c.l.b16 %v12273
  %v12438 = vunpack.c.l.b16 %v12274
  %v12439 = vunpack.c.l.b16 %v12275
  %v12440 = vunpack.c.l.b16 %v12276
  %v12441 = vunpack.c.l.b16 %v12277
  %v12442 = vunpack.c.l.b16 %v12278
  %v12443 = vunpack.c.l.b16 %v12279
  %v12444 = vunpack.c.l.b16 %v12280
  %v12445 = vunpack.c.l.b16 %v12281
  %v12446 = vunpack.c.l.b16 %v12282
  %v12447 = vunpack.c.l.b16 %v12283
  %v12448 = vunpack.c.l.b16 %v12284
  %v12449 = vunpack.c.l.b16 %v12285
  %v12450 = vunpack.c.l.b16 %v12286
  %v12451 = vunpack.c.l.b16 %v12287
  %v12452 = vunpack.c.l.b16 %v12288
  %v12453 = vunpack.c.l.b16 %v12289
  %v12454 = vunpack.c.l.b16 %v12290
  %v12455 = vunpack.c.l.b16 %v12291
  %v12456 = vunpack.c.l.b16 %v12292
  %v12457 = vunpack.c.l.b16 %v12293
  %v12458 = vunpack.c.l.b16 %v12294
  %v12459 = vunpack.c.l.b16 %v12295
  %v12460 = vunpack.c.l.b16 %v12296
  %v12461 = vunpack.c.l.b16 %v12297
  %v12462 = vunpack.c.l.b16 %v12298
  %v12463 = vunpack.c.l.b16 %v12299
  %v12464 = vunpack.c.l.b16 %v12300
  %v12465 = vunpack.c.l.b16 %v12301
  %v12466 = vunpack.c.l.b16 %v12302
  %v12467 = vunpack.c.l.b16 %v12303
  %v12468 = vunpack.c.l.b16 %v12304
  %v12469 = vpack.c.b16 %v12407, %v12406
  %v12470 = vpack.c.b16 %v12409, %v12408
  %v12471 = vpack.c.b16 %v12411, %v12410
  %v12472 = vpack.c.b16 %v12413, %v12412
  %v12473 = vpack.c.b16 %v12415, %v12414
  %v12474 = vpack.c.b16 %v12417, %v12416
  %v12475 = vpack.c.b16 %v12419, %v12418
  %v12476 = vpack.c.b16 %v12421, %v12420
  %v12477 = vpack.c.b16 %v12423, %v12422
  %v12478 = vpack.c.b16 %v12425, %v12424
  %v12479 = vpack.c.b16 %v12427, %v12426
  %v12480 = vpack.c.b16 %v12429, %v12428
  %v12481 = vpack.c.b16 %v12431, %v12430
  %v12482 = vpack.c.b16 %v12433, %v12432
  %v12483 = vpack.c.b16 %v12435, %v12434
  %v12484 = vpack.c.b16 %v12437, %v12436
  %v12485 = vpack.c.b16 %v12439, %v12438
  %v12486 = vpack.c.b16 %v12441, %v12440
  %v12487 = vpack.c.b16 %v12443, %v12442
  %v12488 = vpack.c.b16 %v12445, %v12444
  %v12489 = vpack.c.b16 %v12447, %v12446
  %v12490 = vpack.c.b16 %v12449, %v12448
  %v12491 = vpack.c.b16 %v12451, %v12450
  %v12492 = vpack.c.b16 %v12453, %v12452
  %v12493 = vpack.c.b16 %v12455, %v12454
  %v12494 = vpack.c.b16 %v12457, %v12456
  %v12495 = vpack.c.b16 %v12459, %v12458
  %v12496 = vpack.c.b16 %v12461, %v12460
  %v12497 = vpack.c.b16 %v12463, %v12462
  %v12498 = vpack.c.b16 %v12465, %v12464
  %v12499 = vpack.c.b16 %v12467, %v12466
  %v12500 = vpack.c.b16 %v12468, %v12468
  %vm12532 = vcmask 982016
  %v12534 = vsel %vm12532, %v12332, 0
  %v12537 = vsel %vm12532, %v12336, 0
  %vm12539 = vcmask 1043456
  %v12541 = vsel %vm12539, %v12500, 0
  %12543 = vmatprep.subr.bf16.mxu0 0
  %12544 = vmatpush1.bf16.msra.mxu0 %v12469
  %12545 = vmatprep.subr.bf16.mxu0 0
  %12546 = vmatpush1.bf16.msra.mxu0 %v12470
  %12547 = vmatprep.subr.bf16.mxu0 0
  %12548 = vmatpush1.bf16.msra.mxu0 %v12471
  %12549 = vmatprep.subr.bf16.mxu0 0
  %12550 = vmatpush1.bf16.msra.mxu0 %v12472
  %12551 = vmatprep.subr.bf16.mxu0 0
  %12552 = vmatpush1.bf16.msra.mxu0 %v12473
  %12553 = vmatprep.subr.bf16.mxu0 0
  %12554 = vmatpush1.bf16.msra.mxu0 %v12474
  %12555 = vmatprep.subr.bf16.mxu0 0
  %12556 = vmatpush1.bf16.msra.mxu0 %v12475
  %12557 = vmatprep.subr.bf16.mxu0 0
  %12558 = vmatpush1.bf16.msra.mxu0 %v12476
  %12559 = vmatprep.subr.bf16.mxu0 0
  %12560 = vmatpush1.bf16.msra.mxu0 %v12477
  %12561 = vmatprep.subr.bf16.mxu0 0
  %12562 = vmatpush1.bf16.msra.mxu0 %v12478
  %12563 = vmatprep.subr.bf16.mxu0 0
  %12564 = vmatpush1.bf16.msra.mxu0 %v12479
  %12565 = vmatprep.subr.bf16.mxu0 0
  %12566 = vmatpush1.bf16.msra.mxu0 %v12480
  %12567 = vmatprep.subr.bf16.mxu0 0
  %12568 = vmatpush1.bf16.msra.mxu0 %v12481
  %12569 = vmatprep.subr.bf16.mxu0 0
  %12570 = vmatpush1.bf16.msra.mxu0 %v12482
  %12571 = vmatprep.subr.bf16.mxu0 0
  %12572 = vmatpush1.bf16.msra.mxu0 %v12483
  %12573 = vmatprep.subr.bf16.mxu0 0
  %12574 = vmatpush1.bf16.msra.mxu0 %v12484
  %12575 = vmatprep.mubr.bf16.mxu0 %v12330
  %12576 = vmatmul.mubr.bf16.gmra.mrb[0].mxu0 %v12329
  %v12577 = vpop.f32.mrb[0].mxu0
  %v12578 = vadd.f32 0.0, %v12577
  %v12579 = vpop.f32.mrb[0].mxu0
  %v12580 = vpop.f32.mrb[0].mxu0
  %v12581 = vadd.f32 0.0, %v12580
  %v12582 = vpop.f32.mrb[0].mxu0
  %12583 = vmatprep.mubr.bf16.mxu0 %v12334
  %12584 = vmatmul.mubr.bf16.gmra.mrb[0].mxu0 %v12333
  %v12585 = vpop.f32.mrb[0].mxu0
  %v12586 = vadd.f32 0.0, %v12585
  %v12587 = vpop.f32.mrb[0].mxu0
  %v12588 = vpop.f32.mrb[0].mxu0
  %v12589 = vadd.f32 0.0, %v12588
  %v12590 = vpop.f32.mrb[0].mxu0
  %12591 = vdwg.mxu0
  %12592 = vmatprep.subr.bf16.mxu0 0
  %12593 = vmatpush1.bf16.msra.mxu0 %v12485
  %12594 = vmatprep.subr.bf16.mxu0 0
  %12595 = vmatpush1.bf16.msra.mxu0 %v12486
  %12596 = vmatprep.subr.bf16.mxu0 0
  %12597 = vmatpush1.bf16.msra.mxu0 %v12487
  %12598 = vmatprep.subr.bf16.mxu0 0
  %12599 = vmatpush1.bf16.msra.mxu0 %v12488
  %12600 = vmatprep.subr.bf16.mxu0 0
  %12601 = vmatpush1.bf16.msra.mxu0 %v12489
  %12602 = vmatprep.subr.bf16.mxu0 0
  %12603 = vmatpush1.bf16.msra.mxu0 %v12490
  %12604 = vmatprep.subr.bf16.mxu0 0
  %12605 = vmatpush1.bf16.msra.mxu0 %v12491
  %12606 = vmatprep.subr.bf16.mxu0 0
  %12607 = vmatpush1.bf16.msra.mxu0 %v12492
  %12608 = vmatprep.subr.bf16.mxu0 0
  %12609 = vmatpush1.bf16.msra.mxu0 %v12493
  %12610 = vmatprep.subr.bf16.mxu0 0
  %12611 = vmatpush1.bf16.msra.mxu0 %v12494
  %12612 = vmatprep.subr.bf16.mxu0 0
  %12613 = vmatpush1.bf16.msra.mxu0 %v12495
  %12614 = vmatprep.subr.bf16.mxu0 0
  %12615 = vmatpush1.bf16.msra.mxu0 %v12496
  %12616 = vmatprep.subr.bf16.mxu0 0
  %12617 = vmatpush1.bf16.msra.mxu0 %v12497
  %12618 = vmatprep.subr.bf16.mxu0 0
  %12619 = vmatpush1.bf16.msra.mxu0 %v12498
  %12620 = vmatprep.subr.bf16.mxu0 0
  %12621 = vmatpush1.bf16.msra.mxu0 %v12499
  %12622 = vmatprep.subr.bf16.mxu0 0
  %12623 = vmatpush1.bf16.msra.mxu0 %v12541
  %12624 = vmatprep.mubr.bf16.mxu0 %v12534
  %12625 = vmatmul.mubr.bf16.gmra.mrb[0].mxu0 %v12331
  %v12626 = vpop.f32.mrb[0].mxu0
  %v12627 = vadd.f32 %v12578, %v12626
  %v12628 = vpop.f32.mrb[0].mxu0
  %v12629 = vpop.f32.mrb[0].mxu0
  %v12630 = vadd.f32 %v12581, %v12629
  %v12631 = vpop.f32.mrb[0].mxu0
  %12632 = vmatprep.mubr.bf16.mxu0 %v12537
  %12633 = vmatmul.mubr.bf16.gmra.mrb[0].mxu0 %v12335
  %v12634 = vpop.f32.mrb[0].mxu0
  %v12635 = vadd.f32 %v12586, %v12634
  %v12636 = vpop.f32.mrb[0].mxu0
  %v12637 = vpop.f32.mrb[0].mxu0
  %v12638 = vadd.f32 %v12589, %v12637
  %v12639 = vpop.f32.mrb[0].mxu0
  %12640 = vdwg.mxu0
  %v12641 = vpack.c.bf16 %v12630, %v12627
  %v12642 = vpack.c.bf16 %v12638, %v12635
  %v12643 = vld [vmem:[%s10] sm:$0xf]
  %v12644 = vld [vmem:[%s10 + $0x4] sm:$0xf]
  %v12645 = vld [vmem:[%s10 + $0x8] sm:$0xf]
  %v12646 = vld [vmem:[%s10 + $0xc] sm:$0xf]
  %v12647 = vld [vmem:[%s10 + $0x10] sm:$0xf]
  %v12648 = vld [vmem:[%s10 + $0x14] sm:$0xf]
  %v12649 = vld [vmem:[%s10 + $0x18] sm:$0xf]
  %v12650 = vld [vmem:[%s10 + $0x1c] sm:$0xf]
  %v12651 = vld [vmem:[%s10 + $0x20] sm:$0xf]
  %v12652 = vld [vmem:[%s10 + $0x24] sm:$0xf]
  %v12653 = vld [vmem:[%s10 + $0x28] sm:$0xf]
  %v12654 = vld [vmem:[%s10 + $0x2c] sm:$0xf]
  %v12655 = vld [vmem:[%s10 + $0x30] sm:$0xf]
  %v12656 = vld [vmem:[%s10 + $0x34] sm:$0xf]
  %v12657 = vld [vmem:[%s10 + $0x38] sm:$0xf]
  %v12658 = vld [vmem:[%s10 + $0x3c] sm:$0xf]
  %v12659 = vld [vmem:[%s11] sm:$0x1]
  %v12661 = vlaneseq
  %v12662 = vshrl.u32 %v12661, 7
  %v12663 = vsub.s32 0, %v12662
  %v12664 = vrot.slane %v12659, %v12663
  %v12682 = vunpack.c.l.b16 %v12643
  %v12683 = vunpack.c.l.b16 %v12644
  %v12684 = vunpack.c.l.b16 %v12645
  %v12685 = vunpack.c.l.b16 %v12646
  %v12686 = vunpack.c.l.b16 %v12647
  %v12687 = vunpack.c.l.b16 %v12648
  %v12688 = vunpack.c.l.b16 %v12649
  %v12689 = vunpack.c.l.b16 %v12650
  %v12690 = vunpack.c.l.b16 %v12651
  %v12691 = vunpack.c.l.b16 %v12652
  %v12692 = vunpack.c.l.b16 %v12653
  %v12693 = vunpack.c.l.b16 %v12654
  %v12694 = vunpack.c.l.b16 %v12655
  %v12695 = vunpack.c.l.b16 %v12656
  %v12696 = vunpack.c.l.b16 %v12657
  %v12697 = vunpack.c.l.b16 %v12658
  %v12698 = vpack.c.b16 %v12683, %v12682
  %v12699 = vpack.c.b16 %v12685, %v12684
  %v12700 = vpack.c.b16 %v12687, %v12686
  %v12701 = vpack.c.b16 %v12689, %v12688
  %v12702 = vpack.c.b16 %v12691, %v12690
  %v12703 = vpack.c.b16 %v12693, %v12692
  %v12704 = vpack.c.b16 %v12695, %v12694
  %v12705 = vpack.c.b16 %v12697, %v12696
  %12714 = vmatprep.subr.bf16.mxu0 0
  %12715 = vmatpush1.bf16.msra.mxu0 %v12698
  %12716 = vmatprep.subr.bf16.mxu0 0
  %12717 = vmatpush1.bf16.msra.mxu0 %v12699
  %12718 = vmatprep.subr.bf16.mxu0 0
  %12719 = vmatpush1.bf16.msra.mxu0 %v12700
  %12720 = vmatprep.subr.bf16.mxu0 0
  %12721 = vmatpush1.bf16.msra.mxu0 %v12701
  %12722 = vmatprep.subr.bf16.mxu0 0
  %12723 = vmatpush1.bf16.msra.mxu0 %v12702
  %12724 = vmatprep.subr.bf16.mxu0 0
  %12725 = vmatpush1.bf16.msra.mxu0 %v12703
  %12726 = vmatprep.subr.bf16.mxu0 0
  %12727 = vmatpush1.bf16.msra.mxu0 %v12704
  %12728 = vmatprep.subr.bf16.mxu0 0
  %12729 = vmatpush1.bf16.msra.mxu0 %v12705
  %12730 = vmatprep.subr.bf16.mxu0 0
  %12731 = vmatpush1.bf16.msra.mxu0 0
  %12732 = vmatprep.subr.bf16.mxu0 0
  %12733 = vmatpush1.bf16.msra.mxu0 0
  %12734 = vmatprep.subr.bf16.mxu0 0
  %12735 = vmatpush1.bf16.msra.mxu0 0
  %12736 = vmatprep.subr.bf16.mxu0 0
  %12737 = vmatpush1.bf16.msra.mxu0 0
  %12738 = vmatprep.subr.bf16.mxu0 0
  %12739 = vmatpush1.bf16.msra.mxu0 0
  %12740 = vmatprep.subr.bf16.mxu0 0
  %12741 = vmatpush1.bf16.msra.mxu0 0
  %12742 = vmatprep.subr.bf16.mxu0 0
  %12743 = vmatpush1.bf16.msra.mxu0 0
  %12744 = vmatprep.subr.bf16.mxu0 0
  %12745 = vmatpush1.bf16.msra.mxu0 0
  %12746 = vmatprep.mubr.bf16.mxu0 0
  %12747 = vmatmul.mubr.bf16.gmra.mrb[0].mxu0 %v12641
  %v12748 = vpop.f32.mrb[0].mxu0
  %v12749 = vadd.f32 %v12664, %v12748
  %v12750 = vpop.f32.mrb[0].mxu0
  %v12751 = vpop.f32.mrb[0].mxu0
  %v12752 = vadd.f32 %v12664, %v12751
  %v12753 = vpop.f32.mrb[0].mxu0
  %12754 = vmatprep.mubr.bf16.mxu0 0
  %12755 = vmatmul.mubr.bf16.gmra.mrb[0].mxu0 %v12642
  %v12756 = vpop.f32.mrb[0].mxu0
  %v12757 = vadd.f32 %v12664, %v12756
  %v12758 = vpop.f32.mrb[0].mxu0
  %v12759 = vpop.f32.mrb[0].mxu0
  %v12760 = vadd.f32 %v12664, %v12759
  %v12761 = vpop.f32.mrb[0].mxu0
  %12762 = vdwg.mxu0
  %v12763 = vld [vmem:[%s1] sm:$0xff]
  %v12764 = vld [vmem:[%s1 + $0x8] sm:$0xff]
  %v12765 = vld [vmem:[%s1 + $0x10] sm:$0xff]
  %v12766 = vld [vmem:[%s1 + $0x18] sm:$0xf]
  %vm12767 = vcmp.gt.f32.partialorder %v12763, 0.5
  %vm12768 = vcmp.gt.f32.partialorder %v12764, 0.5
  %vm12769 = vcmp.gt.f32.partialorder %v12765, 0.5
  %vm12770 = vcmp.gt.f32.partialorder %v12766, 0.5
  %v12771 = vsel %vm12767, 1, 0
  %v12772 = vsel %vm12768, 1, 0
  %v12773 = vsel %vm12769, 1, 0
  %v12774 = vsel %vm12770, 1, 0
  %12775 = vset.pattern.permute.xlu0 0
  %12776 = vperm.xlu0 %12775, %v12771
  %v12777 = vpop.permute.xlu0 %12776
  %12778 = vset.pattern.permute.xlu0 0
  %12779 = vperm.xlu0 %12778, %v12772
  %v12780 = vpop.permute.xlu0 %12779
  %12781 = vset.pattern.permute.xlu0 0
  %12782 = vperm.xlu0 %12781, %v12773
  %v12783 = vpop.permute.xlu0 %12782
  %12784 = vset.pattern.permute.xlu0 0
  %12785 = vperm.xlu0 %12784, %v12774
  %v12786 = vpop.permute.xlu0 %12785
  %vm12787 = vcmp.eq.s32.totalorder %v12777, 1
  %vm12788 = vcmp.eq.s32.totalorder %v12780, 1
  %vm12789 = vcmp.eq.s32.totalorder %v12783, 1
  %vm12790 = vcmp.eq.s32.totalorder %v12786, 1
  %v12791 = vld [vmem:[%s12] sm:$0x1]
  %v12793 = vlaneseq
  %v12794 = vshrl.u32 %v12793, 7
  %v12795 = vsub.s32 0, %v12794
  %v12796 = vrot.slane %v12791, %v12795
  %v12798 = vsel %vm12787, %v12796, %v12749
  %v12799 = vsel %vm12788, %v12796, %v12752
  %v12800 = vsel %vm12789, %v12796, %v12757
  %v12801 = vsel %vm12790, %v12796, %v12760
  %12802 = vst [vmem:[%s13] sm:$0xff] %v12798
  %12803 = vst [vmem:[%s13 + $0x8] sm:$0xff] %v12799
  %12804 = vst [vmem:[%s13 + $0x10] sm:$0xff] %v12800
  %12805 = vst [vmem:[%s13 + $0x18] sm:$0xf] %v12801
  // Predicated region
  $region54: #{resnet_threshold_forward.1} parent=0 // pred_check
    _
  $region55: #{resnet_threshold_forward.1} parent=0 // pred_check_branch
    %12807 = sbr.rel (0) target = $region57
  $region56: #{resnet_threshold_forward.1} parent=0 // pred_region
    _
  $region57: #{resnet_threshold_forward.1} parent=0 // pred_fallthru
    _
  // Predicated region
  $region58: #{resnet_threshold_forward.1} parent=0 // pred_check
    _
  $region59: #{resnet_threshold_forward.1} parent=0 // pred_check_branch
    %12809 = sbr.rel (0) target = $region61
  $region60: #{resnet_threshold_forward.1} parent=0 // pred_region
    _
  $region61: #{resnet_threshold_forward.1} parent=0 // pred_fallthru
    _

</llo_original>
